<compile_context>
chip_gen: v6e
topology: v6e:2x2x1
jax: 0.10.0
libtpu: 0.0.40
codegen_flags: <defaults>
</compile_context>

<pallas_src>
import numpy as np

import jax
import jax.numpy as jnp
from jax.experimental import pallas as pl
from jax.experimental.pallas import tpu as pltpu


# ----------------------------- model dimensions ---------------------------- #
B = 2                  # kernel row bookkeeping below is specialized to B == 2
C_IN = 4
H = W = 64
SIGNAL_DIM = 8
ENC_SIG = 16
ACTION_SIZE = 1

# conv stack geometry (Large Atari net)
H1 = W1 = 15          # conv1: k=8, s=4 on 64 -> 15
H2 = W2 = 6           # conv2: k=4, s=2 on 15 -> 6
H3 = W3 = 4           # conv3: k=3, s=1 on 6  -> 4
C1, C2, C3 = 32, 64, 64

HB = 16               # number of 4x4 space-to-depth H (and W) blocks for conv1
K_S2D = 4 * 4 * C_IN  # 64 channels per space-to-depth block
LANES_IN = HB * K_S2D  # 1024
LANES_1 = W1 * C1      # 480
LANES_2 = W2 * C2      # 384
LANES_3 = W3 * C3      # 256


# ------------------------------ Pallas kernel ------------------------------ #
#
# Row layouts (both batches stacked along sublanes, parity-major):
#   xs  (32, 1024): rows  0.. 7 b0 even H-blocks (hb=0,2,..,14)
#                   rows  8..15 b1 even H-blocks
#                   rows 16..23 b0 odd  H-blocks (hb=1,3,..,15)
#                   rows 24..31 b1 odd  H-blocks
#   y1  (32,  480): rows  0.. 7 b0 even conv1 rows (oh=0,2,..,14)
#                   rows  8..15 b1 even conv1 rows
#                   rows 16..22 b0 odd  conv1 rows (oh=1,3,..,13)
#                   row  23     garbage (window crossed the batch boundary)
#                   rows 24..30 b1 odd  conv1 rows, row 31 unused
#   y2  (16,  384): rows 0..5 b0 conv2 rows, rows 6,7 garbage,
#                   rows 8..13 b1 conv2 rows, rows 14,15 unused
#   y3  (16,  256): rows 0..3 b0 conv3 rows, rows 4..7 garbage,
#                   rows 8..11 b1 conv3 rows, rows 12..15 unused

def _fused_kernel(xs_ref, sig_ref,
                  bw1_ref, b1_ref, bw2_ref, b2_ref, bw3_ref, b3_ref,
                  ws1_ref, bs1_ref, ws2_ref, bs2_ref,
                  wh1a_ref, wh1b_ref, bh1_ref, wh2_ref, bh2_ref,
                  o_ref,
                  y1_s, y2_s, y3_s, pool_s):
    bf16 = jnp.bfloat16

    def mm(a, b):
        return jnp.dot(a, b, preferred_element_type=jnp.float32)

    # ----- signal encoder: Linear + tanh, Linear + tanh (both batch rows) --- #
    s = sig_ref[...]                                       # (B, 8)  f32
    s = jnp.tanh(mm(s, ws1_ref[...]) + bs1_ref[...])       # (B, 16)
    s = jnp.tanh(mm(s, ws2_ref[...]) + bs2_ref[...])       # (B, 16)

    bias1 = b1_ref[...]                                    # (1, 480)
    bias2 = b2_ref[...]                                    # (1, 384)
    bias3 = b3_ref[...]                                    # (1, 256)

    # ---- conv1 (8x8, stride 4) + tanh : both batches per matmul ----------- #
    # The W direction of the conv (incl. stride) lives inside bw1; the H
    # direction is a kernel-2 stride-1 conv over the space-to-depth rows.
    e = mm(xs_ref[pl.ds(0, 16), :], bw1_ref[0]) \
        + mm(xs_ref[pl.ds(16, 16), :], bw1_ref[1])         # even oh, b0 then b1
    od = mm(xs_ref[pl.ds(16, 15), :], bw1_ref[0]) \
        + mm(xs_ref[pl.ds(1, 15), :], bw1_ref[1])          # odd oh (row 7 garbage)
    y1_s[pl.ds(0, 16), :] = jnp.tanh(e + bias1).astype(bf16)
    y1_s[pl.ds(16, 15), :] = jnp.tanh(od + bias1).astype(bf16)

    # ---- conv2 (4x4, stride 2) + tanh -------------------------------------- #
    # kernel row ki reads conv1 rows of parity (ki % 2); even parities live in
    # y1 rows 0..15, odd parities in rows 16..30 -- always contiguous windows.
    acc2 = mm(y1_s[pl.ds(0, 14), :], bw2_ref[0])
    acc2 = acc2 + mm(y1_s[pl.ds(16, 14), :], bw2_ref[1])
    acc2 = acc2 + mm(y1_s[pl.ds(1, 14), :], bw2_ref[2])
    acc2 = acc2 + mm(y1_s[pl.ds(17, 14), :], bw2_ref[3])
    y2_s[pl.ds(0, 14), :] = jnp.tanh(acc2 + bias2).astype(bf16)

    # ---- conv3 (3x3, stride 1) + tanh -------------------------------------- #
    acc3 = mm(y2_s[pl.ds(0, 12), :], bw3_ref[0])
    acc3 = acc3 + mm(y2_s[pl.ds(1, 12), :], bw3_ref[1])
    acc3 = acc3 + mm(y2_s[pl.ds(2, 12), :], bw3_ref[2])
    y3_s[pl.ds(0, 12), :] = jnp.tanh(acc3 + bias3)          # lanes = (ow3, c)

    # ---- AdaptiveMaxPool2d(1): max over 4 rows x 4 lane groups of 64 ------- #
    def lane_max(row0):
        rows = pl.ds(row0, 4)
        m = jnp.maximum(
            jnp.maximum(y3_s[rows, pl.ds(0, 64)], y3_s[rows, pl.ds(64, 64)]),
            jnp.maximum(y3_s[rows, pl.ds(128, 64)], y3_s[rows, pl.ds(192, 64)]))
        return jnp.max(m, axis=0, keepdims=True)            # (1, 64)

    pool_s[pl.ds(0, 1), :] = lane_max(0)                     # batch 0 rows 0..3
    pool_s[pl.ds(1, 1), :] = lane_max(8)                     # batch 1 rows 8..11

    # ---- head: concat([pooled, sig]) @ W1 as a split matmul, tanh, linear2 - #
    pooled = pool_s[...]                                     # (B, 64)
    h = jnp.tanh(mm(pooled, wh1a_ref[...]) + mm(s, wh1b_ref[...]) + bh1_ref[...])
    o_ref[...] = (mm(h, wh2_ref[...]) + bh2_ref[...]).astype(o_ref.dtype)


# ------------------------------ parameter glue ------------------------------ #

def init_params(key):
    """Random params, PyTorch-default U(-1/sqrt(fan_in), 1/sqrt(fan_in)) init."""
    keys = jax.random.split(key, 14)

    def uni(k, shape, lim):
        return jax.random.uniform(k, shape, jnp.float32, -lim, lim)

    def conv(kw, kb, ksz, cin, cout):
        lim = 1.0 / np.sqrt(cin * ksz * ksz)
        return uni(kw, (ksz, ksz, cin, cout), lim), uni(kb, (cout,), lim)

    def lin(kw, kb, fin, fout):
        lim = 1.0 / np.sqrt(fin)
        return uni(kw, (fin, fout), lim), uni(kb, (fout,), lim)

    return {
        # conv weights stored (kh, kw, C_in, C_out); PyTorch (C_out,C_in,kh,kw)
        # weights map onto this via .permute(2, 3, 1, 0).
        "conv1": conv(keys[0], keys[1], 8, C_IN, C1),
        "conv2": conv(keys[2], keys[3], 4, C1, C2),
        "conv3": conv(keys[4], keys[5], 3, C2, C3),
        "sig1": lin(keys[6], keys[7], SIGNAL_DIM, 16),
        "sig2": lin(keys[8], keys[9], 16, ENC_SIG),
        "linear1": lin(keys[10], keys[11], C3 + ENC_SIG, 64),
        "linear2": lin(keys[12], keys[13], 64, ACTION_SIZE),
    }


def pack_params(params):
    """Precompute (once) banded conv weight matrices and lane-tiled biases."""

    def banded(wc, wi, stride):
        # wc: (k, k, cin, cout) -> per-kernel-row matrices (k, wi*cin, wo*cout)
        # BW[ki][(w, c), (ow, co)] = wc[ki, w - stride*ow, c, co] inside the band.
        k, _, cin, cout = wc.shape
        wo = (wi - k) // stride + 1
        m = np.zeros((k, wi * cin, wo * cout), np.float32)
        for ki in range(k):
            for ow in range(wo):
                for kj in range(k):
                    w = stride * ow + kj
                    m[ki, w * cin:(w + 1) * cin,
                      ow * cout:(ow + 1) * cout] = wc[ki, kj]
        return m

    w1, b1 = (np.asarray(t, np.float32) for t in params["conv1"])
    w2, b2 = (np.asarray(t, np.float32) for t in params["conv2"])
    w3, b3 = (np.asarray(t, np.float32) for t in params["conv3"])

    # conv1 re-expressed as a kernel-2 / stride-1 conv over 4x4 space-to-depth
    # blocks: (8,8,4,32) -> (2,2,64,32) with per-block channel order (pi,pj,c).
    w1_s2d = w1.reshape(2, 4, 2, 4, C_IN, C1).transpose(0, 2, 1, 3, 4, 5)
    w1_s2d = w1_s2d.reshape(2, 2, K_S2D, C1)

    wl1, bl1 = params["linear1"]
    wl2, bl2 = params["linear2"]
    bf16 = jnp.bfloat16
    return {
        "bw1": jnp.asarray(banded(w1_s2d, HB, 1), bf16),   # (2, 1024, 480)
        "b1": jnp.asarray(np.tile(b1, W1)[None, :]),       # (1, 480)
        "bw2": jnp.asarray(banded(w2, W1, 2), bf16),       # (4, 480, 384)
        "b2": jnp.asarray(np.tile(b2, W2)[None, :]),       # (1, 384)
        "bw3": jnp.asarray(banded(w3, W2, 1), bf16),       # (3, 384, 256)
        "b3": jnp.asarray(np.tile(b3, W3)[None, :]),       # (1, 256)
        "ws1": params["sig1"][0], "bs1": params["sig1"][1].reshape(1, -1),
        "ws2": params["sig2"][0], "bs2": params["sig2"][1].reshape(1, -1),
        "wh1a": wl1[:C3], "wh1b": wl1[C3:], "bh1": bl1.reshape(1, -1),
        "wh2": wl2, "bh2": bl2.reshape(1, -1),
    }


def _full_spec(shape):
    return pl.BlockSpec(shape, lambda i, _s=shape: (0,) * len(_s))


@jax.jit
def pooled_value_function(packed, image_nchw, articulation):
    """Fused forward pass. image_nchw: (B, C_in, 64, 64); articulation: (B, 8)."""
    x = image_nchw.astype(jnp.float32)
    # 4x4 space-to-depth, parity-major & batch-stacked rows, flat (32, 1024):
    #   row r = v*16 + b*8 + u  ->  H block hb = 2*u + v of batch b
    #   lane  = (wb, p_i, p_j, c) with  h = 4*hb + p_i,  w = 4*wb + p_j
    x = x.reshape(B, C_IN, 8, 2, 4, HB, 4)              # (B, c, u, v, pi, wb, pj)
    x = jnp.transpose(x, (3, 0, 2, 5, 4, 6, 1))         # (v, B, u, wb, pi, pj, c)
    xs = x.reshape(2 * B * 8, LANES_IN).astype(jnp.bfloat16)   # (32, 1024)
    sig = articulation.astype(jnp.float32)

    operands = (xs, sig,
                packed["bw1"], packed["b1"], packed["bw2"], packed["b2"],
                packed["bw3"], packed["b3"],
                packed["ws1"], packed["bs1"], packed["ws2"], packed["bs2"],
                packed["wh1a"], packed["wh1b"], packed["bh1"],
                packed["wh2"], packed["bh2"])

    return pl.pallas_call(
        _fused_kernel,
        out_shape=jax.ShapeDtypeStruct((B, ACTION_SIZE), jnp.float32),
        grid=(1,),
        in_specs=[_full_spec(a.shape) for a in operands],
        out_specs=_full_spec((B, ACTION_SIZE)),
        scratch_shapes=[
            pltpu.VMEM((32, LANES_1), jnp.bfloat16),    # conv1 activations (both b)
            pltpu.VMEM((16, LANES_2), jnp.bfloat16),    # conv2 activations (both b)
            pltpu.VMEM((16, LANES_3), jnp.float32),     # conv3 activations (both b)
            pltpu.VMEM((B, C3), jnp.float32),           # pooled features
        ],
        compiler_params=pltpu.CompilerParams(
            dimension_semantics=("arbitrary",),
            vmem_limit_bytes=32 * 1024 * 1024),
    )(*operands)


# ------------------------- pure-JAX f32 reference --------------------------- #

def reference_forward(params, image_nchw, articulation):
    x = jnp.transpose(image_nchw, (0, 2, 3, 1)).astype(jnp.float32)
    for name, s in (("conv1", 4), ("conv2", 2), ("conv3", 1)):
        w, bias = params[name]
        x = jax.lax.conv_general_dilated(
            x, w, window_strides=(s, s), padding="VALID",
            dimension_numbers=("NHWC", "HWIO", "NHWC"))
        x = jnp.tanh(x + bias)
    pooled = jnp.max(x, axis=(1, 2))
    a = articulation.astype(jnp.float32)
    a = jnp.tanh(a @ params["sig1"][0] + params["sig1"][1])
    a = jnp.tanh(a @ params["sig2"][0] + params["sig2"][1])
    h = jnp.concatenate([pooled, a], axis=1)
    h = jnp.tanh(h @ params["linear1"][0] + params["linear1"][1])
    return h @ params["linear2"][0] + params["linear2"][1]


# ---------------------------------- main ------------------------------------ #

if __name__ == "__main__":
    key = jax.random.PRNGKey(0)
    k_img, k_sig, k_par = jax.random.split(key, 3)

    image = jax.random.normal(k_img, (B, C_IN, H, W), jnp.float32)
    articulation = jax.random.normal(k_sig, (B, SIGNAL_DIM), jnp.float32)

    params = init_params(k_par)
    packed = pack_params(params)

    out = pooled_value_function(packed, image, articulation)
    out = jax.block_until_ready(out)

    assert out.shape == (B, ACTION_SIZE), out.shape
    assert bool(jnp.all(jnp.isfinite(out)))

    # tolerance check vs. f32 reference (kernel uses bf16 MXU inputs)
    ref = reference_forward(params, image, articulation)
    assert jnp.allclose(out, ref, atol=5e-2, rtol=5e-2), (out, ref)

    print("KERNEL_OK")
</pallas_src>

<mosaic_0001>
module attributes {stable_mosaic.version = 11 : i64} {
  func.func @_fused_kernel(%arg0: i32, %arg1: memref<32x1024xbf16, #tpu.memory_space<vmem>>, %arg2: memref<2x8xf32, #tpu.memory_space<vmem>>, %arg3: memref<2x1024x480xbf16, #tpu.memory_space<vmem>>, %arg4: memref<1x480xf32, #tpu.memory_space<vmem>>, %arg5: memref<4x480x384xbf16, #tpu.memory_space<vmem>>, %arg6: memref<1x384xf32, #tpu.memory_space<vmem>>, %arg7: memref<3x384x256xbf16, #tpu.memory_space<vmem>>, %arg8: memref<1x256xf32, #tpu.memory_space<vmem>>, %arg9: memref<8x16xf32, #tpu.memory_space<vmem>>, %arg10: memref<1x16xf32, #tpu.memory_space<vmem>>, %arg11: memref<16x16xf32, #tpu.memory_space<vmem>>, %arg12: memref<1x16xf32, #tpu.memory_space<vmem>>, %arg13: memref<64x64xf32, #tpu.memory_space<vmem>>, %arg14: memref<16x64xf32, #tpu.memory_space<vmem>>, %arg15: memref<1x64xf32, #tpu.memory_space<vmem>>, %arg16: memref<64x1xf32, #tpu.memory_space<vmem>>, %arg17: memref<1x1xf32, #tpu.memory_space<vmem>>, %arg18: memref<2x1xf32, #tpu.memory_space<vmem>>, %arg19: memref<32x480xbf16, #tpu.memory_space<vmem>>, %arg20: memref<16x384xbf16, #tpu.memory_space<vmem>>, %arg21: memref<16x256xf32, #tpu.memory_space<vmem>>, %arg22: memref<2x64xf32, #tpu.memory_space<vmem>>) attributes {dimension_semantics = [#tpu.dimension_semantics<arbitrary>], iteration_bounds = array<i64: 1>, scalar_prefetch = 0 : i64, scratch_operands = 4 : i64, tpu.core_type = #tpu.core_type<tc>, window_params = [{pipeline_mode = #tpu.pipeline_mode<synchronous>, transform_indices = @transform_0, window_bounds = array<i64: 32, 1024>}, {pipeline_mode = #tpu.pipeline_mode<synchronous>, transform_indices = @transform_1, window_bounds = array<i64: 2, 8>}, {pipeline_mode = #tpu.pipeline_mode<synchronous>, transform_indices = @transform_2, window_bounds = array<i64: 2, 1024, 480>}, {pipeline_mode = #tpu.pipeline_mode<synchronous>, transform_indices = @transform_3, window_bounds = array<i64: 1, 480>}, {pipeline_mode = #tpu.pipeline_mode<synchronous>, transform_indices = @transform_4, window_bounds = array<i64: 4, 480, 384>}, {pipeline_mode = #tpu.pipeline_mode<synchronous>, transform_indices = @transform_5, window_bounds = array<i64: 1, 384>}, {pipeline_mode = #tpu.pipeline_mode<synchronous>, transform_indices = @transform_6, window_bounds = array<i64: 3, 384, 256>}, {pipeline_mode = #tpu.pipeline_mode<synchronous>, transform_indices = @transform_7, window_bounds = array<i64: 1, 256>}, {pipeline_mode = #tpu.pipeline_mode<synchronous>, transform_indices = @transform_8, window_bounds = array<i64: 8, 16>}, {pipeline_mode = #tpu.pipeline_mode<synchronous>, transform_indices = @transform_9, window_bounds = array<i64: 1, 16>}, {pipeline_mode = #tpu.pipeline_mode<synchronous>, transform_indices = @transform_10, window_bounds = array<i64: 16, 16>}, {pipeline_mode = #tpu.pipeline_mode<synchronous>, transform_indices = @transform_11, window_bounds = array<i64: 1, 16>}, {pipeline_mode = #tpu.pipeline_mode<synchronous>, transform_indices = @transform_12, window_bounds = array<i64: 64, 64>}, {pipeline_mode = #tpu.pipeline_mode<synchronous>, transform_indices = @transform_13, window_bounds = array<i64: 16, 64>}, {pipeline_mode = #tpu.pipeline_mode<synchronous>, transform_indices = @transform_14, window_bounds = array<i64: 1, 64>}, {pipeline_mode = #tpu.pipeline_mode<synchronous>, transform_indices = @transform_15, window_bounds = array<i64: 64, 1>}, {pipeline_mode = #tpu.pipeline_mode<synchronous>, transform_indices = @transform_16, window_bounds = array<i64: 1, 1>}, {pipeline_mode = #tpu.pipeline_mode<synchronous>, transform_indices = @transform_17, window_bounds = array<i64: 2, 1>}]} {
    %c0 = arith.constant 0 : index
    %c0_0 = arith.constant 0 : index
    %0 = vector.load %arg2[%c0, %c0_0] : memref<2x8xf32, #tpu.memory_space<vmem>>, vector<2x8xf32>
    %c0_1 = arith.constant 0 : index
    %c0_2 = arith.constant 0 : index
    %1 = vector.load %arg9[%c0_1, %c0_2] : memref<8x16xf32, #tpu.memory_space<vmem>>, vector<8x16xf32>
    %cst = arith.constant dense<0.000000e+00> : vector<2x16xf32>
    %2 = tpu.matmul %0, %1, %cst {dimension_numbers = #tpu.dot_dimension_numbers<[1], [0], [0], [1], [0, 0, 1, 1], [], []>} : vector<2x8xf32>, vector<8x16xf32>, vector<2x16xf32> -> vector<2x16xf32>
    %c0_3 = arith.constant 0 : index
    %c0_4 = arith.constant 0 : index
    %3 = vector.load %arg10[%c0_3, %c0_4] : memref<1x16xf32, #tpu.memory_space<vmem>>, vector<1x16xf32>
    %4 = vector.broadcast %3 : vector<1x16xf32> to vector<2x16xf32>
    %5 = arith.addf %2, %4 : vector<2x16xf32>
    %6 = math.tanh %5 : vector<2x16xf32>
    %c0_5 = arith.constant 0 : index
    %c0_6 = arith.constant 0 : index
    %7 = vector.load %arg11[%c0_5, %c0_6] : memref<16x16xf32, #tpu.memory_space<vmem>>, vector<16x16xf32>
    %cst_7 = arith.constant dense<0.000000e+00> : vector<2x16xf32>
    %8 = tpu.matmul %6, %7, %cst_7 {dimension_numbers = #tpu.dot_dimension_numbers<[1], [0], [0], [1], [0, 0, 1, 1], [], []>} : vector<2x16xf32>, vector<16x16xf32>, vector<2x16xf32> -> vector<2x16xf32>
    %c0_8 = arith.constant 0 : index
    %c0_9 = arith.constant 0 : index
    %9 = vector.load %arg12[%c0_8, %c0_9] : memref<1x16xf32, #tpu.memory_space<vmem>>, vector<1x16xf32>
    %10 = vector.broadcast %9 : vector<1x16xf32> to vector<2x16xf32>
    %11 = arith.addf %8, %10 : vector<2x16xf32>
    %12 = math.tanh %11 : vector<2x16xf32>
    %c0_10 = arith.constant 0 : index
    %c0_11 = arith.constant 0 : index
    %13 = vector.load %arg4[%c0_10, %c0_11] : memref<1x480xf32, #tpu.memory_space<vmem>>, vector<1x480xf32>
    %c0_12 = arith.constant 0 : index
    %c0_13 = arith.constant 0 : index
    %14 = vector.load %arg6[%c0_12, %c0_13] : memref<1x384xf32, #tpu.memory_space<vmem>>, vector<1x384xf32>
    %c0_14 = arith.constant 0 : index
    %c0_15 = arith.constant 0 : index
    %15 = vector.load %arg8[%c0_14, %c0_15] : memref<1x256xf32, #tpu.memory_space<vmem>>, vector<1x256xf32>
    %c0_16 = arith.constant 0 : index
    %c0_17 = arith.constant 0 : index
    %16 = vector.load %arg1[%c0_16, %c0_17] : memref<32x1024xbf16, #tpu.memory_space<vmem>>, vector<16x1024xbf16>
    %c0_18 = arith.constant 0 : index
    %c0_19 = arith.constant 0 : index
    %c0_20 = arith.constant 0 : index
    %17 = vector.load %arg3[%c0_18, %c0_19, %c0_20] : memref<2x1024x480xbf16, #tpu.memory_space<vmem>>, vector<1x1024x480xbf16>
    %18 = vector.shape_cast %17 : vector<1x1024x480xbf16> to vector<1024x480xbf16>
    %cst_21 = arith.constant dense<0.000000e+00> : vector<16x480xf32>
    %19 = tpu.matmul %16, %18, %cst_21 {dimension_numbers = #tpu.dot_dimension_numbers<[1], [0], [0], [1], [0, 0, 1, 1], [], []>} : vector<16x1024xbf16>, vector<1024x480xbf16>, vector<16x480xf32> -> vector<16x480xf32>
    %c16 = arith.constant 16 : index
    %c0_22 = arith.constant 0 : index
    %20 = vector.load %arg1[%c16, %c0_22] : memref<32x1024xbf16, #tpu.memory_space<vmem>>, vector<16x1024xbf16>
    %c1 = arith.constant 1 : index
    %c0_23 = arith.constant 0 : index
    %c0_24 = arith.constant 0 : index
    %21 = vector.load %arg3[%c1, %c0_23, %c0_24] : memref<2x1024x480xbf16, #tpu.memory_space<vmem>>, vector<1x1024x480xbf16>
    %22 = vector.shape_cast %21 : vector<1x1024x480xbf16> to vector<1024x480xbf16>
    %cst_25 = arith.constant dense<0.000000e+00> : vector<16x480xf32>
    %23 = tpu.matmul %20, %22, %cst_25 {dimension_numbers = #tpu.dot_dimension_numbers<[1], [0], [0], [1], [0, 0, 1, 1], [], []>} : vector<16x1024xbf16>, vector<1024x480xbf16>, vector<16x480xf32> -> vector<16x480xf32>
    %24 = arith.addf %19, %23 : vector<16x480xf32>
    %c16_26 = arith.constant 16 : index
    %c0_27 = arith.constant 0 : index
    %25 = vector.load %arg1[%c16_26, %c0_27] : memref<32x1024xbf16, #tpu.memory_space<vmem>>, vector<15x1024xbf16>
    %c0_28 = arith.constant 0 : index
    %c0_29 = arith.constant 0 : index
    %c0_30 = arith.constant 0 : index
    %26 = vector.load %arg3[%c0_28, %c0_29, %c0_30] : memref<2x1024x480xbf16, #tpu.memory_space<vmem>>, vector<1x1024x480xbf16>
    %27 = vector.shape_cast %26 : vector<1x1024x480xbf16> to vector<1024x480xbf16>
    %cst_31 = arith.constant dense<0.000000e+00> : vector<15x480xf32>
    %28 = tpu.matmul %25, %27, %cst_31 {dimension_numbers = #tpu.dot_dimension_numbers<[1], [0], [0], [1], [0, 0, 1, 1], [], []>} : vector<15x1024xbf16>, vector<1024x480xbf16>, vector<15x480xf32> -> vector<15x480xf32>
    %c1_32 = arith.constant 1 : index
    %c0_33 = arith.constant 0 : index
    %29 = vector.load %arg1[%c1_32, %c0_33] : memref<32x1024xbf16, #tpu.memory_space<vmem>>, vector<15x1024xbf16>
    %c1_34 = arith.constant 1 : index
    %c0_35 = arith.constant 0 : index
    %c0_36 = arith.constant 0 : index
    %30 = vector.load %arg3[%c1_34, %c0_35, %c0_36] : memref<2x1024x480xbf16, #tpu.memory_space<vmem>>, vector<1x1024x480xbf16>
    %31 = vector.shape_cast %30 : vector<1x1024x480xbf16> to vector<1024x480xbf16>
    %cst_37 = arith.constant dense<0.000000e+00> : vector<15x480xf32>
    %32 = tpu.matmul %29, %31, %cst_37 {dimension_numbers = #tpu.dot_dimension_numbers<[1], [0], [0], [1], [0, 0, 1, 1], [], []>} : vector<15x1024xbf16>, vector<1024x480xbf16>, vector<15x480xf32> -> vector<15x480xf32>
    %33 = arith.addf %28, %32 : vector<15x480xf32>
    %34 = vector.broadcast %13 : vector<1x480xf32> to vector<16x480xf32>
    %35 = arith.addf %24, %34 : vector<16x480xf32>
    %36 = math.tanh %35 : vector<16x480xf32>
    %37 = arith.truncf %36 : vector<16x480xf32> to vector<16x480xbf16>
    %c0_38 = arith.constant 0 : index
    %c0_39 = arith.constant 0 : index
    %38 = vector.load %arg19[%c0_38, %c0_39] : memref<32x480xbf16, #tpu.memory_space<vmem>>, vector<16x480xbf16>
    tpu.vector_store %arg19[%c0_38, %c0_39], %37 {strides = array<i32>} : memref<32x480xbf16, #tpu.memory_space<vmem>>, vector<16x480xbf16>,
    %39 = vector.broadcast %13 : vector<1x480xf32> to vector<15x480xf32>
    %40 = arith.addf %33, %39 : vector<15x480xf32>
    %41 = math.tanh %40 : vector<15x480xf32>
    %42 = arith.truncf %41 : vector<15x480xf32> to vector<15x480xbf16>
    %c16_40 = arith.constant 16 : index
    %c0_41 = arith.constant 0 : index
    %43 = vector.load %arg19[%c16_40, %c0_41] : memref<32x480xbf16, #tpu.memory_space<vmem>>, vector<15x480xbf16>
    tpu.vector_store %arg19[%c16_40, %c0_41], %42 {strides = array<i32>} : memref<32x480xbf16, #tpu.memory_space<vmem>>, vector<15x480xbf16>,
    %c0_42 = arith.constant 0 : index
    %c0_43 = arith.constant 0 : index
    %44 = vector.load %arg19[%c0_42, %c0_43] : memref<32x480xbf16, #tpu.memory_space<vmem>>, vector<14x480xbf16>
    %c0_44 = arith.constant 0 : index
    %c0_45 = arith.constant 0 : index
    %c0_46 = arith.constant 0 : index
    %45 = vector.load %arg5[%c0_44, %c0_45, %c0_46] : memref<4x480x384xbf16, #tpu.memory_space<vmem>>, vector<1x480x384xbf16>
    %46 = vector.shape_cast %45 : vector<1x480x384xbf16> to vector<480x384xbf16>
    %cst_47 = arith.constant dense<0.000000e+00> : vector<14x384xf32>
    %47 = tpu.matmul %44, %46, %cst_47 {dimension_numbers = #tpu.dot_dimension_numbers<[1], [0], [0], [1], [0, 0, 1, 1], [], []>} : vector<14x480xbf16>, vector<480x384xbf16>, vector<14x384xf32> -> vector<14x384xf32>
    %c16_48 = arith.constant 16 : index
    %c0_49 = arith.constant 0 : index
    %48 = vector.load %arg19[%c16_48, %c0_49] : memref<32x480xbf16, #tpu.memory_space<vmem>>, vector<14x480xbf16>
    %c1_50 = arith.constant 1 : index
    %c0_51 = arith.constant 0 : index
    %c0_52 = arith.constant 0 : index
    %49 = vector.load %arg5[%c1_50, %c0_51, %c0_52] : memref<4x480x384xbf16, #tpu.memory_space<vmem>>, vector<1x480x384xbf16>
    %50 = vector.shape_cast %49 : vector<1x480x384xbf16> to vector<480x384xbf16>
    %cst_53 = arith.constant dense<0.000000e+00> : vector<14x384xf32>
    %51 = tpu.matmul %48, %50, %cst_53 {dimension_numbers = #tpu.dot_dimension_numbers<[1], [0], [0], [1], [0, 0, 1, 1], [], []>} : vector<14x480xbf16>, vector<480x384xbf16>, vector<14x384xf32> -> vector<14x384xf32>
    %52 = arith.addf %47, %51 : vector<14x384xf32>
    %c1_54 = arith.constant 1 : index
    %c0_55 = arith.constant 0 : index
    %53 = vector.load %arg19[%c1_54, %c0_55] : memref<32x480xbf16, #tpu.memory_space<vmem>>, vector<14x480xbf16>
    %c2 = arith.constant 2 : index
    %c0_56 = arith.constant 0 : index
    %c0_57 = arith.constant 0 : index
    %54 = vector.load %arg5[%c2, %c0_56, %c0_57] : memref<4x480x384xbf16, #tpu.memory_space<vmem>>, vector<1x480x384xbf16>
    %55 = vector.shape_cast %54 : vector<1x480x384xbf16> to vector<480x384xbf16>
    %cst_58 = arith.constant dense<0.000000e+00> : vector<14x384xf32>
    %56 = tpu.matmul %53, %55, %cst_58 {dimension_numbers = #tpu.dot_dimension_numbers<[1], [0], [0], [1], [0, 0, 1, 1], [], []>} : vector<14x480xbf16>, vector<480x384xbf16>, vector<14x384xf32> -> vector<14x384xf32>
    %57 = arith.addf %52, %56 : vector<14x384xf32>
    %c17 = arith.constant 17 : index
    %c0_59 = arith.constant 0 : index
    %58 = vector.load %arg19[%c17, %c0_59] : memref<32x480xbf16, #tpu.memory_space<vmem>>, vector<14x480xbf16>
    %c3 = arith.constant 3 : index
    %c0_60 = arith.constant 0 : index
    %c0_61 = arith.constant 0 : index
    %59 = vector.load %arg5[%c3, %c0_60, %c0_61] : memref<4x480x384xbf16, #tpu.memory_space<vmem>>, vector<1x480x384xbf16>
    %60 = vector.shape_cast %59 : vector<1x480x384xbf16> to vector<480x384xbf16>
    %cst_62 = arith.constant dense<0.000000e+00> : vector<14x384xf32>
    %61 = tpu.matmul %58, %60, %cst_62 {dimension_numbers = #tpu.dot_dimension_numbers<[1], [0], [0], [1], [0, 0, 1, 1], [], []>} : vector<14x480xbf16>, vector<480x384xbf16>, vector<14x384xf32> -> vector<14x384xf32>
    %62 = arith.addf %57, %61 : vector<14x384xf32>
    %63 = vector.broadcast %14 : vector<1x384xf32> to vector<14x384xf32>
    %64 = arith.addf %62, %63 : vector<14x384xf32>
    %65 = math.tanh %64 : vector<14x384xf32>
    %66 = arith.truncf %65 : vector<14x384xf32> to vector<14x384xbf16>
    %c0_63 = arith.constant 0 : index
    %c0_64 = arith.constant 0 : index
    %67 = vector.load %arg20[%c0_63, %c0_64] : memref<16x384xbf16, #tpu.memory_space<vmem>>, vector<14x384xbf16>
    tpu.vector_store %arg20[%c0_63, %c0_64], %66 {strides = array<i32>} : memref<16x384xbf16, #tpu.memory_space<vmem>>, vector<14x384xbf16>,
    %c0_65 = arith.constant 0 : index
    %c0_66 = arith.constant 0 : index
    %68 = vector.load %arg20[%c0_65, %c0_66] : memref<16x384xbf16, #tpu.memory_space<vmem>>, vector<12x384xbf16>
    %c0_67 = arith.constant 0 : index
    %c0_68 = arith.constant 0 : index
    %c0_69 = arith.constant 0 : index
    %69 = vector.load %arg7[%c0_67, %c0_68, %c0_69] : memref<3x384x256xbf16, #tpu.memory_space<vmem>>, vector<1x384x256xbf16>
    %70 = vector.shape_cast %69 : vector<1x384x256xbf16> to vector<384x256xbf16>
    %cst_70 = arith.constant dense<0.000000e+00> : vector<12x256xf32>
    %71 = tpu.matmul %68, %70, %cst_70 {dimension_numbers = #tpu.dot_dimension_numbers<[1], [0], [0], [1], [0, 0, 1, 1], [], []>} : vector<12x384xbf16>, vector<384x256xbf16>, vector<12x256xf32> -> vector<12x256xf32>
    %c1_71 = arith.constant 1 : index
    %c0_72 = arith.constant 0 : index
    %72 = vector.load %arg20[%c1_71, %c0_72] : memref<16x384xbf16, #tpu.memory_space<vmem>>, vector<12x384xbf16>
    %c1_73 = arith.constant 1 : index
    %c0_74 = arith.constant 0 : index
    %c0_75 = arith.constant 0 : index
    %73 = vector.load %arg7[%c1_73, %c0_74, %c0_75] : memref<3x384x256xbf16, #tpu.memory_space<vmem>>, vector<1x384x256xbf16>
    %74 = vector.shape_cast %73 : vector<1x384x256xbf16> to vector<384x256xbf16>
    %cst_76 = arith.constant dense<0.000000e+00> : vector<12x256xf32>
    %75 = tpu.matmul %72, %74, %cst_76 {dimension_numbers = #tpu.dot_dimension_numbers<[1], [0], [0], [1], [0, 0, 1, 1], [], []>} : vector<12x384xbf16>, vector<384x256xbf16>, vector<12x256xf32> -> vector<12x256xf32>
    %76 = arith.addf %71, %75 : vector<12x256xf32>
    %c2_77 = arith.constant 2 : index
    %c0_78 = arith.constant 0 : index
    %77 = vector.load %arg20[%c2_77, %c0_78] : memref<16x384xbf16, #tpu.memory_space<vmem>>, vector<12x384xbf16>
    %c2_79 = arith.constant 2 : index
    %c0_80 = arith.constant 0 : index
    %c0_81 = arith.constant 0 : index
    %78 = vector.load %arg7[%c2_79, %c0_80, %c0_81] : memref<3x384x256xbf16, #tpu.memory_space<vmem>>, vector<1x384x256xbf16>
    %79 = vector.shape_cast %78 : vector<1x384x256xbf16> to vector<384x256xbf16>
    %cst_82 = arith.constant dense<0.000000e+00> : vector<12x256xf32>
    %80 = tpu.matmul %77, %79, %cst_82 {dimension_numbers = #tpu.dot_dimension_numbers<[1], [0], [0], [1], [0, 0, 1, 1], [], []>} : vector<12x384xbf16>, vector<384x256xbf16>, vector<12x256xf32> -> vector<12x256xf32>
    %81 = arith.addf %76, %80 : vector<12x256xf32>
    %82 = vector.broadcast %15 : vector<1x256xf32> to vector<12x256xf32>
    %83 = arith.addf %81, %82 : vector<12x256xf32>
    %84 = math.tanh %83 : vector<12x256xf32>
    %c0_83 = arith.constant 0 : index
    %c0_84 = arith.constant 0 : index
    %85 = vector.load %arg21[%c0_83, %c0_84] : memref<16x256xf32, #tpu.memory_space<vmem>>, vector<12x256xf32>
    tpu.vector_store %arg21[%c0_83, %c0_84], %84 {strides = array<i32>} : memref<16x256xf32, #tpu.memory_space<vmem>>, vector<12x256xf32>,
    %c0_85 = arith.constant 0 : index
    %c0_86 = arith.constant 0 : index
    %86 = vector.load %arg21[%c0_85, %c0_86] : memref<16x256xf32, #tpu.memory_space<vmem>>, vector<4x64xf32>
    %c0_87 = arith.constant 0 : index
    %c64 = arith.constant 64 : index
    %87 = vector.load %arg21[%c0_87, %c64] : memref<16x256xf32, #tpu.memory_space<vmem>>, vector<4x64xf32>
    %88 = arith.maximumf %86, %87 : vector<4x64xf32>
    %c0_88 = arith.constant 0 : index
    %c128 = arith.constant 128 : index
    %89 = vector.load %arg21[%c0_88, %c128] : memref<16x256xf32, #tpu.memory_space<vmem>>, vector<4x64xf32>
    %c0_89 = arith.constant 0 : index
    %c192 = arith.constant 192 : index
    %90 = vector.load %arg21[%c0_89, %c192] : memref<16x256xf32, #tpu.memory_space<vmem>>, vector<4x64xf32>
    %91 = arith.maximumf %89, %90 : vector<4x64xf32>
    %92 = arith.maximumf %88, %91 : vector<4x64xf32>
    %cst_90 = arith.constant dense<0xFF800000> : vector<64xf32>
    %93 = vector.multi_reduction <maximumf>, %92, %cst_90 [0] : vector<4x64xf32> to vector<64xf32>
    %94 = vector.shape_cast %93 : vector<64xf32> to vector<1x64xf32>
    %c0_91 = arith.constant 0 : index
    %c0_92 = arith.constant 0 : index
    %95 = vector.load %arg22[%c0_91, %c0_92] : memref<2x64xf32, #tpu.memory_space<vmem>>, vector<1x64xf32>
    tpu.vector_store %arg22[%c0_91, %c0_92], %94 {strides = array<i32>} : memref<2x64xf32, #tpu.memory_space<vmem>>, vector<1x64xf32>,
    %c8 = arith.constant 8 : index
    %c0_93 = arith.constant 0 : index
    %96 = vector.load %arg21[%c8, %c0_93] : memref<16x256xf32, #tpu.memory_space<vmem>>, vector<4x64xf32>
    %c8_94 = arith.constant 8 : index
    %c64_95 = arith.constant 64 : index
    %97 = vector.load %arg21[%c8_94, %c64_95] : memref<16x256xf32, #tpu.memory_space<vmem>>, vector<4x64xf32>
    %98 = arith.maximumf %96, %97 : vector<4x64xf32>
    %c8_96 = arith.constant 8 : index
    %c128_97 = arith.constant 128 : index
    %99 = vector.load %arg21[%c8_96, %c128_97] : memref<16x256xf32, #tpu.memory_space<vmem>>, vector<4x64xf32>
    %c8_98 = arith.constant 8 : index
    %c192_99 = arith.constant 192 : index
    %100 = vector.load %arg21[%c8_98, %c192_99] : memref<16x256xf32, #tpu.memory_space<vmem>>, vector<4x64xf32>
    %101 = arith.maximumf %99, %100 : vector<4x64xf32>
    %102 = arith.maximumf %98, %101 : vector<4x64xf32>
    %cst_100 = arith.constant dense<0xFF800000> : vector<64xf32>
    %103 = vector.multi_reduction <maximumf>, %102, %cst_100 [0] : vector<4x64xf32> to vector<64xf32>
    %104 = vector.shape_cast %103 : vector<64xf32> to vector<1x64xf32>
    %c1_101 = arith.constant 1 : index
    %c0_102 = arith.constant 0 : index
    %105 = vector.load %arg22[%c1_101, %c0_102] : memref<2x64xf32, #tpu.memory_space<vmem>>, vector<1x64xf32>
    tpu.vector_store %arg22[%c1_101, %c0_102], %104 {strides = array<i32>} : memref<2x64xf32, #tpu.memory_space<vmem>>, vector<1x64xf32>,
    %c0_103 = arith.constant 0 : index
    %c0_104 = arith.constant 0 : index
    %106 = vector.load %arg22[%c0_103, %c0_104] : memref<2x64xf32, #tpu.memory_space<vmem>>, vector<2x64xf32>
    %c0_105 = arith.constant 0 : index
    %c0_106 = arith.constant 0 : index
    %107 = vector.load %arg13[%c0_105, %c0_106] : memref<64x64xf32, #tpu.memory_space<vmem>>, vector<64x64xf32>
    %cst_107 = arith.constant dense<0.000000e+00> : vector<2x64xf32>
    %108 = tpu.matmul %106, %107, %cst_107 {dimension_numbers = #tpu.dot_dimension_numbers<[1], [0], [0], [1], [0, 0, 1, 1], [], []>} : vector<2x64xf32>, vector<64x64xf32>, vector<2x64xf32> -> vector<2x64xf32>
    %c0_108 = arith.constant 0 : index
    %c0_109 = arith.constant 0 : index
    %109 = vector.load %arg14[%c0_108, %c0_109] : memref<16x64xf32, #tpu.memory_space<vmem>>, vector<16x64xf32>
    %cst_110 = arith.constant dense<0.000000e+00> : vector<2x64xf32>
    %110 = tpu.matmul %12, %109, %cst_110 {dimension_numbers = #tpu.dot_dimension_numbers<[1], [0], [0], [1], [0, 0, 1, 1], [], []>} : vector<2x16xf32>, vector<16x64xf32>, vector<2x64xf32> -> vector<2x64xf32>
    %111 = arith.addf %108, %110 : vector<2x64xf32>
    %c0_111 = arith.constant 0 : index
    %c0_112 = arith.constant 0 : index
    %112 = vector.load %arg15[%c0_111, %c0_112] : memref<1x64xf32, #tpu.memory_space<vmem>>, vector<1x64xf32>
    %113 = vector.broadcast %112 : vector<1x64xf32> to vector<2x64xf32>
    %114 = arith.addf %111, %113 : vector<2x64xf32>
    %115 = math.tanh %114 : vector<2x64xf32>
    %c0_113 = arith.constant 0 : index
    %c0_114 = arith.constant 0 : index
    %116 = vector.load %arg16[%c0_113, %c0_114] : memref<64x1xf32, #tpu.memory_space<vmem>>, vector<64x1xf32>
    %cst_115 = arith.constant dense<0.000000e+00> : vector<2x1xf32>
    %117 = tpu.matmul %115, %116, %cst_115 {dimension_numbers = #tpu.dot_dimension_numbers<[1], [0], [0], [1], [0, 0, 1, 1], [], []>} : vector<2x64xf32>, vector<64x1xf32>, vector<2x1xf32> -> vector<2x1xf32>
    %c0_116 = arith.constant 0 : index
    %c0_117 = arith.constant 0 : index
    %118 = vector.load %arg17[%c0_116, %c0_117] : memref<1x1xf32, #tpu.memory_space<vmem>>, vector<1x1xf32>
    %119 = vector.broadcast %118 : vector<1x1xf32> to vector<2x1xf32>
    %120 = arith.addf %117, %119 : vector<2x1xf32>
    %c0_118 = arith.constant 0 : index
    %c0_119 = arith.constant 0 : index
    %121 = vector.load %arg18[%c0_118, %c0_119] : memref<2x1xf32, #tpu.memory_space<vmem>>, vector<2x1xf32>
    tpu.vector_store %arg18[%c0_118, %c0_119], %120 {strides = array<i32>} : memref<2x1xf32, #tpu.memory_space<vmem>>, vector<2x1xf32>,
    return
  }
  func.func @transform_0(%arg0: i32) -> (i32, i32) {
    %c0_i32 = arith.constant 0 : i32
    %c0_i32_0 = arith.constant 0 : i32
    %c0_i32_1 = arith.constant 0 : i32
    return %c0_i32, %c0_i32_0 : i32, i32
  }
  func.func @transform_1(%arg0: i32) -> (i32, i32) {
    %c0_i32 = arith.constant 0 : i32
    %c0_i32_0 = arith.constant 0 : i32
    %c0_i32_1 = arith.constant 0 : i32
    return %c0_i32, %c0_i32_0 : i32, i32
  }
  func.func @transform_2(%arg0: i32) -> (i32, i32, i32) {
    %c0_i32 = arith.constant 0 : i32
    %c0_i32_0 = arith.constant 0 : i32
    %c0_i32_1 = arith.constant 0 : i32
    %c0_i32_2 = arith.constant 0 : i32
    return %c0_i32, %c0_i32_0, %c0_i32_1 : i32, i32, i32
  }
  func.func @transform_3(%arg0: i32) -> (i32, i32) {
    %c0_i32 = arith.constant 0 : i32
    %c0_i32_0 = arith.constant 0 : i32
    %c0_i32_1 = arith.constant 0 : i32
    return %c0_i32, %c0_i32_0 : i32, i32
  }
  func.func @transform_4(%arg0: i32) -> (i32, i32, i32) {
    %c0_i32 = arith.constant 0 : i32
    %c0_i32_0 = arith.constant 0 : i32
    %c0_i32_1 = arith.constant 0 : i32
    %c0_i32_2 = arith.constant 0 : i32
    return %c0_i32, %c0_i32_0, %c0_i32_1 : i32, i32, i32
  }
  func.func @transform_5(%arg0: i32) -> (i32, i32) {
    %c0_i32 = arith.constant 0 : i32
    %c0_i32_0 = arith.constant 0 : i32
    %c0_i32_1 = arith.constant 0 : i32
    return %c0_i32, %c0_i32_0 : i32, i32
  }
  func.func @transform_6(%arg0: i32) -> (i32, i32, i32) {
    %c0_i32 = arith.constant 0 : i32
    %c0_i32_0 = arith.constant 0 : i32
    %c0_i32_1 = arith.constant 0 : i32
    %c0_i32_2 = arith.constant 0 : i32
    return %c0_i32, %c0_i32_0, %c0_i32_1 : i32, i32, i32
  }
  func.func @transform_7(%arg0: i32) -> (i32, i32) {
    %c0_i32 = arith.constant 0 : i32
    %c0_i32_0 = arith.constant 0 : i32
    %c0_i32_1 = arith.constant 0 : i32
    return %c0_i32, %c0_i32_0 : i32, i32
  }
  func.func @transform_8(%arg0: i32) -> (i32, i32) {
    %c0_i32 = arith.constant 0 : i32
    %c0_i32_0 = arith.constant 0 : i32
    %c0_i32_1 = arith.constant 0 : i32
    return %c0_i32, %c0_i32_0 : i32, i32
  }
  func.func @transform_9(%arg0: i32) -> (i32, i32) {
    %c0_i32 = arith.constant 0 : i32
    %c0_i32_0 = arith.constant 0 : i32
    %c0_i32_1 = arith.constant 0 : i32
    return %c0_i32, %c0_i32_0 : i32, i32
  }
  func.func @transform_10(%arg0: i32) -> (i32, i32) {
    %c0_i32 = arith.constant 0 : i32
    %c0_i32_0 = arith.constant 0 : i32
    %c0_i32_1 = arith.constant 0 : i32
    return %c0_i32, %c0_i32_0 : i32, i32
  }
  func.func @transform_11(%arg0: i32) -> (i32, i32) {
    %c0_i32 = arith.constant 0 : i32
    %c0_i32_0 = arith.constant 0 : i32
    %c0_i32_1 = arith.constant 0 : i32
    return %c0_i32, %c0_i32_0 : i32, i32
  }
  func.func @transform_12(%arg0: i32) -> (i32, i32) {
    %c0_i32 = arith.constant 0 : i32
    %c0_i32_0 = arith.constant 0 : i32
    %c0_i32_1 = arith.constant 0 : i32
    return %c0_i32, %c0_i32_0 : i32, i32
  }
  func.func @transform_13(%arg0: i32) -> (i32, i32) {
    %c0_i32 = arith.constant 0 : i32
    %c0_i32_0 = arith.constant 0 : i32
    %c0_i32_1 = arith.constant 0 : i32
    return %c0_i32, %c0_i32_0 : i32, i32
  }
  func.func @transform_14(%arg0: i32) -> (i32, i32) {
    %c0_i32 = arith.constant 0 : i32
    %c0_i32_0 = arith.constant 0 : i32
    %c0_i32_1 = arith.constant 0 : i32
    return %c0_i32, %c0_i32_0 : i32, i32
  }
  func.func @transform_15(%arg0: i32) -> (i32, i32) {
    %c0_i32 = arith.constant 0 : i32
    %c0_i32_0 = arith.constant 0 : i32
    %c0_i32_1 = arith.constant 0 : i32
    return %c0_i32, %c0_i32_0 : i32, i32
  }
  func.func @transform_16(%arg0: i32) -> (i32, i32) {
    %c0_i32 = arith.constant 0 : i32
    %c0_i32_0 = arith.constant 0 : i32
    %c0_i32_1 = arith.constant 0 : i32
    return %c0_i32, %c0_i32_0 : i32, i32
  }
  func.func @transform_17(%arg0: i32) -> (i32, i32) {
    %c0_i32 = arith.constant 0 : i32
    %c0_i32_0 = arith.constant 0 : i32
    %c0_i32_1 = arith.constant 0 : i32
    return %c0_i32, %c0_i32_0 : i32, i32
  }
}

</mosaic_0001>

<llo_original>
// kernel: pooled_value_function.1
$region0: #{pooled_value_function.1}
  #allocation0 [shape = 'u32[]', space=smem, size = 0x4, offset = 0x4, fixed_abs, tag = 'smem constant byte address 0x4 - core index']
  #allocation1 [shape = 'u32[144,128]{1,0:T(1,128)}', space=vmem, size = 0x12000, scoped, tag = 'internal scratch']
  #allocation2 [shape = 'bf16[32,480]{1,0:T(8,128)(2,1)}', space=vmem, size = 0x8000, scoped, tag = 'scratch operand']
  #allocation3 [shape = 'bf16[16,384]{1,0:T(8,128)(2,1)}', space=vmem, size = 0x3000, scoped, tag = 'scratch operand']
  #allocation4 [shape = 'f32[16,256]{1,0:T(8,128)}', space=vmem, size = 0x4000, scoped, tag = 'scratch operand']
  #allocation5 [shape = 'f32[2,64]{1,0:T(2,128)}', space=vmem, size = 0x400, scoped, tag = 'scratch operand']
  #allocation6 [shape = 'f32[1,1]{1,0:T(1,128)S(1)}', space=vmem, size = 0x200, scoped, tag = 'scoped memory for pooled_value_function.1']
  %s0 = inlined_call_operand.vmem [shape: bf16[32,1024], index: 0, kind: input, shape index: {}]
  %s1 = inlined_call_operand.vmem [shape: f32[2,8], index: 1, kind: input, shape index: {}]
  %s2 = inlined_call_operand.vmem [shape: bf16[2,1024,480], index: 2, kind: input, shape index: {}]
  %s3 = inlined_call_operand.vmem [shape: f32[1,480], index: 3, kind: input, shape index: {}]
  %s4 = inlined_call_operand.vmem [shape: bf16[4,480,384], index: 4, kind: input, shape index: {}]
  %s5 = inlined_call_operand.vmem [shape: f32[1,384], index: 5, kind: input, shape index: {}]
  %s6 = inlined_call_operand.vmem [shape: bf16[3,384,256], index: 6, kind: input, shape index: {}]
  %s7 = inlined_call_operand.vmem [shape: f32[1,256], index: 7, kind: input, shape index: {}]
  %s8 = inlined_call_operand.vmem [shape: f32[8,16], index: 8, kind: input, shape index: {}]
  %s9 = inlined_call_operand.vmem [shape: f32[1,16], index: 9, kind: input, shape index: {}]
  %s10 = inlined_call_operand.vmem [shape: f32[16,16], index: 10, kind: input, shape index: {}]
  %s11 = inlined_call_operand.vmem [shape: f32[1,16], index: 11, kind: input, shape index: {}]
  %s12 = inlined_call_operand.vmem [shape: f32[64,64], index: 12, kind: input, shape index: {}]
  %s13 = inlined_call_operand.vmem [shape: f32[16,64], index: 13, kind: input, shape index: {}]
  %s14 = inlined_call_operand.vmem [shape: f32[1,64], index: 14, kind: input, shape index: {}]
  %s15 = inlined_call_operand.vmem [shape: f32[64,1], index: 15, kind: input, shape index: {}]
  %s16 = inlined_call_operand.<no memory space> [shape: f32[1,1], index: 16, kind: input, shape index: {}]
  %s17 = inlined_call_operand.vmem [shape: f32[2,1], index: 17, kind: output, shape index: {}]
  %s18 = sld [smem:[#allocation0]]
  $region78: #{pooled_value_function.1} parent=0
    _
  %s20 = ssub.s32 1, %s18
  %s21 = scalar_select 0, %s20, %s18
  %v22 = vstv %s16
  %23 = vst [vmem:[#allocation6] sm:$0x1] %v22
  // Predicated region
  $region2: #{pooled_value_function.1} parent=0 // pred_check
    _
  $region3: #{pooled_value_function.1} parent=0 // pred_check_branch
    %25 = sbr.rel (0) target = $region5
  $region4: #{pooled_value_function.1} parent=0 // pred_region
    _
  $region5: #{pooled_value_function.1} parent=0 // pred_fallthru
    _
  // Predicated region
  $region6: #{pooled_value_function.1} parent=0 // pred_check
    _
  $region7: #{pooled_value_function.1} parent=0 // pred_check_branch
    %27 = sbr.rel (0) target = $region9
  $region8: #{pooled_value_function.1} parent=0 // pred_region
    _
  $region9: #{pooled_value_function.1} parent=0 // pred_fallthru
    _
  // Predicated region
  $region10: #{pooled_value_function.1} parent=0 // pred_check
    _
  $region11: #{pooled_value_function.1} parent=0 // pred_check_branch
    %29 = sbr.rel (0) target = $region13
  $region12: #{pooled_value_function.1} parent=0 // pred_region
    _
  $region13: #{pooled_value_function.1} parent=0 // pred_fallthru
    _
  // Predicated region
  $region14: #{pooled_value_function.1} parent=0 // pred_check
    _
  $region15: #{pooled_value_function.1} parent=0 // pred_check_branch
    %31 = sbr.rel (0) target = $region17
  $region16: #{pooled_value_function.1} parent=0 // pred_region
    _
  $region17: #{pooled_value_function.1} parent=0 // pred_fallthru
    _
  // Predicated region
  $region18: #{pooled_value_function.1} parent=0 // pred_check
    _
  $region19: #{pooled_value_function.1} parent=0 // pred_check_branch
    %33 = sbr.rel (0) target = $region21
  $region20: #{pooled_value_function.1} parent=0 // pred_region
    _
  $region21: #{pooled_value_function.1} parent=0 // pred_fallthru
    _
  // Predicated region
  $region22: #{pooled_value_function.1} parent=0 // pred_check
    _
  $region23: #{pooled_value_function.1} parent=0 // pred_check_branch
    %35 = sbr.rel (0) target = $region25
  $region24: #{pooled_value_function.1} parent=0 // pred_region
    _
  $region25: #{pooled_value_function.1} parent=0 // pred_fallthru
    _
  // Predicated region
  $region26: #{pooled_value_function.1} parent=0 // pred_check
    _
  $region27: #{pooled_value_function.1} parent=0 // pred_check_branch
    %37 = sbr.rel (0) target = $region29
  $region28: #{pooled_value_function.1} parent=0 // pred_region
    _
  $region29: #{pooled_value_function.1} parent=0 // pred_fallthru
    _
  // Predicated region
  $region30: #{pooled_value_function.1} parent=0 // pred_check
    _
  $region31: #{pooled_value_function.1} parent=0 // pred_check_branch
    %39 = sbr.rel (0) target = $region33
  $region32: #{pooled_value_function.1} parent=0 // pred_region
    _
  $region33: #{pooled_value_function.1} parent=0 // pred_fallthru
    _
  // Predicated region
  $region34: #{pooled_value_function.1} parent=0 // pred_check
    _
  $region35: #{pooled_value_function.1} parent=0 // pred_check_branch
    %41 = sbr.rel (0) target = $region37
  $region36: #{pooled_value_function.1} parent=0 // pred_region
    _
  $region37: #{pooled_value_function.1} parent=0 // pred_fallthru
    _
  // Predicated region
  $region38: #{pooled_value_function.1} parent=0 // pred_check
    _
  $region39: #{pooled_value_function.1} parent=0 // pred_check_branch
    %43 = sbr.rel (0) target = $region41
  $region40: #{pooled_value_function.1} parent=0 // pred_region
    _
  $region41: #{pooled_value_function.1} parent=0 // pred_fallthru
    _
  // Predicated region
  $region42: #{pooled_value_function.1} parent=0 // pred_check
    _
  $region43: #{pooled_value_function.1} parent=0 // pred_check_branch
    %45 = sbr.rel (0) target = $region45
  $region44: #{pooled_value_function.1} parent=0 // pred_region
    _
  $region45: #{pooled_value_function.1} parent=0 // pred_fallthru
    _
  // Predicated region
  $region46: #{pooled_value_function.1} parent=0 // pred_check
    _
  $region47: #{pooled_value_function.1} parent=0 // pred_check_branch
    %47 = sbr.rel (0) target = $region49
  $region48: #{pooled_value_function.1} parent=0 // pred_region
    _
  $region49: #{pooled_value_function.1} parent=0 // pred_fallthru
    _
  // Predicated region
  $region50: #{pooled_value_function.1} parent=0 // pred_check
    _
  $region51: #{pooled_value_function.1} parent=0 // pred_check_branch
    %49 = sbr.rel (0) target = $region53
  $region52: #{pooled_value_function.1} parent=0 // pred_region
    _
  $region53: #{pooled_value_function.1} parent=0 // pred_fallthru
    _
  // Predicated region
  $region54: #{pooled_value_function.1} parent=0 // pred_check
    _
  $region55: #{pooled_value_function.1} parent=0 // pred_check_branch
    %51 = sbr.rel (0) target = $region57
  $region56: #{pooled_value_function.1} parent=0 // pred_region
    _
  $region57: #{pooled_value_function.1} parent=0 // pred_fallthru
    _
  // Predicated region
  $region58: #{pooled_value_function.1} parent=0 // pred_check
    _
  $region59: #{pooled_value_function.1} parent=0 // pred_check_branch
    %53 = sbr.rel (0) target = $region61
  $region60: #{pooled_value_function.1} parent=0 // pred_region
    _
  $region61: #{pooled_value_function.1} parent=0 // pred_fallthru
    _
  // Predicated region
  $region62: #{pooled_value_function.1} parent=0 // pred_check
    _
  $region63: #{pooled_value_function.1} parent=0 // pred_check_branch
    %55 = sbr.rel (0) target = $region65
  $region64: #{pooled_value_function.1} parent=0 // pred_region
    _
  $region65: #{pooled_value_function.1} parent=0 // pred_fallthru
    _
  // Predicated region
  $region66: #{pooled_value_function.1} parent=0 // pred_check
    _
  $region67: #{pooled_value_function.1} parent=0 // pred_check_branch
    %57 = sbr.rel (0) target = $region69
  $region68: #{pooled_value_function.1} parent=0 // pred_region
    _
  $region69: #{pooled_value_function.1} parent=0 // pred_fallthru
    _
  %v59 = vld [vmem:[%s1] sm:$0x3]
  %v60 = vld [vmem:[%s8] sm:$0xff]
  %v61 = vld [vmem:[%s9] sm:$0x1]
  %v63 = vlaneseq
  %v64 = vshrl.u32 %v63, 7
  %v65 = vsub.s32 0, %v64
  %v66 = vrot.slane %v61, %v65
  %vm68 = vcmask 64512
  %v70 = vsel %vm68, %v59, 0
  %72 = vmatprep.subr.mxu0 0.0
  %73 = vmatpush1.msra.mxu0 0.0
  %74 = vmatprep.subr.mxu0 0.0
  %75 = vmatpush1.msra.mxu0 0.0
  %76 = vmatprep.subr.mxu0 0.0
  %77 = vmatpush1.msra.mxu0 0.0
  %78 = vmatprep.subr.mxu0 0.0
  %79 = vmatpush1.msra.mxu0 0.0
  %80 = vmatprep.subr.mxu0 0.0
  %81 = vmatpush1.msra.mxu0 0.0
  %82 = vmatprep.subr.mxu0 0.0
  %83 = vmatpush1.msra.mxu0 0.0
  %84 = vmatprep.subr.mxu0 0.0
  %85 = vmatpush1.msra.mxu0 0.0
  %86 = vmatprep.subr.mxu0 0.0
  %87 = vmatpush1.msra.mxu0 0.0
  %88 = vmatprep.subr.mxu0 0.0
  %89 = vmatpush1.msra.mxu0 0.0
  %90 = vmatprep.subr.mxu0 0.0
  %91 = vmatpush1.msra.mxu0 0.0
  %92 = vmatprep.subr.mxu0 0.0
  %93 = vmatpush1.msra.mxu0 0.0
  %94 = vmatprep.subr.mxu0 0.0
  %95 = vmatpush1.msra.mxu0 0.0
  %96 = vmatprep.subr.mxu0 0.0
  %97 = vmatpush1.msra.mxu0 0.0
  %98 = vmatprep.subr.mxu0 0.0
  %99 = vmatpush1.msra.mxu0 0.0
  %100 = vmatprep.subr.mxu0 0.0
  %101 = vmatpush1.msra.mxu0 0.0
  %102 = vmatprep.subr.mxu0 0.0
  %103 = vmatpush1.msra.mxu0 %v60
  %104 = vmatprep.subr.mxu0 0.0
  %105 = vmatpush2.msra.mxu0 0.0
  %106 = vmatprep.subr.mxu0 0.0
  %107 = vmatpush2.msra.mxu0 0.0
  %108 = vmatprep.subr.mxu0 0.0
  %109 = vmatpush2.msra.mxu0 0.0
  %110 = vmatprep.subr.mxu0 0.0
  %111 = vmatpush2.msra.mxu0 0.0
  %112 = vmatprep.subr.mxu0 0.0
  %113 = vmatpush2.msra.mxu0 0.0
  %114 = vmatprep.subr.mxu0 0.0
  %115 = vmatpush2.msra.mxu0 0.0
  %116 = vmatprep.subr.mxu0 0.0
  %117 = vmatpush2.msra.mxu0 0.0
  %118 = vmatprep.subr.mxu0 0.0
  %119 = vmatpush2.msra.mxu0 0.0
  %120 = vmatprep.subr.mxu0 0.0
  %121 = vmatpush2.msra.mxu0 0.0
  %122 = vmatprep.subr.mxu0 0.0
  %123 = vmatpush2.msra.mxu0 0.0
  %124 = vmatprep.subr.mxu0 0.0
  %125 = vmatpush2.msra.mxu0 0.0
  %126 = vmatprep.subr.mxu0 0.0
  %127 = vmatpush2.msra.mxu0 0.0
  %128 = vmatprep.subr.mxu0 0.0
  %129 = vmatpush2.msra.mxu0 0.0
  %130 = vmatprep.subr.mxu0 0.0
  %131 = vmatpush2.msra.mxu0 0.0
  %132 = vmatprep.subr.mxu0 0.0
  %133 = vmatpush2.msra.mxu0 0.0
  %134 = vmatprep.subr.mxu0 0.0
  %135 = vmatpush2.msra.mxu0 0.0
  %136 = vmatprep.mubr.f32.mxu0 0.0
  %137 = vmatmul.mubr.f32.gmra.mxu0 %v70
  %v138 = vpop.f32.mrf.mxu0
  %v139 = vadd.f32 %v66, %v138
  %v140 = vpop.f32.mrf.mxu0
  %141 = vdwg.mxu0
  %v142 = vtanh.pop %v139
  %v143 = vld [vmem:[%s10] sm:$0xff]
  %v144 = vld [vmem:[%s10 + $0x8] sm:$0xff]
  %v145 = vld [vmem:[%s11] sm:$0x1]
  %v147 = vlaneseq
  %v148 = vshrl.u32 %v147, 7
  %v149 = vsub.s32 0, %v148
  %v150 = vrot.slane %v145, %v149
  %vm152 = vcmask 130048
  %v154 = vsel %vm152, %v142, 0
  %156 = vmatprep.subr.mxu0 0.0
  %157 = vmatpush1.msra.mxu0 0.0
  %158 = vmatprep.subr.mxu0 0.0
  %159 = vmatpush1.msra.mxu0 0.0
  %160 = vmatprep.subr.mxu0 0.0
  %161 = vmatpush1.msra.mxu0 0.0
  %162 = vmatprep.subr.mxu0 0.0
  %163 = vmatpush1.msra.mxu0 0.0
  %164 = vmatprep.subr.mxu0 0.0
  %165 = vmatpush1.msra.mxu0 0.0
  %166 = vmatprep.subr.mxu0 0.0
  %167 = vmatpush1.msra.mxu0 0.0
  %168 = vmatprep.subr.mxu0 0.0
  %169 = vmatpush1.msra.mxu0 0.0
  %170 = vmatprep.subr.mxu0 0.0
  %171 = vmatpush1.msra.mxu0 0.0
  %172 = vmatprep.subr.mxu0 0.0
  %173 = vmatpush1.msra.mxu0 0.0
  %174 = vmatprep.subr.mxu0 0.0
  %175 = vmatpush1.msra.mxu0 0.0
  %176 = vmatprep.subr.mxu0 0.0
  %177 = vmatpush1.msra.mxu0 0.0
  %178 = vmatprep.subr.mxu0 0.0
  %179 = vmatpush1.msra.mxu0 0.0
  %180 = vmatprep.subr.mxu0 0.0
  %181 = vmatpush1.msra.mxu0 0.0
  %182 = vmatprep.subr.mxu0 0.0
  %183 = vmatpush1.msra.mxu0 0.0
  %184 = vmatprep.subr.mxu0 0.0
  %185 = vmatpush1.msra.mxu0 %v144
  %186 = vmatprep.subr.mxu0 0.0
  %187 = vmatpush1.msra.mxu0 %v143
  %188 = vmatprep.subr.mxu0 0.0
  %189 = vmatpush2.msra.mxu0 0.0
  %190 = vmatprep.subr.mxu0 0.0
  %191 = vmatpush2.msra.mxu0 0.0
  %192 = vmatprep.subr.mxu0 0.0
  %193 = vmatpush2.msra.mxu0 0.0
  %194 = vmatprep.subr.mxu0 0.0
  %195 = vmatpush2.msra.mxu0 0.0
  %196 = vmatprep.subr.mxu0 0.0
  %197 = vmatpush2.msra.mxu0 0.0
  %198 = vmatprep.subr.mxu0 0.0
  %199 = vmatpush2.msra.mxu0 0.0
  %200 = vmatprep.subr.mxu0 0.0
  %201 = vmatpush2.msra.mxu0 0.0
  %202 = vmatprep.subr.mxu0 0.0
  %203 = vmatpush2.msra.mxu0 0.0
  %204 = vmatprep.subr.mxu0 0.0
  %205 = vmatpush2.msra.mxu0 0.0
  %206 = vmatprep.subr.mxu0 0.0
  %207 = vmatpush2.msra.mxu0 0.0
  %208 = vmatprep.subr.mxu0 0.0
  %209 = vmatpush2.msra.mxu0 0.0
  %210 = vmatprep.subr.mxu0 0.0
  %211 = vmatpush2.msra.mxu0 0.0
  %212 = vmatprep.subr.mxu0 0.0
  %213 = vmatpush2.msra.mxu0 0.0
  %214 = vmatprep.subr.mxu0 0.0
  %215 = vmatpush2.msra.mxu0 0.0
  %216 = vmatprep.subr.mxu0 0.0
  %217 = vmatpush2.msra.mxu0 0.0
  %218 = vmatprep.subr.mxu0 0.0
  %219 = vmatpush2.msra.mxu0 0.0
  %220 = vmatprep.mubr.f32.mxu0 0.0
  %221 = vmatmul.mubr.f32.gmra.mxu0 %v154
  %v222 = vpop.f32.mrf.mxu0
  %v223 = vadd.f32 %v150, %v222
  %v224 = vpop.f32.mrf.mxu0
  %225 = vdwg.mxu0
  %v226 = vtanh.pop %v223
  %v227 = vld [vmem:[%s3] sm:$0xf]
  %v228 = vld [vmem:[%s5] sm:$0x7]
  %v229 = vld [vmem:[%s7] sm:$0x3]
  %v230 = vld [vmem:[%s0] sm:$0xff]
  %v231 = vld [vmem:[%s0 + $0x8] sm:$0xff]
  %v232 = vld [vmem:[%s0 + $0x10] sm:$0xff]
  %v233 = vld [vmem:[%s0 + $0x18] sm:$0xff]
  %v234 = vld [vmem:[%s0 + $0x20] sm:$0xff]
  %v235 = vld [vmem:[%s0 + $0x28] sm:$0xff]
  %v236 = vld [vmem:[%s0 + $0x30] sm:$0xff]
  %v237 = vld [vmem:[%s0 + $0x38] sm:$0xff]
  %v238 = vld [vmem:[%s2] sm:$0xff]
  %v239 = vld [vmem:[%s2 + $0x8] sm:$0xff]
  %v240 = vld [vmem:[%s2 + $0x10] sm:$0xff]
  %v241 = vld [vmem:[%s2 + $0x18] sm:$0xff]
  %v242 = vld [vmem:[%s2 + $0x20] sm:$0xff]
  %v243 = vld [vmem:[%s2 + $0x28] sm:$0xff]
  %v244 = vld [vmem:[%s2 + $0x30] sm:$0xff]
  %v245 = vld [vmem:[%s2 + $0x38] sm:$0xff]
  %v246 = vld [vmem:[%s2 + $0x40] sm:$0xff]
  %v247 = vld [vmem:[%s2 + $0x48] sm:$0xff]
  %v248 = vld [vmem:[%s2 + $0x50] sm:$0xff]
  %v249 = vld [vmem:[%s2 + $0x58] sm:$0xff]
  %v250 = vld [vmem:[%s2 + $0x60] sm:$0xff]
  %v251 = vld [vmem:[%s2 + $0x68] sm:$0xff]
  %v252 = vld [vmem:[%s2 + $0x70] sm:$0xff]
  %v253 = vld [vmem:[%s2 + $0x78] sm:$0xff]
  %v254 = vld [vmem:[%s2 + $0x80] sm:$0xff]
  %v255 = vld [vmem:[%s2 + $0x88] sm:$0xff]
  %v256 = vld [vmem:[%s2 + $0x90] sm:$0xff]
  %v257 = vld [vmem:[%s2 + $0x98] sm:$0xff]
  %v258 = vld [vmem:[%s2 + $0xa0] sm:$0xff]
  %v259 = vld [vmem:[%s2 + $0xa8] sm:$0xff]
  %v260 = vld [vmem:[%s2 + $0xb0] sm:$0xff]
  %v261 = vld [vmem:[%s2 + $0xb8] sm:$0xff]
  %v262 = vld [vmem:[%s2 + $0xc0] sm:$0xff]
  %v263 = vld [vmem:[%s2 + $0xc8] sm:$0xff]
  %v264 = vld [vmem:[%s2 + $0xd0] sm:$0xff]
  %v265 = vld [vmem:[%s2 + $0xd8] sm:$0xff]
  %v266 = vld [vmem:[%s2 + $0xe0] sm:$0xff]
  %v267 = vld [vmem:[%s2 + $0xe8] sm:$0xff]
  %v268 = vld [vmem:[%s2 + $0xf0] sm:$0xff]
  %v269 = vld [vmem:[%s2 + $0xf8] sm:$0xff]
  %v270 = vld [vmem:[%s2 + $0x100] sm:$0xff]
  %v271 = vld [vmem:[%s2 + $0x108] sm:$0xff]
  %v272 = vld [vmem:[%s2 + $0x110] sm:$0xff]
  %v273 = vld [vmem:[%s2 + $0x118] sm:$0xff]
  %v274 = vld [vmem:[%s2 + $0x120] sm:$0xff]
  %v275 = vld [vmem:[%s2 + $0x128] sm:$0xff]
  %v276 = vld [vmem:[%s2 + $0x130] sm:$0xff]
  %v277 = vld [vmem:[%s2 + $0x138] sm:$0xff]
  %v278 = vld [vmem:[%s2 + $0x140] sm:$0xff]
  %v279 = vld [vmem:[%s2 + $0x148] sm:$0xff]
  %v280 = vld [vmem:[%s2 + $0x150] sm:$0xff]
  %v281 = vld [vmem:[%s2 + $0x158] sm:$0xff]
  %v282 = vld [vmem:[%s2 + $0x160] sm:$0xff]
  %v283 = vld [vmem:[%s2 + $0x168] sm:$0xff]
  %v284 = vld [vmem:[%s2 + $0x170] sm:$0xff]
  %v285 = vld [vmem:[%s2 + $0x178] sm:$0xff]
  %v286 = vld [vmem:[%s2 + $0x180] sm:$0xff]
  %v287 = vld [vmem:[%s2 + $0x188] sm:$0xff]
  %v288 = vld [vmem:[%s2 + $0x190] sm:$0xff]
  %v289 = vld [vmem:[%s2 + $0x198] sm:$0xff]
  %v290 = vld [vmem:[%s2 + $0x1a0] sm:$0xff]
  %v291 = vld [vmem:[%s2 + $0x1a8] sm:$0xff]
  %v292 = vld [vmem:[%s2 + $0x1b0] sm:$0xff]
  %v293 = vld [vmem:[%s2 + $0x1b8] sm:$0xff]
  %v294 = vld [vmem:[%s2 + $0x1c0] sm:$0xff]
  %v295 = vld [vmem:[%s2 + $0x1c8] sm:$0xff]
  %v296 = vld [vmem:[%s2 + $0x1d0] sm:$0xff]
  %v297 = vld [vmem:[%s2 + $0x1d8] sm:$0xff]
  %v298 = vld [vmem:[%s2 + $0x1e0] sm:$0xff]
  %v299 = vld [vmem:[%s2 + $0x1e8] sm:$0xff]
  %v300 = vld [vmem:[%s2 + $0x1f0] sm:$0xff]
  %v301 = vld [vmem:[%s2 + $0x1f8] sm:$0xff]
  %v302 = vld [vmem:[%s2 + $0x200] sm:$0xff]
  %v303 = vld [vmem:[%s2 + $0x208] sm:$0xff]
  %v304 = vld [vmem:[%s2 + $0x210] sm:$0xff]
  %v305 = vld [vmem:[%s2 + $0x218] sm:$0xff]
  %v306 = vld [vmem:[%s2 + $0x220] sm:$0xff]
  %v307 = vld [vmem:[%s2 + $0x228] sm:$0xff]
  %v308 = vld [vmem:[%s2 + $0x230] sm:$0xff]
  %v309 = vld [vmem:[%s2 + $0x238] sm:$0xff]
  %v310 = vld [vmem:[%s2 + $0x240] sm:$0xff]
  %v311 = vld [vmem:[%s2 + $0x248] sm:$0xff]
  %v312 = vld [vmem:[%s2 + $0x250] sm:$0xff]
  %v313 = vld [vmem:[%s2 + $0x258] sm:$0xff]
  %v314 = vld [vmem:[%s2 + $0x260] sm:$0xff]
  %v315 = vld [vmem:[%s2 + $0x268] sm:$0xff]
  %v316 = vld [vmem:[%s2 + $0x270] sm:$0xff]
  %v317 = vld [vmem:[%s2 + $0x278] sm:$0xff]
  %v318 = vld [vmem:[%s2 + $0x280] sm:$0xff]
  %v319 = vld [vmem:[%s2 + $0x288] sm:$0xff]
  %v320 = vld [vmem:[%s2 + $0x290] sm:$0xff]
  %v321 = vld [vmem:[%s2 + $0x298] sm:$0xff]
  %v322 = vld [vmem:[%s2 + $0x2a0] sm:$0xff]
  %v323 = vld [vmem:[%s2 + $0x2a8] sm:$0xff]
  %v324 = vld [vmem:[%s2 + $0x2b0] sm:$0xff]
  %v325 = vld [vmem:[%s2 + $0x2b8] sm:$0xff]
  %v326 = vld [vmem:[%s2 + $0x2c0] sm:$0xff]
  %v327 = vld [vmem:[%s2 + $0x2c8] sm:$0xff]
  %v328 = vld [vmem:[%s2 + $0x2d0] sm:$0xff]
  %v329 = vld [vmem:[%s2 + $0x2d8] sm:$0xff]
  %v330 = vld [vmem:[%s2 + $0x2e0] sm:$0xff]
  %v331 = vld [vmem:[%s2 + $0x2e8] sm:$0xff]
  %v332 = vld [vmem:[%s2 + $0x2f0] sm:$0xff]
  %v333 = vld [vmem:[%s2 + $0x2f8] sm:$0xff]
  %v334 = vld [vmem:[%s2 + $0x300] sm:$0xff]
  %v335 = vld [vmem:[%s2 + $0x308] sm:$0xff]
  %v336 = vld [vmem:[%s2 + $0x310] sm:$0xff]
  %v337 = vld [vmem:[%s2 + $0x318] sm:$0xff]
  %v338 = vld [vmem:[%s2 + $0x320] sm:$0xff]
  %v339 = vld [vmem:[%s2 + $0x328] sm:$0xff]
  %v340 = vld [vmem:[%s2 + $0x330] sm:$0xff]
  %v341 = vld [vmem:[%s2 + $0x338] sm:$0xff]
  %v342 = vld [vmem:[%s2 + $0x340] sm:$0xff]
  %v343 = vld [vmem:[%s2 + $0x348] sm:$0xff]
  %v344 = vld [vmem:[%s2 + $0x350] sm:$0xff]
  %v345 = vld [vmem:[%s2 + $0x358] sm:$0xff]
  %v346 = vld [vmem:[%s2 + $0x360] sm:$0xff]
  %v347 = vld [vmem:[%s2 + $0x368] sm:$0xff]
  %v348 = vld [vmem:[%s2 + $0x370] sm:$0xff]
  %v349 = vld [vmem:[%s2 + $0x378] sm:$0xff]
  %v350 = vld [vmem:[%s2 + $0x380] sm:$0xff]
  %v351 = vld [vmem:[%s2 + $0x388] sm:$0xff]
  %v352 = vld [vmem:[%s2 + $0x390] sm:$0xff]
  %v353 = vld [vmem:[%s2 + $0x398] sm:$0xff]
  %v354 = vld [vmem:[%s2 + $0x3a0] sm:$0xff]
  %v355 = vld [vmem:[%s2 + $0x3a8] sm:$0xff]
  %v356 = vld [vmem:[%s2 + $0x3b0] sm:$0xff]
  %v357 = vld [vmem:[%s2 + $0x3b8] sm:$0xff]
  %v358 = vld [vmem:[%s2 + $0x3c0] sm:$0xff]
  %v359 = vld [vmem:[%s2 + $0x3c8] sm:$0xff]
  %v360 = vld [vmem:[%s2 + $0x3d0] sm:$0xff]
  %v361 = vld [vmem:[%s2 + $0x3d8] sm:$0xff]
  %v362 = vld [vmem:[%s2 + $0x3e0] sm:$0xff]
  %v363 = vld [vmem:[%s2 + $0x3e8] sm:$0xff]
  %v364 = vld [vmem:[%s2 + $0x3f0] sm:$0xff]
  %v365 = vld [vmem:[%s2 + $0x3f8] sm:$0xff]
  %v366 = vld [vmem:[%s2 + $0x400] sm:$0xff]
  %v367 = vld [vmem:[%s2 + $0x408] sm:$0xff]
  %v368 = vld [vmem:[%s2 + $0x410] sm:$0xff]
  %v369 = vld [vmem:[%s2 + $0x418] sm:$0xff]
  %v370 = vld [vmem:[%s2 + $0x420] sm:$0xff]
  %v371 = vld [vmem:[%s2 + $0x428] sm:$0xff]
  %v372 = vld [vmem:[%s2 + $0x430] sm:$0xff]
  %v373 = vld [vmem:[%s2 + $0x438] sm:$0xff]
  %v374 = vld [vmem:[%s2 + $0x440] sm:$0xff]
  %v375 = vld [vmem:[%s2 + $0x448] sm:$0xff]
  %v376 = vld [vmem:[%s2 + $0x450] sm:$0xff]
  %v377 = vld [vmem:[%s2 + $0x458] sm:$0xff]
  %v378 = vld [vmem:[%s2 + $0x460] sm:$0xff]
  %v379 = vld [vmem:[%s2 + $0x468] sm:$0xff]
  %v380 = vld [vmem:[%s2 + $0x470] sm:$0xff]
  %v381 = vld [vmem:[%s2 + $0x478] sm:$0xff]
  %v382 = vld [vmem:[%s2 + $0x480] sm:$0xff]
  %v383 = vld [vmem:[%s2 + $0x488] sm:$0xff]
  %v384 = vld [vmem:[%s2 + $0x490] sm:$0xff]
  %v385 = vld [vmem:[%s2 + $0x498] sm:$0xff]
  %v386 = vld [vmem:[%s2 + $0x4a0] sm:$0xff]
  %v387 = vld [vmem:[%s2 + $0x4a8] sm:$0xff]
  %v388 = vld [vmem:[%s2 + $0x4b0] sm:$0xff]
  %v389 = vld [vmem:[%s2 + $0x4b8] sm:$0xff]
  %v390 = vld [vmem:[%s2 + $0x4c0] sm:$0xff]
  %v391 = vld [vmem:[%s2 + $0x4c8] sm:$0xff]
  %v392 = vld [vmem:[%s2 + $0x4d0] sm:$0xff]
  %v393 = vld [vmem:[%s2 + $0x4d8] sm:$0xff]
  %v394 = vld [vmem:[%s2 + $0x4e0] sm:$0xff]
  %v395 = vld [vmem:[%s2 + $0x4e8] sm:$0xff]
  %v396 = vld [vmem:[%s2 + $0x4f0] sm:$0xff]
  %v397 = vld [vmem:[%s2 + $0x4f8] sm:$0xff]
  %v398 = vld [vmem:[%s2 + $0x500] sm:$0xff]
  %v399 = vld [vmem:[%s2 + $0x508] sm:$0xff]
  %v400 = vld [vmem:[%s2 + $0x510] sm:$0xff]
  %v401 = vld [vmem:[%s2 + $0x518] sm:$0xff]
  %v402 = vld [vmem:[%s2 + $0x520] sm:$0xff]
  %v403 = vld [vmem:[%s2 + $0x528] sm:$0xff]
  %v404 = vld [vmem:[%s2 + $0x530] sm:$0xff]
  %v405 = vld [vmem:[%s2 + $0x538] sm:$0xff]
  %v406 = vld [vmem:[%s2 + $0x540] sm:$0xff]
  %v407 = vld [vmem:[%s2 + $0x548] sm:$0xff]
  %v408 = vld [vmem:[%s2 + $0x550] sm:$0xff]
  %v409 = vld [vmem:[%s2 + $0x558] sm:$0xff]
  %v410 = vld [vmem:[%s2 + $0x560] sm:$0xff]
  %v411 = vld [vmem:[%s2 + $0x568] sm:$0xff]
  %v412 = vld [vmem:[%s2 + $0x570] sm:$0xff]
  %v413 = vld [vmem:[%s2 + $0x578] sm:$0xff]
  %v414 = vld [vmem:[%s2 + $0x580] sm:$0xff]
  %v415 = vld [vmem:[%s2 + $0x588] sm:$0xff]
  %v416 = vld [vmem:[%s2 + $0x590] sm:$0xff]
  %v417 = vld [vmem:[%s2 + $0x598] sm:$0xff]
  %v418 = vld [vmem:[%s2 + $0x5a0] sm:$0xff]
  %v419 = vld [vmem:[%s2 + $0x5a8] sm:$0xff]
  %v420 = vld [vmem:[%s2 + $0x5b0] sm:$0xff]
  %v421 = vld [vmem:[%s2 + $0x5b8] sm:$0xff]
  %v422 = vld [vmem:[%s2 + $0x5c0] sm:$0xff]
  %v423 = vld [vmem:[%s2 + $0x5c8] sm:$0xff]
  %v424 = vld [vmem:[%s2 + $0x5d0] sm:$0xff]
  %v425 = vld [vmem:[%s2 + $0x5d8] sm:$0xff]
  %v426 = vld [vmem:[%s2 + $0x5e0] sm:$0xff]
  %v427 = vld [vmem:[%s2 + $0x5e8] sm:$0xff]
  %v428 = vld [vmem:[%s2 + $0x5f0] sm:$0xff]
  %v429 = vld [vmem:[%s2 + $0x5f8] sm:$0xff]
  %v430 = vld [vmem:[%s2 + $0x600] sm:$0xff]
  %v431 = vld [vmem:[%s2 + $0x608] sm:$0xff]
  %v432 = vld [vmem:[%s2 + $0x610] sm:$0xff]
  %v433 = vld [vmem:[%s2 + $0x618] sm:$0xff]
  %v434 = vld [vmem:[%s2 + $0x620] sm:$0xff]
  %v435 = vld [vmem:[%s2 + $0x628] sm:$0xff]
  %v436 = vld [vmem:[%s2 + $0x630] sm:$0xff]
  %v437 = vld [vmem:[%s2 + $0x638] sm:$0xff]
  %v438 = vld [vmem:[%s2 + $0x640] sm:$0xff]
  %v439 = vld [vmem:[%s2 + $0x648] sm:$0xff]
  %v440 = vld [vmem:[%s2 + $0x650] sm:$0xff]
  %v441 = vld [vmem:[%s2 + $0x658] sm:$0xff]
  %v442 = vld [vmem:[%s2 + $0x660] sm:$0xff]
  %v443 = vld [vmem:[%s2 + $0x668] sm:$0xff]
  %v444 = vld [vmem:[%s2 + $0x670] sm:$0xff]
  %v445 = vld [vmem:[%s2 + $0x678] sm:$0xff]
  %v446 = vld [vmem:[%s2 + $0x680] sm:$0xff]
  %v447 = vld [vmem:[%s2 + $0x688] sm:$0xff]
  %v448 = vld [vmem:[%s2 + $0x690] sm:$0xff]
  %v449 = vld [vmem:[%s2 + $0x698] sm:$0xff]
  %v450 = vld [vmem:[%s2 + $0x6a0] sm:$0xff]
  %v451 = vld [vmem:[%s2 + $0x6a8] sm:$0xff]
  %v452 = vld [vmem:[%s2 + $0x6b0] sm:$0xff]
  %v453 = vld [vmem:[%s2 + $0x6b8] sm:$0xff]
  %v454 = vld [vmem:[%s2 + $0x6c0] sm:$0xff]
  %v455 = vld [vmem:[%s2 + $0x6c8] sm:$0xff]
  %v456 = vld [vmem:[%s2 + $0x6d0] sm:$0xff]
  %v457 = vld [vmem:[%s2 + $0x6d8] sm:$0xff]
  %v458 = vld [vmem:[%s2 + $0x6e0] sm:$0xff]
  %v459 = vld [vmem:[%s2 + $0x6e8] sm:$0xff]
  %v460 = vld [vmem:[%s2 + $0x6f0] sm:$0xff]
  %v461 = vld [vmem:[%s2 + $0x6f8] sm:$0xff]
  %v462 = vld [vmem:[%s2 + $0x700] sm:$0xff]
  %v463 = vld [vmem:[%s2 + $0x708] sm:$0xff]
  %v464 = vld [vmem:[%s2 + $0x710] sm:$0xff]
  %v465 = vld [vmem:[%s2 + $0x718] sm:$0xff]
  %v466 = vld [vmem:[%s2 + $0x720] sm:$0xff]
  %v467 = vld [vmem:[%s2 + $0x728] sm:$0xff]
  %v468 = vld [vmem:[%s2 + $0x730] sm:$0xff]
  %v469 = vld [vmem:[%s2 + $0x738] sm:$0xff]
  %v470 = vld [vmem:[%s2 + $0x740] sm:$0xff]
  %v471 = vld [vmem:[%s2 + $0x748] sm:$0xff]
  %v472 = vld [vmem:[%s2 + $0x750] sm:$0xff]
  %v473 = vld [vmem:[%s2 + $0x758] sm:$0xff]
  %v474 = vld [vmem:[%s2 + $0x760] sm:$0xff]
  %v475 = vld [vmem:[%s2 + $0x768] sm:$0xff]
  %v476 = vld [vmem:[%s2 + $0x770] sm:$0xff]
  %v477 = vld [vmem:[%s2 + $0x778] sm:$0xff]
  %v478 = vld [vmem:[%s2 + $0x780] sm:$0xff]
  %v479 = vld [vmem:[%s2 + $0x788] sm:$0xff]
  %v480 = vld [vmem:[%s2 + $0x790] sm:$0xff]
  %v481 = vld [vmem:[%s2 + $0x798] sm:$0xff]
  %v482 = vld [vmem:[%s2 + $0x7a0] sm:$0xff]
  %v483 = vld [vmem:[%s2 + $0x7a8] sm:$0xff]
  %v484 = vld [vmem:[%s2 + $0x7b0] sm:$0xff]
  %v485 = vld [vmem:[%s2 + $0x7b8] sm:$0xff]
  %v486 = vld [vmem:[%s2 + $0x7c0] sm:$0xff]
  %v487 = vld [vmem:[%s2 + $0x7c8] sm:$0xff]
  %v488 = vld [vmem:[%s2 + $0x7d0] sm:$0xff]
  %v489 = vld [vmem:[%s2 + $0x7d8] sm:$0xff]
  %v490 = vld [vmem:[%s2 + $0x7e0] sm:$0xff]
  %v491 = vld [vmem:[%s2 + $0x7e8] sm:$0xff]
  %v492 = vld [vmem:[%s2 + $0x7f0] sm:$0xff]
  %v493 = vld [vmem:[%s2 + $0x7f8] sm:$0xff]
  %v494 = vld [vmem:[%s0 + $0x40] sm:$0xff]
  %v495 = vld [vmem:[%s0 + $0x48] sm:$0xff]
  %v496 = vld [vmem:[%s0 + $0x50] sm:$0xff]
  %v497 = vld [vmem:[%s0 + $0x58] sm:$0xff]
  %v498 = vld [vmem:[%s0 + $0x60] sm:$0xff]
  %v499 = vld [vmem:[%s0 + $0x68] sm:$0xff]
  %v500 = vld [vmem:[%s0 + $0x70] sm:$0xff]
  %v501 = vld [vmem:[%s0 + $0x78] sm:$0xff]
  %s502 = scalar_lea.vmem %s2, 2048
  %v503 = vld [vmem:[%s502] sm:$0xff]
  %v504 = vld [vmem:[%s502 + $0x8] sm:$0xff]
  %v505 = vld [vmem:[%s502 + $0x10] sm:$0xff]
  %v506 = vld [vmem:[%s502 + $0x18] sm:$0xff]
  %v507 = vld [vmem:[%s502 + $0x20] sm:$0xff]
  %v508 = vld [vmem:[%s502 + $0x28] sm:$0xff]
  %v509 = vld [vmem:[%s502 + $0x30] sm:$0xff]
  %v510 = vld [vmem:[%s502 + $0x38] sm:$0xff]
  %v511 = vld [vmem:[%s502 + $0x40] sm:$0xff]
  %v512 = vld [vmem:[%s502 + $0x48] sm:$0xff]
  %v513 = vld [vmem:[%s502 + $0x50] sm:$0xff]
  %v514 = vld [vmem:[%s502 + $0x58] sm:$0xff]
  %v515 = vld [vmem:[%s502 + $0x60] sm:$0xff]
  %v516 = vld [vmem:[%s502 + $0x68] sm:$0xff]
  %v517 = vld [vmem:[%s502 + $0x70] sm:$0xff]
  %v518 = vld [vmem:[%s502 + $0x78] sm:$0xff]
  %v519 = vld [vmem:[%s502 + $0x80] sm:$0xff]
  %v520 = vld [vmem:[%s502 + $0x88] sm:$0xff]
  %v521 = vld [vmem:[%s502 + $0x90] sm:$0xff]
  %v522 = vld [vmem:[%s502 + $0x98] sm:$0xff]
  %v523 = vld [vmem:[%s502 + $0xa0] sm:$0xff]
  %v524 = vld [vmem:[%s502 + $0xa8] sm:$0xff]
  %v525 = vld [vmem:[%s502 + $0xb0] sm:$0xff]
  %v526 = vld [vmem:[%s502 + $0xb8] sm:$0xff]
  %v527 = vld [vmem:[%s502 + $0xc0] sm:$0xff]
  %v528 = vld [vmem:[%s502 + $0xc8] sm:$0xff]
  %v529 = vld [vmem:[%s502 + $0xd0] sm:$0xff]
  %v530 = vld [vmem:[%s502 + $0xd8] sm:$0xff]
  %v531 = vld [vmem:[%s502 + $0xe0] sm:$0xff]
  %v532 = vld [vmem:[%s502 + $0xe8] sm:$0xff]
  %v533 = vld [vmem:[%s502 + $0xf0] sm:$0xff]
  %v534 = vld [vmem:[%s502 + $0xf8] sm:$0xff]
  %v535 = vld [vmem:[%s502 + $0x100] sm:$0xff]
  %v536 = vld [vmem:[%s502 + $0x108] sm:$0xff]
  %v537 = vld [vmem:[%s502 + $0x110] sm:$0xff]
  %v538 = vld [vmem:[%s502 + $0x118] sm:$0xff]
  %v539 = vld [vmem:[%s502 + $0x120] sm:$0xff]
  %v540 = vld [vmem:[%s502 + $0x128] sm:$0xff]
  %v541 = vld [vmem:[%s502 + $0x130] sm:$0xff]
  %v542 = vld [vmem:[%s502 + $0x138] sm:$0xff]
  %v543 = vld [vmem:[%s502 + $0x140] sm:$0xff]
  %v544 = vld [vmem:[%s502 + $0x148] sm:$0xff]
  %v545 = vld [vmem:[%s502 + $0x150] sm:$0xff]
  %v546 = vld [vmem:[%s502 + $0x158] sm:$0xff]
  %v547 = vld [vmem:[%s502 + $0x160] sm:$0xff]
  %v548 = vld [vmem:[%s502 + $0x168] sm:$0xff]
  %v549 = vld [vmem:[%s502 + $0x170] sm:$0xff]
  %v550 = vld [vmem:[%s502 + $0x178] sm:$0xff]
  %v551 = vld [vmem:[%s502 + $0x180] sm:$0xff]
  %v552 = vld [vmem:[%s502 + $0x188] sm:$0xff]
  %v553 = vld [vmem:[%s502 + $0x190] sm:$0xff]
  %v554 = vld [vmem:[%s502 + $0x198] sm:$0xff]
  %v555 = vld [vmem:[%s502 + $0x1a0] sm:$0xff]
  %v556 = vld [vmem:[%s502 + $0x1a8] sm:$0xff]
  %v557 = vld [vmem:[%s502 + $0x1b0] sm:$0xff]
  %v558 = vld [vmem:[%s502 + $0x1b8] sm:$0xff]
  %v559 = vld [vmem:[%s502 + $0x1c0] sm:$0xff]
  %v560 = vld [vmem:[%s502 + $0x1c8] sm:$0xff]
  %v561 = vld [vmem:[%s502 + $0x1d0] sm:$0xff]
  %v562 = vld [vmem:[%s502 + $0x1d8] sm:$0xff]
  %v563 = vld [vmem:[%s502 + $0x1e0] sm:$0xff]
  %v564 = vld [vmem:[%s502 + $0x1e8] sm:$0xff]
  %v565 = vld [vmem:[%s502 + $0x1f0] sm:$0xff]
  %v566 = vld [vmem:[%s502 + $0x1f8] sm:$0xff]
  %v567 = vld [vmem:[%s502 + $0x200] sm:$0xff]
  %v568 = vld [vmem:[%s502 + $0x208] sm:$0xff]
  %v569 = vld [vmem:[%s502 + $0x210] sm:$0xff]
  %v570 = vld [vmem:[%s502 + $0x218] sm:$0xff]
  %v571 = vld [vmem:[%s502 + $0x220] sm:$0xff]
  %v572 = vld [vmem:[%s502 + $0x228] sm:$0xff]
  %v573 = vld [vmem:[%s502 + $0x230] sm:$0xff]
  %v574 = vld [vmem:[%s502 + $0x238] sm:$0xff]
  %v575 = vld [vmem:[%s502 + $0x240] sm:$0xff]
  %v576 = vld [vmem:[%s502 + $0x248] sm:$0xff]
  %v577 = vld [vmem:[%s502 + $0x250] sm:$0xff]
  %v578 = vld [vmem:[%s502 + $0x258] sm:$0xff]
  %v579 = vld [vmem:[%s502 + $0x260] sm:$0xff]
  %v580 = vld [vmem:[%s502 + $0x268] sm:$0xff]
  %v581 = vld [vmem:[%s502 + $0x270] sm:$0xff]
  %v582 = vld [vmem:[%s502 + $0x278] sm:$0xff]
  %v583 = vld [vmem:[%s502 + $0x280] sm:$0xff]
  %v584 = vld [vmem:[%s502 + $0x288] sm:$0xff]
  %v585 = vld [vmem:[%s502 + $0x290] sm:$0xff]
  %v586 = vld [vmem:[%s502 + $0x298] sm:$0xff]
  %v587 = vld [vmem:[%s502 + $0x2a0] sm:$0xff]
  %v588 = vld [vmem:[%s502 + $0x2a8] sm:$0xff]
  %v589 = vld [vmem:[%s502 + $0x2b0] sm:$0xff]
  %v590 = vld [vmem:[%s502 + $0x2b8] sm:$0xff]
  %v591 = vld [vmem:[%s502 + $0x2c0] sm:$0xff]
  %v592 = vld [vmem:[%s502 + $0x2c8] sm:$0xff]
  %v593 = vld [vmem:[%s502 + $0x2d0] sm:$0xff]
  %v594 = vld [vmem:[%s502 + $0x2d8] sm:$0xff]
  %v595 = vld [vmem:[%s502 + $0x2e0] sm:$0xff]
  %v596 = vld [vmem:[%s502 + $0x2e8] sm:$0xff]
  %v597 = vld [vmem:[%s502 + $0x2f0] sm:$0xff]
  %v598 = vld [vmem:[%s502 + $0x2f8] sm:$0xff]
  %v599 = vld [vmem:[%s502 + $0x300] sm:$0xff]
  %v600 = vld [vmem:[%s502 + $0x308] sm:$0xff]
  %v601 = vld [vmem:[%s502 + $0x310] sm:$0xff]
  %v602 = vld [vmem:[%s502 + $0x318] sm:$0xff]
  %v603 = vld [vmem:[%s502 + $0x320] sm:$0xff]
  %v604 = vld [vmem:[%s502 + $0x328] sm:$0xff]
  %v605 = vld [vmem:[%s502 + $0x330] sm:$0xff]
  %v606 = vld [vmem:[%s502 + $0x338] sm:$0xff]
  %v607 = vld [vmem:[%s502 + $0x340] sm:$0xff]
  %v608 = vld [vmem:[%s502 + $0x348] sm:$0xff]
  %v609 = vld [vmem:[%s502 + $0x350] sm:$0xff]
  %v610 = vld [vmem:[%s502 + $0x358] sm:$0xff]
  %v611 = vld [vmem:[%s502 + $0x360] sm:$0xff]
  %v612 = vld [vmem:[%s502 + $0x368] sm:$0xff]
  %v613 = vld [vmem:[%s502 + $0x370] sm:$0xff]
  %v614 = vld [vmem:[%s502 + $0x378] sm:$0xff]
  %v615 = vld [vmem:[%s502 + $0x380] sm:$0xff]
  %v616 = vld [vmem:[%s502 + $0x388] sm:$0xff]
  %v617 = vld [vmem:[%s502 + $0x390] sm:$0xff]
  %v618 = vld [vmem:[%s502 + $0x398] sm:$0xff]
  %v619 = vld [vmem:[%s502 + $0x3a0] sm:$0xff]
  %v620 = vld [vmem:[%s502 + $0x3a8] sm:$0xff]
  %v621 = vld [vmem:[%s502 + $0x3b0] sm:$0xff]
  %v622 = vld [vmem:[%s502 + $0x3b8] sm:$0xff]
  %v623 = vld [vmem:[%s502 + $0x3c0] sm:$0xff]
  %v624 = vld [vmem:[%s502 + $0x3c8] sm:$0xff]
  %v625 = vld [vmem:[%s502 + $0x3d0] sm:$0xff]
  %v626 = vld [vmem:[%s502 + $0x3d8] sm:$0xff]
  %v627 = vld [vmem:[%s502 + $0x3e0] sm:$0xff]
  %v628 = vld [vmem:[%s502 + $0x3e8] sm:$0xff]
  %v629 = vld [vmem:[%s502 + $0x3f0] sm:$0xff]
  %v630 = vld [vmem:[%s502 + $0x3f8] sm:$0xff]
  %v631 = vld [vmem:[%s502 + $0x400] sm:$0xff]
  %v632 = vld [vmem:[%s502 + $0x408] sm:$0xff]
  %v633 = vld [vmem:[%s502 + $0x410] sm:$0xff]
  %v634 = vld [vmem:[%s502 + $0x418] sm:$0xff]
  %v635 = vld [vmem:[%s502 + $0x420] sm:$0xff]
  %v636 = vld [vmem:[%s502 + $0x428] sm:$0xff]
  %v637 = vld [vmem:[%s502 + $0x430] sm:$0xff]
  %v638 = vld [vmem:[%s502 + $0x438] sm:$0xff]
  %v639 = vld [vmem:[%s502 + $0x440] sm:$0xff]
  %v640 = vld [vmem:[%s502 + $0x448] sm:$0xff]
  %v641 = vld [vmem:[%s502 + $0x450] sm:$0xff]
  %v642 = vld [vmem:[%s502 + $0x458] sm:$0xff]
  %v643 = vld [vmem:[%s502 + $0x460] sm:$0xff]
  %v644 = vld [vmem:[%s502 + $0x468] sm:$0xff]
  %v645 = vld [vmem:[%s502 + $0x470] sm:$0xff]
  %v646 = vld [vmem:[%s502 + $0x478] sm:$0xff]
  %v647 = vld [vmem:[%s502 + $0x480] sm:$0xff]
  %v648 = vld [vmem:[%s502 + $0x488] sm:$0xff]
  %v649 = vld [vmem:[%s502 + $0x490] sm:$0xff]
  %v650 = vld [vmem:[%s502 + $0x498] sm:$0xff]
  %v651 = vld [vmem:[%s502 + $0x4a0] sm:$0xff]
  %v652 = vld [vmem:[%s502 + $0x4a8] sm:$0xff]
  %v653 = vld [vmem:[%s502 + $0x4b0] sm:$0xff]
  %v654 = vld [vmem:[%s502 + $0x4b8] sm:$0xff]
  %v655 = vld [vmem:[%s502 + $0x4c0] sm:$0xff]
  %v656 = vld [vmem:[%s502 + $0x4c8] sm:$0xff]
  %v657 = vld [vmem:[%s502 + $0x4d0] sm:$0xff]
  %v658 = vld [vmem:[%s502 + $0x4d8] sm:$0xff]
  %v659 = vld [vmem:[%s502 + $0x4e0] sm:$0xff]
  %v660 = vld [vmem:[%s502 + $0x4e8] sm:$0xff]
  %v661 = vld [vmem:[%s502 + $0x4f0] sm:$0xff]
  %v662 = vld [vmem:[%s502 + $0x4f8] sm:$0xff]
  %v663 = vld [vmem:[%s502 + $0x500] sm:$0xff]
  %v664 = vld [vmem:[%s502 + $0x508] sm:$0xff]
  %v665 = vld [vmem:[%s502 + $0x510] sm:$0xff]
  %v666 = vld [vmem:[%s502 + $0x518] sm:$0xff]
  %v667 = vld [vmem:[%s502 + $0x520] sm:$0xff]
  %v668 = vld [vmem:[%s502 + $0x528] sm:$0xff]
  %v669 = vld [vmem:[%s502 + $0x530] sm:$0xff]
  %v670 = vld [vmem:[%s502 + $0x538] sm:$0xff]
  %v671 = vld [vmem:[%s502 + $0x540] sm:$0xff]
  %v672 = vld [vmem:[%s502 + $0x548] sm:$0xff]
  %v673 = vld [vmem:[%s502 + $0x550] sm:$0xff]
  %v674 = vld [vmem:[%s502 + $0x558] sm:$0xff]
  %v675 = vld [vmem:[%s502 + $0x560] sm:$0xff]
  %v676 = vld [vmem:[%s502 + $0x568] sm:$0xff]
  %v677 = vld [vmem:[%s502 + $0x570] sm:$0xff]
  %v678 = vld [vmem:[%s502 + $0x578] sm:$0xff]
  %v679 = vld [vmem:[%s502 + $0x580] sm:$0xff]
  %v680 = vld [vmem:[%s502 + $0x588] sm:$0xff]
  %v681 = vld [vmem:[%s502 + $0x590] sm:$0xff]
  %v682 = vld [vmem:[%s502 + $0x598] sm:$0xff]
  %v683 = vld [vmem:[%s502 + $0x5a0] sm:$0xff]
  %v684 = vld [vmem:[%s502 + $0x5a8] sm:$0xff]
  %v685 = vld [vmem:[%s502 + $0x5b0] sm:$0xff]
  %v686 = vld [vmem:[%s502 + $0x5b8] sm:$0xff]
  %v687 = vld [vmem:[%s502 + $0x5c0] sm:$0xff]
  %v688 = vld [vmem:[%s502 + $0x5c8] sm:$0xff]
  %v689 = vld [vmem:[%s502 + $0x5d0] sm:$0xff]
  %v690 = vld [vmem:[%s502 + $0x5d8] sm:$0xff]
  %v691 = vld [vmem:[%s502 + $0x5e0] sm:$0xff]
  %v692 = vld [vmem:[%s502 + $0x5e8] sm:$0xff]
  %v693 = vld [vmem:[%s502 + $0x5f0] sm:$0xff]
  %v694 = vld [vmem:[%s502 + $0x5f8] sm:$0xff]
  %v695 = vld [vmem:[%s502 + $0x600] sm:$0xff]
  %v696 = vld [vmem:[%s502 + $0x608] sm:$0xff]
  %v697 = vld [vmem:[%s502 + $0x610] sm:$0xff]
  %v698 = vld [vmem:[%s502 + $0x618] sm:$0xff]
  %v699 = vld [vmem:[%s502 + $0x620] sm:$0xff]
  %v700 = vld [vmem:[%s502 + $0x628] sm:$0xff]
  %v701 = vld [vmem:[%s502 + $0x630] sm:$0xff]
  %v702 = vld [vmem:[%s502 + $0x638] sm:$0xff]
  %v703 = vld [vmem:[%s502 + $0x640] sm:$0xff]
  %v704 = vld [vmem:[%s502 + $0x648] sm:$0xff]
  %v705 = vld [vmem:[%s502 + $0x650] sm:$0xff]
  %v706 = vld [vmem:[%s502 + $0x658] sm:$0xff]
  %v707 = vld [vmem:[%s502 + $0x660] sm:$0xff]
  %v708 = vld [vmem:[%s502 + $0x668] sm:$0xff]
  %v709 = vld [vmem:[%s502 + $0x670] sm:$0xff]
  %v710 = vld [vmem:[%s502 + $0x678] sm:$0xff]
  %v711 = vld [vmem:[%s502 + $0x680] sm:$0xff]
  %v712 = vld [vmem:[%s502 + $0x688] sm:$0xff]
  %v713 = vld [vmem:[%s502 + $0x690] sm:$0xff]
  %v714 = vld [vmem:[%s502 + $0x698] sm:$0xff]
  %v715 = vld [vmem:[%s502 + $0x6a0] sm:$0xff]
  %v716 = vld [vmem:[%s502 + $0x6a8] sm:$0xff]
  %v717 = vld [vmem:[%s502 + $0x6b0] sm:$0xff]
  %v718 = vld [vmem:[%s502 + $0x6b8] sm:$0xff]
  %v719 = vld [vmem:[%s502 + $0x6c0] sm:$0xff]
  %v720 = vld [vmem:[%s502 + $0x6c8] sm:$0xff]
  %v721 = vld [vmem:[%s502 + $0x6d0] sm:$0xff]
  %v722 = vld [vmem:[%s502 + $0x6d8] sm:$0xff]
  %v723 = vld [vmem:[%s502 + $0x6e0] sm:$0xff]
  %v724 = vld [vmem:[%s502 + $0x6e8] sm:$0xff]
  %v725 = vld [vmem:[%s502 + $0x6f0] sm:$0xff]
  %v726 = vld [vmem:[%s502 + $0x6f8] sm:$0xff]
  %v727 = vld [vmem:[%s502 + $0x700] sm:$0xff]
  %v728 = vld [vmem:[%s502 + $0x708] sm:$0xff]
  %v729 = vld [vmem:[%s502 + $0x710] sm:$0xff]
  %v730 = vld [vmem:[%s502 + $0x718] sm:$0xff]
  %v731 = vld [vmem:[%s502 + $0x720] sm:$0xff]
  %v732 = vld [vmem:[%s502 + $0x728] sm:$0xff]
  %v733 = vld [vmem:[%s502 + $0x730] sm:$0xff]
  %v734 = vld [vmem:[%s502 + $0x738] sm:$0xff]
  %v735 = vld [vmem:[%s502 + $0x740] sm:$0xff]
  %v736 = vld [vmem:[%s502 + $0x748] sm:$0xff]
  %v737 = vld [vmem:[%s502 + $0x750] sm:$0xff]
  %v738 = vld [vmem:[%s502 + $0x758] sm:$0xff]
  %v739 = vld [vmem:[%s502 + $0x760] sm:$0xff]
  %v740 = vld [vmem:[%s502 + $0x768] sm:$0xff]
  %v741 = vld [vmem:[%s502 + $0x770] sm:$0xff]
  %v742 = vld [vmem:[%s502 + $0x778] sm:$0xff]
  %v743 = vld [vmem:[%s502 + $0x780] sm:$0xff]
  %v744 = vld [vmem:[%s502 + $0x788] sm:$0xff]
  %v745 = vld [vmem:[%s502 + $0x790] sm:$0xff]
  %v746 = vld [vmem:[%s502 + $0x798] sm:$0xff]
  %v747 = vld [vmem:[%s502 + $0x7a0] sm:$0xff]
  %v748 = vld [vmem:[%s502 + $0x7a8] sm:$0xff]
  %v749 = vld [vmem:[%s502 + $0x7b0] sm:$0xff]
  %v750 = vld [vmem:[%s502 + $0x7b8] sm:$0xff]
  %v751 = vld [vmem:[%s502 + $0x7c0] sm:$0xff]
  %v752 = vld [vmem:[%s502 + $0x7c8] sm:$0xff]
  %v753 = vld [vmem:[%s502 + $0x7d0] sm:$0xff]
  %v754 = vld [vmem:[%s502 + $0x7d8] sm:$0xff]
  %v755 = vld [vmem:[%s502 + $0x7e0] sm:$0xff]
  %v756 = vld [vmem:[%s502 + $0x7e8] sm:$0xff]
  %v757 = vld [vmem:[%s502 + $0x7f0] sm:$0xff]
  %v758 = vld [vmem:[%s502 + $0x7f8] sm:$0xff]
  %v767 = vunpack.c.l.b16 %v494
  %v768 = vunpack.c.h.b16 %v494
  %v769 = vunpack.c.l.b16 %v495
  %v770 = vunpack.c.h.b16 %v495
  %v771 = vunpack.c.l.b16 %v496
  %v772 = vunpack.c.h.b16 %v496
  %v773 = vunpack.c.l.b16 %v497
  %v774 = vunpack.c.h.b16 %v497
  %v775 = vunpack.c.l.b16 %v498
  %v776 = vunpack.c.h.b16 %v498
  %v777 = vunpack.c.l.b16 %v499
  %v778 = vunpack.c.h.b16 %v499
  %v779 = vunpack.c.l.b16 %v500
  %v780 = vunpack.c.h.b16 %v500
  %v781 = vunpack.c.l.b16 %v501
  %v782 = vunpack.c.h.b16 %v501
  %v783 = vpack.c.b16 %v775, %v767
  %v784 = vpack.c.b16 %v776, %v768
  %v785 = vpack.c.b16 %v777, %v769
  %v786 = vpack.c.b16 %v778, %v770
  %v787 = vpack.c.b16 %v779, %v771
  %v788 = vpack.c.b16 %v780, %v772
  %v789 = vpack.c.b16 %v781, %v773
  %v790 = vpack.c.b16 %v782, %v774
  %v1055 = vunpack.c.l.b16 %v503
  %v1056 = vunpack.c.h.b16 %v503
  %v1057 = vunpack.c.l.b16 %v504
  %v1058 = vunpack.c.h.b16 %v504
  %v1059 = vunpack.c.l.b16 %v505
  %v1060 = vunpack.c.h.b16 %v505
  %v1061 = vunpack.c.l.b16 %v506
  %v1062 = vunpack.c.h.b16 %v506
  %v1063 = vunpack.c.l.b16 %v507
  %v1064 = vunpack.c.h.b16 %v507
  %v1065 = vunpack.c.l.b16 %v508
  %v1066 = vunpack.c.h.b16 %v508
  %v1067 = vunpack.c.l.b16 %v509
  %v1068 = vunpack.c.h.b16 %v509
  %v1069 = vunpack.c.l.b16 %v510
  %v1070 = vunpack.c.h.b16 %v510
  %v1071 = vunpack.c.l.b16 %v511
  %v1072 = vunpack.c.h.b16 %v511
  %v1073 = vunpack.c.l.b16 %v512
  %v1074 = vunpack.c.h.b16 %v512
  %v1075 = vunpack.c.l.b16 %v513
  %v1076 = vunpack.c.h.b16 %v513
  %v1077 = vunpack.c.l.b16 %v514
  %v1078 = vunpack.c.h.b16 %v514
  %v1079 = vunpack.c.l.b16 %v515
  %v1080 = vunpack.c.h.b16 %v515
  %v1081 = vunpack.c.l.b16 %v516
  %v1082 = vunpack.c.h.b16 %v516
  %v1083 = vunpack.c.l.b16 %v517
  %v1084 = vunpack.c.h.b16 %v517
  %v1085 = vunpack.c.l.b16 %v518
  %v1086 = vunpack.c.h.b16 %v518
  %v1087 = vunpack.c.l.b16 %v519
  %v1088 = vunpack.c.h.b16 %v519
  %v1089 = vunpack.c.l.b16 %v520
  %v1090 = vunpack.c.h.b16 %v520
  %v1091 = vunpack.c.l.b16 %v521
  %v1092 = vunpack.c.h.b16 %v521
  %v1093 = vunpack.c.l.b16 %v522
  %v1094 = vunpack.c.h.b16 %v522
  %v1095 = vunpack.c.l.b16 %v523
  %v1096 = vunpack.c.h.b16 %v523
  %v1097 = vunpack.c.l.b16 %v524
  %v1098 = vunpack.c.h.b16 %v524
  %v1099 = vunpack.c.l.b16 %v525
  %v1100 = vunpack.c.h.b16 %v525
  %v1101 = vunpack.c.l.b16 %v526
  %v1102 = vunpack.c.h.b16 %v526
  %v1103 = vunpack.c.l.b16 %v527
  %v1104 = vunpack.c.h.b16 %v527
  %v1105 = vunpack.c.l.b16 %v528
  %v1106 = vunpack.c.h.b16 %v528
  %v1107 = vunpack.c.l.b16 %v529
  %v1108 = vunpack.c.h.b16 %v529
  %v1109 = vunpack.c.l.b16 %v530
  %v1110 = vunpack.c.h.b16 %v530
  %v1111 = vunpack.c.l.b16 %v531
  %v1112 = vunpack.c.h.b16 %v531
  %v1113 = vunpack.c.l.b16 %v532
  %v1114 = vunpack.c.h.b16 %v532
  %v1115 = vunpack.c.l.b16 %v533
  %v1116 = vunpack.c.h.b16 %v533
  %v1117 = vunpack.c.l.b16 %v534
  %v1118 = vunpack.c.h.b16 %v534
  %v1119 = vunpack.c.l.b16 %v535
  %v1120 = vunpack.c.h.b16 %v535
  %v1121 = vunpack.c.l.b16 %v536
  %v1122 = vunpack.c.h.b16 %v536
  %v1123 = vunpack.c.l.b16 %v537
  %v1124 = vunpack.c.h.b16 %v537
  %v1125 = vunpack.c.l.b16 %v538
  %v1126 = vunpack.c.h.b16 %v538
  %v1127 = vunpack.c.l.b16 %v539
  %v1128 = vunpack.c.h.b16 %v539
  %v1129 = vunpack.c.l.b16 %v540
  %v1130 = vunpack.c.h.b16 %v540
  %v1131 = vunpack.c.l.b16 %v541
  %v1132 = vunpack.c.h.b16 %v541
  %v1133 = vunpack.c.l.b16 %v542
  %v1134 = vunpack.c.h.b16 %v542
  %v1135 = vunpack.c.l.b16 %v543
  %v1136 = vunpack.c.h.b16 %v543
  %v1137 = vunpack.c.l.b16 %v544
  %v1138 = vunpack.c.h.b16 %v544
  %v1139 = vunpack.c.l.b16 %v545
  %v1140 = vunpack.c.h.b16 %v545
  %v1141 = vunpack.c.l.b16 %v546
  %v1142 = vunpack.c.h.b16 %v546
  %v1143 = vunpack.c.l.b16 %v547
  %v1144 = vunpack.c.h.b16 %v547
  %v1145 = vunpack.c.l.b16 %v548
  %v1146 = vunpack.c.h.b16 %v548
  %v1147 = vunpack.c.l.b16 %v549
  %v1148 = vunpack.c.h.b16 %v549
  %v1149 = vunpack.c.l.b16 %v550
  %v1150 = vunpack.c.h.b16 %v550
  %v1151 = vunpack.c.l.b16 %v551
  %v1152 = vunpack.c.h.b16 %v551
  %v1153 = vunpack.c.l.b16 %v552
  %v1154 = vunpack.c.h.b16 %v552
  %v1155 = vunpack.c.l.b16 %v553
  %v1156 = vunpack.c.h.b16 %v553
  %v1157 = vunpack.c.l.b16 %v554
  %v1158 = vunpack.c.h.b16 %v554
  %v1159 = vunpack.c.l.b16 %v555
  %v1160 = vunpack.c.h.b16 %v555
  %v1161 = vunpack.c.l.b16 %v556
  %v1162 = vunpack.c.h.b16 %v556
  %v1163 = vunpack.c.l.b16 %v557
  %v1164 = vunpack.c.h.b16 %v557
  %v1165 = vunpack.c.l.b16 %v558
  %v1166 = vunpack.c.h.b16 %v558
  %v1167 = vunpack.c.l.b16 %v559
  %v1168 = vunpack.c.h.b16 %v559
  %v1169 = vunpack.c.l.b16 %v560
  %v1170 = vunpack.c.h.b16 %v560
  %v1171 = vunpack.c.l.b16 %v561
  %v1172 = vunpack.c.h.b16 %v561
  %v1173 = vunpack.c.l.b16 %v562
  %v1174 = vunpack.c.h.b16 %v562
  %v1175 = vunpack.c.l.b16 %v563
  %v1176 = vunpack.c.h.b16 %v563
  %v1177 = vunpack.c.l.b16 %v564
  %v1178 = vunpack.c.h.b16 %v564
  %v1179 = vunpack.c.l.b16 %v565
  %v1180 = vunpack.c.h.b16 %v565
  %v1181 = vunpack.c.l.b16 %v566
  %v1182 = vunpack.c.h.b16 %v566
  %v1183 = vunpack.c.l.b16 %v567
  %v1184 = vunpack.c.h.b16 %v567
  %v1185 = vunpack.c.l.b16 %v568
  %v1186 = vunpack.c.h.b16 %v568
  %v1187 = vunpack.c.l.b16 %v569
  %v1188 = vunpack.c.h.b16 %v569
  %v1189 = vunpack.c.l.b16 %v570
  %v1190 = vunpack.c.h.b16 %v570
  %v1191 = vunpack.c.l.b16 %v571
  %v1192 = vunpack.c.h.b16 %v571
  %v1193 = vunpack.c.l.b16 %v572
  %v1194 = vunpack.c.h.b16 %v572
  %v1195 = vunpack.c.l.b16 %v573
  %v1196 = vunpack.c.h.b16 %v573
  %v1197 = vunpack.c.l.b16 %v574
  %v1198 = vunpack.c.h.b16 %v574
  %v1199 = vunpack.c.l.b16 %v575
  %v1200 = vunpack.c.h.b16 %v575
  %v1201 = vunpack.c.l.b16 %v576
  %v1202 = vunpack.c.h.b16 %v576
  %v1203 = vunpack.c.l.b16 %v577
  %v1204 = vunpack.c.h.b16 %v577
  %v1205 = vunpack.c.l.b16 %v578
  %v1206 = vunpack.c.h.b16 %v578
  %v1207 = vunpack.c.l.b16 %v579
  %v1208 = vunpack.c.h.b16 %v579
  %v1209 = vunpack.c.l.b16 %v580
  %v1210 = vunpack.c.h.b16 %v580
  %v1211 = vunpack.c.l.b16 %v581
  %v1212 = vunpack.c.h.b16 %v581
  %v1213 = vunpack.c.l.b16 %v582
  %v1214 = vunpack.c.h.b16 %v582
  %v1215 = vunpack.c.l.b16 %v583
  %v1216 = vunpack.c.h.b16 %v583
  %v1217 = vunpack.c.l.b16 %v584
  %v1218 = vunpack.c.h.b16 %v584
  %v1219 = vunpack.c.l.b16 %v585
  %v1220 = vunpack.c.h.b16 %v585
  %v1221 = vunpack.c.l.b16 %v586
  %v1222 = vunpack.c.h.b16 %v586
  %v1223 = vunpack.c.l.b16 %v587
  %v1224 = vunpack.c.h.b16 %v587
  %v1225 = vunpack.c.l.b16 %v588
  %v1226 = vunpack.c.h.b16 %v588
  %v1227 = vunpack.c.l.b16 %v589
  %v1228 = vunpack.c.h.b16 %v589
  %v1229 = vunpack.c.l.b16 %v590
  %v1230 = vunpack.c.h.b16 %v590
  %v1231 = vunpack.c.l.b16 %v591
  %v1232 = vunpack.c.h.b16 %v591
  %v1233 = vunpack.c.l.b16 %v592
  %v1234 = vunpack.c.h.b16 %v592
  %v1235 = vunpack.c.l.b16 %v593
  %v1236 = vunpack.c.h.b16 %v593
  %v1237 = vunpack.c.l.b16 %v594
  %v1238 = vunpack.c.h.b16 %v594
  %v1239 = vunpack.c.l.b16 %v595
  %v1240 = vunpack.c.h.b16 %v595
  %v1241 = vunpack.c.l.b16 %v596
  %v1242 = vunpack.c.h.b16 %v596
  %v1243 = vunpack.c.l.b16 %v597
  %v1244 = vunpack.c.h.b16 %v597
  %v1245 = vunpack.c.l.b16 %v598
  %v1246 = vunpack.c.h.b16 %v598
  %v1247 = vunpack.c.l.b16 %v599
  %v1248 = vunpack.c.h.b16 %v599
  %v1249 = vunpack.c.l.b16 %v600
  %v1250 = vunpack.c.h.b16 %v600
  %v1251 = vunpack.c.l.b16 %v601
  %v1252 = vunpack.c.h.b16 %v601
  %v1253 = vunpack.c.l.b16 %v602
  %v1254 = vunpack.c.h.b16 %v602
  %v1255 = vunpack.c.l.b16 %v603
  %v1256 = vunpack.c.h.b16 %v603
  %v1257 = vunpack.c.l.b16 %v604
  %v1258 = vunpack.c.h.b16 %v604
  %v1259 = vunpack.c.l.b16 %v605
  %v1260 = vunpack.c.h.b16 %v605
  %v1261 = vunpack.c.l.b16 %v606
  %v1262 = vunpack.c.h.b16 %v606
  %v1263 = vunpack.c.l.b16 %v607
  %v1264 = vunpack.c.h.b16 %v607
  %v1265 = vunpack.c.l.b16 %v608
  %v1266 = vunpack.c.h.b16 %v608
  %v1267 = vunpack.c.l.b16 %v609
  %v1268 = vunpack.c.h.b16 %v609
  %v1269 = vunpack.c.l.b16 %v610
  %v1270 = vunpack.c.h.b16 %v610
  %v1271 = vunpack.c.l.b16 %v611
  %v1272 = vunpack.c.h.b16 %v611
  %v1273 = vunpack.c.l.b16 %v612
  %v1274 = vunpack.c.h.b16 %v612
  %v1275 = vunpack.c.l.b16 %v613
  %v1276 = vunpack.c.h.b16 %v613
  %v1277 = vunpack.c.l.b16 %v614
  %v1278 = vunpack.c.h.b16 %v614
  %v1279 = vunpack.c.l.b16 %v615
  %v1280 = vunpack.c.h.b16 %v615
  %v1281 = vunpack.c.l.b16 %v616
  %v1282 = vunpack.c.h.b16 %v616
  %v1283 = vunpack.c.l.b16 %v617
  %v1284 = vunpack.c.h.b16 %v617
  %v1285 = vunpack.c.l.b16 %v618
  %v1286 = vunpack.c.h.b16 %v618
  %v1287 = vunpack.c.l.b16 %v619
  %v1288 = vunpack.c.h.b16 %v619
  %v1289 = vunpack.c.l.b16 %v620
  %v1290 = vunpack.c.h.b16 %v620
  %v1291 = vunpack.c.l.b16 %v621
  %v1292 = vunpack.c.h.b16 %v621
  %v1293 = vunpack.c.l.b16 %v622
  %v1294 = vunpack.c.h.b16 %v622
  %v1295 = vunpack.c.l.b16 %v623
  %v1296 = vunpack.c.h.b16 %v623
  %v1297 = vunpack.c.l.b16 %v624
  %v1298 = vunpack.c.h.b16 %v624
  %v1299 = vunpack.c.l.b16 %v625
  %v1300 = vunpack.c.h.b16 %v625
  %v1301 = vunpack.c.l.b16 %v626
  %v1302 = vunpack.c.h.b16 %v626
  %v1303 = vunpack.c.l.b16 %v627
  %v1304 = vunpack.c.h.b16 %v627
  %v1305 = vunpack.c.l.b16 %v628
  %v1306 = vunpack.c.h.b16 %v628
  %v1307 = vunpack.c.l.b16 %v629
  %v1308 = vunpack.c.h.b16 %v629
  %v1309 = vunpack.c.l.b16 %v630
  %v1310 = vunpack.c.h.b16 %v630
  %v1311 = vunpack.c.l.b16 %v631
  %v1312 = vunpack.c.h.b16 %v631
  %v1313 = vunpack.c.l.b16 %v632
  %v1314 = vunpack.c.h.b16 %v632
  %v1315 = vunpack.c.l.b16 %v633
  %v1316 = vunpack.c.h.b16 %v633
  %v1317 = vunpack.c.l.b16 %v634
  %v1318 = vunpack.c.h.b16 %v634
  %v1319 = vunpack.c.l.b16 %v635
  %v1320 = vunpack.c.h.b16 %v635
  %v1321 = vunpack.c.l.b16 %v636
  %v1322 = vunpack.c.h.b16 %v636
  %v1323 = vunpack.c.l.b16 %v637
  %v1324 = vunpack.c.h.b16 %v637
  %v1325 = vunpack.c.l.b16 %v638
  %v1326 = vunpack.c.h.b16 %v638
  %v1327 = vunpack.c.l.b16 %v639
  %v1328 = vunpack.c.h.b16 %v639
  %v1329 = vunpack.c.l.b16 %v640
  %v1330 = vunpack.c.h.b16 %v640
  %v1331 = vunpack.c.l.b16 %v641
  %v1332 = vunpack.c.h.b16 %v641
  %v1333 = vunpack.c.l.b16 %v642
  %v1334 = vunpack.c.h.b16 %v642
  %v1335 = vunpack.c.l.b16 %v643
  %v1336 = vunpack.c.h.b16 %v643
  %v1337 = vunpack.c.l.b16 %v644
  %v1338 = vunpack.c.h.b16 %v644
  %v1339 = vunpack.c.l.b16 %v645
  %v1340 = vunpack.c.h.b16 %v645
  %v1341 = vunpack.c.l.b16 %v646
  %v1342 = vunpack.c.h.b16 %v646
  %v1343 = vunpack.c.l.b16 %v647
  %v1344 = vunpack.c.h.b16 %v647
  %v1345 = vunpack.c.l.b16 %v648
  %v1346 = vunpack.c.h.b16 %v648
  %v1347 = vunpack.c.l.b16 %v649
  %v1348 = vunpack.c.h.b16 %v649
  %v1349 = vunpack.c.l.b16 %v650
  %v1350 = vunpack.c.h.b16 %v650
  %v1351 = vunpack.c.l.b16 %v651
  %v1352 = vunpack.c.h.b16 %v651
  %v1353 = vunpack.c.l.b16 %v652
  %v1354 = vunpack.c.h.b16 %v652
  %v1355 = vunpack.c.l.b16 %v653
  %v1356 = vunpack.c.h.b16 %v653
  %v1357 = vunpack.c.l.b16 %v654
  %v1358 = vunpack.c.h.b16 %v654
  %v1359 = vunpack.c.l.b16 %v655
  %v1360 = vunpack.c.h.b16 %v655
  %v1361 = vunpack.c.l.b16 %v656
  %v1362 = vunpack.c.h.b16 %v656
  %v1363 = vunpack.c.l.b16 %v657
  %v1364 = vunpack.c.h.b16 %v657
  %v1365 = vunpack.c.l.b16 %v658
  %v1366 = vunpack.c.h.b16 %v658
  %v1367 = vunpack.c.l.b16 %v659
  %v1368 = vunpack.c.h.b16 %v659
  %v1369 = vunpack.c.l.b16 %v660
  %v1370 = vunpack.c.h.b16 %v660
  %v1371 = vunpack.c.l.b16 %v661
  %v1372 = vunpack.c.h.b16 %v661
  %v1373 = vunpack.c.l.b16 %v662
  %v1374 = vunpack.c.h.b16 %v662
  %v1375 = vunpack.c.l.b16 %v663
  %v1376 = vunpack.c.h.b16 %v663
  %v1377 = vunpack.c.l.b16 %v664
  %v1378 = vunpack.c.h.b16 %v664
  %v1379 = vunpack.c.l.b16 %v665
  %v1380 = vunpack.c.h.b16 %v665
  %v1381 = vunpack.c.l.b16 %v666
  %v1382 = vunpack.c.h.b16 %v666
  %v1383 = vunpack.c.l.b16 %v667
  %v1384 = vunpack.c.h.b16 %v667
  %v1385 = vunpack.c.l.b16 %v668
  %v1386 = vunpack.c.h.b16 %v668
  %v1387 = vunpack.c.l.b16 %v669
  %v1388 = vunpack.c.h.b16 %v669
  %v1389 = vunpack.c.l.b16 %v670
  %v1390 = vunpack.c.h.b16 %v670
  %v1391 = vunpack.c.l.b16 %v671
  %v1392 = vunpack.c.h.b16 %v671
  %v1393 = vunpack.c.l.b16 %v672
  %v1394 = vunpack.c.h.b16 %v672
  %v1395 = vunpack.c.l.b16 %v673
  %v1396 = vunpack.c.h.b16 %v673
  %v1397 = vunpack.c.l.b16 %v674
  %v1398 = vunpack.c.h.b16 %v674
  %v1399 = vunpack.c.l.b16 %v675
  %v1400 = vunpack.c.h.b16 %v675
  %v1401 = vunpack.c.l.b16 %v676
  %v1402 = vunpack.c.h.b16 %v676
  %v1403 = vunpack.c.l.b16 %v677
  %v1404 = vunpack.c.h.b16 %v677
  %v1405 = vunpack.c.l.b16 %v678
  %v1406 = vunpack.c.h.b16 %v678
  %v1407 = vunpack.c.l.b16 %v679
  %v1408 = vunpack.c.h.b16 %v679
  %v1409 = vunpack.c.l.b16 %v680
  %v1410 = vunpack.c.h.b16 %v680
  %v1411 = vunpack.c.l.b16 %v681
  %v1412 = vunpack.c.h.b16 %v681
  %v1413 = vunpack.c.l.b16 %v682
  %v1414 = vunpack.c.h.b16 %v682
  %v1415 = vunpack.c.l.b16 %v683
  %v1416 = vunpack.c.h.b16 %v683
  %v1417 = vunpack.c.l.b16 %v684
  %v1418 = vunpack.c.h.b16 %v684
  %v1419 = vunpack.c.l.b16 %v685
  %v1420 = vunpack.c.h.b16 %v685
  %v1421 = vunpack.c.l.b16 %v686
  %v1422 = vunpack.c.h.b16 %v686
  %v1423 = vunpack.c.l.b16 %v687
  %v1424 = vunpack.c.h.b16 %v687
  %v1425 = vunpack.c.l.b16 %v688
  %v1426 = vunpack.c.h.b16 %v688
  %v1427 = vunpack.c.l.b16 %v689
  %v1428 = vunpack.c.h.b16 %v689
  %v1429 = vunpack.c.l.b16 %v690
  %v1430 = vunpack.c.h.b16 %v690
  %v1431 = vunpack.c.l.b16 %v691
  %v1432 = vunpack.c.h.b16 %v691
  %v1433 = vunpack.c.l.b16 %v692
  %v1434 = vunpack.c.h.b16 %v692
  %v1435 = vunpack.c.l.b16 %v693
  %v1436 = vunpack.c.h.b16 %v693
  %v1437 = vunpack.c.l.b16 %v694
  %v1438 = vunpack.c.h.b16 %v694
  %v1439 = vunpack.c.l.b16 %v695
  %v1440 = vunpack.c.h.b16 %v695
  %v1441 = vunpack.c.l.b16 %v696
  %v1442 = vunpack.c.h.b16 %v696
  %v1443 = vunpack.c.l.b16 %v697
  %v1444 = vunpack.c.h.b16 %v697
  %v1445 = vunpack.c.l.b16 %v698
  %v1446 = vunpack.c.h.b16 %v698
  %v1447 = vunpack.c.l.b16 %v699
  %v1448 = vunpack.c.h.b16 %v699
  %v1449 = vunpack.c.l.b16 %v700
  %v1450 = vunpack.c.h.b16 %v700
  %v1451 = vunpack.c.l.b16 %v701
  %v1452 = vunpack.c.h.b16 %v701
  %v1453 = vunpack.c.l.b16 %v702
  %v1454 = vunpack.c.h.b16 %v702
  %v1455 = vunpack.c.l.b16 %v703
  %v1456 = vunpack.c.h.b16 %v703
  %v1457 = vunpack.c.l.b16 %v704
  %v1458 = vunpack.c.h.b16 %v704
  %v1459 = vunpack.c.l.b16 %v705
  %v1460 = vunpack.c.h.b16 %v705
  %v1461 = vunpack.c.l.b16 %v706
  %v1462 = vunpack.c.h.b16 %v706
  %v1463 = vunpack.c.l.b16 %v707
  %v1464 = vunpack.c.h.b16 %v707
  %v1465 = vunpack.c.l.b16 %v708
  %v1466 = vunpack.c.h.b16 %v708
  %v1467 = vunpack.c.l.b16 %v709
  %v1468 = vunpack.c.h.b16 %v709
  %v1469 = vunpack.c.l.b16 %v710
  %v1470 = vunpack.c.h.b16 %v710
  %v1471 = vunpack.c.l.b16 %v711
  %v1472 = vunpack.c.h.b16 %v711
  %v1473 = vunpack.c.l.b16 %v712
  %v1474 = vunpack.c.h.b16 %v712
  %v1475 = vunpack.c.l.b16 %v713
  %v1476 = vunpack.c.h.b16 %v713
  %v1477 = vunpack.c.l.b16 %v714
  %v1478 = vunpack.c.h.b16 %v714
  %v1479 = vunpack.c.l.b16 %v715
  %v1480 = vunpack.c.h.b16 %v715
  %v1481 = vunpack.c.l.b16 %v716
  %v1482 = vunpack.c.h.b16 %v716
  %v1483 = vunpack.c.l.b16 %v717
  %v1484 = vunpack.c.h.b16 %v717
  %v1485 = vunpack.c.l.b16 %v718
  %v1486 = vunpack.c.h.b16 %v718
  %v1487 = vunpack.c.l.b16 %v719
  %v1488 = vunpack.c.h.b16 %v719
  %v1489 = vunpack.c.l.b16 %v720
  %v1490 = vunpack.c.h.b16 %v720
  %v1491 = vunpack.c.l.b16 %v721
  %v1492 = vunpack.c.h.b16 %v721
  %v1493 = vunpack.c.l.b16 %v722
  %v1494 = vunpack.c.h.b16 %v722
  %v1495 = vunpack.c.l.b16 %v723
  %v1496 = vunpack.c.h.b16 %v723
  %v1497 = vunpack.c.l.b16 %v724
  %v1498 = vunpack.c.h.b16 %v724
  %v1499 = vunpack.c.l.b16 %v725
  %v1500 = vunpack.c.h.b16 %v725
  %v1501 = vunpack.c.l.b16 %v726
  %v1502 = vunpack.c.h.b16 %v726
  %v1503 = vunpack.c.l.b16 %v727
  %v1504 = vunpack.c.h.b16 %v727
  %v1505 = vunpack.c.l.b16 %v728
  %v1506 = vunpack.c.h.b16 %v728
  %v1507 = vunpack.c.l.b16 %v729
  %v1508 = vunpack.c.h.b16 %v729
  %v1509 = vunpack.c.l.b16 %v730
  %v1510 = vunpack.c.h.b16 %v730
  %v1511 = vunpack.c.l.b16 %v731
  %v1512 = vunpack.c.h.b16 %v731
  %v1513 = vunpack.c.l.b16 %v732
  %v1514 = vunpack.c.h.b16 %v732
  %v1515 = vunpack.c.l.b16 %v733
  %v1516 = vunpack.c.h.b16 %v733
  %v1517 = vunpack.c.l.b16 %v734
  %v1518 = vunpack.c.h.b16 %v734
  %v1519 = vunpack.c.l.b16 %v735
  %v1520 = vunpack.c.h.b16 %v735
  %v1521 = vunpack.c.l.b16 %v736
  %v1522 = vunpack.c.h.b16 %v736
  %v1523 = vunpack.c.l.b16 %v737
  %v1524 = vunpack.c.h.b16 %v737
  %v1525 = vunpack.c.l.b16 %v738
  %v1526 = vunpack.c.h.b16 %v738
  %v1527 = vunpack.c.l.b16 %v739
  %v1528 = vunpack.c.h.b16 %v739
  %v1529 = vunpack.c.l.b16 %v740
  %v1530 = vunpack.c.h.b16 %v740
  %v1531 = vunpack.c.l.b16 %v741
  %v1532 = vunpack.c.h.b16 %v741
  %v1533 = vunpack.c.l.b16 %v742
  %v1534 = vunpack.c.h.b16 %v742
  %v1535 = vunpack.c.l.b16 %v743
  %v1536 = vunpack.c.h.b16 %v743
  %v1537 = vunpack.c.l.b16 %v744
  %v1538 = vunpack.c.h.b16 %v744
  %v1539 = vunpack.c.l.b16 %v745
  %v1540 = vunpack.c.h.b16 %v745
  %v1541 = vunpack.c.l.b16 %v746
  %v1542 = vunpack.c.h.b16 %v746
  %v1543 = vunpack.c.l.b16 %v747
  %v1544 = vunpack.c.h.b16 %v747
  %v1545 = vunpack.c.l.b16 %v748
  %v1546 = vunpack.c.h.b16 %v748
  %v1547 = vunpack.c.l.b16 %v749
  %v1548 = vunpack.c.h.b16 %v749
  %v1549 = vunpack.c.l.b16 %v750
  %v1550 = vunpack.c.h.b16 %v750
  %v1551 = vunpack.c.l.b16 %v751
  %v1552 = vunpack.c.h.b16 %v751
  %v1553 = vunpack.c.l.b16 %v752
  %v1554 = vunpack.c.h.b16 %v752
  %v1555 = vunpack.c.l.b16 %v753
  %v1556 = vunpack.c.h.b16 %v753
  %v1557 = vunpack.c.l.b16 %v754
  %v1558 = vunpack.c.h.b16 %v754
  %v1559 = vunpack.c.l.b16 %v755
  %v1560 = vunpack.c.h.b16 %v755
  %v1561 = vunpack.c.l.b16 %v756
  %v1562 = vunpack.c.h.b16 %v756
  %v1563 = vunpack.c.l.b16 %v757
  %v1564 = vunpack.c.h.b16 %v757
  %v1565 = vunpack.c.l.b16 %v758
  %v1566 = vunpack.c.h.b16 %v758
  %v1567 = vpack.c.b16 %v1059, %v1055
  %v1568 = vpack.c.b16 %v1060, %v1056
  %v1569 = vpack.c.b16 %v1061, %v1057
  %v1570 = vpack.c.b16 %v1062, %v1058
  %v1571 = vpack.c.b16 %v1067, %v1063
  %v1572 = vpack.c.b16 %v1068, %v1064
  %v1573 = vpack.c.b16 %v1069, %v1065
  %v1574 = vpack.c.b16 %v1070, %v1066
  %v1575 = vpack.c.b16 %v1075, %v1071
  %v1576 = vpack.c.b16 %v1076, %v1072
  %v1577 = vpack.c.b16 %v1077, %v1073
  %v1578 = vpack.c.b16 %v1078, %v1074
  %v1579 = vpack.c.b16 %v1083, %v1079
  %v1580 = vpack.c.b16 %v1084, %v1080
  %v1581 = vpack.c.b16 %v1085, %v1081
  %v1582 = vpack.c.b16 %v1086, %v1082
  %v1583 = vpack.c.b16 %v1091, %v1087
  %v1584 = vpack.c.b16 %v1092, %v1088
  %v1585 = vpack.c.b16 %v1093, %v1089
  %v1586 = vpack.c.b16 %v1094, %v1090
  %v1587 = vpack.c.b16 %v1099, %v1095
  %v1588 = vpack.c.b16 %v1100, %v1096
  %v1589 = vpack.c.b16 %v1101, %v1097
  %v1590 = vpack.c.b16 %v1102, %v1098
  %v1591 = vpack.c.b16 %v1107, %v1103
  %v1592 = vpack.c.b16 %v1108, %v1104
  %v1593 = vpack.c.b16 %v1109, %v1105
  %v1594 = vpack.c.b16 %v1110, %v1106
  %v1595 = vpack.c.b16 %v1115, %v1111
  %v1596 = vpack.c.b16 %v1116, %v1112
  %v1597 = vpack.c.b16 %v1117, %v1113
  %v1598 = vpack.c.b16 %v1118, %v1114
  %v1599 = vpack.c.b16 %v1123, %v1119
  %v1600 = vpack.c.b16 %v1124, %v1120
  %v1601 = vpack.c.b16 %v1125, %v1121
  %v1602 = vpack.c.b16 %v1126, %v1122
  %v1603 = vpack.c.b16 %v1131, %v1127
  %v1604 = vpack.c.b16 %v1132, %v1128
  %v1605 = vpack.c.b16 %v1133, %v1129
  %v1606 = vpack.c.b16 %v1134, %v1130
  %v1607 = vpack.c.b16 %v1139, %v1135
  %v1608 = vpack.c.b16 %v1140, %v1136
  %v1609 = vpack.c.b16 %v1141, %v1137
  %v1610 = vpack.c.b16 %v1142, %v1138
  %v1611 = vpack.c.b16 %v1147, %v1143
  %v1612 = vpack.c.b16 %v1148, %v1144
  %v1613 = vpack.c.b16 %v1149, %v1145
  %v1614 = vpack.c.b16 %v1150, %v1146
  %v1615 = vpack.c.b16 %v1155, %v1151
  %v1616 = vpack.c.b16 %v1156, %v1152
  %v1617 = vpack.c.b16 %v1157, %v1153
  %v1618 = vpack.c.b16 %v1158, %v1154
  %v1619 = vpack.c.b16 %v1163, %v1159
  %v1620 = vpack.c.b16 %v1164, %v1160
  %v1621 = vpack.c.b16 %v1165, %v1161
  %v1622 = vpack.c.b16 %v1166, %v1162
  %v1623 = vpack.c.b16 %v1171, %v1167
  %v1624 = vpack.c.b16 %v1172, %v1168
  %v1625 = vpack.c.b16 %v1173, %v1169
  %v1626 = vpack.c.b16 %v1174, %v1170
  %v1627 = vpack.c.b16 %v1179, %v1175
  %v1628 = vpack.c.b16 %v1180, %v1176
  %v1629 = vpack.c.b16 %v1181, %v1177
  %v1630 = vpack.c.b16 %v1182, %v1178
  %v1631 = vpack.c.b16 %v1187, %v1183
  %v1632 = vpack.c.b16 %v1188, %v1184
  %v1633 = vpack.c.b16 %v1189, %v1185
  %v1634 = vpack.c.b16 %v1190, %v1186
  %v1635 = vpack.c.b16 %v1195, %v1191
  %v1636 = vpack.c.b16 %v1196, %v1192
  %v1637 = vpack.c.b16 %v1197, %v1193
  %v1638 = vpack.c.b16 %v1198, %v1194
  %v1639 = vpack.c.b16 %v1203, %v1199
  %v1640 = vpack.c.b16 %v1204, %v1200
  %v1641 = vpack.c.b16 %v1205, %v1201
  %v1642 = vpack.c.b16 %v1206, %v1202
  %v1643 = vpack.c.b16 %v1211, %v1207
  %v1644 = vpack.c.b16 %v1212, %v1208
  %v1645 = vpack.c.b16 %v1213, %v1209
  %v1646 = vpack.c.b16 %v1214, %v1210
  %v1647 = vpack.c.b16 %v1219, %v1215
  %v1648 = vpack.c.b16 %v1220, %v1216
  %v1649 = vpack.c.b16 %v1221, %v1217
  %v1650 = vpack.c.b16 %v1222, %v1218
  %v1651 = vpack.c.b16 %v1227, %v1223
  %v1652 = vpack.c.b16 %v1228, %v1224
  %v1653 = vpack.c.b16 %v1229, %v1225
  %v1654 = vpack.c.b16 %v1230, %v1226
  %v1655 = vpack.c.b16 %v1235, %v1231
  %v1656 = vpack.c.b16 %v1236, %v1232
  %v1657 = vpack.c.b16 %v1237, %v1233
  %v1658 = vpack.c.b16 %v1238, %v1234
  %v1659 = vpack.c.b16 %v1243, %v1239
  %v1660 = vpack.c.b16 %v1244, %v1240
  %v1661 = vpack.c.b16 %v1245, %v1241
  %v1662 = vpack.c.b16 %v1246, %v1242
  %v1663 = vpack.c.b16 %v1251, %v1247
  %v1664 = vpack.c.b16 %v1252, %v1248
  %v1665 = vpack.c.b16 %v1253, %v1249
  %v1666 = vpack.c.b16 %v1254, %v1250
  %v1667 = vpack.c.b16 %v1259, %v1255
  %v1668 = vpack.c.b16 %v1260, %v1256
  %v1669 = vpack.c.b16 %v1261, %v1257
  %v1670 = vpack.c.b16 %v1262, %v1258
  %v1671 = vpack.c.b16 %v1267, %v1263
  %v1672 = vpack.c.b16 %v1268, %v1264
  %v1673 = vpack.c.b16 %v1269, %v1265
  %v1674 = vpack.c.b16 %v1270, %v1266
  %v1675 = vpack.c.b16 %v1275, %v1271
  %v1676 = vpack.c.b16 %v1276, %v1272
  %v1677 = vpack.c.b16 %v1277, %v1273
  %v1678 = vpack.c.b16 %v1278, %v1274
  %v1679 = vpack.c.b16 %v1283, %v1279
  %v1680 = vpack.c.b16 %v1284, %v1280
  %v1681 = vpack.c.b16 %v1285, %v1281
  %v1682 = vpack.c.b16 %v1286, %v1282
  %v1683 = vpack.c.b16 %v1291, %v1287
  %v1684 = vpack.c.b16 %v1292, %v1288
  %v1685 = vpack.c.b16 %v1293, %v1289
  %v1686 = vpack.c.b16 %v1294, %v1290
  %v1687 = vpack.c.b16 %v1299, %v1295
  %v1688 = vpack.c.b16 %v1300, %v1296
  %v1689 = vpack.c.b16 %v1301, %v1297
  %v1690 = vpack.c.b16 %v1302, %v1298
  %v1691 = vpack.c.b16 %v1307, %v1303
  %v1692 = vpack.c.b16 %v1308, %v1304
  %v1693 = vpack.c.b16 %v1309, %v1305
  %v1694 = vpack.c.b16 %v1310, %v1306
  %v1695 = vpack.c.b16 %v1315, %v1311
  %v1696 = vpack.c.b16 %v1316, %v1312
  %v1697 = vpack.c.b16 %v1317, %v1313
  %v1698 = vpack.c.b16 %v1318, %v1314
  %v1699 = vpack.c.b16 %v1323, %v1319
  %v1700 = vpack.c.b16 %v1324, %v1320
  %v1701 = vpack.c.b16 %v1325, %v1321
  %v1702 = vpack.c.b16 %v1326, %v1322
  %v1703 = vpack.c.b16 %v1331, %v1327
  %v1704 = vpack.c.b16 %v1332, %v1328
  %v1705 = vpack.c.b16 %v1333, %v1329
  %v1706 = vpack.c.b16 %v1334, %v1330
  %v1707 = vpack.c.b16 %v1339, %v1335
  %v1708 = vpack.c.b16 %v1340, %v1336
  %v1709 = vpack.c.b16 %v1341, %v1337
  %v1710 = vpack.c.b16 %v1342, %v1338
  %v1711 = vpack.c.b16 %v1347, %v1343
  %v1712 = vpack.c.b16 %v1348, %v1344
  %v1713 = vpack.c.b16 %v1349, %v1345
  %v1714 = vpack.c.b16 %v1350, %v1346
  %v1715 = vpack.c.b16 %v1355, %v1351
  %v1716 = vpack.c.b16 %v1356, %v1352
  %v1717 = vpack.c.b16 %v1357, %v1353
  %v1718 = vpack.c.b16 %v1358, %v1354
  %v1719 = vpack.c.b16 %v1363, %v1359
  %v1720 = vpack.c.b16 %v1364, %v1360
  %v1721 = vpack.c.b16 %v1365, %v1361
  %v1722 = vpack.c.b16 %v1366, %v1362
  %v1723 = vpack.c.b16 %v1371, %v1367
  %v1724 = vpack.c.b16 %v1372, %v1368
  %v1725 = vpack.c.b16 %v1373, %v1369
  %v1726 = vpack.c.b16 %v1374, %v1370
  %v1727 = vpack.c.b16 %v1379, %v1375
  %v1728 = vpack.c.b16 %v1380, %v1376
  %v1729 = vpack.c.b16 %v1381, %v1377
  %v1730 = vpack.c.b16 %v1382, %v1378
  %v1731 = vpack.c.b16 %v1387, %v1383
  %v1732 = vpack.c.b16 %v1388, %v1384
  %v1733 = vpack.c.b16 %v1389, %v1385
  %v1734 = vpack.c.b16 %v1390, %v1386
  %v1735 = vpack.c.b16 %v1395, %v1391
  %v1736 = vpack.c.b16 %v1396, %v1392
  %v1737 = vpack.c.b16 %v1397, %v1393
  %v1738 = vpack.c.b16 %v1398, %v1394
  %v1739 = vpack.c.b16 %v1403, %v1399
  %v1740 = vpack.c.b16 %v1404, %v1400
  %v1741 = vpack.c.b16 %v1405, %v1401
  %v1742 = vpack.c.b16 %v1406, %v1402
  %v1743 = vpack.c.b16 %v1411, %v1407
  %v1744 = vpack.c.b16 %v1412, %v1408
  %v1745 = vpack.c.b16 %v1413, %v1409
  %v1746 = vpack.c.b16 %v1414, %v1410
  %v1747 = vpack.c.b16 %v1419, %v1415
  %v1748 = vpack.c.b16 %v1420, %v1416
  %v1749 = vpack.c.b16 %v1421, %v1417
  %v1750 = vpack.c.b16 %v1422, %v1418
  %v1751 = vpack.c.b16 %v1427, %v1423
  %v1752 = vpack.c.b16 %v1428, %v1424
  %v1753 = vpack.c.b16 %v1429, %v1425
  %v1754 = vpack.c.b16 %v1430, %v1426
  %v1755 = vpack.c.b16 %v1435, %v1431
  %v1756 = vpack.c.b16 %v1436, %v1432
  %v1757 = vpack.c.b16 %v1437, %v1433
  %v1758 = vpack.c.b16 %v1438, %v1434
  %v1759 = vpack.c.b16 %v1443, %v1439
  %v1760 = vpack.c.b16 %v1444, %v1440
  %v1761 = vpack.c.b16 %v1445, %v1441
  %v1762 = vpack.c.b16 %v1446, %v1442
  %v1763 = vpack.c.b16 %v1451, %v1447
  %v1764 = vpack.c.b16 %v1452, %v1448
  %v1765 = vpack.c.b16 %v1453, %v1449
  %v1766 = vpack.c.b16 %v1454, %v1450
  %v1767 = vpack.c.b16 %v1459, %v1455
  %v1768 = vpack.c.b16 %v1460, %v1456
  %v1769 = vpack.c.b16 %v1461, %v1457
  %v1770 = vpack.c.b16 %v1462, %v1458
  %v1771 = vpack.c.b16 %v1467, %v1463
  %v1772 = vpack.c.b16 %v1468, %v1464
  %v1773 = vpack.c.b16 %v1469, %v1465
  %v1774 = vpack.c.b16 %v1470, %v1466
  %v1775 = vpack.c.b16 %v1475, %v1471
  %v1776 = vpack.c.b16 %v1476, %v1472
  %v1777 = vpack.c.b16 %v1477, %v1473
  %v1778 = vpack.c.b16 %v1478, %v1474
  %v1779 = vpack.c.b16 %v1483, %v1479
  %v1780 = vpack.c.b16 %v1484, %v1480
  %v1781 = vpack.c.b16 %v1485, %v1481
  %v1782 = vpack.c.b16 %v1486, %v1482
  %v1783 = vpack.c.b16 %v1491, %v1487
  %v1784 = vpack.c.b16 %v1492, %v1488
  %v1785 = vpack.c.b16 %v1493, %v1489
  %v1786 = vpack.c.b16 %v1494, %v1490
  %v1787 = vpack.c.b16 %v1499, %v1495
  %v1788 = vpack.c.b16 %v1500, %v1496
  %v1789 = vpack.c.b16 %v1501, %v1497
  %v1790 = vpack.c.b16 %v1502, %v1498
  %v1791 = vpack.c.b16 %v1507, %v1503
  %v1792 = vpack.c.b16 %v1508, %v1504
  %v1793 = vpack.c.b16 %v1509, %v1505
  %v1794 = vpack.c.b16 %v1510, %v1506
  %v1795 = vpack.c.b16 %v1515, %v1511
  %v1796 = vpack.c.b16 %v1516, %v1512
  %v1797 = vpack.c.b16 %v1517, %v1513
  %v1798 = vpack.c.b16 %v1518, %v1514
  %v1799 = vpack.c.b16 %v1523, %v1519
  %v1800 = vpack.c.b16 %v1524, %v1520
  %v1801 = vpack.c.b16 %v1525, %v1521
  %v1802 = vpack.c.b16 %v1526, %v1522
  %v1803 = vpack.c.b16 %v1531, %v1527
  %v1804 = vpack.c.b16 %v1532, %v1528
  %v1805 = vpack.c.b16 %v1533, %v1529
  %v1806 = vpack.c.b16 %v1534, %v1530
  %v1807 = vpack.c.b16 %v1539, %v1535
  %v1808 = vpack.c.b16 %v1540, %v1536
  %v1809 = vpack.c.b16 %v1541, %v1537
  %v1810 = vpack.c.b16 %v1542, %v1538
  %v1811 = vpack.c.b16 %v1547, %v1543
  %v1812 = vpack.c.b16 %v1548, %v1544
  %v1813 = vpack.c.b16 %v1549, %v1545
  %v1814 = vpack.c.b16 %v1550, %v1546
  %v1815 = vpack.c.b16 %v1555, %v1551
  %v1816 = vpack.c.b16 %v1556, %v1552
  %v1817 = vpack.c.b16 %v1557, %v1553
  %v1818 = vpack.c.b16 %v1558, %v1554
  %v1819 = vpack.c.b16 %v1563, %v1559
  %v1820 = vpack.c.b16 %v1564, %v1560
  %v1821 = vpack.c.b16 %v1565, %v1561
  %v1822 = vpack.c.b16 %v1566, %v1562
  %2079 = vmatprep.subr.bf16.mxu0 %v1596
  %2080 = vmatpush1.bf16.msra.mxu0 %v1595
  %2081 = vmatprep.subr.bf16.mxu0 %v1592
  %2082 = vmatpush1.bf16.msra.mxu0 %v1591
  %2083 = vmatprep.subr.bf16.mxu0 %v1588
  %2084 = vmatpush1.bf16.msra.mxu0 %v1587
  %2085 = vmatprep.subr.bf16.mxu0 %v1584
  %2086 = vmatpush1.bf16.msra.mxu0 %v1583
  %2087 = vmatprep.subr.bf16.mxu0 %v1580
  %2088 = vmatpush1.bf16.msra.mxu0 %v1579
  %2089 = vmatprep.subr.bf16.mxu0 %v1576
  %2090 = vmatpush1.bf16.msra.mxu0 %v1575
  %2091 = vmatprep.subr.bf16.mxu0 %v1572
  %2092 = vmatpush1.bf16.msra.mxu0 %v1571
  %2093 = vmatprep.subr.bf16.mxu0 %v1568
  %2094 = vmatpush1.bf16.msra.mxu0 %v1567
  %2095 = vmatprep.subr.bf16.mxu0 %v1628
  %2096 = vmatpush2.bf16.msra.mxu0 %v1627
  %2097 = vmatprep.subr.bf16.mxu0 %v1624
  %2098 = vmatpush2.bf16.msra.mxu0 %v1623
  %2099 = vmatprep.subr.bf16.mxu0 %v1620
  %2100 = vmatpush2.bf16.msra.mxu0 %v1619
  %2101 = vmatprep.subr.bf16.mxu0 %v1616
  %2102 = vmatpush2.bf16.msra.mxu0 %v1615
  %2103 = vmatprep.subr.bf16.mxu0 %v1612
  %2104 = vmatpush2.bf16.msra.mxu0 %v1611
  %2105 = vmatprep.subr.bf16.mxu0 %v1608
  %2106 = vmatpush2.bf16.msra.mxu0 %v1607
  %2107 = vmatprep.subr.bf16.mxu0 %v1604
  %2108 = vmatpush2.bf16.msra.mxu0 %v1603
  %2109 = vmatprep.subr.bf16.mxu0 %v1600
  %2110 = vmatpush2.bf16.msra.mxu0 %v1599
  %2111 = vmatprep.mubr.bf16.mxu0 %v784
  %2112 = vmatmul.mubr.bf16.gmra.mxu0 %v783
  %v2113 = vpop.f32.mrf.mxu0
  %v2114 = vadd.f32 0.0, %v2113
  %v2115 = vpop.f32.mrf.mxu0
  %v2116 = vadd.f32 0.0, %v2115
  %v2117 = vpop.f32.mrf.mxu0
  %v2118 = vadd.f32 0.0, %v2117
  %v2119 = vpop.f32.mrf.mxu0
  %v2120 = vadd.f32 0.0, %v2119
  %2121 = vdwg.mxu0
  %2122 = vmatprep.subr.bf16.mxu0 %v1660
  %2123 = vmatpush1.bf16.msra.mxu0 %v1659
  %2124 = vmatprep.subr.bf16.mxu0 %v1656
  %2125 = vmatpush1.bf16.msra.mxu0 %v1655
  %2126 = vmatprep.subr.bf16.mxu0 %v1652
  %2127 = vmatpush1.bf16.msra.mxu0 %v1651
  %2128 = vmatprep.subr.bf16.mxu0 %v1648
  %2129 = vmatpush1.bf16.msra.mxu0 %v1647
  %2130 = vmatprep.subr.bf16.mxu0 %v1644
  %2131 = vmatpush1.bf16.msra.mxu0 %v1643
  %2132 = vmatprep.subr.bf16.mxu0 %v1640
  %2133 = vmatpush1.bf16.msra.mxu0 %v1639
  %2134 = vmatprep.subr.bf16.mxu0 %v1636
  %2135 = vmatpush1.bf16.msra.mxu0 %v1635
  %2136 = vmatprep.subr.bf16.mxu0 %v1632
  %2137 = vmatpush1.bf16.msra.mxu0 %v1631
  %2138 = vmatprep.subr.bf16.mxu0 %v1692
  %2139 = vmatpush2.bf16.msra.mxu0 %v1691
  %2140 = vmatprep.subr.bf16.mxu0 %v1688
  %2141 = vmatpush2.bf16.msra.mxu0 %v1687
  %2142 = vmatprep.subr.bf16.mxu0 %v1684
  %2143 = vmatpush2.bf16.msra.mxu0 %v1683
  %2144 = vmatprep.subr.bf16.mxu0 %v1680
  %2145 = vmatpush2.bf16.msra.mxu0 %v1679
  %2146 = vmatprep.subr.bf16.mxu0 %v1676
  %2147 = vmatpush2.bf16.msra.mxu0 %v1675
  %2148 = vmatprep.subr.bf16.mxu0 %v1672
  %2149 = vmatpush2.bf16.msra.mxu0 %v1671
  %2150 = vmatprep.subr.bf16.mxu0 %v1668
  %2151 = vmatpush2.bf16.msra.mxu0 %v1667
  %2152 = vmatprep.subr.bf16.mxu0 %v1664
  %2153 = vmatpush2.bf16.msra.mxu0 %v1663
  %2154 = vmatprep.mubr.bf16.mxu0 %v786
  %2155 = vmatmul.mubr.bf16.gmra.mxu0 %v785
  %v2156 = vpop.f32.mrf.mxu0
  %v2157 = vadd.f32 %v2114, %v2156
  %v2158 = vpop.f32.mrf.mxu0
  %v2159 = vadd.f32 %v2116, %v2158
  %v2160 = vpop.f32.mrf.mxu0
  %v2161 = vadd.f32 %v2118, %v2160
  %v2162 = vpop.f32.mrf.mxu0
  %v2163 = vadd.f32 %v2120, %v2162
  %2164 = vdwg.mxu0
  %2165 = vmatprep.subr.bf16.mxu0 %v1724
  %2166 = vmatpush1.bf16.msra.mxu0 %v1723
  %2167 = vmatprep.subr.bf16.mxu0 %v1720
  %2168 = vmatpush1.bf16.msra.mxu0 %v1719
  %2169 = vmatprep.subr.bf16.mxu0 %v1716
  %2170 = vmatpush1.bf16.msra.mxu0 %v1715
  %2171 = vmatprep.subr.bf16.mxu0 %v1712
  %2172 = vmatpush1.bf16.msra.mxu0 %v1711
  %2173 = vmatprep.subr.bf16.mxu0 %v1708
  %2174 = vmatpush1.bf16.msra.mxu0 %v1707
  %2175 = vmatprep.subr.bf16.mxu0 %v1704
  %2176 = vmatpush1.bf16.msra.mxu0 %v1703
  %2177 = vmatprep.subr.bf16.mxu0 %v1700
  %2178 = vmatpush1.bf16.msra.mxu0 %v1699
  %2179 = vmatprep.subr.bf16.mxu0 %v1696
  %2180 = vmatpush1.bf16.msra.mxu0 %v1695
  %2181 = vmatprep.subr.bf16.mxu0 %v1756
  %2182 = vmatpush2.bf16.msra.mxu0 %v1755
  %2183 = vmatprep.subr.bf16.mxu0 %v1752
  %2184 = vmatpush2.bf16.msra.mxu0 %v1751
  %2185 = vmatprep.subr.bf16.mxu0 %v1748
  %2186 = vmatpush2.bf16.msra.mxu0 %v1747
  %2187 = vmatprep.subr.bf16.mxu0 %v1744
  %2188 = vmatpush2.bf16.msra.mxu0 %v1743
  %2189 = vmatprep.subr.bf16.mxu0 %v1740
  %2190 = vmatpush2.bf16.msra.mxu0 %v1739
  %2191 = vmatprep.subr.bf16.mxu0 %v1736
  %2192 = vmatpush2.bf16.msra.mxu0 %v1735
  %2193 = vmatprep.subr.bf16.mxu0 %v1732
  %2194 = vmatpush2.bf16.msra.mxu0 %v1731
  %2195 = vmatprep.subr.bf16.mxu0 %v1728
  %2196 = vmatpush2.bf16.msra.mxu0 %v1727
  %2197 = vmatprep.mubr.bf16.mxu0 %v788
  %2198 = vmatmul.mubr.bf16.gmra.mxu0 %v787
  %v2199 = vpop.f32.mrf.mxu0
  %v2200 = vadd.f32 %v2157, %v2199
  %v2201 = vpop.f32.mrf.mxu0
  %v2202 = vadd.f32 %v2159, %v2201
  %v2203 = vpop.f32.mrf.mxu0
  %v2204 = vadd.f32 %v2161, %v2203
  %v2205 = vpop.f32.mrf.mxu0
  %v2206 = vadd.f32 %v2163, %v2205
  %2207 = vdwg.mxu0
  %2208 = vmatprep.subr.bf16.mxu0 %v1788
  %2209 = vmatpush1.bf16.msra.mxu0 %v1787
  %2210 = vmatprep.subr.bf16.mxu0 %v1784
  %2211 = vmatpush1.bf16.msra.mxu0 %v1783
  %2212 = vmatprep.subr.bf16.mxu0 %v1780
  %2213 = vmatpush1.bf16.msra.mxu0 %v1779
  %2214 = vmatprep.subr.bf16.mxu0 %v1776
  %2215 = vmatpush1.bf16.msra.mxu0 %v1775
  %2216 = vmatprep.subr.bf16.mxu0 %v1772
  %2217 = vmatpush1.bf16.msra.mxu0 %v1771
  %2218 = vmatprep.subr.bf16.mxu0 %v1768
  %2219 = vmatpush1.bf16.msra.mxu0 %v1767
  %2220 = vmatprep.subr.bf16.mxu0 %v1764
  %2221 = vmatpush1.bf16.msra.mxu0 %v1763
  %2222 = vmatprep.subr.bf16.mxu0 %v1760
  %2223 = vmatpush1.bf16.msra.mxu0 %v1759
  %2224 = vmatprep.subr.bf16.mxu0 %v1820
  %2225 = vmatpush2.bf16.msra.mxu0 %v1819
  %2226 = vmatprep.subr.bf16.mxu0 %v1816
  %2227 = vmatpush2.bf16.msra.mxu0 %v1815
  %2228 = vmatprep.subr.bf16.mxu0 %v1812
  %2229 = vmatpush2.bf16.msra.mxu0 %v1811
  %2230 = vmatprep.subr.bf16.mxu0 %v1808
  %2231 = vmatpush2.bf16.msra.mxu0 %v1807
  %2232 = vmatprep.subr.bf16.mxu0 %v1804
  %2233 = vmatpush2.bf16.msra.mxu0 %v1803
  %2234 = vmatprep.subr.bf16.mxu0 %v1800
  %2235 = vmatpush2.bf16.msra.mxu0 %v1799
  %2236 = vmatprep.subr.bf16.mxu0 %v1796
  %2237 = vmatpush2.bf16.msra.mxu0 %v1795
  %2238 = vmatprep.subr.bf16.mxu0 %v1792
  %2239 = vmatpush2.bf16.msra.mxu0 %v1791
  %2240 = vmatprep.mubr.bf16.mxu0 %v790
  %2241 = vmatmul.mubr.bf16.gmra.mxu0 %v789
  %v2242 = vpop.f32.mrf.mxu0
  %v2243 = vadd.f32 %v2200, %v2242
  %v2244 = vpop.f32.mrf.mxu0
  %v2245 = vadd.f32 %v2202, %v2244
  %v2246 = vpop.f32.mrf.mxu0
  %v2247 = vadd.f32 %v2204, %v2246
  %v2248 = vpop.f32.mrf.mxu0
  %v2249 = vadd.f32 %v2206, %v2248
  %2250 = vdwg.mxu0
  %2251 = vmatprep.subr.bf16.mxu0 %v1598
  %2252 = vmatpush1.bf16.msra.mxu0 %v1597
  %2253 = vmatprep.subr.bf16.mxu0 %v1594
  %2254 = vmatpush1.bf16.msra.mxu0 %v1593
  %2255 = vmatprep.subr.bf16.mxu0 %v1590
  %2256 = vmatpush1.bf16.msra.mxu0 %v1589
  %2257 = vmatprep.subr.bf16.mxu0 %v1586
  %2258 = vmatpush1.bf16.msra.mxu0 %v1585
  %2259 = vmatprep.subr.bf16.mxu0 %v1582
  %2260 = vmatpush1.bf16.msra.mxu0 %v1581
  %2261 = vmatprep.subr.bf16.mxu0 %v1578
  %2262 = vmatpush1.bf16.msra.mxu0 %v1577
  %2263 = vmatprep.subr.bf16.mxu0 %v1574
  %2264 = vmatpush1.bf16.msra.mxu0 %v1573
  %2265 = vmatprep.subr.bf16.mxu0 %v1570
  %2266 = vmatpush1.bf16.msra.mxu0 %v1569
  %2267 = vmatprep.subr.bf16.mxu0 %v1630
  %2268 = vmatpush2.bf16.msra.mxu0 %v1629
  %2269 = vmatprep.subr.bf16.mxu0 %v1626
  %2270 = vmatpush2.bf16.msra.mxu0 %v1625
  %2271 = vmatprep.subr.bf16.mxu0 %v1622
  %2272 = vmatpush2.bf16.msra.mxu0 %v1621
  %2273 = vmatprep.subr.bf16.mxu0 %v1618
  %2274 = vmatpush2.bf16.msra.mxu0 %v1617
  %2275 = vmatprep.subr.bf16.mxu0 %v1614
  %2276 = vmatpush2.bf16.msra.mxu0 %v1613
  %2277 = vmatprep.subr.bf16.mxu0 %v1610
  %2278 = vmatpush2.bf16.msra.mxu0 %v1609
  %2279 = vmatprep.subr.bf16.mxu0 %v1606
  %2280 = vmatpush2.bf16.msra.mxu0 %v1605
  %2281 = vmatprep.subr.bf16.mxu0 %v1602
  %2282 = vmatpush2.bf16.msra.mxu0 %v1601
  %2283 = vmatprep.mubr.bf16.mxu0 %v784
  %2284 = vmatmul.mubr.bf16.gmra.mxu0 %v783
  %v2285 = vpop.f32.mrf.mxu0
  %v2286 = vadd.f32 0.0, %v2285
  %v2287 = vpop.f32.mrf.mxu0
  %v2288 = vadd.f32 0.0, %v2287
  %v2289 = vpop.f32.mrf.mxu0
  %v2290 = vadd.f32 0.0, %v2289
  %v2291 = vpop.f32.mrf.mxu0
  %v2292 = vadd.f32 0.0, %v2291
  %2293 = vdwg.mxu0
  %2294 = vmatprep.subr.bf16.mxu0 %v1662
  %2295 = vmatpush1.bf16.msra.mxu0 %v1661
  %2296 = vmatprep.subr.bf16.mxu0 %v1658
  %2297 = vmatpush1.bf16.msra.mxu0 %v1657
  %2298 = vmatprep.subr.bf16.mxu0 %v1654
  %2299 = vmatpush1.bf16.msra.mxu0 %v1653
  %2300 = vmatprep.subr.bf16.mxu0 %v1650
  %2301 = vmatpush1.bf16.msra.mxu0 %v1649
  %2302 = vmatprep.subr.bf16.mxu0 %v1646
  %2303 = vmatpush1.bf16.msra.mxu0 %v1645
  %2304 = vmatprep.subr.bf16.mxu0 %v1642
  %2305 = vmatpush1.bf16.msra.mxu0 %v1641
  %2306 = vmatprep.subr.bf16.mxu0 %v1638
  %2307 = vmatpush1.bf16.msra.mxu0 %v1637
  %2308 = vmatprep.subr.bf16.mxu0 %v1634
  %2309 = vmatpush1.bf16.msra.mxu0 %v1633
  %2310 = vmatprep.subr.bf16.mxu0 %v1694
  %2311 = vmatpush2.bf16.msra.mxu0 %v1693
  %2312 = vmatprep.subr.bf16.mxu0 %v1690
  %2313 = vmatpush2.bf16.msra.mxu0 %v1689
  %2314 = vmatprep.subr.bf16.mxu0 %v1686
  %2315 = vmatpush2.bf16.msra.mxu0 %v1685
  %2316 = vmatprep.subr.bf16.mxu0 %v1682
  %2317 = vmatpush2.bf16.msra.mxu0 %v1681
  %2318 = vmatprep.subr.bf16.mxu0 %v1678
  %2319 = vmatpush2.bf16.msra.mxu0 %v1677
  %2320 = vmatprep.subr.bf16.mxu0 %v1674
  %2321 = vmatpush2.bf16.msra.mxu0 %v1673
  %2322 = vmatprep.subr.bf16.mxu0 %v1670
  %2323 = vmatpush2.bf16.msra.mxu0 %v1669
  %2324 = vmatprep.subr.bf16.mxu0 %v1666
  %2325 = vmatpush2.bf16.msra.mxu0 %v1665
  %2326 = vmatprep.mubr.bf16.mxu0 %v786
  %2327 = vmatmul.mubr.bf16.gmra.mxu0 %v785
  %v2328 = vpop.f32.mrf.mxu0
  %v2329 = vadd.f32 %v2286, %v2328
  %v2330 = vpop.f32.mrf.mxu0
  %v2331 = vadd.f32 %v2288, %v2330
  %v2332 = vpop.f32.mrf.mxu0
  %v2333 = vadd.f32 %v2290, %v2332
  %v2334 = vpop.f32.mrf.mxu0
  %v2335 = vadd.f32 %v2292, %v2334
  %2336 = vdwg.mxu0
  %2337 = vmatprep.subr.bf16.mxu0 %v1726
  %2338 = vmatpush1.bf16.msra.mxu0 %v1725
  %2339 = vmatprep.subr.bf16.mxu0 %v1722
  %2340 = vmatpush1.bf16.msra.mxu0 %v1721
  %2341 = vmatprep.subr.bf16.mxu0 %v1718
  %2342 = vmatpush1.bf16.msra.mxu0 %v1717
  %2343 = vmatprep.subr.bf16.mxu0 %v1714
  %2344 = vmatpush1.bf16.msra.mxu0 %v1713
  %2345 = vmatprep.subr.bf16.mxu0 %v1710
  %2346 = vmatpush1.bf16.msra.mxu0 %v1709
  %2347 = vmatprep.subr.bf16.mxu0 %v1706
  %2348 = vmatpush1.bf16.msra.mxu0 %v1705
  %2349 = vmatprep.subr.bf16.mxu0 %v1702
  %2350 = vmatpush1.bf16.msra.mxu0 %v1701
  %2351 = vmatprep.subr.bf16.mxu0 %v1698
  %2352 = vmatpush1.bf16.msra.mxu0 %v1697
  %2353 = vmatprep.subr.bf16.mxu0 %v1758
  %2354 = vmatpush2.bf16.msra.mxu0 %v1757
  %2355 = vmatprep.subr.bf16.mxu0 %v1754
  %2356 = vmatpush2.bf16.msra.mxu0 %v1753
  %2357 = vmatprep.subr.bf16.mxu0 %v1750
  %2358 = vmatpush2.bf16.msra.mxu0 %v1749
  %2359 = vmatprep.subr.bf16.mxu0 %v1746
  %2360 = vmatpush2.bf16.msra.mxu0 %v1745
  %2361 = vmatprep.subr.bf16.mxu0 %v1742
  %2362 = vmatpush2.bf16.msra.mxu0 %v1741
  %2363 = vmatprep.subr.bf16.mxu0 %v1738
  %2364 = vmatpush2.bf16.msra.mxu0 %v1737
  %2365 = vmatprep.subr.bf16.mxu0 %v1734
  %2366 = vmatpush2.bf16.msra.mxu0 %v1733
  %2367 = vmatprep.subr.bf16.mxu0 %v1730
  %2368 = vmatpush2.bf16.msra.mxu0 %v1729
  %2369 = vmatprep.mubr.bf16.mxu0 %v788
  %2370 = vmatmul.mubr.bf16.gmra.mxu0 %v787
  %v2371 = vpop.f32.mrf.mxu0
  %v2372 = vadd.f32 %v2329, %v2371
  %v2373 = vpop.f32.mrf.mxu0
  %v2374 = vadd.f32 %v2331, %v2373
  %v2375 = vpop.f32.mrf.mxu0
  %v2376 = vadd.f32 %v2333, %v2375
  %v2377 = vpop.f32.mrf.mxu0
  %v2378 = vadd.f32 %v2335, %v2377
  %2379 = vdwg.mxu0
  %2380 = vmatprep.subr.bf16.mxu0 %v1790
  %2381 = vmatpush1.bf16.msra.mxu0 %v1789
  %2382 = vmatprep.subr.bf16.mxu0 %v1786
  %2383 = vmatpush1.bf16.msra.mxu0 %v1785
  %2384 = vmatprep.subr.bf16.mxu0 %v1782
  %2385 = vmatpush1.bf16.msra.mxu0 %v1781
  %2386 = vmatprep.subr.bf16.mxu0 %v1778
  %2387 = vmatpush1.bf16.msra.mxu0 %v1777
  %2388 = vmatprep.subr.bf16.mxu0 %v1774
  %2389 = vmatpush1.bf16.msra.mxu0 %v1773
  %2390 = vmatprep.subr.bf16.mxu0 %v1770
  %2391 = vmatpush1.bf16.msra.mxu0 %v1769
  %2392 = vmatprep.subr.bf16.mxu0 %v1766
  %2393 = vmatpush1.bf16.msra.mxu0 %v1765
  %2394 = vmatprep.subr.bf16.mxu0 %v1762
  %2395 = vmatpush1.bf16.msra.mxu0 %v1761
  %2396 = vmatprep.subr.bf16.mxu0 %v1822
  %2397 = vmatpush2.bf16.msra.mxu0 %v1821
  %2398 = vmatprep.subr.bf16.mxu0 %v1818
  %2399 = vmatpush2.bf16.msra.mxu0 %v1817
  %2400 = vmatprep.subr.bf16.mxu0 %v1814
  %2401 = vmatpush2.bf16.msra.mxu0 %v1813
  %2402 = vmatprep.subr.bf16.mxu0 %v1810
  %2403 = vmatpush2.bf16.msra.mxu0 %v1809
  %2404 = vmatprep.subr.bf16.mxu0 %v1806
  %2405 = vmatpush2.bf16.msra.mxu0 %v1805
  %2406 = vmatprep.subr.bf16.mxu0 %v1802
  %2407 = vmatpush2.bf16.msra.mxu0 %v1801
  %2408 = vmatprep.subr.bf16.mxu0 %v1798
  %2409 = vmatpush2.bf16.msra.mxu0 %v1797
  %2410 = vmatprep.subr.bf16.mxu0 %v1794
  %2411 = vmatpush2.bf16.msra.mxu0 %v1793
  %2412 = vmatprep.mubr.bf16.mxu0 %v790
  %2413 = vmatmul.mubr.bf16.gmra.mxu0 %v789
  %v2414 = vpop.f32.mrf.mxu0
  %v2415 = vadd.f32 %v2372, %v2414
  %v2416 = vpop.f32.mrf.mxu0
  %v2417 = vadd.f32 %v2374, %v2416
  %v2418 = vpop.f32.mrf.mxu0
  %v2419 = vadd.f32 %v2376, %v2418
  %v2420 = vpop.f32.mrf.mxu0
  %v2421 = vadd.f32 %v2378, %v2420
  %2422 = vdwg.mxu0
  %v2431 = vunpack.c.l.b16 %v230
  %v2432 = vunpack.c.h.b16 %v230
  %v2433 = vunpack.c.l.b16 %v231
  %v2434 = vunpack.c.h.b16 %v231
  %v2435 = vunpack.c.l.b16 %v232
  %v2436 = vunpack.c.h.b16 %v232
  %v2437 = vunpack.c.l.b16 %v233
  %v2438 = vunpack.c.h.b16 %v233
  %v2439 = vunpack.c.l.b16 %v234
  %v2440 = vunpack.c.h.b16 %v234
  %v2441 = vunpack.c.l.b16 %v235
  %v2442 = vunpack.c.h.b16 %v235
  %v2443 = vunpack.c.l.b16 %v236
  %v2444 = vunpack.c.h.b16 %v236
  %v2445 = vunpack.c.l.b16 %v237
  %v2446 = vunpack.c.h.b16 %v237
  %v2447 = vpack.c.b16 %v2439, %v2431
  %v2448 = vpack.c.b16 %v2440, %v2432
  %v2449 = vpack.c.b16 %v2441, %v2433
  %v2450 = vpack.c.b16 %v2442, %v2434
  %v2451 = vpack.c.b16 %v2443, %v2435
  %v2452 = vpack.c.b16 %v2444, %v2436
  %v2453 = vpack.c.b16 %v2445, %v2437
  %v2454 = vpack.c.b16 %v2446, %v2438
  %v2719 = vunpack.c.l.b16 %v238
  %v2720 = vunpack.c.h.b16 %v238
  %v2721 = vunpack.c.l.b16 %v239
  %v2722 = vunpack.c.h.b16 %v239
  %v2723 = vunpack.c.l.b16 %v240
  %v2724 = vunpack.c.h.b16 %v240
  %v2725 = vunpack.c.l.b16 %v241
  %v2726 = vunpack.c.h.b16 %v241
  %v2727 = vunpack.c.l.b16 %v242
  %v2728 = vunpack.c.h.b16 %v242
  %v2729 = vunpack.c.l.b16 %v243
  %v2730 = vunpack.c.h.b16 %v243
  %v2731 = vunpack.c.l.b16 %v244
  %v2732 = vunpack.c.h.b16 %v244
  %v2733 = vunpack.c.l.b16 %v245
  %v2734 = vunpack.c.h.b16 %v245
  %v2735 = vunpack.c.l.b16 %v246
  %v2736 = vunpack.c.h.b16 %v246
  %v2737 = vunpack.c.l.b16 %v247
  %v2738 = vunpack.c.h.b16 %v247
  %v2739 = vunpack.c.l.b16 %v248
  %v2740 = vunpack.c.h.b16 %v248
  %v2741 = vunpack.c.l.b16 %v249
  %v2742 = vunpack.c.h.b16 %v249
  %v2743 = vunpack.c.l.b16 %v250
  %v2744 = vunpack.c.h.b16 %v250
  %v2745 = vunpack.c.l.b16 %v251
  %v2746 = vunpack.c.h.b16 %v251
  %v2747 = vunpack.c.l.b16 %v252
  %v2748 = vunpack.c.h.b16 %v252
  %v2749 = vunpack.c.l.b16 %v253
  %v2750 = vunpack.c.h.b16 %v253
  %v2751 = vunpack.c.l.b16 %v254
  %v2752 = vunpack.c.h.b16 %v254
  %v2753 = vunpack.c.l.b16 %v255
  %v2754 = vunpack.c.h.b16 %v255
  %v2755 = vunpack.c.l.b16 %v256
  %v2756 = vunpack.c.h.b16 %v256
  %v2757 = vunpack.c.l.b16 %v257
  %v2758 = vunpack.c.h.b16 %v257
  %v2759 = vunpack.c.l.b16 %v258
  %v2760 = vunpack.c.h.b16 %v258
  %v2761 = vunpack.c.l.b16 %v259
  %v2762 = vunpack.c.h.b16 %v259
  %v2763 = vunpack.c.l.b16 %v260
  %v2764 = vunpack.c.h.b16 %v260
  %v2765 = vunpack.c.l.b16 %v261
  %v2766 = vunpack.c.h.b16 %v261
  %v2767 = vunpack.c.l.b16 %v262
  %v2768 = vunpack.c.h.b16 %v262
  %v2769 = vunpack.c.l.b16 %v263
  %v2770 = vunpack.c.h.b16 %v263
  %v2771 = vunpack.c.l.b16 %v264
  %v2772 = vunpack.c.h.b16 %v264
  %v2773 = vunpack.c.l.b16 %v265
  %v2774 = vunpack.c.h.b16 %v265
  %v2775 = vunpack.c.l.b16 %v266
  %v2776 = vunpack.c.h.b16 %v266
  %v2777 = vunpack.c.l.b16 %v267
  %v2778 = vunpack.c.h.b16 %v267
  %v2779 = vunpack.c.l.b16 %v268
  %v2780 = vunpack.c.h.b16 %v268
  %v2781 = vunpack.c.l.b16 %v269
  %v2782 = vunpack.c.h.b16 %v269
  %v2783 = vunpack.c.l.b16 %v270
  %v2784 = vunpack.c.h.b16 %v270
  %v2785 = vunpack.c.l.b16 %v271
  %v2786 = vunpack.c.h.b16 %v271
  %v2787 = vunpack.c.l.b16 %v272
  %v2788 = vunpack.c.h.b16 %v272
  %v2789 = vunpack.c.l.b16 %v273
  %v2790 = vunpack.c.h.b16 %v273
  %v2791 = vunpack.c.l.b16 %v274
  %v2792 = vunpack.c.h.b16 %v274
  %v2793 = vunpack.c.l.b16 %v275
  %v2794 = vunpack.c.h.b16 %v275
  %v2795 = vunpack.c.l.b16 %v276
  %v2796 = vunpack.c.h.b16 %v276
  %v2797 = vunpack.c.l.b16 %v277
  %v2798 = vunpack.c.h.b16 %v277
  %v2799 = vunpack.c.l.b16 %v278
  %v2800 = vunpack.c.h.b16 %v278
  %v2801 = vunpack.c.l.b16 %v279
  %v2802 = vunpack.c.h.b16 %v279
  %v2803 = vunpack.c.l.b16 %v280
  %v2804 = vunpack.c.h.b16 %v280
  %v2805 = vunpack.c.l.b16 %v281
  %v2806 = vunpack.c.h.b16 %v281
  %v2807 = vunpack.c.l.b16 %v282
  %v2808 = vunpack.c.h.b16 %v282
  %v2809 = vunpack.c.l.b16 %v283
  %v2810 = vunpack.c.h.b16 %v283
  %v2811 = vunpack.c.l.b16 %v284
  %v2812 = vunpack.c.h.b16 %v284
  %v2813 = vunpack.c.l.b16 %v285
  %v2814 = vunpack.c.h.b16 %v285
  %v2815 = vunpack.c.l.b16 %v286
  %v2816 = vunpack.c.h.b16 %v286
  %v2817 = vunpack.c.l.b16 %v287
  %v2818 = vunpack.c.h.b16 %v287
  %v2819 = vunpack.c.l.b16 %v288
  %v2820 = vunpack.c.h.b16 %v288
  %v2821 = vunpack.c.l.b16 %v289
  %v2822 = vunpack.c.h.b16 %v289
  %v2823 = vunpack.c.l.b16 %v290
  %v2824 = vunpack.c.h.b16 %v290
  %v2825 = vunpack.c.l.b16 %v291
  %v2826 = vunpack.c.h.b16 %v291
  %v2827 = vunpack.c.l.b16 %v292
  %v2828 = vunpack.c.h.b16 %v292
  %v2829 = vunpack.c.l.b16 %v293
  %v2830 = vunpack.c.h.b16 %v293
  %v2831 = vunpack.c.l.b16 %v294
  %v2832 = vunpack.c.h.b16 %v294
  %v2833 = vunpack.c.l.b16 %v295
  %v2834 = vunpack.c.h.b16 %v295
  %v2835 = vunpack.c.l.b16 %v296
  %v2836 = vunpack.c.h.b16 %v296
  %v2837 = vunpack.c.l.b16 %v297
  %v2838 = vunpack.c.h.b16 %v297
  %v2839 = vunpack.c.l.b16 %v298
  %v2840 = vunpack.c.h.b16 %v298
  %v2841 = vunpack.c.l.b16 %v299
  %v2842 = vunpack.c.h.b16 %v299
  %v2843 = vunpack.c.l.b16 %v300
  %v2844 = vunpack.c.h.b16 %v300
  %v2845 = vunpack.c.l.b16 %v301
  %v2846 = vunpack.c.h.b16 %v301
  %v2847 = vunpack.c.l.b16 %v302
  %v2848 = vunpack.c.h.b16 %v302
  %v2849 = vunpack.c.l.b16 %v303
  %v2850 = vunpack.c.h.b16 %v303
  %v2851 = vunpack.c.l.b16 %v304
  %v2852 = vunpack.c.h.b16 %v304
  %v2853 = vunpack.c.l.b16 %v305
  %v2854 = vunpack.c.h.b16 %v305
  %v2855 = vunpack.c.l.b16 %v306
  %v2856 = vunpack.c.h.b16 %v306
  %v2857 = vunpack.c.l.b16 %v307
  %v2858 = vunpack.c.h.b16 %v307
  %v2859 = vunpack.c.l.b16 %v308
  %v2860 = vunpack.c.h.b16 %v308
  %v2861 = vunpack.c.l.b16 %v309
  %v2862 = vunpack.c.h.b16 %v309
  %v2863 = vunpack.c.l.b16 %v310
  %v2864 = vunpack.c.h.b16 %v310
  %v2865 = vunpack.c.l.b16 %v311
  %v2866 = vunpack.c.h.b16 %v311
  %v2867 = vunpack.c.l.b16 %v312
  %v2868 = vunpack.c.h.b16 %v312
  %v2869 = vunpack.c.l.b16 %v313
  %v2870 = vunpack.c.h.b16 %v313
  %v2871 = vunpack.c.l.b16 %v314
  %v2872 = vunpack.c.h.b16 %v314
  %v2873 = vunpack.c.l.b16 %v315
  %v2874 = vunpack.c.h.b16 %v315
  %v2875 = vunpack.c.l.b16 %v316
  %v2876 = vunpack.c.h.b16 %v316
  %v2877 = vunpack.c.l.b16 %v317
  %v2878 = vunpack.c.h.b16 %v317
  %v2879 = vunpack.c.l.b16 %v318
  %v2880 = vunpack.c.h.b16 %v318
  %v2881 = vunpack.c.l.b16 %v319
  %v2882 = vunpack.c.h.b16 %v319
  %v2883 = vunpack.c.l.b16 %v320
  %v2884 = vunpack.c.h.b16 %v320
  %v2885 = vunpack.c.l.b16 %v321
  %v2886 = vunpack.c.h.b16 %v321
  %v2887 = vunpack.c.l.b16 %v322
  %v2888 = vunpack.c.h.b16 %v322
  %v2889 = vunpack.c.l.b16 %v323
  %v2890 = vunpack.c.h.b16 %v323
  %v2891 = vunpack.c.l.b16 %v324
  %v2892 = vunpack.c.h.b16 %v324
  %v2893 = vunpack.c.l.b16 %v325
  %v2894 = vunpack.c.h.b16 %v325
  %v2895 = vunpack.c.l.b16 %v326
  %v2896 = vunpack.c.h.b16 %v326
  %v2897 = vunpack.c.l.b16 %v327
  %v2898 = vunpack.c.h.b16 %v327
  %v2899 = vunpack.c.l.b16 %v328
  %v2900 = vunpack.c.h.b16 %v328
  %v2901 = vunpack.c.l.b16 %v329
  %v2902 = vunpack.c.h.b16 %v329
  %v2903 = vunpack.c.l.b16 %v330
  %v2904 = vunpack.c.h.b16 %v330
  %v2905 = vunpack.c.l.b16 %v331
  %v2906 = vunpack.c.h.b16 %v331
  %v2907 = vunpack.c.l.b16 %v332
  %v2908 = vunpack.c.h.b16 %v332
  %v2909 = vunpack.c.l.b16 %v333
  %v2910 = vunpack.c.h.b16 %v333
  %v2911 = vunpack.c.l.b16 %v334
  %v2912 = vunpack.c.h.b16 %v334
  %v2913 = vunpack.c.l.b16 %v335
  %v2914 = vunpack.c.h.b16 %v335
  %v2915 = vunpack.c.l.b16 %v336
  %v2916 = vunpack.c.h.b16 %v336
  %v2917 = vunpack.c.l.b16 %v337
  %v2918 = vunpack.c.h.b16 %v337
  %v2919 = vunpack.c.l.b16 %v338
  %v2920 = vunpack.c.h.b16 %v338
  %v2921 = vunpack.c.l.b16 %v339
  %v2922 = vunpack.c.h.b16 %v339
  %v2923 = vunpack.c.l.b16 %v340
  %v2924 = vunpack.c.h.b16 %v340
  %v2925 = vunpack.c.l.b16 %v341
  %v2926 = vunpack.c.h.b16 %v341
  %v2927 = vunpack.c.l.b16 %v342
  %v2928 = vunpack.c.h.b16 %v342
  %v2929 = vunpack.c.l.b16 %v343
  %v2930 = vunpack.c.h.b16 %v343
  %v2931 = vunpack.c.l.b16 %v344
  %v2932 = vunpack.c.h.b16 %v344
  %v2933 = vunpack.c.l.b16 %v345
  %v2934 = vunpack.c.h.b16 %v345
  %v2935 = vunpack.c.l.b16 %v346
  %v2936 = vunpack.c.h.b16 %v346
  %v2937 = vunpack.c.l.b16 %v347
  %v2938 = vunpack.c.h.b16 %v347
  %v2939 = vunpack.c.l.b16 %v348
  %v2940 = vunpack.c.h.b16 %v348
  %v2941 = vunpack.c.l.b16 %v349
  %v2942 = vunpack.c.h.b16 %v349
  %v2943 = vunpack.c.l.b16 %v350
  %v2944 = vunpack.c.h.b16 %v350
  %v2945 = vunpack.c.l.b16 %v351
  %v2946 = vunpack.c.h.b16 %v351
  %v2947 = vunpack.c.l.b16 %v352
  %v2948 = vunpack.c.h.b16 %v352
  %v2949 = vunpack.c.l.b16 %v353
  %v2950 = vunpack.c.h.b16 %v353
  %v2951 = vunpack.c.l.b16 %v354
  %v2952 = vunpack.c.h.b16 %v354
  %v2953 = vunpack.c.l.b16 %v355
  %v2954 = vunpack.c.h.b16 %v355
  %v2955 = vunpack.c.l.b16 %v356
  %v2956 = vunpack.c.h.b16 %v356
  %v2957 = vunpack.c.l.b16 %v357
  %v2958 = vunpack.c.h.b16 %v357
  %v2959 = vunpack.c.l.b16 %v358
  %v2960 = vunpack.c.h.b16 %v358
  %v2961 = vunpack.c.l.b16 %v359
  %v2962 = vunpack.c.h.b16 %v359
  %v2963 = vunpack.c.l.b16 %v360
  %v2964 = vunpack.c.h.b16 %v360
  %v2965 = vunpack.c.l.b16 %v361
  %v2966 = vunpack.c.h.b16 %v361
  %v2967 = vunpack.c.l.b16 %v362
  %v2968 = vunpack.c.h.b16 %v362
  %v2969 = vunpack.c.l.b16 %v363
  %v2970 = vunpack.c.h.b16 %v363
  %v2971 = vunpack.c.l.b16 %v364
  %v2972 = vunpack.c.h.b16 %v364
  %v2973 = vunpack.c.l.b16 %v365
  %v2974 = vunpack.c.h.b16 %v365
  %v2975 = vunpack.c.l.b16 %v366
  %v2976 = vunpack.c.h.b16 %v366
  %v2977 = vunpack.c.l.b16 %v367
  %v2978 = vunpack.c.h.b16 %v367
  %v2979 = vunpack.c.l.b16 %v368
  %v2980 = vunpack.c.h.b16 %v368
  %v2981 = vunpack.c.l.b16 %v369
  %v2982 = vunpack.c.h.b16 %v369
  %v2983 = vunpack.c.l.b16 %v370
  %v2984 = vunpack.c.h.b16 %v370
  %v2985 = vunpack.c.l.b16 %v371
  %v2986 = vunpack.c.h.b16 %v371
  %v2987 = vunpack.c.l.b16 %v372
  %v2988 = vunpack.c.h.b16 %v372
  %v2989 = vunpack.c.l.b16 %v373
  %v2990 = vunpack.c.h.b16 %v373
  %v2991 = vunpack.c.l.b16 %v374
  %v2992 = vunpack.c.h.b16 %v374
  %v2993 = vunpack.c.l.b16 %v375
  %v2994 = vunpack.c.h.b16 %v375
  %v2995 = vunpack.c.l.b16 %v376
  %v2996 = vunpack.c.h.b16 %v376
  %v2997 = vunpack.c.l.b16 %v377
  %v2998 = vunpack.c.h.b16 %v377
  %v2999 = vunpack.c.l.b16 %v378
  %v3000 = vunpack.c.h.b16 %v378
  %v3001 = vunpack.c.l.b16 %v379
  %v3002 = vunpack.c.h.b16 %v379
  %v3003 = vunpack.c.l.b16 %v380
  %v3004 = vunpack.c.h.b16 %v380
  %v3005 = vunpack.c.l.b16 %v381
  %v3006 = vunpack.c.h.b16 %v381
  %v3007 = vunpack.c.l.b16 %v382
  %v3008 = vunpack.c.h.b16 %v382
  %v3009 = vunpack.c.l.b16 %v383
  %v3010 = vunpack.c.h.b16 %v383
  %v3011 = vunpack.c.l.b16 %v384
  %v3012 = vunpack.c.h.b16 %v384
  %v3013 = vunpack.c.l.b16 %v385
  %v3014 = vunpack.c.h.b16 %v385
  %v3015 = vunpack.c.l.b16 %v386
  %v3016 = vunpack.c.h.b16 %v386
  %v3017 = vunpack.c.l.b16 %v387
  %v3018 = vunpack.c.h.b16 %v387
  %v3019 = vunpack.c.l.b16 %v388
  %v3020 = vunpack.c.h.b16 %v388
  %v3021 = vunpack.c.l.b16 %v389
  %v3022 = vunpack.c.h.b16 %v389
  %v3023 = vunpack.c.l.b16 %v390
  %v3024 = vunpack.c.h.b16 %v390
  %v3025 = vunpack.c.l.b16 %v391
  %v3026 = vunpack.c.h.b16 %v391
  %v3027 = vunpack.c.l.b16 %v392
  %v3028 = vunpack.c.h.b16 %v392
  %v3029 = vunpack.c.l.b16 %v393
  %v3030 = vunpack.c.h.b16 %v393
  %v3031 = vunpack.c.l.b16 %v394
  %v3032 = vunpack.c.h.b16 %v394
  %v3033 = vunpack.c.l.b16 %v395
  %v3034 = vunpack.c.h.b16 %v395
  %v3035 = vunpack.c.l.b16 %v396
  %v3036 = vunpack.c.h.b16 %v396
  %v3037 = vunpack.c.l.b16 %v397
  %v3038 = vunpack.c.h.b16 %v397
  %v3039 = vunpack.c.l.b16 %v398
  %v3040 = vunpack.c.h.b16 %v398
  %v3041 = vunpack.c.l.b16 %v399
  %v3042 = vunpack.c.h.b16 %v399
  %v3043 = vunpack.c.l.b16 %v400
  %v3044 = vunpack.c.h.b16 %v400
  %v3045 = vunpack.c.l.b16 %v401
  %v3046 = vunpack.c.h.b16 %v401
  %v3047 = vunpack.c.l.b16 %v402
  %v3048 = vunpack.c.h.b16 %v402
  %v3049 = vunpack.c.l.b16 %v403
  %v3050 = vunpack.c.h.b16 %v403
  %v3051 = vunpack.c.l.b16 %v404
  %v3052 = vunpack.c.h.b16 %v404
  %v3053 = vunpack.c.l.b16 %v405
  %v3054 = vunpack.c.h.b16 %v405
  %v3055 = vunpack.c.l.b16 %v406
  %v3056 = vunpack.c.h.b16 %v406
  %v3057 = vunpack.c.l.b16 %v407
  %v3058 = vunpack.c.h.b16 %v407
  %v3059 = vunpack.c.l.b16 %v408
  %v3060 = vunpack.c.h.b16 %v408
  %v3061 = vunpack.c.l.b16 %v409
  %v3062 = vunpack.c.h.b16 %v409
  %v3063 = vunpack.c.l.b16 %v410
  %v3064 = vunpack.c.h.b16 %v410
  %v3065 = vunpack.c.l.b16 %v411
  %v3066 = vunpack.c.h.b16 %v411
  %v3067 = vunpack.c.l.b16 %v412
  %v3068 = vunpack.c.h.b16 %v412
  %v3069 = vunpack.c.l.b16 %v413
  %v3070 = vunpack.c.h.b16 %v413
  %v3071 = vunpack.c.l.b16 %v414
  %v3072 = vunpack.c.h.b16 %v414
  %v3073 = vunpack.c.l.b16 %v415
  %v3074 = vunpack.c.h.b16 %v415
  %v3075 = vunpack.c.l.b16 %v416
  %v3076 = vunpack.c.h.b16 %v416
  %v3077 = vunpack.c.l.b16 %v417
  %v3078 = vunpack.c.h.b16 %v417
  %v3079 = vunpack.c.l.b16 %v418
  %v3080 = vunpack.c.h.b16 %v418
  %v3081 = vunpack.c.l.b16 %v419
  %v3082 = vunpack.c.h.b16 %v419
  %v3083 = vunpack.c.l.b16 %v420
  %v3084 = vunpack.c.h.b16 %v420
  %v3085 = vunpack.c.l.b16 %v421
  %v3086 = vunpack.c.h.b16 %v421
  %v3087 = vunpack.c.l.b16 %v422
  %v3088 = vunpack.c.h.b16 %v422
  %v3089 = vunpack.c.l.b16 %v423
  %v3090 = vunpack.c.h.b16 %v423
  %v3091 = vunpack.c.l.b16 %v424
  %v3092 = vunpack.c.h.b16 %v424
  %v3093 = vunpack.c.l.b16 %v425
  %v3094 = vunpack.c.h.b16 %v425
  %v3095 = vunpack.c.l.b16 %v426
  %v3096 = vunpack.c.h.b16 %v426
  %v3097 = vunpack.c.l.b16 %v427
  %v3098 = vunpack.c.h.b16 %v427
  %v3099 = vunpack.c.l.b16 %v428
  %v3100 = vunpack.c.h.b16 %v428
  %v3101 = vunpack.c.l.b16 %v429
  %v3102 = vunpack.c.h.b16 %v429
  %v3103 = vunpack.c.l.b16 %v430
  %v3104 = vunpack.c.h.b16 %v430
  %v3105 = vunpack.c.l.b16 %v431
  %v3106 = vunpack.c.h.b16 %v431
  %v3107 = vunpack.c.l.b16 %v432
  %v3108 = vunpack.c.h.b16 %v432
  %v3109 = vunpack.c.l.b16 %v433
  %v3110 = vunpack.c.h.b16 %v433
  %v3111 = vunpack.c.l.b16 %v434
  %v3112 = vunpack.c.h.b16 %v434
  %v3113 = vunpack.c.l.b16 %v435
  %v3114 = vunpack.c.h.b16 %v435
  %v3115 = vunpack.c.l.b16 %v436
  %v3116 = vunpack.c.h.b16 %v436
  %v3117 = vunpack.c.l.b16 %v437
  %v3118 = vunpack.c.h.b16 %v437
  %v3119 = vunpack.c.l.b16 %v438
  %v3120 = vunpack.c.h.b16 %v438
  %v3121 = vunpack.c.l.b16 %v439
  %v3122 = vunpack.c.h.b16 %v439
  %v3123 = vunpack.c.l.b16 %v440
  %v3124 = vunpack.c.h.b16 %v440
  %v3125 = vunpack.c.l.b16 %v441
  %v3126 = vunpack.c.h.b16 %v441
  %v3127 = vunpack.c.l.b16 %v442
  %v3128 = vunpack.c.h.b16 %v442
  %v3129 = vunpack.c.l.b16 %v443
  %v3130 = vunpack.c.h.b16 %v443
  %v3131 = vunpack.c.l.b16 %v444
  %v3132 = vunpack.c.h.b16 %v444
  %v3133 = vunpack.c.l.b16 %v445
  %v3134 = vunpack.c.h.b16 %v445
  %v3135 = vunpack.c.l.b16 %v446
  %v3136 = vunpack.c.h.b16 %v446
  %v3137 = vunpack.c.l.b16 %v447
  %v3138 = vunpack.c.h.b16 %v447
  %v3139 = vunpack.c.l.b16 %v448
  %v3140 = vunpack.c.h.b16 %v448
  %v3141 = vunpack.c.l.b16 %v449
  %v3142 = vunpack.c.h.b16 %v449
  %v3143 = vunpack.c.l.b16 %v450
  %v3144 = vunpack.c.h.b16 %v450
  %v3145 = vunpack.c.l.b16 %v451
  %v3146 = vunpack.c.h.b16 %v451
  %v3147 = vunpack.c.l.b16 %v452
  %v3148 = vunpack.c.h.b16 %v452
  %v3149 = vunpack.c.l.b16 %v453
  %v3150 = vunpack.c.h.b16 %v453
  %v3151 = vunpack.c.l.b16 %v454
  %v3152 = vunpack.c.h.b16 %v454
  %v3153 = vunpack.c.l.b16 %v455
  %v3154 = vunpack.c.h.b16 %v455
  %v3155 = vunpack.c.l.b16 %v456
  %v3156 = vunpack.c.h.b16 %v456
  %v3157 = vunpack.c.l.b16 %v457
  %v3158 = vunpack.c.h.b16 %v457
  %v3159 = vunpack.c.l.b16 %v458
  %v3160 = vunpack.c.h.b16 %v458
  %v3161 = vunpack.c.l.b16 %v459
  %v3162 = vunpack.c.h.b16 %v459
  %v3163 = vunpack.c.l.b16 %v460
  %v3164 = vunpack.c.h.b16 %v460
  %v3165 = vunpack.c.l.b16 %v461
  %v3166 = vunpack.c.h.b16 %v461
  %v3167 = vunpack.c.l.b16 %v462
  %v3168 = vunpack.c.h.b16 %v462
  %v3169 = vunpack.c.l.b16 %v463
  %v3170 = vunpack.c.h.b16 %v463
  %v3171 = vunpack.c.l.b16 %v464
  %v3172 = vunpack.c.h.b16 %v464
  %v3173 = vunpack.c.l.b16 %v465
  %v3174 = vunpack.c.h.b16 %v465
  %v3175 = vunpack.c.l.b16 %v466
  %v3176 = vunpack.c.h.b16 %v466
  %v3177 = vunpack.c.l.b16 %v467
  %v3178 = vunpack.c.h.b16 %v467
  %v3179 = vunpack.c.l.b16 %v468
  %v3180 = vunpack.c.h.b16 %v468
  %v3181 = vunpack.c.l.b16 %v469
  %v3182 = vunpack.c.h.b16 %v469
  %v3183 = vunpack.c.l.b16 %v470
  %v3184 = vunpack.c.h.b16 %v470
  %v3185 = vunpack.c.l.b16 %v471
  %v3186 = vunpack.c.h.b16 %v471
  %v3187 = vunpack.c.l.b16 %v472
  %v3188 = vunpack.c.h.b16 %v472
  %v3189 = vunpack.c.l.b16 %v473
  %v3190 = vunpack.c.h.b16 %v473
  %v3191 = vunpack.c.l.b16 %v474
  %v3192 = vunpack.c.h.b16 %v474
  %v3193 = vunpack.c.l.b16 %v475
  %v3194 = vunpack.c.h.b16 %v475
  %v3195 = vunpack.c.l.b16 %v476
  %v3196 = vunpack.c.h.b16 %v476
  %v3197 = vunpack.c.l.b16 %v477
  %v3198 = vunpack.c.h.b16 %v477
  %v3199 = vunpack.c.l.b16 %v478
  %v3200 = vunpack.c.h.b16 %v478
  %v3201 = vunpack.c.l.b16 %v479
  %v3202 = vunpack.c.h.b16 %v479
  %v3203 = vunpack.c.l.b16 %v480
  %v3204 = vunpack.c.h.b16 %v480
  %v3205 = vunpack.c.l.b16 %v481
  %v3206 = vunpack.c.h.b16 %v481
  %v3207 = vunpack.c.l.b16 %v482
  %v3208 = vunpack.c.h.b16 %v482
  %v3209 = vunpack.c.l.b16 %v483
  %v3210 = vunpack.c.h.b16 %v483
  %v3211 = vunpack.c.l.b16 %v484
  %v3212 = vunpack.c.h.b16 %v484
  %v3213 = vunpack.c.l.b16 %v485
  %v3214 = vunpack.c.h.b16 %v485
  %v3215 = vunpack.c.l.b16 %v486
  %v3216 = vunpack.c.h.b16 %v486
  %v3217 = vunpack.c.l.b16 %v487
  %v3218 = vunpack.c.h.b16 %v487
  %v3219 = vunpack.c.l.b16 %v488
  %v3220 = vunpack.c.h.b16 %v488
  %v3221 = vunpack.c.l.b16 %v489
  %v3222 = vunpack.c.h.b16 %v489
  %v3223 = vunpack.c.l.b16 %v490
  %v3224 = vunpack.c.h.b16 %v490
  %v3225 = vunpack.c.l.b16 %v491
  %v3226 = vunpack.c.h.b16 %v491
  %v3227 = vunpack.c.l.b16 %v492
  %v3228 = vunpack.c.h.b16 %v492
  %v3229 = vunpack.c.l.b16 %v493
  %v3230 = vunpack.c.h.b16 %v493
  %v3231 = vpack.c.b16 %v2723, %v2719
  %v3232 = vpack.c.b16 %v2724, %v2720
  %v3233 = vpack.c.b16 %v2725, %v2721
  %v3234 = vpack.c.b16 %v2726, %v2722
  %v3235 = vpack.c.b16 %v2731, %v2727
  %v3236 = vpack.c.b16 %v2732, %v2728
  %v3237 = vpack.c.b16 %v2733, %v2729
  %v3238 = vpack.c.b16 %v2734, %v2730
  %v3239 = vpack.c.b16 %v2739, %v2735
  %v3240 = vpack.c.b16 %v2740, %v2736
  %v3241 = vpack.c.b16 %v2741, %v2737
  %v3242 = vpack.c.b16 %v2742, %v2738
  %v3243 = vpack.c.b16 %v2747, %v2743
  %v3244 = vpack.c.b16 %v2748, %v2744
  %v3245 = vpack.c.b16 %v2749, %v2745
  %v3246 = vpack.c.b16 %v2750, %v2746
  %v3247 = vpack.c.b16 %v2755, %v2751
  %v3248 = vpack.c.b16 %v2756, %v2752
  %v3249 = vpack.c.b16 %v2757, %v2753
  %v3250 = vpack.c.b16 %v2758, %v2754
  %v3251 = vpack.c.b16 %v2763, %v2759
  %v3252 = vpack.c.b16 %v2764, %v2760
  %v3253 = vpack.c.b16 %v2765, %v2761
  %v3254 = vpack.c.b16 %v2766, %v2762
  %v3255 = vpack.c.b16 %v2771, %v2767
  %v3256 = vpack.c.b16 %v2772, %v2768
  %v3257 = vpack.c.b16 %v2773, %v2769
  %v3258 = vpack.c.b16 %v2774, %v2770
  %v3259 = vpack.c.b16 %v2779, %v2775
  %v3260 = vpack.c.b16 %v2780, %v2776
  %v3261 = vpack.c.b16 %v2781, %v2777
  %v3262 = vpack.c.b16 %v2782, %v2778
  %v3263 = vpack.c.b16 %v2787, %v2783
  %v3264 = vpack.c.b16 %v2788, %v2784
  %v3265 = vpack.c.b16 %v2789, %v2785
  %v3266 = vpack.c.b16 %v2790, %v2786
  %v3267 = vpack.c.b16 %v2795, %v2791
  %v3268 = vpack.c.b16 %v2796, %v2792
  %v3269 = vpack.c.b16 %v2797, %v2793
  %v3270 = vpack.c.b16 %v2798, %v2794
  %v3271 = vpack.c.b16 %v2803, %v2799
  %v3272 = vpack.c.b16 %v2804, %v2800
  %v3273 = vpack.c.b16 %v2805, %v2801
  %v3274 = vpack.c.b16 %v2806, %v2802
  %v3275 = vpack.c.b16 %v2811, %v2807
  %v3276 = vpack.c.b16 %v2812, %v2808
  %v3277 = vpack.c.b16 %v2813, %v2809
  %v3278 = vpack.c.b16 %v2814, %v2810
  %v3279 = vpack.c.b16 %v2819, %v2815
  %v3280 = vpack.c.b16 %v2820, %v2816
  %v3281 = vpack.c.b16 %v2821, %v2817
  %v3282 = vpack.c.b16 %v2822, %v2818
  %v3283 = vpack.c.b16 %v2827, %v2823
  %v3284 = vpack.c.b16 %v2828, %v2824
  %v3285 = vpack.c.b16 %v2829, %v2825
  %v3286 = vpack.c.b16 %v2830, %v2826
  %v3287 = vpack.c.b16 %v2835, %v2831
  %v3288 = vpack.c.b16 %v2836, %v2832
  %v3289 = vpack.c.b16 %v2837, %v2833
  %v3290 = vpack.c.b16 %v2838, %v2834
  %v3291 = vpack.c.b16 %v2843, %v2839
  %v3292 = vpack.c.b16 %v2844, %v2840
  %v3293 = vpack.c.b16 %v2845, %v2841
  %v3294 = vpack.c.b16 %v2846, %v2842
  %v3295 = vpack.c.b16 %v2851, %v2847
  %v3296 = vpack.c.b16 %v2852, %v2848
  %v3297 = vpack.c.b16 %v2853, %v2849
  %v3298 = vpack.c.b16 %v2854, %v2850
  %v3299 = vpack.c.b16 %v2859, %v2855
  %v3300 = vpack.c.b16 %v2860, %v2856
  %v3301 = vpack.c.b16 %v2861, %v2857
  %v3302 = vpack.c.b16 %v2862, %v2858
  %v3303 = vpack.c.b16 %v2867, %v2863
  %v3304 = vpack.c.b16 %v2868, %v2864
  %v3305 = vpack.c.b16 %v2869, %v2865
  %v3306 = vpack.c.b16 %v2870, %v2866
  %v3307 = vpack.c.b16 %v2875, %v2871
  %v3308 = vpack.c.b16 %v2876, %v2872
  %v3309 = vpack.c.b16 %v2877, %v2873
  %v3310 = vpack.c.b16 %v2878, %v2874
  %v3311 = vpack.c.b16 %v2883, %v2879
  %v3312 = vpack.c.b16 %v2884, %v2880
  %v3313 = vpack.c.b16 %v2885, %v2881
  %v3314 = vpack.c.b16 %v2886, %v2882
  %v3315 = vpack.c.b16 %v2891, %v2887
  %v3316 = vpack.c.b16 %v2892, %v2888
  %v3317 = vpack.c.b16 %v2893, %v2889
  %v3318 = vpack.c.b16 %v2894, %v2890
  %v3319 = vpack.c.b16 %v2899, %v2895
  %v3320 = vpack.c.b16 %v2900, %v2896
  %v3321 = vpack.c.b16 %v2901, %v2897
  %v3322 = vpack.c.b16 %v2902, %v2898
  %v3323 = vpack.c.b16 %v2907, %v2903
  %v3324 = vpack.c.b16 %v2908, %v2904
  %v3325 = vpack.c.b16 %v2909, %v2905
  %v3326 = vpack.c.b16 %v2910, %v2906
  %v3327 = vpack.c.b16 %v2915, %v2911
  %v3328 = vpack.c.b16 %v2916, %v2912
  %v3329 = vpack.c.b16 %v2917, %v2913
  %v3330 = vpack.c.b16 %v2918, %v2914
  %v3331 = vpack.c.b16 %v2923, %v2919
  %v3332 = vpack.c.b16 %v2924, %v2920
  %v3333 = vpack.c.b16 %v2925, %v2921
  %v3334 = vpack.c.b16 %v2926, %v2922
  %v3335 = vpack.c.b16 %v2931, %v2927
  %v3336 = vpack.c.b16 %v2932, %v2928
  %v3337 = vpack.c.b16 %v2933, %v2929
  %v3338 = vpack.c.b16 %v2934, %v2930
  %v3339 = vpack.c.b16 %v2939, %v2935
  %v3340 = vpack.c.b16 %v2940, %v2936
  %v3341 = vpack.c.b16 %v2941, %v2937
  %v3342 = vpack.c.b16 %v2942, %v2938
  %v3343 = vpack.c.b16 %v2947, %v2943
  %v3344 = vpack.c.b16 %v2948, %v2944
  %v3345 = vpack.c.b16 %v2949, %v2945
  %v3346 = vpack.c.b16 %v2950, %v2946
  %v3347 = vpack.c.b16 %v2955, %v2951
  %v3348 = vpack.c.b16 %v2956, %v2952
  %v3349 = vpack.c.b16 %v2957, %v2953
  %v3350 = vpack.c.b16 %v2958, %v2954
  %v3351 = vpack.c.b16 %v2963, %v2959
  %v3352 = vpack.c.b16 %v2964, %v2960
  %v3353 = vpack.c.b16 %v2965, %v2961
  %v3354 = vpack.c.b16 %v2966, %v2962
  %v3355 = vpack.c.b16 %v2971, %v2967
  %v3356 = vpack.c.b16 %v2972, %v2968
  %v3357 = vpack.c.b16 %v2973, %v2969
  %v3358 = vpack.c.b16 %v2974, %v2970
  %v3359 = vpack.c.b16 %v2979, %v2975
  %v3360 = vpack.c.b16 %v2980, %v2976
  %v3361 = vpack.c.b16 %v2981, %v2977
  %v3362 = vpack.c.b16 %v2982, %v2978
  %v3363 = vpack.c.b16 %v2987, %v2983
  %v3364 = vpack.c.b16 %v2988, %v2984
  %v3365 = vpack.c.b16 %v2989, %v2985
  %v3366 = vpack.c.b16 %v2990, %v2986
  %v3367 = vpack.c.b16 %v2995, %v2991
  %v3368 = vpack.c.b16 %v2996, %v2992
  %v3369 = vpack.c.b16 %v2997, %v2993
  %v3370 = vpack.c.b16 %v2998, %v2994
  %v3371 = vpack.c.b16 %v3003, %v2999
  %v3372 = vpack.c.b16 %v3004, %v3000
  %v3373 = vpack.c.b16 %v3005, %v3001
  %v3374 = vpack.c.b16 %v3006, %v3002
  %v3375 = vpack.c.b16 %v3011, %v3007
  %v3376 = vpack.c.b16 %v3012, %v3008
  %v3377 = vpack.c.b16 %v3013, %v3009
  %v3378 = vpack.c.b16 %v3014, %v3010
  %v3379 = vpack.c.b16 %v3019, %v3015
  %v3380 = vpack.c.b16 %v3020, %v3016
  %v3381 = vpack.c.b16 %v3021, %v3017
  %v3382 = vpack.c.b16 %v3022, %v3018
  %v3383 = vpack.c.b16 %v3027, %v3023
  %v3384 = vpack.c.b16 %v3028, %v3024
  %v3385 = vpack.c.b16 %v3029, %v3025
  %v3386 = vpack.c.b16 %v3030, %v3026
  %v3387 = vpack.c.b16 %v3035, %v3031
  %v3388 = vpack.c.b16 %v3036, %v3032
  %v3389 = vpack.c.b16 %v3037, %v3033
  %v3390 = vpack.c.b16 %v3038, %v3034
  %v3391 = vpack.c.b16 %v3043, %v3039
  %v3392 = vpack.c.b16 %v3044, %v3040
  %v3393 = vpack.c.b16 %v3045, %v3041
  %v3394 = vpack.c.b16 %v3046, %v3042
  %v3395 = vpack.c.b16 %v3051, %v3047
  %v3396 = vpack.c.b16 %v3052, %v3048
  %v3397 = vpack.c.b16 %v3053, %v3049
  %v3398 = vpack.c.b16 %v3054, %v3050
  %v3399 = vpack.c.b16 %v3059, %v3055
  %v3400 = vpack.c.b16 %v3060, %v3056
  %v3401 = vpack.c.b16 %v3061, %v3057
  %v3402 = vpack.c.b16 %v3062, %v3058
  %v3403 = vpack.c.b16 %v3067, %v3063
  %v3404 = vpack.c.b16 %v3068, %v3064
  %v3405 = vpack.c.b16 %v3069, %v3065
  %v3406 = vpack.c.b16 %v3070, %v3066
  %v3407 = vpack.c.b16 %v3075, %v3071
  %v3408 = vpack.c.b16 %v3076, %v3072
  %v3409 = vpack.c.b16 %v3077, %v3073
  %v3410 = vpack.c.b16 %v3078, %v3074
  %v3411 = vpack.c.b16 %v3083, %v3079
  %v3412 = vpack.c.b16 %v3084, %v3080
  %v3413 = vpack.c.b16 %v3085, %v3081
  %v3414 = vpack.c.b16 %v3086, %v3082
  %v3415 = vpack.c.b16 %v3091, %v3087
  %v3416 = vpack.c.b16 %v3092, %v3088
  %v3417 = vpack.c.b16 %v3093, %v3089
  %v3418 = vpack.c.b16 %v3094, %v3090
  %v3419 = vpack.c.b16 %v3099, %v3095
  %v3420 = vpack.c.b16 %v3100, %v3096
  %v3421 = vpack.c.b16 %v3101, %v3097
  %v3422 = vpack.c.b16 %v3102, %v3098
  %v3423 = vpack.c.b16 %v3107, %v3103
  %v3424 = vpack.c.b16 %v3108, %v3104
  %v3425 = vpack.c.b16 %v3109, %v3105
  %v3426 = vpack.c.b16 %v3110, %v3106
  %v3427 = vpack.c.b16 %v3115, %v3111
  %v3428 = vpack.c.b16 %v3116, %v3112
  %v3429 = vpack.c.b16 %v3117, %v3113
  %v3430 = vpack.c.b16 %v3118, %v3114
  %v3431 = vpack.c.b16 %v3123, %v3119
  %v3432 = vpack.c.b16 %v3124, %v3120
  %v3433 = vpack.c.b16 %v3125, %v3121
  %v3434 = vpack.c.b16 %v3126, %v3122
  %v3435 = vpack.c.b16 %v3131, %v3127
  %v3436 = vpack.c.b16 %v3132, %v3128
  %v3437 = vpack.c.b16 %v3133, %v3129
  %v3438 = vpack.c.b16 %v3134, %v3130
  %v3439 = vpack.c.b16 %v3139, %v3135
  %v3440 = vpack.c.b16 %v3140, %v3136
  %v3441 = vpack.c.b16 %v3141, %v3137
  %v3442 = vpack.c.b16 %v3142, %v3138
  %v3443 = vpack.c.b16 %v3147, %v3143
  %v3444 = vpack.c.b16 %v3148, %v3144
  %v3445 = vpack.c.b16 %v3149, %v3145
  %v3446 = vpack.c.b16 %v3150, %v3146
  %v3447 = vpack.c.b16 %v3155, %v3151
  %v3448 = vpack.c.b16 %v3156, %v3152
  %v3449 = vpack.c.b16 %v3157, %v3153
  %v3450 = vpack.c.b16 %v3158, %v3154
  %v3451 = vpack.c.b16 %v3163, %v3159
  %v3452 = vpack.c.b16 %v3164, %v3160
  %v3453 = vpack.c.b16 %v3165, %v3161
  %v3454 = vpack.c.b16 %v3166, %v3162
  %v3455 = vpack.c.b16 %v3171, %v3167
  %v3456 = vpack.c.b16 %v3172, %v3168
  %v3457 = vpack.c.b16 %v3173, %v3169
  %v3458 = vpack.c.b16 %v3174, %v3170
  %v3459 = vpack.c.b16 %v3179, %v3175
  %v3460 = vpack.c.b16 %v3180, %v3176
  %v3461 = vpack.c.b16 %v3181, %v3177
  %v3462 = vpack.c.b16 %v3182, %v3178
  %v3463 = vpack.c.b16 %v3187, %v3183
  %v3464 = vpack.c.b16 %v3188, %v3184
  %v3465 = vpack.c.b16 %v3189, %v3185
  %v3466 = vpack.c.b16 %v3190, %v3186
  %v3467 = vpack.c.b16 %v3195, %v3191
  %v3468 = vpack.c.b16 %v3196, %v3192
  %v3469 = vpack.c.b16 %v3197, %v3193
  %v3470 = vpack.c.b16 %v3198, %v3194
  %v3471 = vpack.c.b16 %v3203, %v3199
  %v3472 = vpack.c.b16 %v3204, %v3200
  %v3473 = vpack.c.b16 %v3205, %v3201
  %v3474 = vpack.c.b16 %v3206, %v3202
  %v3475 = vpack.c.b16 %v3211, %v3207
  %v3476 = vpack.c.b16 %v3212, %v3208
  %v3477 = vpack.c.b16 %v3213, %v3209
  %v3478 = vpack.c.b16 %v3214, %v3210
  %v3479 = vpack.c.b16 %v3219, %v3215
  %v3480 = vpack.c.b16 %v3220, %v3216
  %v3481 = vpack.c.b16 %v3221, %v3217
  %v3482 = vpack.c.b16 %v3222, %v3218
  %v3483 = vpack.c.b16 %v3227, %v3223
  %v3484 = vpack.c.b16 %v3228, %v3224
  %v3485 = vpack.c.b16 %v3229, %v3225
  %v3486 = vpack.c.b16 %v3230, %v3226
  %3743 = vmatprep.subr.bf16.mxu0 %v3260
  %3744 = vmatpush1.bf16.msra.mxu0 %v3259
  %3745 = vmatprep.subr.bf16.mxu0 %v3256
  %3746 = vmatpush1.bf16.msra.mxu0 %v3255
  %3747 = vmatprep.subr.bf16.mxu0 %v3252
  %3748 = vmatpush1.bf16.msra.mxu0 %v3251
  %3749 = vmatprep.subr.bf16.mxu0 %v3248
  %3750 = vmatpush1.bf16.msra.mxu0 %v3247
  %3751 = vmatprep.subr.bf16.mxu0 %v3244
  %3752 = vmatpush1.bf16.msra.mxu0 %v3243
  %3753 = vmatprep.subr.bf16.mxu0 %v3240
  %3754 = vmatpush1.bf16.msra.mxu0 %v3239
  %3755 = vmatprep.subr.bf16.mxu0 %v3236
  %3756 = vmatpush1.bf16.msra.mxu0 %v3235
  %3757 = vmatprep.subr.bf16.mxu0 %v3232
  %3758 = vmatpush1.bf16.msra.mxu0 %v3231
  %3759 = vmatprep.subr.bf16.mxu0 %v3292
  %3760 = vmatpush2.bf16.msra.mxu0 %v3291
  %3761 = vmatprep.subr.bf16.mxu0 %v3288
  %3762 = vmatpush2.bf16.msra.mxu0 %v3287
  %3763 = vmatprep.subr.bf16.mxu0 %v3284
  %3764 = vmatpush2.bf16.msra.mxu0 %v3283
  %3765 = vmatprep.subr.bf16.mxu0 %v3280
  %3766 = vmatpush2.bf16.msra.mxu0 %v3279
  %3767 = vmatprep.subr.bf16.mxu0 %v3276
  %3768 = vmatpush2.bf16.msra.mxu0 %v3275
  %3769 = vmatprep.subr.bf16.mxu0 %v3272
  %3770 = vmatpush2.bf16.msra.mxu0 %v3271
  %3771 = vmatprep.subr.bf16.mxu0 %v3268
  %3772 = vmatpush2.bf16.msra.mxu0 %v3267
  %3773 = vmatprep.subr.bf16.mxu0 %v3264
  %3774 = vmatpush2.bf16.msra.mxu0 %v3263
  %3775 = vmatprep.mubr.bf16.mxu0 %v2448
  %3776 = vmatmul.mubr.bf16.gmra.mxu0 %v2447
  %v3777 = vpop.f32.mrf.mxu0
  %v3778 = vadd.f32 %v2243, %v3777
  %v3779 = vpop.f32.mrf.mxu0
  %v3780 = vadd.f32 %v2245, %v3779
  %v3781 = vpop.f32.mrf.mxu0
  %v3782 = vadd.f32 %v2247, %v3781
  %v3783 = vpop.f32.mrf.mxu0
  %v3784 = vadd.f32 %v2249, %v3783
  %3785 = vdwg.mxu0
  %3786 = vmatprep.subr.bf16.mxu0 %v3324
  %3787 = vmatpush1.bf16.msra.mxu0 %v3323
  %3788 = vmatprep.subr.bf16.mxu0 %v3320
  %3789 = vmatpush1.bf16.msra.mxu0 %v3319
  %3790 = vmatprep.subr.bf16.mxu0 %v3316
  %3791 = vmatpush1.bf16.msra.mxu0 %v3315
  %3792 = vmatprep.subr.bf16.mxu0 %v3312
  %3793 = vmatpush1.bf16.msra.mxu0 %v3311
  %3794 = vmatprep.subr.bf16.mxu0 %v3308
  %3795 = vmatpush1.bf16.msra.mxu0 %v3307
  %3796 = vmatprep.subr.bf16.mxu0 %v3304
  %3797 = vmatpush1.bf16.msra.mxu0 %v3303
  %3798 = vmatprep.subr.bf16.mxu0 %v3300
  %3799 = vmatpush1.bf16.msra.mxu0 %v3299
  %3800 = vmatprep.subr.bf16.mxu0 %v3296
  %3801 = vmatpush1.bf16.msra.mxu0 %v3295
  %3802 = vmatprep.subr.bf16.mxu0 %v3356
  %3803 = vmatpush2.bf16.msra.mxu0 %v3355
  %3804 = vmatprep.subr.bf16.mxu0 %v3352
  %3805 = vmatpush2.bf16.msra.mxu0 %v3351
  %3806 = vmatprep.subr.bf16.mxu0 %v3348
  %3807 = vmatpush2.bf16.msra.mxu0 %v3347
  %3808 = vmatprep.subr.bf16.mxu0 %v3344
  %3809 = vmatpush2.bf16.msra.mxu0 %v3343
  %3810 = vmatprep.subr.bf16.mxu0 %v3340
  %3811 = vmatpush2.bf16.msra.mxu0 %v3339
  %3812 = vmatprep.subr.bf16.mxu0 %v3336
  %3813 = vmatpush2.bf16.msra.mxu0 %v3335
  %3814 = vmatprep.subr.bf16.mxu0 %v3332
  %3815 = vmatpush2.bf16.msra.mxu0 %v3331
  %3816 = vmatprep.subr.bf16.mxu0 %v3328
  %3817 = vmatpush2.bf16.msra.mxu0 %v3327
  %3818 = vmatprep.mubr.bf16.mxu0 %v2450
  %3819 = vmatmul.mubr.bf16.gmra.mxu0 %v2449
  %v3820 = vpop.f32.mrf.mxu0
  %v3821 = vadd.f32 %v3778, %v3820
  %v3822 = vpop.f32.mrf.mxu0
  %v3823 = vadd.f32 %v3780, %v3822
  %v3824 = vpop.f32.mrf.mxu0
  %v3825 = vadd.f32 %v3782, %v3824
  %v3826 = vpop.f32.mrf.mxu0
  %v3827 = vadd.f32 %v3784, %v3826
  %3828 = vdwg.mxu0
  %3829 = vmatprep.subr.bf16.mxu0 %v3388
  %3830 = vmatpush1.bf16.msra.mxu0 %v3387
  %3831 = vmatprep.subr.bf16.mxu0 %v3384
  %3832 = vmatpush1.bf16.msra.mxu0 %v3383
  %3833 = vmatprep.subr.bf16.mxu0 %v3380
  %3834 = vmatpush1.bf16.msra.mxu0 %v3379
  %3835 = vmatprep.subr.bf16.mxu0 %v3376
  %3836 = vmatpush1.bf16.msra.mxu0 %v3375
  %3837 = vmatprep.subr.bf16.mxu0 %v3372
  %3838 = vmatpush1.bf16.msra.mxu0 %v3371
  %3839 = vmatprep.subr.bf16.mxu0 %v3368
  %3840 = vmatpush1.bf16.msra.mxu0 %v3367
  %3841 = vmatprep.subr.bf16.mxu0 %v3364
  %3842 = vmatpush1.bf16.msra.mxu0 %v3363
  %3843 = vmatprep.subr.bf16.mxu0 %v3360
  %3844 = vmatpush1.bf16.msra.mxu0 %v3359
  %3845 = vmatprep.subr.bf16.mxu0 %v3420
  %3846 = vmatpush2.bf16.msra.mxu0 %v3419
  %3847 = vmatprep.subr.bf16.mxu0 %v3416
  %3848 = vmatpush2.bf16.msra.mxu0 %v3415
  %3849 = vmatprep.subr.bf16.mxu0 %v3412
  %3850 = vmatpush2.bf16.msra.mxu0 %v3411
  %3851 = vmatprep.subr.bf16.mxu0 %v3408
  %3852 = vmatpush2.bf16.msra.mxu0 %v3407
  %3853 = vmatprep.subr.bf16.mxu0 %v3404
  %3854 = vmatpush2.bf16.msra.mxu0 %v3403
  %3855 = vmatprep.subr.bf16.mxu0 %v3400
  %3856 = vmatpush2.bf16.msra.mxu0 %v3399
  %3857 = vmatprep.subr.bf16.mxu0 %v3396
  %3858 = vmatpush2.bf16.msra.mxu0 %v3395
  %3859 = vmatprep.subr.bf16.mxu0 %v3392
  %3860 = vmatpush2.bf16.msra.mxu0 %v3391
  %3861 = vmatprep.mubr.bf16.mxu0 %v2452
  %3862 = vmatmul.mubr.bf16.gmra.mxu0 %v2451
  %v3863 = vpop.f32.mrf.mxu0
  %v3864 = vadd.f32 %v3821, %v3863
  %v3865 = vpop.f32.mrf.mxu0
  %v3866 = vadd.f32 %v3823, %v3865
  %v3867 = vpop.f32.mrf.mxu0
  %v3868 = vadd.f32 %v3825, %v3867
  %v3869 = vpop.f32.mrf.mxu0
  %v3870 = vadd.f32 %v3827, %v3869
  %3871 = vdwg.mxu0
  %3872 = vmatprep.subr.bf16.mxu0 %v3452
  %3873 = vmatpush1.bf16.msra.mxu0 %v3451
  %3874 = vmatprep.subr.bf16.mxu0 %v3448
  %3875 = vmatpush1.bf16.msra.mxu0 %v3447
  %3876 = vmatprep.subr.bf16.mxu0 %v3444
  %3877 = vmatpush1.bf16.msra.mxu0 %v3443
  %3878 = vmatprep.subr.bf16.mxu0 %v3440
  %3879 = vmatpush1.bf16.msra.mxu0 %v3439
  %3880 = vmatprep.subr.bf16.mxu0 %v3436
  %3881 = vmatpush1.bf16.msra.mxu0 %v3435
  %3882 = vmatprep.subr.bf16.mxu0 %v3432
  %3883 = vmatpush1.bf16.msra.mxu0 %v3431
  %3884 = vmatprep.subr.bf16.mxu0 %v3428
  %3885 = vmatpush1.bf16.msra.mxu0 %v3427
  %3886 = vmatprep.subr.bf16.mxu0 %v3424
  %3887 = vmatpush1.bf16.msra.mxu0 %v3423
  %3888 = vmatprep.subr.bf16.mxu0 %v3484
  %3889 = vmatpush2.bf16.msra.mxu0 %v3483
  %3890 = vmatprep.subr.bf16.mxu0 %v3480
  %3891 = vmatpush2.bf16.msra.mxu0 %v3479
  %3892 = vmatprep.subr.bf16.mxu0 %v3476
  %3893 = vmatpush2.bf16.msra.mxu0 %v3475
  %3894 = vmatprep.subr.bf16.mxu0 %v3472
  %3895 = vmatpush2.bf16.msra.mxu0 %v3471
  %3896 = vmatprep.subr.bf16.mxu0 %v3468
  %3897 = vmatpush2.bf16.msra.mxu0 %v3467
  %3898 = vmatprep.subr.bf16.mxu0 %v3464
  %3899 = vmatpush2.bf16.msra.mxu0 %v3463
  %3900 = vmatprep.subr.bf16.mxu0 %v3460
  %3901 = vmatpush2.bf16.msra.mxu0 %v3459
  %3902 = vmatprep.subr.bf16.mxu0 %v3456
  %3903 = vmatpush2.bf16.msra.mxu0 %v3455
  %3904 = vmatprep.mubr.bf16.mxu0 %v2454
  %3905 = vmatmul.mubr.bf16.gmra.mxu0 %v2453
  %v3906 = vpop.f32.mrf.mxu0
  %v3907 = vadd.f32 %v3864, %v3906
  %v3908 = vpop.f32.mrf.mxu0
  %v3909 = vadd.f32 %v3866, %v3908
  %v3910 = vpop.f32.mrf.mxu0
  %v3911 = vadd.f32 %v3868, %v3910
  %v3912 = vpop.f32.mrf.mxu0
  %v3913 = vadd.f32 %v3870, %v3912
  %3914 = vdwg.mxu0
  %3915 = vmatprep.subr.bf16.mxu0 %v3262
  %3916 = vmatpush1.bf16.msra.mxu0 %v3261
  %3917 = vmatprep.subr.bf16.mxu0 %v3258
  %3918 = vmatpush1.bf16.msra.mxu0 %v3257
  %3919 = vmatprep.subr.bf16.mxu0 %v3254
  %3920 = vmatpush1.bf16.msra.mxu0 %v3253
  %3921 = vmatprep.subr.bf16.mxu0 %v3250
  %3922 = vmatpush1.bf16.msra.mxu0 %v3249
  %3923 = vmatprep.subr.bf16.mxu0 %v3246
  %3924 = vmatpush1.bf16.msra.mxu0 %v3245
  %3925 = vmatprep.subr.bf16.mxu0 %v3242
  %3926 = vmatpush1.bf16.msra.mxu0 %v3241
  %3927 = vmatprep.subr.bf16.mxu0 %v3238
  %3928 = vmatpush1.bf16.msra.mxu0 %v3237
  %3929 = vmatprep.subr.bf16.mxu0 %v3234
  %3930 = vmatpush1.bf16.msra.mxu0 %v3233
  %3931 = vmatprep.subr.bf16.mxu0 %v3294
  %3932 = vmatpush2.bf16.msra.mxu0 %v3293
  %3933 = vmatprep.subr.bf16.mxu0 %v3290
  %3934 = vmatpush2.bf16.msra.mxu0 %v3289
  %3935 = vmatprep.subr.bf16.mxu0 %v3286
  %3936 = vmatpush2.bf16.msra.mxu0 %v3285
  %3937 = vmatprep.subr.bf16.mxu0 %v3282
  %3938 = vmatpush2.bf16.msra.mxu0 %v3281
  %3939 = vmatprep.subr.bf16.mxu0 %v3278
  %3940 = vmatpush2.bf16.msra.mxu0 %v3277
  %3941 = vmatprep.subr.bf16.mxu0 %v3274
  %3942 = vmatpush2.bf16.msra.mxu0 %v3273
  %3943 = vmatprep.subr.bf16.mxu0 %v3270
  %3944 = vmatpush2.bf16.msra.mxu0 %v3269
  %3945 = vmatprep.subr.bf16.mxu0 %v3266
  %3946 = vmatpush2.bf16.msra.mxu0 %v3265
  %3947 = vmatprep.mubr.bf16.mxu0 %v2448
  %3948 = vmatmul.mubr.bf16.gmra.mxu0 %v2447
  %v3949 = vpop.f32.mrf.mxu0
  %v3950 = vadd.f32 %v2415, %v3949
  %v3951 = vpop.f32.mrf.mxu0
  %v3952 = vadd.f32 %v2417, %v3951
  %v3953 = vpop.f32.mrf.mxu0
  %v3954 = vadd.f32 %v2419, %v3953
  %v3955 = vpop.f32.mrf.mxu0
  %v3956 = vadd.f32 %v2421, %v3955
  %3957 = vdwg.mxu0
  %3958 = vmatprep.subr.bf16.mxu0 %v3326
  %3959 = vmatpush1.bf16.msra.mxu0 %v3325
  %3960 = vmatprep.subr.bf16.mxu0 %v3322
  %3961 = vmatpush1.bf16.msra.mxu0 %v3321
  %3962 = vmatprep.subr.bf16.mxu0 %v3318
  %3963 = vmatpush1.bf16.msra.mxu0 %v3317
  %3964 = vmatprep.subr.bf16.mxu0 %v3314
  %3965 = vmatpush1.bf16.msra.mxu0 %v3313
  %3966 = vmatprep.subr.bf16.mxu0 %v3310
  %3967 = vmatpush1.bf16.msra.mxu0 %v3309
  %3968 = vmatprep.subr.bf16.mxu0 %v3306
  %3969 = vmatpush1.bf16.msra.mxu0 %v3305
  %3970 = vmatprep.subr.bf16.mxu0 %v3302
  %3971 = vmatpush1.bf16.msra.mxu0 %v3301
  %3972 = vmatprep.subr.bf16.mxu0 %v3298
  %3973 = vmatpush1.bf16.msra.mxu0 %v3297
  %3974 = vmatprep.subr.bf16.mxu0 %v3358
  %3975 = vmatpush2.bf16.msra.mxu0 %v3357
  %3976 = vmatprep.subr.bf16.mxu0 %v3354
  %3977 = vmatpush2.bf16.msra.mxu0 %v3353
  %3978 = vmatprep.subr.bf16.mxu0 %v3350
  %3979 = vmatpush2.bf16.msra.mxu0 %v3349
  %3980 = vmatprep.subr.bf16.mxu0 %v3346
  %3981 = vmatpush2.bf16.msra.mxu0 %v3345
  %3982 = vmatprep.subr.bf16.mxu0 %v3342
  %3983 = vmatpush2.bf16.msra.mxu0 %v3341
  %3984 = vmatprep.subr.bf16.mxu0 %v3338
  %3985 = vmatpush2.bf16.msra.mxu0 %v3337
  %3986 = vmatprep.subr.bf16.mxu0 %v3334
  %3987 = vmatpush2.bf16.msra.mxu0 %v3333
  %3988 = vmatprep.subr.bf16.mxu0 %v3330
  %3989 = vmatpush2.bf16.msra.mxu0 %v3329
  %3990 = vmatprep.mubr.bf16.mxu0 %v2450
  %3991 = vmatmul.mubr.bf16.gmra.mxu0 %v2449
  %v3992 = vpop.f32.mrf.mxu0
  %v3993 = vadd.f32 %v3950, %v3992
  %v3994 = vpop.f32.mrf.mxu0
  %v3995 = vadd.f32 %v3952, %v3994
  %v3996 = vpop.f32.mrf.mxu0
  %v3997 = vadd.f32 %v3954, %v3996
  %v3998 = vpop.f32.mrf.mxu0
  %v3999 = vadd.f32 %v3956, %v3998
  %4000 = vdwg.mxu0
  %4001 = vmatprep.subr.bf16.mxu0 %v3390
  %4002 = vmatpush1.bf16.msra.mxu0 %v3389
  %4003 = vmatprep.subr.bf16.mxu0 %v3386
  %4004 = vmatpush1.bf16.msra.mxu0 %v3385
  %4005 = vmatprep.subr.bf16.mxu0 %v3382
  %4006 = vmatpush1.bf16.msra.mxu0 %v3381
  %4007 = vmatprep.subr.bf16.mxu0 %v3378
  %4008 = vmatpush1.bf16.msra.mxu0 %v3377
  %4009 = vmatprep.subr.bf16.mxu0 %v3374
  %4010 = vmatpush1.bf16.msra.mxu0 %v3373
  %4011 = vmatprep.subr.bf16.mxu0 %v3370
  %4012 = vmatpush1.bf16.msra.mxu0 %v3369
  %4013 = vmatprep.subr.bf16.mxu0 %v3366
  %4014 = vmatpush1.bf16.msra.mxu0 %v3365
  %4015 = vmatprep.subr.bf16.mxu0 %v3362
  %4016 = vmatpush1.bf16.msra.mxu0 %v3361
  %4017 = vmatprep.subr.bf16.mxu0 %v3422
  %4018 = vmatpush2.bf16.msra.mxu0 %v3421
  %4019 = vmatprep.subr.bf16.mxu0 %v3418
  %4020 = vmatpush2.bf16.msra.mxu0 %v3417
  %4021 = vmatprep.subr.bf16.mxu0 %v3414
  %4022 = vmatpush2.bf16.msra.mxu0 %v3413
  %4023 = vmatprep.subr.bf16.mxu0 %v3410
  %4024 = vmatpush2.bf16.msra.mxu0 %v3409
  %4025 = vmatprep.subr.bf16.mxu0 %v3406
  %4026 = vmatpush2.bf16.msra.mxu0 %v3405
  %4027 = vmatprep.subr.bf16.mxu0 %v3402
  %4028 = vmatpush2.bf16.msra.mxu0 %v3401
  %4029 = vmatprep.subr.bf16.mxu0 %v3398
  %4030 = vmatpush2.bf16.msra.mxu0 %v3397
  %4031 = vmatprep.subr.bf16.mxu0 %v3394
  %4032 = vmatpush2.bf16.msra.mxu0 %v3393
  %4033 = vmatprep.mubr.bf16.mxu0 %v2452
  %4034 = vmatmul.mubr.bf16.gmra.mxu0 %v2451
  %v4035 = vpop.f32.mrf.mxu0
  %v4036 = vadd.f32 %v3993, %v4035
  %v4037 = vpop.f32.mrf.mxu0
  %v4038 = vadd.f32 %v3995, %v4037
  %v4039 = vpop.f32.mrf.mxu0
  %v4040 = vadd.f32 %v3997, %v4039
  %v4041 = vpop.f32.mrf.mxu0
  %v4042 = vadd.f32 %v3999, %v4041
  %4043 = vdwg.mxu0
  %4044 = vmatprep.subr.bf16.mxu0 %v3454
  %4045 = vmatpush1.bf16.msra.mxu0 %v3453
  %4046 = vmatprep.subr.bf16.mxu0 %v3450
  %4047 = vmatpush1.bf16.msra.mxu0 %v3449
  %4048 = vmatprep.subr.bf16.mxu0 %v3446
  %4049 = vmatpush1.bf16.msra.mxu0 %v3445
  %4050 = vmatprep.subr.bf16.mxu0 %v3442
  %4051 = vmatpush1.bf16.msra.mxu0 %v3441
  %4052 = vmatprep.subr.bf16.mxu0 %v3438
  %4053 = vmatpush1.bf16.msra.mxu0 %v3437
  %4054 = vmatprep.subr.bf16.mxu0 %v3434
  %4055 = vmatpush1.bf16.msra.mxu0 %v3433
  %4056 = vmatprep.subr.bf16.mxu0 %v3430
  %4057 = vmatpush1.bf16.msra.mxu0 %v3429
  %4058 = vmatprep.subr.bf16.mxu0 %v3426
  %4059 = vmatpush1.bf16.msra.mxu0 %v3425
  %4060 = vmatprep.subr.bf16.mxu0 %v3486
  %4061 = vmatpush2.bf16.msra.mxu0 %v3485
  %4062 = vmatprep.subr.bf16.mxu0 %v3482
  %4063 = vmatpush2.bf16.msra.mxu0 %v3481
  %4064 = vmatprep.subr.bf16.mxu0 %v3478
  %4065 = vmatpush2.bf16.msra.mxu0 %v3477
  %4066 = vmatprep.subr.bf16.mxu0 %v3474
  %4067 = vmatpush2.bf16.msra.mxu0 %v3473
  %4068 = vmatprep.subr.bf16.mxu0 %v3470
  %4069 = vmatpush2.bf16.msra.mxu0 %v3469
  %4070 = vmatprep.subr.bf16.mxu0 %v3466
  %4071 = vmatpush2.bf16.msra.mxu0 %v3465
  %4072 = vmatprep.subr.bf16.mxu0 %v3462
  %4073 = vmatpush2.bf16.msra.mxu0 %v3461
  %4074 = vmatprep.subr.bf16.mxu0 %v3458
  %4075 = vmatpush2.bf16.msra.mxu0 %v3457
  %4076 = vmatprep.mubr.bf16.mxu0 %v2454
  %4077 = vmatmul.mubr.bf16.gmra.mxu0 %v2453
  %v4078 = vpop.f32.mrf.mxu0
  %v4079 = vadd.f32 %v4036, %v4078
  %v4080 = vpop.f32.mrf.mxu0
  %v4081 = vadd.f32 %v4038, %v4080
  %v4082 = vpop.f32.mrf.mxu0
  %v4083 = vadd.f32 %v4040, %v4082
  %v4084 = vpop.f32.mrf.mxu0
  %v4085 = vadd.f32 %v4042, %v4084
  %4086 = vdwg.mxu0
  %v4088 = vshrl.u32 %v2447, 16
  %v4090 = vshll.u32 %v2447, 16
  %v4092 = vrot.slane %v4090, 1
  %v4093 = vor.u32 %v4088, %v4092
  %v4095 = vshrl.u32 %v2448, 16
  %v4097 = vshll.u32 %v2448, 16
  %v4099 = vrot.slane %v4097, 1
  %v4100 = vor.u32 %v4095, %v4099
  %v4102 = vshrl.u32 %v2449, 16
  %v4104 = vshll.u32 %v2449, 16
  %v4106 = vrot.slane %v4104, 1
  %v4107 = vor.u32 %v4102, %v4106
  %v4109 = vshrl.u32 %v2450, 16
  %v4111 = vshll.u32 %v2450, 16
  %v4113 = vrot.slane %v4111, 1
  %v4114 = vor.u32 %v4109, %v4113
  %v4116 = vshrl.u32 %v2451, 16
  %v4118 = vshll.u32 %v2451, 16
  %v4120 = vrot.slane %v4118, 1
  %v4121 = vor.u32 %v4116, %v4120
  %v4123 = vshrl.u32 %v2452, 16
  %v4125 = vshll.u32 %v2452, 16
  %v4127 = vrot.slane %v4125, 1
  %v4128 = vor.u32 %v4123, %v4127
  %v4130 = vshrl.u32 %v2453, 16
  %v4132 = vshll.u32 %v2453, 16
  %v4134 = vrot.slane %v4132, 1
  %v4135 = vor.u32 %v4130, %v4134
  %v4137 = vshrl.u32 %v2454, 16
  %v4139 = vshll.u32 %v2454, 16
  %v4141 = vrot.slane %v4139, 1
  %v4142 = vor.u32 %v4137, %v4141
  %4151 = vmatprep.subr.bf16.mxu0 %v1596
  %4152 = vmatpush1.bf16.msra.mxu0 %v1595
  %4153 = vmatprep.subr.bf16.mxu0 %v1592
  %4154 = vmatpush1.bf16.msra.mxu0 %v1591
  %4155 = vmatprep.subr.bf16.mxu0 %v1588
  %4156 = vmatpush1.bf16.msra.mxu0 %v1587
  %4157 = vmatprep.subr.bf16.mxu0 %v1584
  %4158 = vmatpush1.bf16.msra.mxu0 %v1583
  %4159 = vmatprep.subr.bf16.mxu0 %v1580
  %4160 = vmatpush1.bf16.msra.mxu0 %v1579
  %4161 = vmatprep.subr.bf16.mxu0 %v1576
  %4162 = vmatpush1.bf16.msra.mxu0 %v1575
  %4163 = vmatprep.subr.bf16.mxu0 %v1572
  %4164 = vmatpush1.bf16.msra.mxu0 %v1571
  %4165 = vmatprep.subr.bf16.mxu0 %v1568
  %4166 = vmatpush1.bf16.msra.mxu0 %v1567
  %4167 = vmatprep.subr.bf16.mxu0 %v1628
  %4168 = vmatpush2.bf16.msra.mxu0 %v1627
  %4169 = vmatprep.subr.bf16.mxu0 %v1624
  %4170 = vmatpush2.bf16.msra.mxu0 %v1623
  %4171 = vmatprep.subr.bf16.mxu0 %v1620
  %4172 = vmatpush2.bf16.msra.mxu0 %v1619
  %4173 = vmatprep.subr.bf16.mxu0 %v1616
  %4174 = vmatpush2.bf16.msra.mxu0 %v1615
  %4175 = vmatprep.subr.bf16.mxu0 %v1612
  %4176 = vmatpush2.bf16.msra.mxu0 %v1611
  %4177 = vmatprep.subr.bf16.mxu0 %v1608
  %4178 = vmatpush2.bf16.msra.mxu0 %v1607
  %4179 = vmatprep.subr.bf16.mxu0 %v1604
  %4180 = vmatpush2.bf16.msra.mxu0 %v1603
  %4181 = vmatprep.subr.bf16.mxu0 %v1600
  %4182 = vmatpush2.bf16.msra.mxu0 %v1599
  %4183 = vmatprep.mubr.bf16.mxu0 %v4100
  %4184 = vmatmul.mubr.bf16.gmra.mxu0 %v4093
  %v4185 = vpop.f32.mrf.mxu0
  %v4186 = vadd.f32 0.0, %v4185
  %v4187 = vpop.f32.mrf.mxu0
  %v4188 = vadd.f32 0.0, %v4187
  %v4189 = vpop.f32.mrf.mxu0
  %v4190 = vadd.f32 0.0, %v4189
  %v4191 = vpop.f32.mrf.mxu0
  %v4192 = vadd.f32 0.0, %v4191
  %4193 = vdwg.mxu0
  %4194 = vmatprep.subr.bf16.mxu0 %v1660
  %4195 = vmatpush1.bf16.msra.mxu0 %v1659
  %4196 = vmatprep.subr.bf16.mxu0 %v1656
  %4197 = vmatpush1.bf16.msra.mxu0 %v1655
  %4198 = vmatprep.subr.bf16.mxu0 %v1652
  %4199 = vmatpush1.bf16.msra.mxu0 %v1651
  %4200 = vmatprep.subr.bf16.mxu0 %v1648
  %4201 = vmatpush1.bf16.msra.mxu0 %v1647
  %4202 = vmatprep.subr.bf16.mxu0 %v1644
  %4203 = vmatpush1.bf16.msra.mxu0 %v1643
  %4204 = vmatprep.subr.bf16.mxu0 %v1640
  %4205 = vmatpush1.bf16.msra.mxu0 %v1639
  %4206 = vmatprep.subr.bf16.mxu0 %v1636
  %4207 = vmatpush1.bf16.msra.mxu0 %v1635
  %4208 = vmatprep.subr.bf16.mxu0 %v1632
  %4209 = vmatpush1.bf16.msra.mxu0 %v1631
  %4210 = vmatprep.subr.bf16.mxu0 %v1692
  %4211 = vmatpush2.bf16.msra.mxu0 %v1691
  %4212 = vmatprep.subr.bf16.mxu0 %v1688
  %4213 = vmatpush2.bf16.msra.mxu0 %v1687
  %4214 = vmatprep.subr.bf16.mxu0 %v1684
  %4215 = vmatpush2.bf16.msra.mxu0 %v1683
  %4216 = vmatprep.subr.bf16.mxu0 %v1680
  %4217 = vmatpush2.bf16.msra.mxu0 %v1679
  %4218 = vmatprep.subr.bf16.mxu0 %v1676
  %4219 = vmatpush2.bf16.msra.mxu0 %v1675
  %4220 = vmatprep.subr.bf16.mxu0 %v1672
  %4221 = vmatpush2.bf16.msra.mxu0 %v1671
  %4222 = vmatprep.subr.bf16.mxu0 %v1668
  %4223 = vmatpush2.bf16.msra.mxu0 %v1667
  %4224 = vmatprep.subr.bf16.mxu0 %v1664
  %4225 = vmatpush2.bf16.msra.mxu0 %v1663
  %4226 = vmatprep.mubr.bf16.mxu0 %v4114
  %4227 = vmatmul.mubr.bf16.gmra.mxu0 %v4107
  %v4228 = vpop.f32.mrf.mxu0
  %v4229 = vadd.f32 %v4186, %v4228
  %v4230 = vpop.f32.mrf.mxu0
  %v4231 = vadd.f32 %v4188, %v4230
  %v4232 = vpop.f32.mrf.mxu0
  %v4233 = vadd.f32 %v4190, %v4232
  %v4234 = vpop.f32.mrf.mxu0
  %v4235 = vadd.f32 %v4192, %v4234
  %4236 = vdwg.mxu0
  %4237 = vmatprep.subr.bf16.mxu0 %v1724
  %4238 = vmatpush1.bf16.msra.mxu0 %v1723
  %4239 = vmatprep.subr.bf16.mxu0 %v1720
  %4240 = vmatpush1.bf16.msra.mxu0 %v1719
  %4241 = vmatprep.subr.bf16.mxu0 %v1716
  %4242 = vmatpush1.bf16.msra.mxu0 %v1715
  %4243 = vmatprep.subr.bf16.mxu0 %v1712
  %4244 = vmatpush1.bf16.msra.mxu0 %v1711
  %4245 = vmatprep.subr.bf16.mxu0 %v1708
  %4246 = vmatpush1.bf16.msra.mxu0 %v1707
  %4247 = vmatprep.subr.bf16.mxu0 %v1704
  %4248 = vmatpush1.bf16.msra.mxu0 %v1703
  %4249 = vmatprep.subr.bf16.mxu0 %v1700
  %4250 = vmatpush1.bf16.msra.mxu0 %v1699
  %4251 = vmatprep.subr.bf16.mxu0 %v1696
  %4252 = vmatpush1.bf16.msra.mxu0 %v1695
  %4253 = vmatprep.subr.bf16.mxu0 %v1756
  %4254 = vmatpush2.bf16.msra.mxu0 %v1755
  %4255 = vmatprep.subr.bf16.mxu0 %v1752
  %4256 = vmatpush2.bf16.msra.mxu0 %v1751
  %4257 = vmatprep.subr.bf16.mxu0 %v1748
  %4258 = vmatpush2.bf16.msra.mxu0 %v1747
  %4259 = vmatprep.subr.bf16.mxu0 %v1744
  %4260 = vmatpush2.bf16.msra.mxu0 %v1743
  %4261 = vmatprep.subr.bf16.mxu0 %v1740
  %4262 = vmatpush2.bf16.msra.mxu0 %v1739
  %4263 = vmatprep.subr.bf16.mxu0 %v1736
  %4264 = vmatpush2.bf16.msra.mxu0 %v1735
  %4265 = vmatprep.subr.bf16.mxu0 %v1732
  %4266 = vmatpush2.bf16.msra.mxu0 %v1731
  %4267 = vmatprep.subr.bf16.mxu0 %v1728
  %4268 = vmatpush2.bf16.msra.mxu0 %v1727
  %4269 = vmatprep.mubr.bf16.mxu0 %v4128
  %4270 = vmatmul.mubr.bf16.gmra.mxu0 %v4121
  %v4271 = vpop.f32.mrf.mxu0
  %v4272 = vadd.f32 %v4229, %v4271
  %v4273 = vpop.f32.mrf.mxu0
  %v4274 = vadd.f32 %v4231, %v4273
  %v4275 = vpop.f32.mrf.mxu0
  %v4276 = vadd.f32 %v4233, %v4275
  %v4277 = vpop.f32.mrf.mxu0
  %v4278 = vadd.f32 %v4235, %v4277
  %4279 = vdwg.mxu0
  %4280 = vmatprep.subr.bf16.mxu0 %v1788
  %4281 = vmatpush1.bf16.msra.mxu0 %v1787
  %4282 = vmatprep.subr.bf16.mxu0 %v1784
  %4283 = vmatpush1.bf16.msra.mxu0 %v1783
  %4284 = vmatprep.subr.bf16.mxu0 %v1780
  %4285 = vmatpush1.bf16.msra.mxu0 %v1779
  %4286 = vmatprep.subr.bf16.mxu0 %v1776
  %4287 = vmatpush1.bf16.msra.mxu0 %v1775
  %4288 = vmatprep.subr.bf16.mxu0 %v1772
  %4289 = vmatpush1.bf16.msra.mxu0 %v1771
  %4290 = vmatprep.subr.bf16.mxu0 %v1768
  %4291 = vmatpush1.bf16.msra.mxu0 %v1767
  %4292 = vmatprep.subr.bf16.mxu0 %v1764
  %4293 = vmatpush1.bf16.msra.mxu0 %v1763
  %4294 = vmatprep.subr.bf16.mxu0 %v1760
  %4295 = vmatpush1.bf16.msra.mxu0 %v1759
  %4296 = vmatprep.subr.bf16.mxu0 %v1820
  %4297 = vmatpush2.bf16.msra.mxu0 %v1819
  %4298 = vmatprep.subr.bf16.mxu0 %v1816
  %4299 = vmatpush2.bf16.msra.mxu0 %v1815
  %4300 = vmatprep.subr.bf16.mxu0 %v1812
  %4301 = vmatpush2.bf16.msra.mxu0 %v1811
  %4302 = vmatprep.subr.bf16.mxu0 %v1808
  %4303 = vmatpush2.bf16.msra.mxu0 %v1807
  %4304 = vmatprep.subr.bf16.mxu0 %v1804
  %4305 = vmatpush2.bf16.msra.mxu0 %v1803
  %4306 = vmatprep.subr.bf16.mxu0 %v1800
  %4307 = vmatpush2.bf16.msra.mxu0 %v1799
  %4308 = vmatprep.subr.bf16.mxu0 %v1796
  %4309 = vmatpush2.bf16.msra.mxu0 %v1795
  %4310 = vmatprep.subr.bf16.mxu0 %v1792
  %4311 = vmatpush2.bf16.msra.mxu0 %v1791
  %4312 = vmatprep.mubr.bf16.mxu0 %v4142
  %4313 = vmatmul.mubr.bf16.gmra.mxu0 %v4135
  %v4314 = vpop.f32.mrf.mxu0
  %v4315 = vadd.f32 %v4272, %v4314
  %v4316 = vpop.f32.mrf.mxu0
  %v4317 = vadd.f32 %v4274, %v4316
  %v4318 = vpop.f32.mrf.mxu0
  %v4319 = vadd.f32 %v4276, %v4318
  %v4320 = vpop.f32.mrf.mxu0
  %v4321 = vadd.f32 %v4278, %v4320
  %4322 = vdwg.mxu0
  %4323 = vmatprep.subr.bf16.mxu0 %v1598
  %4324 = vmatpush1.bf16.msra.mxu0 %v1597
  %4325 = vmatprep.subr.bf16.mxu0 %v1594
  %4326 = vmatpush1.bf16.msra.mxu0 %v1593
  %4327 = vmatprep.subr.bf16.mxu0 %v1590
  %4328 = vmatpush1.bf16.msra.mxu0 %v1589
  %4329 = vmatprep.subr.bf16.mxu0 %v1586
  %4330 = vmatpush1.bf16.msra.mxu0 %v1585
  %4331 = vmatprep.subr.bf16.mxu0 %v1582
  %4332 = vmatpush1.bf16.msra.mxu0 %v1581
  %4333 = vmatprep.subr.bf16.mxu0 %v1578
  %4334 = vmatpush1.bf16.msra.mxu0 %v1577
  %4335 = vmatprep.subr.bf16.mxu0 %v1574
  %4336 = vmatpush1.bf16.msra.mxu0 %v1573
  %4337 = vmatprep.subr.bf16.mxu0 %v1570
  %4338 = vmatpush1.bf16.msra.mxu0 %v1569
  %4339 = vmatprep.subr.bf16.mxu0 %v1630
  %4340 = vmatpush2.bf16.msra.mxu0 %v1629
  %4341 = vmatprep.subr.bf16.mxu0 %v1626
  %4342 = vmatpush2.bf16.msra.mxu0 %v1625
  %4343 = vmatprep.subr.bf16.mxu0 %v1622
  %4344 = vmatpush2.bf16.msra.mxu0 %v1621
  %4345 = vmatprep.subr.bf16.mxu0 %v1618
  %4346 = vmatpush2.bf16.msra.mxu0 %v1617
  %4347 = vmatprep.subr.bf16.mxu0 %v1614
  %4348 = vmatpush2.bf16.msra.mxu0 %v1613
  %4349 = vmatprep.subr.bf16.mxu0 %v1610
  %4350 = vmatpush2.bf16.msra.mxu0 %v1609
  %4351 = vmatprep.subr.bf16.mxu0 %v1606
  %4352 = vmatpush2.bf16.msra.mxu0 %v1605
  %4353 = vmatprep.subr.bf16.mxu0 %v1602
  %4354 = vmatpush2.bf16.msra.mxu0 %v1601
  %4355 = vmatprep.mubr.bf16.mxu0 %v4100
  %4356 = vmatmul.mubr.bf16.gmra.mxu0 %v4093
  %v4357 = vpop.f32.mrf.mxu0
  %v4358 = vadd.f32 0.0, %v4357
  %v4359 = vpop.f32.mrf.mxu0
  %v4360 = vadd.f32 0.0, %v4359
  %v4361 = vpop.f32.mrf.mxu0
  %v4362 = vadd.f32 0.0, %v4361
  %v4363 = vpop.f32.mrf.mxu0
  %v4364 = vadd.f32 0.0, %v4363
  %4365 = vdwg.mxu0
  %4366 = vmatprep.subr.bf16.mxu0 %v1662
  %4367 = vmatpush1.bf16.msra.mxu0 %v1661
  %4368 = vmatprep.subr.bf16.mxu0 %v1658
  %4369 = vmatpush1.bf16.msra.mxu0 %v1657
  %4370 = vmatprep.subr.bf16.mxu0 %v1654
  %4371 = vmatpush1.bf16.msra.mxu0 %v1653
  %4372 = vmatprep.subr.bf16.mxu0 %v1650
  %4373 = vmatpush1.bf16.msra.mxu0 %v1649
  %4374 = vmatprep.subr.bf16.mxu0 %v1646
  %4375 = vmatpush1.bf16.msra.mxu0 %v1645
  %4376 = vmatprep.subr.bf16.mxu0 %v1642
  %4377 = vmatpush1.bf16.msra.mxu0 %v1641
  %4378 = vmatprep.subr.bf16.mxu0 %v1638
  %4379 = vmatpush1.bf16.msra.mxu0 %v1637
  %4380 = vmatprep.subr.bf16.mxu0 %v1634
  %4381 = vmatpush1.bf16.msra.mxu0 %v1633
  %4382 = vmatprep.subr.bf16.mxu0 %v1694
  %4383 = vmatpush2.bf16.msra.mxu0 %v1693
  %4384 = vmatprep.subr.bf16.mxu0 %v1690
  %4385 = vmatpush2.bf16.msra.mxu0 %v1689
  %4386 = vmatprep.subr.bf16.mxu0 %v1686
  %4387 = vmatpush2.bf16.msra.mxu0 %v1685
  %4388 = vmatprep.subr.bf16.mxu0 %v1682
  %4389 = vmatpush2.bf16.msra.mxu0 %v1681
  %4390 = vmatprep.subr.bf16.mxu0 %v1678
  %4391 = vmatpush2.bf16.msra.mxu0 %v1677
  %4392 = vmatprep.subr.bf16.mxu0 %v1674
  %4393 = vmatpush2.bf16.msra.mxu0 %v1673
  %4394 = vmatprep.subr.bf16.mxu0 %v1670
  %4395 = vmatpush2.bf16.msra.mxu0 %v1669
  %4396 = vmatprep.subr.bf16.mxu0 %v1666
  %4397 = vmatpush2.bf16.msra.mxu0 %v1665
  %4398 = vmatprep.mubr.bf16.mxu0 %v4114
  %4399 = vmatmul.mubr.bf16.gmra.mxu0 %v4107
  %v4400 = vpop.f32.mrf.mxu0
  %v4401 = vadd.f32 %v4358, %v4400
  %v4402 = vpop.f32.mrf.mxu0
  %v4403 = vadd.f32 %v4360, %v4402
  %v4404 = vpop.f32.mrf.mxu0
  %v4405 = vadd.f32 %v4362, %v4404
  %v4406 = vpop.f32.mrf.mxu0
  %v4407 = vadd.f32 %v4364, %v4406
  %4408 = vdwg.mxu0
  %4409 = vmatprep.subr.bf16.mxu0 %v1726
  %4410 = vmatpush1.bf16.msra.mxu0 %v1725
  %4411 = vmatprep.subr.bf16.mxu0 %v1722
  %4412 = vmatpush1.bf16.msra.mxu0 %v1721
  %4413 = vmatprep.subr.bf16.mxu0 %v1718
  %4414 = vmatpush1.bf16.msra.mxu0 %v1717
  %4415 = vmatprep.subr.bf16.mxu0 %v1714
  %4416 = vmatpush1.bf16.msra.mxu0 %v1713
  %4417 = vmatprep.subr.bf16.mxu0 %v1710
  %4418 = vmatpush1.bf16.msra.mxu0 %v1709
  %4419 = vmatprep.subr.bf16.mxu0 %v1706
  %4420 = vmatpush1.bf16.msra.mxu0 %v1705
  %4421 = vmatprep.subr.bf16.mxu0 %v1702
  %4422 = vmatpush1.bf16.msra.mxu0 %v1701
  %4423 = vmatprep.subr.bf16.mxu0 %v1698
  %4424 = vmatpush1.bf16.msra.mxu0 %v1697
  %4425 = vmatprep.subr.bf16.mxu0 %v1758
  %4426 = vmatpush2.bf16.msra.mxu0 %v1757
  %4427 = vmatprep.subr.bf16.mxu0 %v1754
  %4428 = vmatpush2.bf16.msra.mxu0 %v1753
  %4429 = vmatprep.subr.bf16.mxu0 %v1750
  %4430 = vmatpush2.bf16.msra.mxu0 %v1749
  %4431 = vmatprep.subr.bf16.mxu0 %v1746
  %4432 = vmatpush2.bf16.msra.mxu0 %v1745
  %4433 = vmatprep.subr.bf16.mxu0 %v1742
  %4434 = vmatpush2.bf16.msra.mxu0 %v1741
  %4435 = vmatprep.subr.bf16.mxu0 %v1738
  %4436 = vmatpush2.bf16.msra.mxu0 %v1737
  %4437 = vmatprep.subr.bf16.mxu0 %v1734
  %4438 = vmatpush2.bf16.msra.mxu0 %v1733
  %4439 = vmatprep.subr.bf16.mxu0 %v1730
  %4440 = vmatpush2.bf16.msra.mxu0 %v1729
  %4441 = vmatprep.mubr.bf16.mxu0 %v4128
  %4442 = vmatmul.mubr.bf16.gmra.mxu0 %v4121
  %v4443 = vpop.f32.mrf.mxu0
  %v4444 = vadd.f32 %v4401, %v4443
  %v4445 = vpop.f32.mrf.mxu0
  %v4446 = vadd.f32 %v4403, %v4445
  %v4447 = vpop.f32.mrf.mxu0
  %v4448 = vadd.f32 %v4405, %v4447
  %v4449 = vpop.f32.mrf.mxu0
  %v4450 = vadd.f32 %v4407, %v4449
  %4451 = vdwg.mxu0
  %4452 = vmatprep.subr.bf16.mxu0 %v1790
  %4453 = vmatpush1.bf16.msra.mxu0 %v1789
  %4454 = vmatprep.subr.bf16.mxu0 %v1786
  %4455 = vmatpush1.bf16.msra.mxu0 %v1785
  %4456 = vmatprep.subr.bf16.mxu0 %v1782
  %4457 = vmatpush1.bf16.msra.mxu0 %v1781
  %4458 = vmatprep.subr.bf16.mxu0 %v1778
  %4459 = vmatpush1.bf16.msra.mxu0 %v1777
  %4460 = vmatprep.subr.bf16.mxu0 %v1774
  %4461 = vmatpush1.bf16.msra.mxu0 %v1773
  %4462 = vmatprep.subr.bf16.mxu0 %v1770
  %4463 = vmatpush1.bf16.msra.mxu0 %v1769
  %4464 = vmatprep.subr.bf16.mxu0 %v1766
  %4465 = vmatpush1.bf16.msra.mxu0 %v1765
  %4466 = vmatprep.subr.bf16.mxu0 %v1762
  %4467 = vmatpush1.bf16.msra.mxu0 %v1761
  %4468 = vmatprep.subr.bf16.mxu0 %v1822
  %4469 = vmatpush2.bf16.msra.mxu0 %v1821
  %4470 = vmatprep.subr.bf16.mxu0 %v1818
  %4471 = vmatpush2.bf16.msra.mxu0 %v1817
  %4472 = vmatprep.subr.bf16.mxu0 %v1814
  %4473 = vmatpush2.bf16.msra.mxu0 %v1813
  %4474 = vmatprep.subr.bf16.mxu0 %v1810
  %4475 = vmatpush2.bf16.msra.mxu0 %v1809
  %4476 = vmatprep.subr.bf16.mxu0 %v1806
  %4477 = vmatpush2.bf16.msra.mxu0 %v1805
  %4478 = vmatprep.subr.bf16.mxu0 %v1802
  %4479 = vmatpush2.bf16.msra.mxu0 %v1801
  %4480 = vmatprep.subr.bf16.mxu0 %v1798
  %4481 = vmatpush2.bf16.msra.mxu0 %v1797
  %4482 = vmatprep.subr.bf16.mxu0 %v1794
  %4483 = vmatpush2.bf16.msra.mxu0 %v1793
  %4484 = vmatprep.mubr.bf16.mxu0 %v4142
  %4485 = vmatmul.mubr.bf16.gmra.mxu0 %v4135
  %v4486 = vpop.f32.mrf.mxu0
  %v4487 = vadd.f32 %v4444, %v4486
  %v4488 = vpop.f32.mrf.mxu0
  %v4489 = vadd.f32 %v4446, %v4488
  %v4490 = vpop.f32.mrf.mxu0
  %v4491 = vadd.f32 %v4448, %v4490
  %v4492 = vpop.f32.mrf.mxu0
  %v4493 = vadd.f32 %v4450, %v4492
  %4494 = vdwg.mxu0
  %4495 = vmatprep.subr.bf16.mxu0 %v3260
  %4496 = vmatpush1.bf16.msra.mxu0 %v3259
  %4497 = vmatprep.subr.bf16.mxu0 %v3256
  %4498 = vmatpush1.bf16.msra.mxu0 %v3255
  %4499 = vmatprep.subr.bf16.mxu0 %v3252
  %4500 = vmatpush1.bf16.msra.mxu0 %v3251
  %4501 = vmatprep.subr.bf16.mxu0 %v3248
  %4502 = vmatpush1.bf16.msra.mxu0 %v3247
  %4503 = vmatprep.subr.bf16.mxu0 %v3244
  %4504 = vmatpush1.bf16.msra.mxu0 %v3243
  %4505 = vmatprep.subr.bf16.mxu0 %v3240
  %4506 = vmatpush1.bf16.msra.mxu0 %v3239
  %4507 = vmatprep.subr.bf16.mxu0 %v3236
  %4508 = vmatpush1.bf16.msra.mxu0 %v3235
  %4509 = vmatprep.subr.bf16.mxu0 %v3232
  %4510 = vmatpush1.bf16.msra.mxu0 %v3231
  %4511 = vmatprep.subr.bf16.mxu0 %v3292
  %4512 = vmatpush2.bf16.msra.mxu0 %v3291
  %4513 = vmatprep.subr.bf16.mxu0 %v3288
  %4514 = vmatpush2.bf16.msra.mxu0 %v3287
  %4515 = vmatprep.subr.bf16.mxu0 %v3284
  %4516 = vmatpush2.bf16.msra.mxu0 %v3283
  %4517 = vmatprep.subr.bf16.mxu0 %v3280
  %4518 = vmatpush2.bf16.msra.mxu0 %v3279
  %4519 = vmatprep.subr.bf16.mxu0 %v3276
  %4520 = vmatpush2.bf16.msra.mxu0 %v3275
  %4521 = vmatprep.subr.bf16.mxu0 %v3272
  %4522 = vmatpush2.bf16.msra.mxu0 %v3271
  %4523 = vmatprep.subr.bf16.mxu0 %v3268
  %4524 = vmatpush2.bf16.msra.mxu0 %v3267
  %4525 = vmatprep.subr.bf16.mxu0 %v3264
  %4526 = vmatpush2.bf16.msra.mxu0 %v3263
  %4527 = vmatprep.mubr.bf16.mxu0 %v784
  %4528 = vmatmul.mubr.bf16.gmra.mxu0 %v783
  %v4529 = vpop.f32.mrf.mxu0
  %v4530 = vadd.f32 %v4315, %v4529
  %v4531 = vpop.f32.mrf.mxu0
  %v4532 = vadd.f32 %v4317, %v4531
  %v4533 = vpop.f32.mrf.mxu0
  %v4534 = vadd.f32 %v4319, %v4533
  %v4535 = vpop.f32.mrf.mxu0
  %v4536 = vadd.f32 %v4321, %v4535
  %4537 = vdwg.mxu0
  %4538 = vmatprep.subr.bf16.mxu0 %v3324
  %4539 = vmatpush1.bf16.msra.mxu0 %v3323
  %4540 = vmatprep.subr.bf16.mxu0 %v3320
  %4541 = vmatpush1.bf16.msra.mxu0 %v3319
  %4542 = vmatprep.subr.bf16.mxu0 %v3316
  %4543 = vmatpush1.bf16.msra.mxu0 %v3315
  %4544 = vmatprep.subr.bf16.mxu0 %v3312
  %4545 = vmatpush1.bf16.msra.mxu0 %v3311
  %4546 = vmatprep.subr.bf16.mxu0 %v3308
  %4547 = vmatpush1.bf16.msra.mxu0 %v3307
  %4548 = vmatprep.subr.bf16.mxu0 %v3304
  %4549 = vmatpush1.bf16.msra.mxu0 %v3303
  %4550 = vmatprep.subr.bf16.mxu0 %v3300
  %4551 = vmatpush1.bf16.msra.mxu0 %v3299
  %4552 = vmatprep.subr.bf16.mxu0 %v3296
  %4553 = vmatpush1.bf16.msra.mxu0 %v3295
  %4554 = vmatprep.subr.bf16.mxu0 %v3356
  %4555 = vmatpush2.bf16.msra.mxu0 %v3355
  %4556 = vmatprep.subr.bf16.mxu0 %v3352
  %4557 = vmatpush2.bf16.msra.mxu0 %v3351
  %4558 = vmatprep.subr.bf16.mxu0 %v3348
  %4559 = vmatpush2.bf16.msra.mxu0 %v3347
  %4560 = vmatprep.subr.bf16.mxu0 %v3344
  %4561 = vmatpush2.bf16.msra.mxu0 %v3343
  %4562 = vmatprep.subr.bf16.mxu0 %v3340
  %4563 = vmatpush2.bf16.msra.mxu0 %v3339
  %4564 = vmatprep.subr.bf16.mxu0 %v3336
  %4565 = vmatpush2.bf16.msra.mxu0 %v3335
  %4566 = vmatprep.subr.bf16.mxu0 %v3332
  %4567 = vmatpush2.bf16.msra.mxu0 %v3331
  %4568 = vmatprep.subr.bf16.mxu0 %v3328
  %4569 = vmatpush2.bf16.msra.mxu0 %v3327
  %4570 = vmatprep.mubr.bf16.mxu0 %v786
  %4571 = vmatmul.mubr.bf16.gmra.mxu0 %v785
  %v4572 = vpop.f32.mrf.mxu0
  %v4573 = vadd.f32 %v4530, %v4572
  %v4574 = vpop.f32.mrf.mxu0
  %v4575 = vadd.f32 %v4532, %v4574
  %v4576 = vpop.f32.mrf.mxu0
  %v4577 = vadd.f32 %v4534, %v4576
  %v4578 = vpop.f32.mrf.mxu0
  %v4579 = vadd.f32 %v4536, %v4578
  %4580 = vdwg.mxu0
  %4581 = vmatprep.subr.bf16.mxu0 %v3388
  %4582 = vmatpush1.bf16.msra.mxu0 %v3387
  %4583 = vmatprep.subr.bf16.mxu0 %v3384
  %4584 = vmatpush1.bf16.msra.mxu0 %v3383
  %4585 = vmatprep.subr.bf16.mxu0 %v3380
  %4586 = vmatpush1.bf16.msra.mxu0 %v3379
  %4587 = vmatprep.subr.bf16.mxu0 %v3376
  %4588 = vmatpush1.bf16.msra.mxu0 %v3375
  %4589 = vmatprep.subr.bf16.mxu0 %v3372
  %4590 = vmatpush1.bf16.msra.mxu0 %v3371
  %4591 = vmatprep.subr.bf16.mxu0 %v3368
  %4592 = vmatpush1.bf16.msra.mxu0 %v3367
  %4593 = vmatprep.subr.bf16.mxu0 %v3364
  %4594 = vmatpush1.bf16.msra.mxu0 %v3363
  %4595 = vmatprep.subr.bf16.mxu0 %v3360
  %4596 = vmatpush1.bf16.msra.mxu0 %v3359
  %4597 = vmatprep.subr.bf16.mxu0 %v3420
  %4598 = vmatpush2.bf16.msra.mxu0 %v3419
  %4599 = vmatprep.subr.bf16.mxu0 %v3416
  %4600 = vmatpush2.bf16.msra.mxu0 %v3415
  %4601 = vmatprep.subr.bf16.mxu0 %v3412
  %4602 = vmatpush2.bf16.msra.mxu0 %v3411
  %4603 = vmatprep.subr.bf16.mxu0 %v3408
  %4604 = vmatpush2.bf16.msra.mxu0 %v3407
  %4605 = vmatprep.subr.bf16.mxu0 %v3404
  %4606 = vmatpush2.bf16.msra.mxu0 %v3403
  %4607 = vmatprep.subr.bf16.mxu0 %v3400
  %4608 = vmatpush2.bf16.msra.mxu0 %v3399
  %4609 = vmatprep.subr.bf16.mxu0 %v3396
  %4610 = vmatpush2.bf16.msra.mxu0 %v3395
  %4611 = vmatprep.subr.bf16.mxu0 %v3392
  %4612 = vmatpush2.bf16.msra.mxu0 %v3391
  %4613 = vmatprep.mubr.bf16.mxu0 %v788
  %4614 = vmatmul.mubr.bf16.gmra.mxu0 %v787
  %v4615 = vpop.f32.mrf.mxu0
  %v4616 = vadd.f32 %v4573, %v4615
  %v4617 = vpop.f32.mrf.mxu0
  %v4618 = vadd.f32 %v4575, %v4617
  %v4619 = vpop.f32.mrf.mxu0
  %v4620 = vadd.f32 %v4577, %v4619
  %v4621 = vpop.f32.mrf.mxu0
  %v4622 = vadd.f32 %v4579, %v4621
  %4623 = vdwg.mxu0
  %4624 = vmatprep.subr.bf16.mxu0 %v3452
  %4625 = vmatpush1.bf16.msra.mxu0 %v3451
  %4626 = vmatprep.subr.bf16.mxu0 %v3448
  %4627 = vmatpush1.bf16.msra.mxu0 %v3447
  %4628 = vmatprep.subr.bf16.mxu0 %v3444
  %4629 = vmatpush1.bf16.msra.mxu0 %v3443
  %4630 = vmatprep.subr.bf16.mxu0 %v3440
  %4631 = vmatpush1.bf16.msra.mxu0 %v3439
  %4632 = vmatprep.subr.bf16.mxu0 %v3436
  %4633 = vmatpush1.bf16.msra.mxu0 %v3435
  %4634 = vmatprep.subr.bf16.mxu0 %v3432
  %4635 = vmatpush1.bf16.msra.mxu0 %v3431
  %4636 = vmatprep.subr.bf16.mxu0 %v3428
  %4637 = vmatpush1.bf16.msra.mxu0 %v3427
  %4638 = vmatprep.subr.bf16.mxu0 %v3424
  %4639 = vmatpush1.bf16.msra.mxu0 %v3423
  %4640 = vmatprep.subr.bf16.mxu0 %v3484
  %4641 = vmatpush2.bf16.msra.mxu0 %v3483
  %4642 = vmatprep.subr.bf16.mxu0 %v3480
  %4643 = vmatpush2.bf16.msra.mxu0 %v3479
  %4644 = vmatprep.subr.bf16.mxu0 %v3476
  %4645 = vmatpush2.bf16.msra.mxu0 %v3475
  %4646 = vmatprep.subr.bf16.mxu0 %v3472
  %4647 = vmatpush2.bf16.msra.mxu0 %v3471
  %4648 = vmatprep.subr.bf16.mxu0 %v3468
  %4649 = vmatpush2.bf16.msra.mxu0 %v3467
  %4650 = vmatprep.subr.bf16.mxu0 %v3464
  %4651 = vmatpush2.bf16.msra.mxu0 %v3463
  %4652 = vmatprep.subr.bf16.mxu0 %v3460
  %4653 = vmatpush2.bf16.msra.mxu0 %v3459
  %4654 = vmatprep.subr.bf16.mxu0 %v3456
  %4655 = vmatpush2.bf16.msra.mxu0 %v3455
  %4656 = vmatprep.mubr.bf16.mxu0 %v790
  %4657 = vmatmul.mubr.bf16.gmra.mxu0 %v789
  %v4658 = vpop.f32.mrf.mxu0
  %v4659 = vadd.f32 %v4616, %v4658
  %v4660 = vpop.f32.mrf.mxu0
  %v4661 = vadd.f32 %v4618, %v4660
  %v4662 = vpop.f32.mrf.mxu0
  %v4663 = vadd.f32 %v4620, %v4662
  %v4664 = vpop.f32.mrf.mxu0
  %v4665 = vadd.f32 %v4622, %v4664
  %4666 = vdwg.mxu0
  %4667 = vmatprep.subr.bf16.mxu0 %v3262
  %4668 = vmatpush1.bf16.msra.mxu0 %v3261
  %4669 = vmatprep.subr.bf16.mxu0 %v3258
  %4670 = vmatpush1.bf16.msra.mxu0 %v3257
  %4671 = vmatprep.subr.bf16.mxu0 %v3254
  %4672 = vmatpush1.bf16.msra.mxu0 %v3253
  %4673 = vmatprep.subr.bf16.mxu0 %v3250
  %4674 = vmatpush1.bf16.msra.mxu0 %v3249
  %4675 = vmatprep.subr.bf16.mxu0 %v3246
  %4676 = vmatpush1.bf16.msra.mxu0 %v3245
  %4677 = vmatprep.subr.bf16.mxu0 %v3242
  %4678 = vmatpush1.bf16.msra.mxu0 %v3241
  %4679 = vmatprep.subr.bf16.mxu0 %v3238
  %4680 = vmatpush1.bf16.msra.mxu0 %v3237
  %4681 = vmatprep.subr.bf16.mxu0 %v3234
  %4682 = vmatpush1.bf16.msra.mxu0 %v3233
  %4683 = vmatprep.subr.bf16.mxu0 %v3294
  %4684 = vmatpush2.bf16.msra.mxu0 %v3293
  %4685 = vmatprep.subr.bf16.mxu0 %v3290
  %4686 = vmatpush2.bf16.msra.mxu0 %v3289
  %4687 = vmatprep.subr.bf16.mxu0 %v3286
  %4688 = vmatpush2.bf16.msra.mxu0 %v3285
  %4689 = vmatprep.subr.bf16.mxu0 %v3282
  %4690 = vmatpush2.bf16.msra.mxu0 %v3281
  %4691 = vmatprep.subr.bf16.mxu0 %v3278
  %4692 = vmatpush2.bf16.msra.mxu0 %v3277
  %4693 = vmatprep.subr.bf16.mxu0 %v3274
  %4694 = vmatpush2.bf16.msra.mxu0 %v3273
  %4695 = vmatprep.subr.bf16.mxu0 %v3270
  %4696 = vmatpush2.bf16.msra.mxu0 %v3269
  %4697 = vmatprep.subr.bf16.mxu0 %v3266
  %4698 = vmatpush2.bf16.msra.mxu0 %v3265
  %4699 = vmatprep.mubr.bf16.mxu0 %v784
  %4700 = vmatmul.mubr.bf16.gmra.mxu0 %v783
  %v4701 = vpop.f32.mrf.mxu0
  %v4702 = vadd.f32 %v4487, %v4701
  %v4703 = vpop.f32.mrf.mxu0
  %v4704 = vadd.f32 %v4489, %v4703
  %v4705 = vpop.f32.mrf.mxu0
  %v4706 = vadd.f32 %v4491, %v4705
  %v4707 = vpop.f32.mrf.mxu0
  %v4708 = vadd.f32 %v4493, %v4707
  %4709 = vdwg.mxu0
  %4710 = vmatprep.subr.bf16.mxu0 %v3326
  %4711 = vmatpush1.bf16.msra.mxu0 %v3325
  %4712 = vmatprep.subr.bf16.mxu0 %v3322
  %4713 = vmatpush1.bf16.msra.mxu0 %v3321
  %4714 = vmatprep.subr.bf16.mxu0 %v3318
  %4715 = vmatpush1.bf16.msra.mxu0 %v3317
  %4716 = vmatprep.subr.bf16.mxu0 %v3314
  %4717 = vmatpush1.bf16.msra.mxu0 %v3313
  %4718 = vmatprep.subr.bf16.mxu0 %v3310
  %4719 = vmatpush1.bf16.msra.mxu0 %v3309
  %4720 = vmatprep.subr.bf16.mxu0 %v3306
  %4721 = vmatpush1.bf16.msra.mxu0 %v3305
  %4722 = vmatprep.subr.bf16.mxu0 %v3302
  %4723 = vmatpush1.bf16.msra.mxu0 %v3301
  %4724 = vmatprep.subr.bf16.mxu0 %v3298
  %4725 = vmatpush1.bf16.msra.mxu0 %v3297
  %4726 = vmatprep.subr.bf16.mxu0 %v3358
  %4727 = vmatpush2.bf16.msra.mxu0 %v3357
  %4728 = vmatprep.subr.bf16.mxu0 %v3354
  %4729 = vmatpush2.bf16.msra.mxu0 %v3353
  %4730 = vmatprep.subr.bf16.mxu0 %v3350
  %4731 = vmatpush2.bf16.msra.mxu0 %v3349
  %4732 = vmatprep.subr.bf16.mxu0 %v3346
  %4733 = vmatpush2.bf16.msra.mxu0 %v3345
  %4734 = vmatprep.subr.bf16.mxu0 %v3342
  %4735 = vmatpush2.bf16.msra.mxu0 %v3341
  %4736 = vmatprep.subr.bf16.mxu0 %v3338
  %4737 = vmatpush2.bf16.msra.mxu0 %v3337
  %4738 = vmatprep.subr.bf16.mxu0 %v3334
  %4739 = vmatpush2.bf16.msra.mxu0 %v3333
  %4740 = vmatprep.subr.bf16.mxu0 %v3330
  %4741 = vmatpush2.bf16.msra.mxu0 %v3329
  %4742 = vmatprep.mubr.bf16.mxu0 %v786
  %4743 = vmatmul.mubr.bf16.gmra.mxu0 %v785
  %v4744 = vpop.f32.mrf.mxu0
  %v4745 = vadd.f32 %v4702, %v4744
  %v4746 = vpop.f32.mrf.mxu0
  %v4747 = vadd.f32 %v4704, %v4746
  %v4748 = vpop.f32.mrf.mxu0
  %v4749 = vadd.f32 %v4706, %v4748
  %v4750 = vpop.f32.mrf.mxu0
  %v4751 = vadd.f32 %v4708, %v4750
  %4752 = vdwg.mxu0
  %4753 = vmatprep.subr.bf16.mxu0 %v3390
  %4754 = vmatpush1.bf16.msra.mxu0 %v3389
  %4755 = vmatprep.subr.bf16.mxu0 %v3386
  %4756 = vmatpush1.bf16.msra.mxu0 %v3385
  %4757 = vmatprep.subr.bf16.mxu0 %v3382
  %4758 = vmatpush1.bf16.msra.mxu0 %v3381
  %4759 = vmatprep.subr.bf16.mxu0 %v3378
  %4760 = vmatpush1.bf16.msra.mxu0 %v3377
  %4761 = vmatprep.subr.bf16.mxu0 %v3374
  %4762 = vmatpush1.bf16.msra.mxu0 %v3373
  %4763 = vmatprep.subr.bf16.mxu0 %v3370
  %4764 = vmatpush1.bf16.msra.mxu0 %v3369
  %4765 = vmatprep.subr.bf16.mxu0 %v3366
  %4766 = vmatpush1.bf16.msra.mxu0 %v3365
  %4767 = vmatprep.subr.bf16.mxu0 %v3362
  %4768 = vmatpush1.bf16.msra.mxu0 %v3361
  %4769 = vmatprep.subr.bf16.mxu0 %v3422
  %4770 = vmatpush2.bf16.msra.mxu0 %v3421
  %4771 = vmatprep.subr.bf16.mxu0 %v3418
  %4772 = vmatpush2.bf16.msra.mxu0 %v3417
  %4773 = vmatprep.subr.bf16.mxu0 %v3414
  %4774 = vmatpush2.bf16.msra.mxu0 %v3413
  %4775 = vmatprep.subr.bf16.mxu0 %v3410
  %4776 = vmatpush2.bf16.msra.mxu0 %v3409
  %4777 = vmatprep.subr.bf16.mxu0 %v3406
  %4778 = vmatpush2.bf16.msra.mxu0 %v3405
  %4779 = vmatprep.subr.bf16.mxu0 %v3402
  %4780 = vmatpush2.bf16.msra.mxu0 %v3401
  %4781 = vmatprep.subr.bf16.mxu0 %v3398
  %4782 = vmatpush2.bf16.msra.mxu0 %v3397
  %4783 = vmatprep.subr.bf16.mxu0 %v3394
  %4784 = vmatpush2.bf16.msra.mxu0 %v3393
  %4785 = vmatprep.mubr.bf16.mxu0 %v788
  %4786 = vmatmul.mubr.bf16.gmra.mxu0 %v787
  %v4787 = vpop.f32.mrf.mxu0
  %v4788 = vadd.f32 %v4745, %v4787
  %v4789 = vpop.f32.mrf.mxu0
  %v4790 = vadd.f32 %v4747, %v4789
  %v4791 = vpop.f32.mrf.mxu0
  %v4792 = vadd.f32 %v4749, %v4791
  %v4793 = vpop.f32.mrf.mxu0
  %v4794 = vadd.f32 %v4751, %v4793
  %4795 = vdwg.mxu0
  %4796 = vmatprep.subr.bf16.mxu0 %v3454
  %4797 = vmatpush1.bf16.msra.mxu0 %v3453
  %4798 = vmatprep.subr.bf16.mxu0 %v3450
  %4799 = vmatpush1.bf16.msra.mxu0 %v3449
  %4800 = vmatprep.subr.bf16.mxu0 %v3446
  %4801 = vmatpush1.bf16.msra.mxu0 %v3445
  %4802 = vmatprep.subr.bf16.mxu0 %v3442
  %4803 = vmatpush1.bf16.msra.mxu0 %v3441
  %4804 = vmatprep.subr.bf16.mxu0 %v3438
  %4805 = vmatpush1.bf16.msra.mxu0 %v3437
  %4806 = vmatprep.subr.bf16.mxu0 %v3434
  %4807 = vmatpush1.bf16.msra.mxu0 %v3433
  %4808 = vmatprep.subr.bf16.mxu0 %v3430
  %4809 = vmatpush1.bf16.msra.mxu0 %v3429
  %4810 = vmatprep.subr.bf16.mxu0 %v3426
  %4811 = vmatpush1.bf16.msra.mxu0 %v3425
  %4812 = vmatprep.subr.bf16.mxu0 %v3486
  %4813 = vmatpush2.bf16.msra.mxu0 %v3485
  %4814 = vmatprep.subr.bf16.mxu0 %v3482
  %4815 = vmatpush2.bf16.msra.mxu0 %v3481
  %4816 = vmatprep.subr.bf16.mxu0 %v3478
  %4817 = vmatpush2.bf16.msra.mxu0 %v3477
  %4818 = vmatprep.subr.bf16.mxu0 %v3474
  %4819 = vmatpush2.bf16.msra.mxu0 %v3473
  %4820 = vmatprep.subr.bf16.mxu0 %v3470
  %4821 = vmatpush2.bf16.msra.mxu0 %v3469
  %4822 = vmatprep.subr.bf16.mxu0 %v3466
  %4823 = vmatpush2.bf16.msra.mxu0 %v3465
  %4824 = vmatprep.subr.bf16.mxu0 %v3462
  %4825 = vmatpush2.bf16.msra.mxu0 %v3461
  %4826 = vmatprep.subr.bf16.mxu0 %v3458
  %4827 = vmatpush2.bf16.msra.mxu0 %v3457
  %4828 = vmatprep.mubr.bf16.mxu0 %v790
  %4829 = vmatmul.mubr.bf16.gmra.mxu0 %v789
  %v4830 = vpop.f32.mrf.mxu0
  %v4831 = vadd.f32 %v4788, %v4830
  %v4832 = vpop.f32.mrf.mxu0
  %v4833 = vadd.f32 %v4790, %v4832
  %v4834 = vpop.f32.mrf.mxu0
  %v4835 = vadd.f32 %v4792, %v4834
  %v4836 = vpop.f32.mrf.mxu0
  %v4837 = vadd.f32 %v4794, %v4836
  %4838 = vdwg.mxu0
  %v4840 = vlaneseq
  %v4841 = vshrl.u32 %v4840, 7
  %v4842 = vsub.s32 0, %v4841
  %v4843 = vrot.slane %v227, %v4842
  %v4844 = vlaneseq
  %v4845 = vshrl.u32 %v4844, 7
  %v4846 = vsub.s32 1, %v4845
  %v4847 = vrot.slane %v227, %v4846
  %v4848 = vlaneseq
  %v4849 = vshrl.u32 %v4848, 7
  %v4850 = vsub.s32 2, %v4849
  %v4851 = vrot.slane %v227, %v4850
  %v4852 = vlaneseq
  %v4853 = vshrl.u32 %v4852, 7
  %v4854 = vsub.s32 3, %v4853
  %v4855 = vrot.slane %v227, %v4854
  %v4860 = vadd.f32 %v3907, %v4843
  %v4861 = vadd.f32 %v3909, %v4847
  %v4862 = vadd.f32 %v4079, %v4851
  %v4863 = vadd.f32 %v4081, %v4855
  %v4864 = vadd.f32 %v3911, %v4843
  %v4865 = vadd.f32 %v3913, %v4847
  %v4866 = vadd.f32 %v4083, %v4851
  %v4867 = vadd.f32 %v4085, %v4855
  %v4868 = vtanh.pop %v4860
  %v4869 = vtanh.pop %v4861
  %v4870 = vtanh.pop %v4862
  %v4871 = vtanh.pop %v4863
  %v4872 = vtanh.pop %v4864
  %v4873 = vtanh.pop %v4865
  %v4874 = vtanh.pop %v4866
  %v4875 = vtanh.pop %v4867
  %v4876 = vpack.c.bf16 %v4872, %v4868
  %v4877 = vpack.c.bf16 %v4873, %v4869
  %v4878 = vpack.c.bf16 %v4874, %v4870
  %v4879 = vpack.c.bf16 %v4875, %v4871
  %v4884 = vunpack.c.l.b16 %v4876
  %v4885 = vunpack.c.l.b16 %v4877
  %v4886 = vunpack.c.l.b16 %v4878
  %v4887 = vunpack.c.l.b16 %v4879
  %v4888 = vunpack.c.h.b16 %v4876
  %v4889 = vunpack.c.h.b16 %v4877
  %v4890 = vunpack.c.h.b16 %v4878
  %v4891 = vunpack.c.h.b16 %v4879
  %v4892 = vpack.c.b16 %v4885, %v4884
  %v4893 = vpack.c.b16 %v4887, %v4886
  %v4894 = vpack.c.b16 %v4889, %v4888
  %v4895 = vpack.c.b16 %v4891, %v4890
  %4900 = vst [vmem:[#allocation2] sm:$0xff] %v4892
  %vm4901 = vcmask 1043456
  %vm4902 = vcmask 785412
  %vm4903 = vmor %vm4902, %vm4901
  %4904 = vst.msk [vmem:[#allocation2 + $0x8] sm:$0xff] %vm4903, %v4893
  %4905 = vst [vmem:[#allocation2 + $0x10] sm:$0xff] %v4894
  %4906 = vst.msk [vmem:[#allocation2 + $0x18] sm:$0xff] %vm4903, %v4895
  %v4907 = vadd.f32 %v4659, %v4843
  %v4908 = vadd.f32 %v4661, %v4847
  %v4909 = vadd.f32 %v4831, %v4851
  %v4910 = vadd.f32 %v4833, %v4855
  %v4911 = vadd.f32 %v4663, %v4843
  %v4912 = vadd.f32 %v4665, %v4847
  %v4913 = vadd.f32 %v4835, %v4851
  %v4914 = vadd.f32 %v4837, %v4855
  %v4915 = vtanh.pop %v4907
  %v4916 = vtanh.pop %v4908
  %v4917 = vtanh.pop %v4909
  %v4918 = vtanh.pop %v4910
  %v4919 = vtanh.pop %v4911
  %v4920 = vtanh.pop %v4912
  %v4921 = vtanh.pop %v4913
  %v4922 = vtanh.pop %v4914
  %v4923 = vpack.c.bf16 %v4919, %v4915
  %v4924 = vpack.c.bf16 %v4920, %v4916
  %v4925 = vpack.c.bf16 %v4921, %v4917
  %v4926 = vpack.c.bf16 %v4922, %v4918
  %v4931 = vunpack.c.l.b16 %v4923
  %v4932 = vunpack.c.l.b16 %v4924
  %v4933 = vunpack.c.l.b16 %v4925
  %v4934 = vunpack.c.l.b16 %v4926
  %v4935 = vunpack.c.h.b16 %v4923
  %v4936 = vunpack.c.h.b16 %v4924
  %v4937 = vunpack.c.h.b16 %v4925
  %v4938 = vunpack.c.h.b16 %v4926
  %v4939 = vpack.c.b16 %v4932, %v4931
  %v4940 = vpack.c.b16 %v4934, %v4933
  %v4941 = vpack.c.b16 %v4936, %v4935
  %v4942 = vpack.c.b16 %v4938, %v4937
  %4947 = vst [vmem:[#allocation2 + $0x20] sm:$0xff] %v4939
  %4948 = vst.msk [vmem:[#allocation2 + $0x28] sm:$0xff] %vm4903, %v4940
  %vm4949 = vcmask 1043456
  %vm4950 = vsmask.f32 3328
  %vm4951 = vmand %vm4949, %vm4950
  %vm4952 = vcmask 1047556
  %vm4953 = vsmask.f32 7424
  %vm4954 = vmand %vm4952, %vm4953
  %vm4955 = vmor %vm4954, %vm4951
  %v4956 = vld [vmem:[#allocation2 + $0x30] sm:$0xff]
  %v4957 = vsel %vm4955, %v4941, %v4956
  %4958 = vst [vmem:[#allocation2 + $0x30] sm:$0xff] %v4957
  %vm4959 = vcmask 785412
  %vm4960 = vmand %vm4959, %vm4953
  %vm4961 = vmor %vm4960, %vm4951
  %v4962 = vld [vmem:[#allocation2 + $0x38] sm:$0xff]
  %v4963 = vsel %vm4961, %v4942, %v4962
  %4964 = vst [vmem:[#allocation2 + $0x38] sm:$0xff] %v4963
  %v4965 = vld [vmem:[#allocation2] sm:$0xff]
  %v4966 = vld [vmem:[#allocation2 + $0x8] sm:$0xff]
  %v4967 = vld [vmem:[#allocation2 + $0x10] sm:$0x77]
  %v4968 = vld [vmem:[#allocation2 + $0x18] sm:$0x77]
  %v4969 = vld [vmem:[%s4] sm:$0xff]
  %v4970 = vld [vmem:[%s4 + $0x8] sm:$0xf]
  %v4971 = vld [vmem:[%s4 + $0xc] sm:$0xff]
  %v4972 = vld [vmem:[%s4 + $0x14] sm:$0xf]
  %v4973 = vld [vmem:[%s4 + $0x18] sm:$0xff]
  %v4974 = vld [vmem:[%s4 + $0x20] sm:$0xf]
  %v4975 = vld [vmem:[%s4 + $0x24] sm:$0xff]
  %v4976 = vld [vmem:[%s4 + $0x2c] sm:$0xf]
  %v4977 = vld [vmem:[%s4 + $0x30] sm:$0xff]
  %v4978 = vld [vmem:[%s4 + $0x38] sm:$0xf]
  %v4979 = vld [vmem:[%s4 + $0x3c] sm:$0xff]
  %v4980 = vld [vmem:[%s4 + $0x44] sm:$0xf]
  %v4981 = vld [vmem:[%s4 + $0x48] sm:$0xff]
  %v4982 = vld [vmem:[%s4 + $0x50] sm:$0xf]
  %v4983 = vld [vmem:[%s4 + $0x54] sm:$0xff]
  %v4984 = vld [vmem:[%s4 + $0x5c] sm:$0xf]
  %v4985 = vld [vmem:[%s4 + $0x60] sm:$0xff]
  %v4986 = vld [vmem:[%s4 + $0x68] sm:$0xf]
  %v4987 = vld [vmem:[%s4 + $0x6c] sm:$0xff]
  %v4988 = vld [vmem:[%s4 + $0x74] sm:$0xf]
  %v4989 = vld [vmem:[%s4 + $0x78] sm:$0xff]
  %v4990 = vld [vmem:[%s4 + $0x80] sm:$0xf]
  %v4991 = vld [vmem:[%s4 + $0x84] sm:$0xff]
  %v4992 = vld [vmem:[%s4 + $0x8c] sm:$0xf]
  %v4993 = vld [vmem:[%s4 + $0x90] sm:$0xff]
  %v4994 = vld [vmem:[%s4 + $0x98] sm:$0xf]
  %v4995 = vld [vmem:[%s4 + $0x9c] sm:$0xff]
  %v4996 = vld [vmem:[%s4 + $0xa4] sm:$0xf]
  %v4997 = vld [vmem:[%s4 + $0xa8] sm:$0xff]
  %v4998 = vld [vmem:[%s4 + $0xb0] sm:$0xf]
  %v4999 = vld [vmem:[%s4 + $0xb4] sm:$0xff]
  %v5000 = vld [vmem:[%s4 + $0xbc] sm:$0xf]
  %v5001 = vld [vmem:[%s4 + $0xc0] sm:$0xff]
  %v5002 = vld [vmem:[%s4 + $0xc8] sm:$0xf]
  %v5003 = vld [vmem:[%s4 + $0xcc] sm:$0xff]
  %v5004 = vld [vmem:[%s4 + $0xd4] sm:$0xf]
  %v5005 = vld [vmem:[%s4 + $0xd8] sm:$0xff]
  %v5006 = vld [vmem:[%s4 + $0xe0] sm:$0xf]
  %v5007 = vld [vmem:[%s4 + $0xe4] sm:$0xff]
  %v5008 = vld [vmem:[%s4 + $0xec] sm:$0xf]
  %v5009 = vld [vmem:[%s4 + $0xf0] sm:$0xff]
  %v5010 = vld [vmem:[%s4 + $0xf8] sm:$0xf]
  %v5011 = vld [vmem:[%s4 + $0xfc] sm:$0xff]
  %v5012 = vld [vmem:[%s4 + $0x104] sm:$0xf]
  %v5013 = vld [vmem:[%s4 + $0x108] sm:$0xff]
  %v5014 = vld [vmem:[%s4 + $0x110] sm:$0xf]
  %v5015 = vld [vmem:[%s4 + $0x114] sm:$0xff]
  %v5016 = vld [vmem:[%s4 + $0x11c] sm:$0xf]
  %v5017 = vld [vmem:[%s4 + $0x120] sm:$0xff]
  %v5018 = vld [vmem:[%s4 + $0x128] sm:$0xf]
  %v5019 = vld [vmem:[%s4 + $0x12c] sm:$0xff]
  %v5020 = vld [vmem:[%s4 + $0x134] sm:$0xf]
  %v5021 = vld [vmem:[%s4 + $0x138] sm:$0xff]
  %v5022 = vld [vmem:[%s4 + $0x140] sm:$0xf]
  %v5023 = vld [vmem:[%s4 + $0x144] sm:$0xff]
  %v5024 = vld [vmem:[%s4 + $0x14c] sm:$0xf]
  %v5025 = vld [vmem:[%s4 + $0x150] sm:$0xff]
  %v5026 = vld [vmem:[%s4 + $0x158] sm:$0xf]
  %v5027 = vld [vmem:[%s4 + $0x15c] sm:$0xff]
  %v5028 = vld [vmem:[%s4 + $0x164] sm:$0xf]
  %v5029 = vld [vmem:[%s4 + $0x168] sm:$0xff]
  %v5030 = vld [vmem:[%s4 + $0x170] sm:$0xf]
  %v5031 = vld [vmem:[%s4 + $0x174] sm:$0xff]
  %v5032 = vld [vmem:[%s4 + $0x17c] sm:$0xf]
  %v5033 = vld [vmem:[%s4 + $0x180] sm:$0xff]
  %v5034 = vld [vmem:[%s4 + $0x188] sm:$0xf]
  %v5035 = vld [vmem:[%s4 + $0x18c] sm:$0xff]
  %v5036 = vld [vmem:[%s4 + $0x194] sm:$0xf]
  %v5037 = vld [vmem:[%s4 + $0x198] sm:$0xff]
  %v5038 = vld [vmem:[%s4 + $0x1a0] sm:$0xf]
  %v5039 = vld [vmem:[%s4 + $0x1a4] sm:$0xff]
  %v5040 = vld [vmem:[%s4 + $0x1ac] sm:$0xf]
  %v5041 = vld [vmem:[%s4 + $0x1b0] sm:$0xff]
  %v5042 = vld [vmem:[%s4 + $0x1b8] sm:$0xf]
  %v5043 = vld [vmem:[%s4 + $0x1bc] sm:$0xff]
  %v5044 = vld [vmem:[%s4 + $0x1c4] sm:$0xf]
  %v5045 = vld [vmem:[%s4 + $0x1c8] sm:$0xff]
  %v5046 = vld [vmem:[%s4 + $0x1d0] sm:$0xf]
  %v5047 = vld [vmem:[%s4 + $0x1d4] sm:$0xff]
  %v5048 = vld [vmem:[%s4 + $0x1dc] sm:$0xf]
  %v5049 = vld [vmem:[%s4 + $0x1e0] sm:$0xff]
  %v5050 = vld [vmem:[%s4 + $0x1e8] sm:$0xf]
  %v5051 = vld [vmem:[%s4 + $0x1ec] sm:$0xff]
  %v5052 = vld [vmem:[%s4 + $0x1f4] sm:$0xf]
  %v5053 = vld [vmem:[%s4 + $0x1f8] sm:$0xff]
  %v5054 = vld [vmem:[%s4 + $0x200] sm:$0xf]
  %v5055 = vld [vmem:[%s4 + $0x204] sm:$0xff]
  %v5056 = vld [vmem:[%s4 + $0x20c] sm:$0xf]
  %v5057 = vld [vmem:[%s4 + $0x210] sm:$0xff]
  %v5058 = vld [vmem:[%s4 + $0x218] sm:$0xf]
  %v5059 = vld [vmem:[%s4 + $0x21c] sm:$0xff]
  %v5060 = vld [vmem:[%s4 + $0x224] sm:$0xf]
  %v5061 = vld [vmem:[%s4 + $0x228] sm:$0xff]
  %v5062 = vld [vmem:[%s4 + $0x230] sm:$0xf]
  %v5063 = vld [vmem:[%s4 + $0x234] sm:$0xff]
  %v5064 = vld [vmem:[%s4 + $0x23c] sm:$0xf]
  %v5065 = vld [vmem:[%s4 + $0x240] sm:$0xff]
  %v5066 = vld [vmem:[%s4 + $0x248] sm:$0xf]
  %v5067 = vld [vmem:[%s4 + $0x24c] sm:$0xff]
  %v5068 = vld [vmem:[%s4 + $0x254] sm:$0xf]
  %v5069 = vld [vmem:[%s4 + $0x258] sm:$0xff]
  %v5070 = vld [vmem:[%s4 + $0x260] sm:$0xf]
  %v5071 = vld [vmem:[%s4 + $0x264] sm:$0xff]
  %v5072 = vld [vmem:[%s4 + $0x26c] sm:$0xf]
  %v5073 = vld [vmem:[%s4 + $0x270] sm:$0xff]
  %v5074 = vld [vmem:[%s4 + $0x278] sm:$0xf]
  %v5075 = vld [vmem:[%s4 + $0x27c] sm:$0xff]
  %v5076 = vld [vmem:[%s4 + $0x284] sm:$0xf]
  %v5077 = vld [vmem:[%s4 + $0x288] sm:$0xff]
  %v5078 = vld [vmem:[%s4 + $0x290] sm:$0xf]
  %v5079 = vld [vmem:[%s4 + $0x294] sm:$0xff]
  %v5080 = vld [vmem:[%s4 + $0x29c] sm:$0xf]
  %v5081 = vld [vmem:[%s4 + $0x2a0] sm:$0xff]
  %v5082 = vld [vmem:[%s4 + $0x2a8] sm:$0xf]
  %v5083 = vld [vmem:[%s4 + $0x2ac] sm:$0xff]
  %v5084 = vld [vmem:[%s4 + $0x2b4] sm:$0xf]
  %v5085 = vld [vmem:[%s4 + $0x2b8] sm:$0xff]
  %v5086 = vld [vmem:[%s4 + $0x2c0] sm:$0xf]
  %v5087 = vld [vmem:[%s4 + $0x2c4] sm:$0xff]
  %v5088 = vld [vmem:[%s4 + $0x2cc] sm:$0xf]
  %v5089 = vld [vmem:[#allocation2 + $0x20] sm:$0xff]
  %v5090 = vld [vmem:[#allocation2 + $0x28] sm:$0xff]
  %v5091 = vld [vmem:[#allocation2 + $0x30] sm:$0x77]
  %v5092 = vld [vmem:[#allocation2 + $0x38] sm:$0x77]
  %s5093 = scalar_lea.vmem %s4, 720
  %v5094 = vld [vmem:[%s5093] sm:$0xff]
  %v5095 = vld [vmem:[%s5093 + $0x8] sm:$0xf]
  %v5096 = vld [vmem:[%s5093 + $0xc] sm:$0xff]
  %v5097 = vld [vmem:[%s5093 + $0x14] sm:$0xf]
  %v5098 = vld [vmem:[%s5093 + $0x18] sm:$0xff]
  %v5099 = vld [vmem:[%s5093 + $0x20] sm:$0xf]
  %v5100 = vld [vmem:[%s5093 + $0x24] sm:$0xff]
  %v5101 = vld [vmem:[%s5093 + $0x2c] sm:$0xf]
  %v5102 = vld [vmem:[%s5093 + $0x30] sm:$0xff]
  %v5103 = vld [vmem:[%s5093 + $0x38] sm:$0xf]
  %v5104 = vld [vmem:[%s5093 + $0x3c] sm:$0xff]
  %v5105 = vld [vmem:[%s5093 + $0x44] sm:$0xf]
  %v5106 = vld [vmem:[%s5093 + $0x48] sm:$0xff]
  %v5107 = vld [vmem:[%s5093 + $0x50] sm:$0xf]
  %v5108 = vld [vmem:[%s5093 + $0x54] sm:$0xff]
  %v5109 = vld [vmem:[%s5093 + $0x5c] sm:$0xf]
  %v5110 = vld [vmem:[%s5093 + $0x60] sm:$0xff]
  %v5111 = vld [vmem:[%s5093 + $0x68] sm:$0xf]
  %v5112 = vld [vmem:[%s5093 + $0x6c] sm:$0xff]
  %v5113 = vld [vmem:[%s5093 + $0x74] sm:$0xf]
  %v5114 = vld [vmem:[%s5093 + $0x78] sm:$0xff]
  %v5115 = vld [vmem:[%s5093 + $0x80] sm:$0xf]
  %v5116 = vld [vmem:[%s5093 + $0x84] sm:$0xff]
  %v5117 = vld [vmem:[%s5093 + $0x8c] sm:$0xf]
  %v5118 = vld [vmem:[%s5093 + $0x90] sm:$0xff]
  %v5119 = vld [vmem:[%s5093 + $0x98] sm:$0xf]
  %v5120 = vld [vmem:[%s5093 + $0x9c] sm:$0xff]
  %v5121 = vld [vmem:[%s5093 + $0xa4] sm:$0xf]
  %v5122 = vld [vmem:[%s5093 + $0xa8] sm:$0xff]
  %v5123 = vld [vmem:[%s5093 + $0xb0] sm:$0xf]
  %v5124 = vld [vmem:[%s5093 + $0xb4] sm:$0xff]
  %v5125 = vld [vmem:[%s5093 + $0xbc] sm:$0xf]
  %v5126 = vld [vmem:[%s5093 + $0xc0] sm:$0xff]
  %v5127 = vld [vmem:[%s5093 + $0xc8] sm:$0xf]
  %v5128 = vld [vmem:[%s5093 + $0xcc] sm:$0xff]
  %v5129 = vld [vmem:[%s5093 + $0xd4] sm:$0xf]
  %v5130 = vld [vmem:[%s5093 + $0xd8] sm:$0xff]
  %v5131 = vld [vmem:[%s5093 + $0xe0] sm:$0xf]
  %v5132 = vld [vmem:[%s5093 + $0xe4] sm:$0xff]
  %v5133 = vld [vmem:[%s5093 + $0xec] sm:$0xf]
  %v5134 = vld [vmem:[%s5093 + $0xf0] sm:$0xff]
  %v5135 = vld [vmem:[%s5093 + $0xf8] sm:$0xf]
  %v5136 = vld [vmem:[%s5093 + $0xfc] sm:$0xff]
  %v5137 = vld [vmem:[%s5093 + $0x104] sm:$0xf]
  %v5138 = vld [vmem:[%s5093 + $0x108] sm:$0xff]
  %v5139 = vld [vmem:[%s5093 + $0x110] sm:$0xf]
  %v5140 = vld [vmem:[%s5093 + $0x114] sm:$0xff]
  %v5141 = vld [vmem:[%s5093 + $0x11c] sm:$0xf]
  %v5142 = vld [vmem:[%s5093 + $0x120] sm:$0xff]
  %v5143 = vld [vmem:[%s5093 + $0x128] sm:$0xf]
  %v5144 = vld [vmem:[%s5093 + $0x12c] sm:$0xff]
  %v5145 = vld [vmem:[%s5093 + $0x134] sm:$0xf]
  %v5146 = vld [vmem:[%s5093 + $0x138] sm:$0xff]
  %v5147 = vld [vmem:[%s5093 + $0x140] sm:$0xf]
  %v5148 = vld [vmem:[%s5093 + $0x144] sm:$0xff]
  %v5149 = vld [vmem:[%s5093 + $0x14c] sm:$0xf]
  %v5150 = vld [vmem:[%s5093 + $0x150] sm:$0xff]
  %v5151 = vld [vmem:[%s5093 + $0x158] sm:$0xf]
  %v5152 = vld [vmem:[%s5093 + $0x15c] sm:$0xff]
  %v5153 = vld [vmem:[%s5093 + $0x164] sm:$0xf]
  %v5154 = vld [vmem:[%s5093 + $0x168] sm:$0xff]
  %v5155 = vld [vmem:[%s5093 + $0x170] sm:$0xf]
  %v5156 = vld [vmem:[%s5093 + $0x174] sm:$0xff]
  %v5157 = vld [vmem:[%s5093 + $0x17c] sm:$0xf]
  %v5158 = vld [vmem:[%s5093 + $0x180] sm:$0xff]
  %v5159 = vld [vmem:[%s5093 + $0x188] sm:$0xf]
  %v5160 = vld [vmem:[%s5093 + $0x18c] sm:$0xff]
  %v5161 = vld [vmem:[%s5093 + $0x194] sm:$0xf]
  %v5162 = vld [vmem:[%s5093 + $0x198] sm:$0xff]
  %v5163 = vld [vmem:[%s5093 + $0x1a0] sm:$0xf]
  %v5164 = vld [vmem:[%s5093 + $0x1a4] sm:$0xff]
  %v5165 = vld [vmem:[%s5093 + $0x1ac] sm:$0xf]
  %v5166 = vld [vmem:[%s5093 + $0x1b0] sm:$0xff]
  %v5167 = vld [vmem:[%s5093 + $0x1b8] sm:$0xf]
  %v5168 = vld [vmem:[%s5093 + $0x1bc] sm:$0xff]
  %v5169 = vld [vmem:[%s5093 + $0x1c4] sm:$0xf]
  %v5170 = vld [vmem:[%s5093 + $0x1c8] sm:$0xff]
  %v5171 = vld [vmem:[%s5093 + $0x1d0] sm:$0xf]
  %v5172 = vld [vmem:[%s5093 + $0x1d4] sm:$0xff]
  %v5173 = vld [vmem:[%s5093 + $0x1dc] sm:$0xf]
  %v5174 = vld [vmem:[%s5093 + $0x1e0] sm:$0xff]
  %v5175 = vld [vmem:[%s5093 + $0x1e8] sm:$0xf]
  %v5176 = vld [vmem:[%s5093 + $0x1ec] sm:$0xff]
  %v5177 = vld [vmem:[%s5093 + $0x1f4] sm:$0xf]
  %v5178 = vld [vmem:[%s5093 + $0x1f8] sm:$0xff]
  %v5179 = vld [vmem:[%s5093 + $0x200] sm:$0xf]
  %v5180 = vld [vmem:[%s5093 + $0x204] sm:$0xff]
  %v5181 = vld [vmem:[%s5093 + $0x20c] sm:$0xf]
  %v5182 = vld [vmem:[%s5093 + $0x210] sm:$0xff]
  %v5183 = vld [vmem:[%s5093 + $0x218] sm:$0xf]
  %v5184 = vld [vmem:[%s5093 + $0x21c] sm:$0xff]
  %v5185 = vld [vmem:[%s5093 + $0x224] sm:$0xf]
  %v5186 = vld [vmem:[%s5093 + $0x228] sm:$0xff]
  %v5187 = vld [vmem:[%s5093 + $0x230] sm:$0xf]
  %v5188 = vld [vmem:[%s5093 + $0x234] sm:$0xff]
  %v5189 = vld [vmem:[%s5093 + $0x23c] sm:$0xf]
  %v5190 = vld [vmem:[%s5093 + $0x240] sm:$0xff]
  %v5191 = vld [vmem:[%s5093 + $0x248] sm:$0xf]
  %v5192 = vld [vmem:[%s5093 + $0x24c] sm:$0xff]
  %v5193 = vld [vmem:[%s5093 + $0x254] sm:$0xf]
  %v5194 = vld [vmem:[%s5093 + $0x258] sm:$0xff]
  %v5195 = vld [vmem:[%s5093 + $0x260] sm:$0xf]
  %v5196 = vld [vmem:[%s5093 + $0x264] sm:$0xff]
  %v5197 = vld [vmem:[%s5093 + $0x26c] sm:$0xf]
  %v5198 = vld [vmem:[%s5093 + $0x270] sm:$0xff]
  %v5199 = vld [vmem:[%s5093 + $0x278] sm:$0xf]
  %v5200 = vld [vmem:[%s5093 + $0x27c] sm:$0xff]
  %v5201 = vld [vmem:[%s5093 + $0x284] sm:$0xf]
  %v5202 = vld [vmem:[%s5093 + $0x288] sm:$0xff]
  %v5203 = vld [vmem:[%s5093 + $0x290] sm:$0xf]
  %v5204 = vld [vmem:[%s5093 + $0x294] sm:$0xff]
  %v5205 = vld [vmem:[%s5093 + $0x29c] sm:$0xf]
  %v5206 = vld [vmem:[%s5093 + $0x2a0] sm:$0xff]
  %v5207 = vld [vmem:[%s5093 + $0x2a8] sm:$0xf]
  %v5208 = vld [vmem:[%s5093 + $0x2ac] sm:$0xff]
  %v5209 = vld [vmem:[%s5093 + $0x2b4] sm:$0xf]
  %v5210 = vld [vmem:[%s5093 + $0x2b8] sm:$0xff]
  %v5211 = vld [vmem:[%s5093 + $0x2c0] sm:$0xf]
  %v5212 = vld [vmem:[%s5093 + $0x2c4] sm:$0xff]
  %v5213 = vld [vmem:[%s5093 + $0x2cc] sm:$0xf]
  %v5218 = vunpack.c.l.b16 %v5089
  %v5219 = vunpack.c.h.b16 %v5089
  %v5220 = vunpack.c.l.b16 %v5090
  %v5221 = vunpack.c.h.b16 %v5090
  %v5222 = vunpack.c.l.b16 %v5091
  %v5223 = vunpack.c.h.b16 %v5091
  %v5224 = vunpack.c.l.b16 %v5092
  %v5225 = vunpack.c.h.b16 %v5092
  %v5226 = vpack.c.b16 %v5222, %v5218
  %v5227 = vpack.c.b16 %v5223, %v5219
  %v5228 = vpack.c.b16 %v5224, %v5220
  %v5229 = vpack.c.b16 %v5225, %v5221
  %v5353 = vunpack.c.l.b16 %v5094
  %v5354 = vunpack.c.h.b16 %v5094
  %v5355 = vunpack.c.l.b16 %v5095
  %v5356 = vunpack.c.l.b16 %v5096
  %v5357 = vunpack.c.h.b16 %v5096
  %v5358 = vunpack.c.l.b16 %v5097
  %v5359 = vunpack.c.l.b16 %v5098
  %v5360 = vunpack.c.h.b16 %v5098
  %v5361 = vunpack.c.l.b16 %v5099
  %v5362 = vunpack.c.l.b16 %v5100
  %v5363 = vunpack.c.h.b16 %v5100
  %v5364 = vunpack.c.l.b16 %v5101
  %v5365 = vunpack.c.l.b16 %v5102
  %v5366 = vunpack.c.h.b16 %v5102
  %v5367 = vunpack.c.l.b16 %v5103
  %v5368 = vunpack.c.l.b16 %v5104
  %v5369 = vunpack.c.h.b16 %v5104
  %v5370 = vunpack.c.l.b16 %v5105
  %v5371 = vunpack.c.l.b16 %v5106
  %v5372 = vunpack.c.h.b16 %v5106
  %v5373 = vunpack.c.l.b16 %v5107
  %v5374 = vunpack.c.l.b16 %v5108
  %v5375 = vunpack.c.h.b16 %v5108
  %v5376 = vunpack.c.l.b16 %v5109
  %v5377 = vunpack.c.l.b16 %v5110
  %v5378 = vunpack.c.h.b16 %v5110
  %v5379 = vunpack.c.l.b16 %v5111
  %v5380 = vunpack.c.l.b16 %v5112
  %v5381 = vunpack.c.h.b16 %v5112
  %v5382 = vunpack.c.l.b16 %v5113
  %v5383 = vunpack.c.l.b16 %v5114
  %v5384 = vunpack.c.h.b16 %v5114
  %v5385 = vunpack.c.l.b16 %v5115
  %v5386 = vunpack.c.l.b16 %v5116
  %v5387 = vunpack.c.h.b16 %v5116
  %v5388 = vunpack.c.l.b16 %v5117
  %v5389 = vunpack.c.l.b16 %v5118
  %v5390 = vunpack.c.h.b16 %v5118
  %v5391 = vunpack.c.l.b16 %v5119
  %v5392 = vunpack.c.l.b16 %v5120
  %v5393 = vunpack.c.h.b16 %v5120
  %v5394 = vunpack.c.l.b16 %v5121
  %v5395 = vunpack.c.l.b16 %v5122
  %v5396 = vunpack.c.h.b16 %v5122
  %v5397 = vunpack.c.l.b16 %v5123
  %v5398 = vunpack.c.l.b16 %v5124
  %v5399 = vunpack.c.h.b16 %v5124
  %v5400 = vunpack.c.l.b16 %v5125
  %v5401 = vunpack.c.l.b16 %v5126
  %v5402 = vunpack.c.h.b16 %v5126
  %v5403 = vunpack.c.l.b16 %v5127
  %v5404 = vunpack.c.l.b16 %v5128
  %v5405 = vunpack.c.h.b16 %v5128
  %v5406 = vunpack.c.l.b16 %v5129
  %v5407 = vunpack.c.l.b16 %v5130
  %v5408 = vunpack.c.h.b16 %v5130
  %v5409 = vunpack.c.l.b16 %v5131
  %v5410 = vunpack.c.l.b16 %v5132
  %v5411 = vunpack.c.h.b16 %v5132
  %v5412 = vunpack.c.l.b16 %v5133
  %v5413 = vunpack.c.l.b16 %v5134
  %v5414 = vunpack.c.h.b16 %v5134
  %v5415 = vunpack.c.l.b16 %v5135
  %v5416 = vunpack.c.l.b16 %v5136
  %v5417 = vunpack.c.h.b16 %v5136
  %v5418 = vunpack.c.l.b16 %v5137
  %v5419 = vunpack.c.l.b16 %v5138
  %v5420 = vunpack.c.h.b16 %v5138
  %v5421 = vunpack.c.l.b16 %v5139
  %v5422 = vunpack.c.l.b16 %v5140
  %v5423 = vunpack.c.h.b16 %v5140
  %v5424 = vunpack.c.l.b16 %v5141
  %v5425 = vunpack.c.l.b16 %v5142
  %v5426 = vunpack.c.h.b16 %v5142
  %v5427 = vunpack.c.l.b16 %v5143
  %v5428 = vunpack.c.l.b16 %v5144
  %v5429 = vunpack.c.h.b16 %v5144
  %v5430 = vunpack.c.l.b16 %v5145
  %v5431 = vunpack.c.l.b16 %v5146
  %v5432 = vunpack.c.h.b16 %v5146
  %v5433 = vunpack.c.l.b16 %v5147
  %v5434 = vunpack.c.l.b16 %v5148
  %v5435 = vunpack.c.h.b16 %v5148
  %v5436 = vunpack.c.l.b16 %v5149
  %v5437 = vunpack.c.l.b16 %v5150
  %v5438 = vunpack.c.h.b16 %v5150
  %v5439 = vunpack.c.l.b16 %v5151
  %v5440 = vunpack.c.l.b16 %v5152
  %v5441 = vunpack.c.h.b16 %v5152
  %v5442 = vunpack.c.l.b16 %v5153
  %v5443 = vunpack.c.l.b16 %v5154
  %v5444 = vunpack.c.h.b16 %v5154
  %v5445 = vunpack.c.l.b16 %v5155
  %v5446 = vunpack.c.l.b16 %v5156
  %v5447 = vunpack.c.h.b16 %v5156
  %v5448 = vunpack.c.l.b16 %v5157
  %v5449 = vunpack.c.l.b16 %v5158
  %v5450 = vunpack.c.h.b16 %v5158
  %v5451 = vunpack.c.l.b16 %v5159
  %v5452 = vunpack.c.l.b16 %v5160
  %v5453 = vunpack.c.h.b16 %v5160
  %v5454 = vunpack.c.l.b16 %v5161
  %v5455 = vunpack.c.l.b16 %v5162
  %v5456 = vunpack.c.h.b16 %v5162
  %v5457 = vunpack.c.l.b16 %v5163
  %v5458 = vunpack.c.l.b16 %v5164
  %v5459 = vunpack.c.h.b16 %v5164
  %v5460 = vunpack.c.l.b16 %v5165
  %v5461 = vunpack.c.l.b16 %v5166
  %v5462 = vunpack.c.h.b16 %v5166
  %v5463 = vunpack.c.l.b16 %v5167
  %v5464 = vunpack.c.l.b16 %v5168
  %v5465 = vunpack.c.h.b16 %v5168
  %v5466 = vunpack.c.l.b16 %v5169
  %v5467 = vunpack.c.l.b16 %v5170
  %v5468 = vunpack.c.h.b16 %v5170
  %v5469 = vunpack.c.l.b16 %v5171
  %v5470 = vunpack.c.l.b16 %v5172
  %v5471 = vunpack.c.h.b16 %v5172
  %v5472 = vunpack.c.l.b16 %v5173
  %v5473 = vunpack.c.l.b16 %v5174
  %v5474 = vunpack.c.h.b16 %v5174
  %v5475 = vunpack.c.l.b16 %v5175
  %v5476 = vunpack.c.l.b16 %v5176
  %v5477 = vunpack.c.h.b16 %v5176
  %v5478 = vunpack.c.l.b16 %v5177
  %v5479 = vunpack.c.l.b16 %v5178
  %v5480 = vunpack.c.h.b16 %v5178
  %v5481 = vunpack.c.l.b16 %v5179
  %v5482 = vunpack.c.l.b16 %v5180
  %v5483 = vunpack.c.h.b16 %v5180
  %v5484 = vunpack.c.l.b16 %v5181
  %v5485 = vunpack.c.l.b16 %v5182
  %v5486 = vunpack.c.h.b16 %v5182
  %v5487 = vunpack.c.l.b16 %v5183
  %v5488 = vunpack.c.l.b16 %v5184
  %v5489 = vunpack.c.h.b16 %v5184
  %v5490 = vunpack.c.l.b16 %v5185
  %v5491 = vunpack.c.l.b16 %v5186
  %v5492 = vunpack.c.h.b16 %v5186
  %v5493 = vunpack.c.l.b16 %v5187
  %v5494 = vunpack.c.l.b16 %v5188
  %v5495 = vunpack.c.h.b16 %v5188
  %v5496 = vunpack.c.l.b16 %v5189
  %v5497 = vunpack.c.l.b16 %v5190
  %v5498 = vunpack.c.h.b16 %v5190
  %v5499 = vunpack.c.l.b16 %v5191
  %v5500 = vunpack.c.l.b16 %v5192
  %v5501 = vunpack.c.h.b16 %v5192
  %v5502 = vunpack.c.l.b16 %v5193
  %v5503 = vunpack.c.l.b16 %v5194
  %v5504 = vunpack.c.h.b16 %v5194
  %v5505 = vunpack.c.l.b16 %v5195
  %v5506 = vunpack.c.l.b16 %v5196
  %v5507 = vunpack.c.h.b16 %v5196
  %v5508 = vunpack.c.l.b16 %v5197
  %v5509 = vunpack.c.l.b16 %v5198
  %v5510 = vunpack.c.h.b16 %v5198
  %v5511 = vunpack.c.l.b16 %v5199
  %v5512 = vunpack.c.l.b16 %v5200
  %v5513 = vunpack.c.h.b16 %v5200
  %v5514 = vunpack.c.l.b16 %v5201
  %v5515 = vunpack.c.l.b16 %v5202
  %v5516 = vunpack.c.h.b16 %v5202
  %v5517 = vunpack.c.l.b16 %v5203
  %v5518 = vunpack.c.l.b16 %v5204
  %v5519 = vunpack.c.h.b16 %v5204
  %v5520 = vunpack.c.l.b16 %v5205
  %v5521 = vunpack.c.l.b16 %v5206
  %v5522 = vunpack.c.h.b16 %v5206
  %v5523 = vunpack.c.l.b16 %v5207
  %v5524 = vunpack.c.l.b16 %v5208
  %v5525 = vunpack.c.h.b16 %v5208
  %v5526 = vunpack.c.l.b16 %v5209
  %v5527 = vunpack.c.l.b16 %v5210
  %v5528 = vunpack.c.h.b16 %v5210
  %v5529 = vunpack.c.l.b16 %v5211
  %v5530 = vunpack.c.l.b16 %v5212
  %v5531 = vunpack.c.h.b16 %v5212
  %v5532 = vunpack.c.l.b16 %v5213
  %v5533 = vpack.c.b16 %v5356, %v5353
  %v5534 = vpack.c.b16 %v5357, %v5354
  %v5535 = vpack.c.b16 %v5358, %v5355
  %v5536 = vpack.c.b16 %v5362, %v5359
  %v5537 = vpack.c.b16 %v5363, %v5360
  %v5538 = vpack.c.b16 %v5364, %v5361
  %v5539 = vpack.c.b16 %v5368, %v5365
  %v5540 = vpack.c.b16 %v5369, %v5366
  %v5541 = vpack.c.b16 %v5370, %v5367
  %v5542 = vpack.c.b16 %v5374, %v5371
  %v5543 = vpack.c.b16 %v5375, %v5372
  %v5544 = vpack.c.b16 %v5376, %v5373
  %v5545 = vpack.c.b16 %v5380, %v5377
  %v5546 = vpack.c.b16 %v5381, %v5378
  %v5547 = vpack.c.b16 %v5382, %v5379
  %v5548 = vpack.c.b16 %v5386, %v5383
  %v5549 = vpack.c.b16 %v5387, %v5384
  %v5550 = vpack.c.b16 %v5388, %v5385
  %v5551 = vpack.c.b16 %v5392, %v5389
  %v5552 = vpack.c.b16 %v5393, %v5390
  %v5553 = vpack.c.b16 %v5394, %v5391
  %v5554 = vpack.c.b16 %v5398, %v5395
  %v5555 = vpack.c.b16 %v5399, %v5396
  %v5556 = vpack.c.b16 %v5400, %v5397
  %v5557 = vpack.c.b16 %v5404, %v5401
  %v5558 = vpack.c.b16 %v5405, %v5402
  %v5559 = vpack.c.b16 %v5406, %v5403
  %v5560 = vpack.c.b16 %v5410, %v5407
  %v5561 = vpack.c.b16 %v5411, %v5408
  %v5562 = vpack.c.b16 %v5412, %v5409
  %v5563 = vpack.c.b16 %v5416, %v5413
  %v5564 = vpack.c.b16 %v5417, %v5414
  %v5565 = vpack.c.b16 %v5418, %v5415
  %v5566 = vpack.c.b16 %v5422, %v5419
  %v5567 = vpack.c.b16 %v5423, %v5420
  %v5568 = vpack.c.b16 %v5424, %v5421
  %v5569 = vpack.c.b16 %v5428, %v5425
  %v5570 = vpack.c.b16 %v5429, %v5426
  %v5571 = vpack.c.b16 %v5430, %v5427
  %v5572 = vpack.c.b16 %v5434, %v5431
  %v5573 = vpack.c.b16 %v5435, %v5432
  %v5574 = vpack.c.b16 %v5436, %v5433
  %v5575 = vpack.c.b16 %v5440, %v5437
  %v5576 = vpack.c.b16 %v5441, %v5438
  %v5577 = vpack.c.b16 %v5442, %v5439
  %v5578 = vpack.c.b16 %v5446, %v5443
  %v5579 = vpack.c.b16 %v5447, %v5444
  %v5580 = vpack.c.b16 %v5448, %v5445
  %v5581 = vpack.c.b16 %v5452, %v5449
  %v5582 = vpack.c.b16 %v5453, %v5450
  %v5583 = vpack.c.b16 %v5454, %v5451
  %v5584 = vpack.c.b16 %v5458, %v5455
  %v5585 = vpack.c.b16 %v5459, %v5456
  %v5586 = vpack.c.b16 %v5460, %v5457
  %v5587 = vpack.c.b16 %v5464, %v5461
  %v5588 = vpack.c.b16 %v5465, %v5462
  %v5589 = vpack.c.b16 %v5466, %v5463
  %v5590 = vpack.c.b16 %v5470, %v5467
  %v5591 = vpack.c.b16 %v5471, %v5468
  %v5592 = vpack.c.b16 %v5472, %v5469
  %v5593 = vpack.c.b16 %v5476, %v5473
  %v5594 = vpack.c.b16 %v5477, %v5474
  %v5595 = vpack.c.b16 %v5478, %v5475
  %v5596 = vpack.c.b16 %v5482, %v5479
  %v5597 = vpack.c.b16 %v5483, %v5480
  %v5598 = vpack.c.b16 %v5484, %v5481
  %v5599 = vpack.c.b16 %v5488, %v5485
  %v5600 = vpack.c.b16 %v5489, %v5486
  %v5601 = vpack.c.b16 %v5490, %v5487
  %v5602 = vpack.c.b16 %v5494, %v5491
  %v5603 = vpack.c.b16 %v5495, %v5492
  %v5604 = vpack.c.b16 %v5496, %v5493
  %v5605 = vpack.c.b16 %v5500, %v5497
  %v5606 = vpack.c.b16 %v5501, %v5498
  %v5607 = vpack.c.b16 %v5502, %v5499
  %v5608 = vpack.c.b16 %v5506, %v5503
  %v5609 = vpack.c.b16 %v5507, %v5504
  %v5610 = vpack.c.b16 %v5508, %v5505
  %v5611 = vpack.c.b16 %v5512, %v5509
  %v5612 = vpack.c.b16 %v5513, %v5510
  %v5613 = vpack.c.b16 %v5514, %v5511
  %v5614 = vpack.c.b16 %v5518, %v5515
  %v5615 = vpack.c.b16 %v5519, %v5516
  %v5616 = vpack.c.b16 %v5520, %v5517
  %v5617 = vpack.c.b16 %v5524, %v5521
  %v5618 = vpack.c.b16 %v5525, %v5522
  %v5619 = vpack.c.b16 %v5526, %v5523
  %v5620 = vpack.c.b16 %v5530, %v5527
  %v5621 = vpack.c.b16 %v5531, %v5528
  %v5622 = vpack.c.b16 %v5532, %v5529
  %vm5713 = vcmask 785408
  %v5715 = vsel %vm5713, %v5229, 0
  %5717 = vmatprep.subr.bf16.mxu0 %v5555
  %5718 = vmatpush1.bf16.msra.mxu0 %v5554
  %5719 = vmatprep.subr.bf16.mxu0 %v5552
  %5720 = vmatpush1.bf16.msra.mxu0 %v5551
  %5721 = vmatprep.subr.bf16.mxu0 %v5549
  %5722 = vmatpush1.bf16.msra.mxu0 %v5548
  %5723 = vmatprep.subr.bf16.mxu0 %v5546
  %5724 = vmatpush1.bf16.msra.mxu0 %v5545
  %5725 = vmatprep.subr.bf16.mxu0 %v5543
  %5726 = vmatpush1.bf16.msra.mxu0 %v5542
  %5727 = vmatprep.subr.bf16.mxu0 %v5540
  %5728 = vmatpush1.bf16.msra.mxu0 %v5539
  %5729 = vmatprep.subr.bf16.mxu0 %v5537
  %5730 = vmatpush1.bf16.msra.mxu0 %v5536
  %5731 = vmatprep.subr.bf16.mxu0 %v5534
  %5732 = vmatpush1.bf16.msra.mxu0 %v5533
  %5733 = vmatprep.subr.bf16.mxu0 %v5579
  %5734 = vmatpush2.bf16.msra.mxu0 %v5578
  %5735 = vmatprep.subr.bf16.mxu0 %v5576
  %5736 = vmatpush2.bf16.msra.mxu0 %v5575
  %5737 = vmatprep.subr.bf16.mxu0 %v5573
  %5738 = vmatpush2.bf16.msra.mxu0 %v5572
  %5739 = vmatprep.subr.bf16.mxu0 %v5570
  %5740 = vmatpush2.bf16.msra.mxu0 %v5569
  %5741 = vmatprep.subr.bf16.mxu0 %v5567
  %5742 = vmatpush2.bf16.msra.mxu0 %v5566
  %5743 = vmatprep.subr.bf16.mxu0 %v5564
  %5744 = vmatpush2.bf16.msra.mxu0 %v5563
  %5745 = vmatprep.subr.bf16.mxu0 %v5561
  %5746 = vmatpush2.bf16.msra.mxu0 %v5560
  %5747 = vmatprep.subr.bf16.mxu0 %v5558
  %5748 = vmatpush2.bf16.msra.mxu0 %v5557
  %5749 = vmatprep.mubr.bf16.mxu0 %v5227
  %5750 = vmatmul.mubr.bf16.gmra.mxu0 %v5226
  %v5751 = vpop.f32.mrf.mxu0
  %v5752 = vadd.f32 0.0, %v5751
  %v5753 = vpop.f32.mrf.mxu0
  %v5754 = vadd.f32 0.0, %v5753
  %v5755 = vpop.f32.mrf.mxu0
  %v5756 = vadd.f32 0.0, %v5755
  %v5757 = vpop.f32.mrf.mxu0
  %v5758 = vadd.f32 0.0, %v5757
  %5759 = vdwg.mxu0
  %5760 = vmatprep.subr.bf16.mxu0 %v5603
  %5761 = vmatpush1.bf16.msra.mxu0 %v5602
  %5762 = vmatprep.subr.bf16.mxu0 %v5600
  %5763 = vmatpush1.bf16.msra.mxu0 %v5599
  %5764 = vmatprep.subr.bf16.mxu0 %v5597
  %5765 = vmatpush1.bf16.msra.mxu0 %v5596
  %5766 = vmatprep.subr.bf16.mxu0 %v5594
  %5767 = vmatpush1.bf16.msra.mxu0 %v5593
  %5768 = vmatprep.subr.bf16.mxu0 %v5591
  %5769 = vmatpush1.bf16.msra.mxu0 %v5590
  %5770 = vmatprep.subr.bf16.mxu0 %v5588
  %5771 = vmatpush1.bf16.msra.mxu0 %v5587
  %5772 = vmatprep.subr.bf16.mxu0 %v5585
  %5773 = vmatpush1.bf16.msra.mxu0 %v5584
  %5774 = vmatprep.subr.bf16.mxu0 %v5582
  %5775 = vmatpush1.bf16.msra.mxu0 %v5581
  %5776 = vmatprep.subr.bf16.mxu0 0
  %5777 = vmatpush2.bf16.msra.mxu0 0
  %5778 = vmatprep.subr.bf16.mxu0 0
  %5779 = vmatpush2.bf16.msra.mxu0 0
  %5780 = vmatprep.subr.bf16.mxu0 %v5621
  %5781 = vmatpush2.bf16.msra.mxu0 %v5620
  %5782 = vmatprep.subr.bf16.mxu0 %v5618
  %5783 = vmatpush2.bf16.msra.mxu0 %v5617
  %5784 = vmatprep.subr.bf16.mxu0 %v5615
  %5785 = vmatpush2.bf16.msra.mxu0 %v5614
  %5786 = vmatprep.subr.bf16.mxu0 %v5612
  %5787 = vmatpush2.bf16.msra.mxu0 %v5611
  %5788 = vmatprep.subr.bf16.mxu0 %v5609
  %5789 = vmatpush2.bf16.msra.mxu0 %v5608
  %5790 = vmatprep.subr.bf16.mxu0 %v5606
  %5791 = vmatpush2.bf16.msra.mxu0 %v5605
  %5792 = vmatprep.mubr.bf16.mxu0 %v5715
  %5793 = vmatmul.mubr.bf16.gmra.mxu0 %v5228
  %v5794 = vpop.f32.mrf.mxu0
  %v5795 = vadd.f32 %v5752, %v5794
  %v5796 = vpop.f32.mrf.mxu0
  %v5797 = vadd.f32 %v5754, %v5796
  %v5798 = vpop.f32.mrf.mxu0
  %v5799 = vadd.f32 %v5756, %v5798
  %v5800 = vpop.f32.mrf.mxu0
  %v5801 = vadd.f32 %v5758, %v5800
  %5802 = vdwg.mxu0
  %5803 = vmatprep.subr.bf16.mxu0 0
  %5804 = vmatpush1.bf16.msra.mxu0 %v5556
  %5805 = vmatprep.subr.bf16.mxu0 0
  %5806 = vmatpush1.bf16.msra.mxu0 %v5553
  %5807 = vmatprep.subr.bf16.mxu0 0
  %5808 = vmatpush1.bf16.msra.mxu0 %v5550
  %5809 = vmatprep.subr.bf16.mxu0 0
  %5810 = vmatpush1.bf16.msra.mxu0 %v5547
  %5811 = vmatprep.subr.bf16.mxu0 0
  %5812 = vmatpush1.bf16.msra.mxu0 %v5544
  %5813 = vmatprep.subr.bf16.mxu0 0
  %5814 = vmatpush1.bf16.msra.mxu0 %v5541
  %5815 = vmatprep.subr.bf16.mxu0 0
  %5816 = vmatpush1.bf16.msra.mxu0 %v5538
  %5817 = vmatprep.subr.bf16.mxu0 0
  %5818 = vmatpush1.bf16.msra.mxu0 %v5535
  %5819 = vmatprep.subr.bf16.mxu0 0
  %5820 = vmatpush2.bf16.msra.mxu0 %v5580
  %5821 = vmatprep.subr.bf16.mxu0 0
  %5822 = vmatpush2.bf16.msra.mxu0 %v5577
  %5823 = vmatprep.subr.bf16.mxu0 0
  %5824 = vmatpush2.bf16.msra.mxu0 %v5574
  %5825 = vmatprep.subr.bf16.mxu0 0
  %5826 = vmatpush2.bf16.msra.mxu0 %v5571
  %5827 = vmatprep.subr.bf16.mxu0 0
  %5828 = vmatpush2.bf16.msra.mxu0 %v5568
  %5829 = vmatprep.subr.bf16.mxu0 0
  %5830 = vmatpush2.bf16.msra.mxu0 %v5565
  %5831 = vmatprep.subr.bf16.mxu0 0
  %5832 = vmatpush2.bf16.msra.mxu0 %v5562
  %5833 = vmatprep.subr.bf16.mxu0 0
  %5834 = vmatpush2.bf16.msra.mxu0 %v5559
  %5835 = vmatprep.mubr.bf16.mxu0 %v5227
  %5836 = vmatmul.mubr.bf16.gmra.mxu0 %v5226
  %v5837 = vpop.f32.mrf.mxu0
  %v5838 = vadd.f32 0.0, %v5837
  %v5839 = vpop.f32.mrf.mxu0
  %v5840 = vpop.f32.mrf.mxu0
  %v5841 = vadd.f32 0.0, %v5840
  %v5842 = vpop.f32.mrf.mxu0
  %5843 = vdwg.mxu0
  %5844 = vmatprep.subr.bf16.mxu0 0
  %5845 = vmatpush1.bf16.msra.mxu0 %v5604
  %5846 = vmatprep.subr.bf16.mxu0 0
  %5847 = vmatpush1.bf16.msra.mxu0 %v5601
  %5848 = vmatprep.subr.bf16.mxu0 0
  %5849 = vmatpush1.bf16.msra.mxu0 %v5598
  %5850 = vmatprep.subr.bf16.mxu0 0
  %5851 = vmatpush1.bf16.msra.mxu0 %v5595
  %5852 = vmatprep.subr.bf16.mxu0 0
  %5853 = vmatpush1.bf16.msra.mxu0 %v5592
  %5854 = vmatprep.subr.bf16.mxu0 0
  %5855 = vmatpush1.bf16.msra.mxu0 %v5589
  %5856 = vmatprep.subr.bf16.mxu0 0
  %5857 = vmatpush1.bf16.msra.mxu0 %v5586
  %5858 = vmatprep.subr.bf16.mxu0 0
  %5859 = vmatpush1.bf16.msra.mxu0 %v5583
  %5860 = vmatprep.subr.bf16.mxu0 0
  %5861 = vmatpush2.bf16.msra.mxu0 0
  %5862 = vmatprep.subr.bf16.mxu0 0
  %5863 = vmatpush2.bf16.msra.mxu0 0
  %5864 = vmatprep.subr.bf16.mxu0 0
  %5865 = vmatpush2.bf16.msra.mxu0 %v5622
  %5866 = vmatprep.subr.bf16.mxu0 0
  %5867 = vmatpush2.bf16.msra.mxu0 %v5619
  %5868 = vmatprep.subr.bf16.mxu0 0
  %5869 = vmatpush2.bf16.msra.mxu0 %v5616
  %5870 = vmatprep.subr.bf16.mxu0 0
  %5871 = vmatpush2.bf16.msra.mxu0 %v5613
  %5872 = vmatprep.subr.bf16.mxu0 0
  %5873 = vmatpush2.bf16.msra.mxu0 %v5610
  %5874 = vmatprep.subr.bf16.mxu0 0
  %5875 = vmatpush2.bf16.msra.mxu0 %v5607
  %5876 = vmatprep.mubr.bf16.mxu0 %v5715
  %5877 = vmatmul.mubr.bf16.gmra.mxu0 %v5228
  %v5878 = vpop.f32.mrf.mxu0
  %v5879 = vadd.f32 %v5838, %v5878
  %v5880 = vpop.f32.mrf.mxu0
  %v5881 = vpop.f32.mrf.mxu0
  %v5882 = vadd.f32 %v5841, %v5881
  %v5883 = vpop.f32.mrf.mxu0
  %5884 = vdwg.mxu0
  %v5889 = vunpack.c.l.b16 %v4965
  %v5890 = vunpack.c.h.b16 %v4965
  %v5891 = vunpack.c.l.b16 %v4966
  %v5892 = vunpack.c.h.b16 %v4966
  %v5893 = vunpack.c.l.b16 %v4967
  %v5894 = vunpack.c.h.b16 %v4967
  %v5895 = vunpack.c.l.b16 %v4968
  %v5896 = vunpack.c.h.b16 %v4968
  %v5897 = vpack.c.b16 %v5893, %v5889
  %v5898 = vpack.c.b16 %v5894, %v5890
  %v5899 = vpack.c.b16 %v5895, %v5891
  %v5900 = vpack.c.b16 %v5896, %v5892
  %v6024 = vunpack.c.l.b16 %v4969
  %v6025 = vunpack.c.h.b16 %v4969
  %v6026 = vunpack.c.l.b16 %v4970
  %v6027 = vunpack.c.l.b16 %v4971
  %v6028 = vunpack.c.h.b16 %v4971
  %v6029 = vunpack.c.l.b16 %v4972
  %v6030 = vunpack.c.l.b16 %v4973
  %v6031 = vunpack.c.h.b16 %v4973
  %v6032 = vunpack.c.l.b16 %v4974
  %v6033 = vunpack.c.l.b16 %v4975
  %v6034 = vunpack.c.h.b16 %v4975
  %v6035 = vunpack.c.l.b16 %v4976
  %v6036 = vunpack.c.l.b16 %v4977
  %v6037 = vunpack.c.h.b16 %v4977
  %v6038 = vunpack.c.l.b16 %v4978
  %v6039 = vunpack.c.l.b16 %v4979
  %v6040 = vunpack.c.h.b16 %v4979
  %v6041 = vunpack.c.l.b16 %v4980
  %v6042 = vunpack.c.l.b16 %v4981
  %v6043 = vunpack.c.h.b16 %v4981
  %v6044 = vunpack.c.l.b16 %v4982
  %v6045 = vunpack.c.l.b16 %v4983
  %v6046 = vunpack.c.h.b16 %v4983
  %v6047 = vunpack.c.l.b16 %v4984
  %v6048 = vunpack.c.l.b16 %v4985
  %v6049 = vunpack.c.h.b16 %v4985
  %v6050 = vunpack.c.l.b16 %v4986
  %v6051 = vunpack.c.l.b16 %v4987
  %v6052 = vunpack.c.h.b16 %v4987
  %v6053 = vunpack.c.l.b16 %v4988
  %v6054 = vunpack.c.l.b16 %v4989
  %v6055 = vunpack.c.h.b16 %v4989
  %v6056 = vunpack.c.l.b16 %v4990
  %v6057 = vunpack.c.l.b16 %v4991
  %v6058 = vunpack.c.h.b16 %v4991
  %v6059 = vunpack.c.l.b16 %v4992
  %v6060 = vunpack.c.l.b16 %v4993
  %v6061 = vunpack.c.h.b16 %v4993
  %v6062 = vunpack.c.l.b16 %v4994
  %v6063 = vunpack.c.l.b16 %v4995
  %v6064 = vunpack.c.h.b16 %v4995
  %v6065 = vunpack.c.l.b16 %v4996
  %v6066 = vunpack.c.l.b16 %v4997
  %v6067 = vunpack.c.h.b16 %v4997
  %v6068 = vunpack.c.l.b16 %v4998
  %v6069 = vunpack.c.l.b16 %v4999
  %v6070 = vunpack.c.h.b16 %v4999
  %v6071 = vunpack.c.l.b16 %v5000
  %v6072 = vunpack.c.l.b16 %v5001
  %v6073 = vunpack.c.h.b16 %v5001
  %v6074 = vunpack.c.l.b16 %v5002
  %v6075 = vunpack.c.l.b16 %v5003
  %v6076 = vunpack.c.h.b16 %v5003
  %v6077 = vunpack.c.l.b16 %v5004
  %v6078 = vunpack.c.l.b16 %v5005
  %v6079 = vunpack.c.h.b16 %v5005
  %v6080 = vunpack.c.l.b16 %v5006
  %v6081 = vunpack.c.l.b16 %v5007
  %v6082 = vunpack.c.h.b16 %v5007
  %v6083 = vunpack.c.l.b16 %v5008
  %v6084 = vunpack.c.l.b16 %v5009
  %v6085 = vunpack.c.h.b16 %v5009
  %v6086 = vunpack.c.l.b16 %v5010
  %v6087 = vunpack.c.l.b16 %v5011
  %v6088 = vunpack.c.h.b16 %v5011
  %v6089 = vunpack.c.l.b16 %v5012
  %v6090 = vunpack.c.l.b16 %v5013
  %v6091 = vunpack.c.h.b16 %v5013
  %v6092 = vunpack.c.l.b16 %v5014
  %v6093 = vunpack.c.l.b16 %v5015
  %v6094 = vunpack.c.h.b16 %v5015
  %v6095 = vunpack.c.l.b16 %v5016
  %v6096 = vunpack.c.l.b16 %v5017
  %v6097 = vunpack.c.h.b16 %v5017
  %v6098 = vunpack.c.l.b16 %v5018
  %v6099 = vunpack.c.l.b16 %v5019
  %v6100 = vunpack.c.h.b16 %v5019
  %v6101 = vunpack.c.l.b16 %v5020
  %v6102 = vunpack.c.l.b16 %v5021
  %v6103 = vunpack.c.h.b16 %v5021
  %v6104 = vunpack.c.l.b16 %v5022
  %v6105 = vunpack.c.l.b16 %v5023
  %v6106 = vunpack.c.h.b16 %v5023
  %v6107 = vunpack.c.l.b16 %v5024
  %v6108 = vunpack.c.l.b16 %v5025
  %v6109 = vunpack.c.h.b16 %v5025
  %v6110 = vunpack.c.l.b16 %v5026
  %v6111 = vunpack.c.l.b16 %v5027
  %v6112 = vunpack.c.h.b16 %v5027
  %v6113 = vunpack.c.l.b16 %v5028
  %v6114 = vunpack.c.l.b16 %v5029
  %v6115 = vunpack.c.h.b16 %v5029
  %v6116 = vunpack.c.l.b16 %v5030
  %v6117 = vunpack.c.l.b16 %v5031
  %v6118 = vunpack.c.h.b16 %v5031
  %v6119 = vunpack.c.l.b16 %v5032
  %v6120 = vunpack.c.l.b16 %v5033
  %v6121 = vunpack.c.h.b16 %v5033
  %v6122 = vunpack.c.l.b16 %v5034
  %v6123 = vunpack.c.l.b16 %v5035
  %v6124 = vunpack.c.h.b16 %v5035
  %v6125 = vunpack.c.l.b16 %v5036
  %v6126 = vunpack.c.l.b16 %v5037
  %v6127 = vunpack.c.h.b16 %v5037
  %v6128 = vunpack.c.l.b16 %v5038
  %v6129 = vunpack.c.l.b16 %v5039
  %v6130 = vunpack.c.h.b16 %v5039
  %v6131 = vunpack.c.l.b16 %v5040
  %v6132 = vunpack.c.l.b16 %v5041
  %v6133 = vunpack.c.h.b16 %v5041
  %v6134 = vunpack.c.l.b16 %v5042
  %v6135 = vunpack.c.l.b16 %v5043
  %v6136 = vunpack.c.h.b16 %v5043
  %v6137 = vunpack.c.l.b16 %v5044
  %v6138 = vunpack.c.l.b16 %v5045
  %v6139 = vunpack.c.h.b16 %v5045
  %v6140 = vunpack.c.l.b16 %v5046
  %v6141 = vunpack.c.l.b16 %v5047
  %v6142 = vunpack.c.h.b16 %v5047
  %v6143 = vunpack.c.l.b16 %v5048
  %v6144 = vunpack.c.l.b16 %v5049
  %v6145 = vunpack.c.h.b16 %v5049
  %v6146 = vunpack.c.l.b16 %v5050
  %v6147 = vunpack.c.l.b16 %v5051
  %v6148 = vunpack.c.h.b16 %v5051
  %v6149 = vunpack.c.l.b16 %v5052
  %v6150 = vunpack.c.l.b16 %v5053
  %v6151 = vunpack.c.h.b16 %v5053
  %v6152 = vunpack.c.l.b16 %v5054
  %v6153 = vunpack.c.l.b16 %v5055
  %v6154 = vunpack.c.h.b16 %v5055
  %v6155 = vunpack.c.l.b16 %v5056
  %v6156 = vunpack.c.l.b16 %v5057
  %v6157 = vunpack.c.h.b16 %v5057
  %v6158 = vunpack.c.l.b16 %v5058
  %v6159 = vunpack.c.l.b16 %v5059
  %v6160 = vunpack.c.h.b16 %v5059
  %v6161 = vunpack.c.l.b16 %v5060
  %v6162 = vunpack.c.l.b16 %v5061
  %v6163 = vunpack.c.h.b16 %v5061
  %v6164 = vunpack.c.l.b16 %v5062
  %v6165 = vunpack.c.l.b16 %v5063
  %v6166 = vunpack.c.h.b16 %v5063
  %v6167 = vunpack.c.l.b16 %v5064
  %v6168 = vunpack.c.l.b16 %v5065
  %v6169 = vunpack.c.h.b16 %v5065
  %v6170 = vunpack.c.l.b16 %v5066
  %v6171 = vunpack.c.l.b16 %v5067
  %v6172 = vunpack.c.h.b16 %v5067
  %v6173 = vunpack.c.l.b16 %v5068
  %v6174 = vunpack.c.l.b16 %v5069
  %v6175 = vunpack.c.h.b16 %v5069
  %v6176 = vunpack.c.l.b16 %v5070
  %v6177 = vunpack.c.l.b16 %v5071
  %v6178 = vunpack.c.h.b16 %v5071
  %v6179 = vunpack.c.l.b16 %v5072
  %v6180 = vunpack.c.l.b16 %v5073
  %v6181 = vunpack.c.h.b16 %v5073
  %v6182 = vunpack.c.l.b16 %v5074
  %v6183 = vunpack.c.l.b16 %v5075
  %v6184 = vunpack.c.h.b16 %v5075
  %v6185 = vunpack.c.l.b16 %v5076
  %v6186 = vunpack.c.l.b16 %v5077
  %v6187 = vunpack.c.h.b16 %v5077
  %v6188 = vunpack.c.l.b16 %v5078
  %v6189 = vunpack.c.l.b16 %v5079
  %v6190 = vunpack.c.h.b16 %v5079
  %v6191 = vunpack.c.l.b16 %v5080
  %v6192 = vunpack.c.l.b16 %v5081
  %v6193 = vunpack.c.h.b16 %v5081
  %v6194 = vunpack.c.l.b16 %v5082
  %v6195 = vunpack.c.l.b16 %v5083
  %v6196 = vunpack.c.h.b16 %v5083
  %v6197 = vunpack.c.l.b16 %v5084
  %v6198 = vunpack.c.l.b16 %v5085
  %v6199 = vunpack.c.h.b16 %v5085
  %v6200 = vunpack.c.l.b16 %v5086
  %v6201 = vunpack.c.l.b16 %v5087
  %v6202 = vunpack.c.h.b16 %v5087
  %v6203 = vunpack.c.l.b16 %v5088
  %v6204 = vpack.c.b16 %v6027, %v6024
  %v6205 = vpack.c.b16 %v6028, %v6025
  %v6206 = vpack.c.b16 %v6029, %v6026
  %v6207 = vpack.c.b16 %v6033, %v6030
  %v6208 = vpack.c.b16 %v6034, %v6031
  %v6209 = vpack.c.b16 %v6035, %v6032
  %v6210 = vpack.c.b16 %v6039, %v6036
  %v6211 = vpack.c.b16 %v6040, %v6037
  %v6212 = vpack.c.b16 %v6041, %v6038
  %v6213 = vpack.c.b16 %v6045, %v6042
  %v6214 = vpack.c.b16 %v6046, %v6043
  %v6215 = vpack.c.b16 %v6047, %v6044
  %v6216 = vpack.c.b16 %v6051, %v6048
  %v6217 = vpack.c.b16 %v6052, %v6049
  %v6218 = vpack.c.b16 %v6053, %v6050
  %v6219 = vpack.c.b16 %v6057, %v6054
  %v6220 = vpack.c.b16 %v6058, %v6055
  %v6221 = vpack.c.b16 %v6059, %v6056
  %v6222 = vpack.c.b16 %v6063, %v6060
  %v6223 = vpack.c.b16 %v6064, %v6061
  %v6224 = vpack.c.b16 %v6065, %v6062
  %v6225 = vpack.c.b16 %v6069, %v6066
  %v6226 = vpack.c.b16 %v6070, %v6067
  %v6227 = vpack.c.b16 %v6071, %v6068
  %v6228 = vpack.c.b16 %v6075, %v6072
  %v6229 = vpack.c.b16 %v6076, %v6073
  %v6230 = vpack.c.b16 %v6077, %v6074
  %v6231 = vpack.c.b16 %v6081, %v6078
  %v6232 = vpack.c.b16 %v6082, %v6079
  %v6233 = vpack.c.b16 %v6083, %v6080
  %v6234 = vpack.c.b16 %v6087, %v6084
  %v6235 = vpack.c.b16 %v6088, %v6085
  %v6236 = vpack.c.b16 %v6089, %v6086
  %v6237 = vpack.c.b16 %v6093, %v6090
  %v6238 = vpack.c.b16 %v6094, %v6091
  %v6239 = vpack.c.b16 %v6095, %v6092
  %v6240 = vpack.c.b16 %v6099, %v6096
  %v6241 = vpack.c.b16 %v6100, %v6097
  %v6242 = vpack.c.b16 %v6101, %v6098
  %v6243 = vpack.c.b16 %v6105, %v6102
  %v6244 = vpack.c.b16 %v6106, %v6103
  %v6245 = vpack.c.b16 %v6107, %v6104
  %v6246 = vpack.c.b16 %v6111, %v6108
  %v6247 = vpack.c.b16 %v6112, %v6109
  %v6248 = vpack.c.b16 %v6113, %v6110
  %v6249 = vpack.c.b16 %v6117, %v6114
  %v6250 = vpack.c.b16 %v6118, %v6115
  %v6251 = vpack.c.b16 %v6119, %v6116
  %v6252 = vpack.c.b16 %v6123, %v6120
  %v6253 = vpack.c.b16 %v6124, %v6121
  %v6254 = vpack.c.b16 %v6125, %v6122
  %v6255 = vpack.c.b16 %v6129, %v6126
  %v6256 = vpack.c.b16 %v6130, %v6127
  %v6257 = vpack.c.b16 %v6131, %v6128
  %v6258 = vpack.c.b16 %v6135, %v6132
  %v6259 = vpack.c.b16 %v6136, %v6133
  %v6260 = vpack.c.b16 %v6137, %v6134
  %v6261 = vpack.c.b16 %v6141, %v6138
  %v6262 = vpack.c.b16 %v6142, %v6139
  %v6263 = vpack.c.b16 %v6143, %v6140
  %v6264 = vpack.c.b16 %v6147, %v6144
  %v6265 = vpack.c.b16 %v6148, %v6145
  %v6266 = vpack.c.b16 %v6149, %v6146
  %v6267 = vpack.c.b16 %v6153, %v6150
  %v6268 = vpack.c.b16 %v6154, %v6151
  %v6269 = vpack.c.b16 %v6155, %v6152
  %v6270 = vpack.c.b16 %v6159, %v6156
  %v6271 = vpack.c.b16 %v6160, %v6157
  %v6272 = vpack.c.b16 %v6161, %v6158
  %v6273 = vpack.c.b16 %v6165, %v6162
  %v6274 = vpack.c.b16 %v6166, %v6163
  %v6275 = vpack.c.b16 %v6167, %v6164
  %v6276 = vpack.c.b16 %v6171, %v6168
  %v6277 = vpack.c.b16 %v6172, %v6169
  %v6278 = vpack.c.b16 %v6173, %v6170
  %v6279 = vpack.c.b16 %v6177, %v6174
  %v6280 = vpack.c.b16 %v6178, %v6175
  %v6281 = vpack.c.b16 %v6179, %v6176
  %v6282 = vpack.c.b16 %v6183, %v6180
  %v6283 = vpack.c.b16 %v6184, %v6181
  %v6284 = vpack.c.b16 %v6185, %v6182
  %v6285 = vpack.c.b16 %v6189, %v6186
  %v6286 = vpack.c.b16 %v6190, %v6187
  %v6287 = vpack.c.b16 %v6191, %v6188
  %v6288 = vpack.c.b16 %v6195, %v6192
  %v6289 = vpack.c.b16 %v6196, %v6193
  %v6290 = vpack.c.b16 %v6197, %v6194
  %v6291 = vpack.c.b16 %v6201, %v6198
  %v6292 = vpack.c.b16 %v6202, %v6199
  %v6293 = vpack.c.b16 %v6203, %v6200
  %v6385 = vsel %vm5713, %v5900, 0
  %6387 = vmatprep.subr.bf16.mxu0 %v6226
  %6388 = vmatpush1.bf16.msra.mxu0 %v6225
  %6389 = vmatprep.subr.bf16.mxu0 %v6223
  %6390 = vmatpush1.bf16.msra.mxu0 %v6222
  %6391 = vmatprep.subr.bf16.mxu0 %v6220
  %6392 = vmatpush1.bf16.msra.mxu0 %v6219
  %6393 = vmatprep.subr.bf16.mxu0 %v6217
  %6394 = vmatpush1.bf16.msra.mxu0 %v6216
  %6395 = vmatprep.subr.bf16.mxu0 %v6214
  %6396 = vmatpush1.bf16.msra.mxu0 %v6213
  %6397 = vmatprep.subr.bf16.mxu0 %v6211
  %6398 = vmatpush1.bf16.msra.mxu0 %v6210
  %6399 = vmatprep.subr.bf16.mxu0 %v6208
  %6400 = vmatpush1.bf16.msra.mxu0 %v6207
  %6401 = vmatprep.subr.bf16.mxu0 %v6205
  %6402 = vmatpush1.bf16.msra.mxu0 %v6204
  %6403 = vmatprep.subr.bf16.mxu0 %v6250
  %6404 = vmatpush2.bf16.msra.mxu0 %v6249
  %6405 = vmatprep.subr.bf16.mxu0 %v6247
  %6406 = vmatpush2.bf16.msra.mxu0 %v6246
  %6407 = vmatprep.subr.bf16.mxu0 %v6244
  %6408 = vmatpush2.bf16.msra.mxu0 %v6243
  %6409 = vmatprep.subr.bf16.mxu0 %v6241
  %6410 = vmatpush2.bf16.msra.mxu0 %v6240
  %6411 = vmatprep.subr.bf16.mxu0 %v6238
  %6412 = vmatpush2.bf16.msra.mxu0 %v6237
  %6413 = vmatprep.subr.bf16.mxu0 %v6235
  %6414 = vmatpush2.bf16.msra.mxu0 %v6234
  %6415 = vmatprep.subr.bf16.mxu0 %v6232
  %6416 = vmatpush2.bf16.msra.mxu0 %v6231
  %6417 = vmatprep.subr.bf16.mxu0 %v6229
  %6418 = vmatpush2.bf16.msra.mxu0 %v6228
  %6419 = vmatprep.mubr.bf16.mxu0 %v5898
  %6420 = vmatmul.mubr.bf16.gmra.mxu0 %v5897
  %v6421 = vpop.f32.mrf.mxu0
  %v6422 = vadd.f32 %v5795, %v6421
  %v6423 = vpop.f32.mrf.mxu0
  %v6424 = vadd.f32 %v5797, %v6423
  %v6425 = vpop.f32.mrf.mxu0
  %v6426 = vadd.f32 %v5799, %v6425
  %v6427 = vpop.f32.mrf.mxu0
  %v6428 = vadd.f32 %v5801, %v6427
  %6429 = vdwg.mxu0
  %6430 = vmatprep.subr.bf16.mxu0 %v6274
  %6431 = vmatpush1.bf16.msra.mxu0 %v6273
  %6432 = vmatprep.subr.bf16.mxu0 %v6271
  %6433 = vmatpush1.bf16.msra.mxu0 %v6270
  %6434 = vmatprep.subr.bf16.mxu0 %v6268
  %6435 = vmatpush1.bf16.msra.mxu0 %v6267
  %6436 = vmatprep.subr.bf16.mxu0 %v6265
  %6437 = vmatpush1.bf16.msra.mxu0 %v6264
  %6438 = vmatprep.subr.bf16.mxu0 %v6262
  %6439 = vmatpush1.bf16.msra.mxu0 %v6261
  %6440 = vmatprep.subr.bf16.mxu0 %v6259
  %6441 = vmatpush1.bf16.msra.mxu0 %v6258
  %6442 = vmatprep.subr.bf16.mxu0 %v6256
  %6443 = vmatpush1.bf16.msra.mxu0 %v6255
  %6444 = vmatprep.subr.bf16.mxu0 %v6253
  %6445 = vmatpush1.bf16.msra.mxu0 %v6252
  %6446 = vmatprep.subr.bf16.mxu0 0
  %6447 = vmatpush2.bf16.msra.mxu0 0
  %6448 = vmatprep.subr.bf16.mxu0 0
  %6449 = vmatpush2.bf16.msra.mxu0 0
  %6450 = vmatprep.subr.bf16.mxu0 %v6292
  %6451 = vmatpush2.bf16.msra.mxu0 %v6291
  %6452 = vmatprep.subr.bf16.mxu0 %v6289
  %6453 = vmatpush2.bf16.msra.mxu0 %v6288
  %6454 = vmatprep.subr.bf16.mxu0 %v6286
  %6455 = vmatpush2.bf16.msra.mxu0 %v6285
  %6456 = vmatprep.subr.bf16.mxu0 %v6283
  %6457 = vmatpush2.bf16.msra.mxu0 %v6282
  %6458 = vmatprep.subr.bf16.mxu0 %v6280
  %6459 = vmatpush2.bf16.msra.mxu0 %v6279
  %6460 = vmatprep.subr.bf16.mxu0 %v6277
  %6461 = vmatpush2.bf16.msra.mxu0 %v6276
  %6462 = vmatprep.mubr.bf16.mxu0 %v6385
  %6463 = vmatmul.mubr.bf16.gmra.mxu0 %v5899
  %v6464 = vpop.f32.mrf.mxu0
  %v6465 = vadd.f32 %v6422, %v6464
  %v6466 = vpop.f32.mrf.mxu0
  %v6467 = vadd.f32 %v6424, %v6466
  %v6468 = vpop.f32.mrf.mxu0
  %v6469 = vadd.f32 %v6426, %v6468
  %v6470 = vpop.f32.mrf.mxu0
  %v6471 = vadd.f32 %v6428, %v6470
  %6472 = vdwg.mxu0
  %6473 = vmatprep.subr.bf16.mxu0 0
  %6474 = vmatpush1.bf16.msra.mxu0 %v6227
  %6475 = vmatprep.subr.bf16.mxu0 0
  %6476 = vmatpush1.bf16.msra.mxu0 %v6224
  %6477 = vmatprep.subr.bf16.mxu0 0
  %6478 = vmatpush1.bf16.msra.mxu0 %v6221
  %6479 = vmatprep.subr.bf16.mxu0 0
  %6480 = vmatpush1.bf16.msra.mxu0 %v6218
  %6481 = vmatprep.subr.bf16.mxu0 0
  %6482 = vmatpush1.bf16.msra.mxu0 %v6215
  %6483 = vmatprep.subr.bf16.mxu0 0
  %6484 = vmatpush1.bf16.msra.mxu0 %v6212
  %6485 = vmatprep.subr.bf16.mxu0 0
  %6486 = vmatpush1.bf16.msra.mxu0 %v6209
  %6487 = vmatprep.subr.bf16.mxu0 0
  %6488 = vmatpush1.bf16.msra.mxu0 %v6206
  %6489 = vmatprep.subr.bf16.mxu0 0
  %6490 = vmatpush2.bf16.msra.mxu0 %v6251
  %6491 = vmatprep.subr.bf16.mxu0 0
  %6492 = vmatpush2.bf16.msra.mxu0 %v6248
  %6493 = vmatprep.subr.bf16.mxu0 0
  %6494 = vmatpush2.bf16.msra.mxu0 %v6245
  %6495 = vmatprep.subr.bf16.mxu0 0
  %6496 = vmatpush2.bf16.msra.mxu0 %v6242
  %6497 = vmatprep.subr.bf16.mxu0 0
  %6498 = vmatpush2.bf16.msra.mxu0 %v6239
  %6499 = vmatprep.subr.bf16.mxu0 0
  %6500 = vmatpush2.bf16.msra.mxu0 %v6236
  %6501 = vmatprep.subr.bf16.mxu0 0
  %6502 = vmatpush2.bf16.msra.mxu0 %v6233
  %6503 = vmatprep.subr.bf16.mxu0 0
  %6504 = vmatpush2.bf16.msra.mxu0 %v6230
  %6505 = vmatprep.mubr.bf16.mxu0 %v5898
  %6506 = vmatmul.mubr.bf16.gmra.mxu0 %v5897
  %v6507 = vpop.f32.mrf.mxu0
  %v6508 = vadd.f32 %v5879, %v6507
  %v6509 = vpop.f32.mrf.mxu0
  %v6510 = vpop.f32.mrf.mxu0
  %v6511 = vadd.f32 %v5882, %v6510
  %v6512 = vpop.f32.mrf.mxu0
  %6513 = vdwg.mxu0
  %6514 = vmatprep.subr.bf16.mxu0 0
  %6515 = vmatpush1.bf16.msra.mxu0 %v6275
  %6516 = vmatprep.subr.bf16.mxu0 0
  %6517 = vmatpush1.bf16.msra.mxu0 %v6272
  %6518 = vmatprep.subr.bf16.mxu0 0
  %6519 = vmatpush1.bf16.msra.mxu0 %v6269
  %6520 = vmatprep.subr.bf16.mxu0 0
  %6521 = vmatpush1.bf16.msra.mxu0 %v6266
  %6522 = vmatprep.subr.bf16.mxu0 0
  %6523 = vmatpush1.bf16.msra.mxu0 %v6263
  %6524 = vmatprep.subr.bf16.mxu0 0
  %6525 = vmatpush1.bf16.msra.mxu0 %v6260
  %6526 = vmatprep.subr.bf16.mxu0 0
  %6527 = vmatpush1.bf16.msra.mxu0 %v6257
  %6528 = vmatprep.subr.bf16.mxu0 0
  %6529 = vmatpush1.bf16.msra.mxu0 %v6254
  %6530 = vmatprep.subr.bf16.mxu0 0
  %6531 = vmatpush2.bf16.msra.mxu0 0
  %6532 = vmatprep.subr.bf16.mxu0 0
  %6533 = vmatpush2.bf16.msra.mxu0 0
  %6534 = vmatprep.subr.bf16.mxu0 0
  %6535 = vmatpush2.bf16.msra.mxu0 %v6293
  %6536 = vmatprep.subr.bf16.mxu0 0
  %6537 = vmatpush2.bf16.msra.mxu0 %v6290
  %6538 = vmatprep.subr.bf16.mxu0 0
  %6539 = vmatpush2.bf16.msra.mxu0 %v6287
  %6540 = vmatprep.subr.bf16.mxu0 0
  %6541 = vmatpush2.bf16.msra.mxu0 %v6284
  %6542 = vmatprep.subr.bf16.mxu0 0
  %6543 = vmatpush2.bf16.msra.mxu0 %v6281
  %6544 = vmatprep.subr.bf16.mxu0 0
  %6545 = vmatpush2.bf16.msra.mxu0 %v6278
  %6546 = vmatprep.mubr.bf16.mxu0 %v6385
  %6547 = vmatmul.mubr.bf16.gmra.mxu0 %v5899
  %v6548 = vpop.f32.mrf.mxu0
  %v6549 = vadd.f32 %v6508, %v6548
  %v6550 = vpop.f32.mrf.mxu0
  %v6551 = vpop.f32.mrf.mxu0
  %v6552 = vadd.f32 %v6511, %v6551
  %v6553 = vpop.f32.mrf.mxu0
  %6554 = vdwg.mxu0
  %v6555 = vld [vmem:[#allocation2 + $0x10] sm:$0xff]
  %v6556 = vld [vmem:[#allocation2 + $0x18] sm:$0xff]
  %s6557 = scalar_lea.vmem %s4, 1440
  %v6558 = vld [vmem:[%s6557] sm:$0xff]
  %v6559 = vld [vmem:[%s6557 + $0x8] sm:$0xf]
  %v6560 = vld [vmem:[%s6557 + $0xc] sm:$0xff]
  %v6561 = vld [vmem:[%s6557 + $0x14] sm:$0xf]
  %v6562 = vld [vmem:[%s6557 + $0x18] sm:$0xff]
  %v6563 = vld [vmem:[%s6557 + $0x20] sm:$0xf]
  %v6564 = vld [vmem:[%s6557 + $0x24] sm:$0xff]
  %v6565 = vld [vmem:[%s6557 + $0x2c] sm:$0xf]
  %v6566 = vld [vmem:[%s6557 + $0x30] sm:$0xff]
  %v6567 = vld [vmem:[%s6557 + $0x38] sm:$0xf]
  %v6568 = vld [vmem:[%s6557 + $0x3c] sm:$0xff]
  %v6569 = vld [vmem:[%s6557 + $0x44] sm:$0xf]
  %v6570 = vld [vmem:[%s6557 + $0x48] sm:$0xff]
  %v6571 = vld [vmem:[%s6557 + $0x50] sm:$0xf]
  %v6572 = vld [vmem:[%s6557 + $0x54] sm:$0xff]
  %v6573 = vld [vmem:[%s6557 + $0x5c] sm:$0xf]
  %v6574 = vld [vmem:[%s6557 + $0x60] sm:$0xff]
  %v6575 = vld [vmem:[%s6557 + $0x68] sm:$0xf]
  %v6576 = vld [vmem:[%s6557 + $0x6c] sm:$0xff]
  %v6577 = vld [vmem:[%s6557 + $0x74] sm:$0xf]
  %v6578 = vld [vmem:[%s6557 + $0x78] sm:$0xff]
  %v6579 = vld [vmem:[%s6557 + $0x80] sm:$0xf]
  %v6580 = vld [vmem:[%s6557 + $0x84] sm:$0xff]
  %v6581 = vld [vmem:[%s6557 + $0x8c] sm:$0xf]
  %v6582 = vld [vmem:[%s6557 + $0x90] sm:$0xff]
  %v6583 = vld [vmem:[%s6557 + $0x98] sm:$0xf]
  %v6584 = vld [vmem:[%s6557 + $0x9c] sm:$0xff]
  %v6585 = vld [vmem:[%s6557 + $0xa4] sm:$0xf]
  %v6586 = vld [vmem:[%s6557 + $0xa8] sm:$0xff]
  %v6587 = vld [vmem:[%s6557 + $0xb0] sm:$0xf]
  %v6588 = vld [vmem:[%s6557 + $0xb4] sm:$0xff]
  %v6589 = vld [vmem:[%s6557 + $0xbc] sm:$0xf]
  %v6590 = vld [vmem:[%s6557 + $0xc0] sm:$0xff]
  %v6591 = vld [vmem:[%s6557 + $0xc8] sm:$0xf]
  %v6592 = vld [vmem:[%s6557 + $0xcc] sm:$0xff]
  %v6593 = vld [vmem:[%s6557 + $0xd4] sm:$0xf]
  %v6594 = vld [vmem:[%s6557 + $0xd8] sm:$0xff]
  %v6595 = vld [vmem:[%s6557 + $0xe0] sm:$0xf]
  %v6596 = vld [vmem:[%s6557 + $0xe4] sm:$0xff]
  %v6597 = vld [vmem:[%s6557 + $0xec] sm:$0xf]
  %v6598 = vld [vmem:[%s6557 + $0xf0] sm:$0xff]
  %v6599 = vld [vmem:[%s6557 + $0xf8] sm:$0xf]
  %v6600 = vld [vmem:[%s6557 + $0xfc] sm:$0xff]
  %v6601 = vld [vmem:[%s6557 + $0x104] sm:$0xf]
  %v6602 = vld [vmem:[%s6557 + $0x108] sm:$0xff]
  %v6603 = vld [vmem:[%s6557 + $0x110] sm:$0xf]
  %v6604 = vld [vmem:[%s6557 + $0x114] sm:$0xff]
  %v6605 = vld [vmem:[%s6557 + $0x11c] sm:$0xf]
  %v6606 = vld [vmem:[%s6557 + $0x120] sm:$0xff]
  %v6607 = vld [vmem:[%s6557 + $0x128] sm:$0xf]
  %v6608 = vld [vmem:[%s6557 + $0x12c] sm:$0xff]
  %v6609 = vld [vmem:[%s6557 + $0x134] sm:$0xf]
  %v6610 = vld [vmem:[%s6557 + $0x138] sm:$0xff]
  %v6611 = vld [vmem:[%s6557 + $0x140] sm:$0xf]
  %v6612 = vld [vmem:[%s6557 + $0x144] sm:$0xff]
  %v6613 = vld [vmem:[%s6557 + $0x14c] sm:$0xf]
  %v6614 = vld [vmem:[%s6557 + $0x150] sm:$0xff]
  %v6615 = vld [vmem:[%s6557 + $0x158] sm:$0xf]
  %v6616 = vld [vmem:[%s6557 + $0x15c] sm:$0xff]
  %v6617 = vld [vmem:[%s6557 + $0x164] sm:$0xf]
  %v6618 = vld [vmem:[%s6557 + $0x168] sm:$0xff]
  %v6619 = vld [vmem:[%s6557 + $0x170] sm:$0xf]
  %v6620 = vld [vmem:[%s6557 + $0x174] sm:$0xff]
  %v6621 = vld [vmem:[%s6557 + $0x17c] sm:$0xf]
  %v6622 = vld [vmem:[%s6557 + $0x180] sm:$0xff]
  %v6623 = vld [vmem:[%s6557 + $0x188] sm:$0xf]
  %v6624 = vld [vmem:[%s6557 + $0x18c] sm:$0xff]
  %v6625 = vld [vmem:[%s6557 + $0x194] sm:$0xf]
  %v6626 = vld [vmem:[%s6557 + $0x198] sm:$0xff]
  %v6627 = vld [vmem:[%s6557 + $0x1a0] sm:$0xf]
  %v6628 = vld [vmem:[%s6557 + $0x1a4] sm:$0xff]
  %v6629 = vld [vmem:[%s6557 + $0x1ac] sm:$0xf]
  %v6630 = vld [vmem:[%s6557 + $0x1b0] sm:$0xff]
  %v6631 = vld [vmem:[%s6557 + $0x1b8] sm:$0xf]
  %v6632 = vld [vmem:[%s6557 + $0x1bc] sm:$0xff]
  %v6633 = vld [vmem:[%s6557 + $0x1c4] sm:$0xf]
  %v6634 = vld [vmem:[%s6557 + $0x1c8] sm:$0xff]
  %v6635 = vld [vmem:[%s6557 + $0x1d0] sm:$0xf]
  %v6636 = vld [vmem:[%s6557 + $0x1d4] sm:$0xff]
  %v6637 = vld [vmem:[%s6557 + $0x1dc] sm:$0xf]
  %v6638 = vld [vmem:[%s6557 + $0x1e0] sm:$0xff]
  %v6639 = vld [vmem:[%s6557 + $0x1e8] sm:$0xf]
  %v6640 = vld [vmem:[%s6557 + $0x1ec] sm:$0xff]
  %v6641 = vld [vmem:[%s6557 + $0x1f4] sm:$0xf]
  %v6642 = vld [vmem:[%s6557 + $0x1f8] sm:$0xff]
  %v6643 = vld [vmem:[%s6557 + $0x200] sm:$0xf]
  %v6644 = vld [vmem:[%s6557 + $0x204] sm:$0xff]
  %v6645 = vld [vmem:[%s6557 + $0x20c] sm:$0xf]
  %v6646 = vld [vmem:[%s6557 + $0x210] sm:$0xff]
  %v6647 = vld [vmem:[%s6557 + $0x218] sm:$0xf]
  %v6648 = vld [vmem:[%s6557 + $0x21c] sm:$0xff]
  %v6649 = vld [vmem:[%s6557 + $0x224] sm:$0xf]
  %v6650 = vld [vmem:[%s6557 + $0x228] sm:$0xff]
  %v6651 = vld [vmem:[%s6557 + $0x230] sm:$0xf]
  %v6652 = vld [vmem:[%s6557 + $0x234] sm:$0xff]
  %v6653 = vld [vmem:[%s6557 + $0x23c] sm:$0xf]
  %v6654 = vld [vmem:[%s6557 + $0x240] sm:$0xff]
  %v6655 = vld [vmem:[%s6557 + $0x248] sm:$0xf]
  %v6656 = vld [vmem:[%s6557 + $0x24c] sm:$0xff]
  %v6657 = vld [vmem:[%s6557 + $0x254] sm:$0xf]
  %v6658 = vld [vmem:[%s6557 + $0x258] sm:$0xff]
  %v6659 = vld [vmem:[%s6557 + $0x260] sm:$0xf]
  %v6660 = vld [vmem:[%s6557 + $0x264] sm:$0xff]
  %v6661 = vld [vmem:[%s6557 + $0x26c] sm:$0xf]
  %v6662 = vld [vmem:[%s6557 + $0x270] sm:$0xff]
  %v6663 = vld [vmem:[%s6557 + $0x278] sm:$0xf]
  %v6664 = vld [vmem:[%s6557 + $0x27c] sm:$0xff]
  %v6665 = vld [vmem:[%s6557 + $0x284] sm:$0xf]
  %v6666 = vld [vmem:[%s6557 + $0x288] sm:$0xff]
  %v6667 = vld [vmem:[%s6557 + $0x290] sm:$0xf]
  %v6668 = vld [vmem:[%s6557 + $0x294] sm:$0xff]
  %v6669 = vld [vmem:[%s6557 + $0x29c] sm:$0xf]
  %v6670 = vld [vmem:[%s6557 + $0x2a0] sm:$0xff]
  %v6671 = vld [vmem:[%s6557 + $0x2a8] sm:$0xf]
  %v6672 = vld [vmem:[%s6557 + $0x2ac] sm:$0xff]
  %v6673 = vld [vmem:[%s6557 + $0x2b4] sm:$0xf]
  %v6674 = vld [vmem:[%s6557 + $0x2b8] sm:$0xff]
  %v6675 = vld [vmem:[%s6557 + $0x2c0] sm:$0xf]
  %v6676 = vld [vmem:[%s6557 + $0x2c4] sm:$0xff]
  %v6677 = vld [vmem:[%s6557 + $0x2cc] sm:$0xf]
  %v6680 = vunpack.c.l.b16 %v6555
  %v6681 = vunpack.c.h.b16 %v6555
  %v6682 = vunpack.c.l.b16 %v6556
  %v6683 = vunpack.c.h.b16 %v6556
  %v6684 = vpack.c.b16 %v6680, %v5889
  %v6685 = vpack.c.b16 %v6681, %v5890
  %v6686 = vpack.c.b16 %v6682, %v5891
  %v6687 = vpack.c.b16 %v6683, %v5892
  %v6689 = vshrl.u32 %v6684, 16
  %v6691 = vshll.u32 %v6684, 16
  %v6693 = vrot.slane %v6691, 1
  %v6694 = vor.u32 %v6689, %v6693
  %v6696 = vshrl.u32 %v6685, 16
  %v6698 = vshll.u32 %v6685, 16
  %v6700 = vrot.slane %v6698, 1
  %v6701 = vor.u32 %v6696, %v6700
  %v6703 = vshrl.u32 %v6686, 16
  %v6705 = vshll.u32 %v6686, 16
  %v6707 = vrot.slane %v6705, 1
  %v6708 = vor.u32 %v6703, %v6707
  %v6710 = vshrl.u32 %v6687, 16
  %v6712 = vshll.u32 %v6687, 16
  %v6714 = vrot.slane %v6712, 1
  %v6715 = vor.u32 %v6710, %v6714
  %v6839 = vunpack.c.l.b16 %v6558
  %v6840 = vunpack.c.h.b16 %v6558
  %v6841 = vunpack.c.l.b16 %v6559
  %v6842 = vunpack.c.l.b16 %v6560
  %v6843 = vunpack.c.h.b16 %v6560
  %v6844 = vunpack.c.l.b16 %v6561
  %v6845 = vunpack.c.l.b16 %v6562
  %v6846 = vunpack.c.h.b16 %v6562
  %v6847 = vunpack.c.l.b16 %v6563
  %v6848 = vunpack.c.l.b16 %v6564
  %v6849 = vunpack.c.h.b16 %v6564
  %v6850 = vunpack.c.l.b16 %v6565
  %v6851 = vunpack.c.l.b16 %v6566
  %v6852 = vunpack.c.h.b16 %v6566
  %v6853 = vunpack.c.l.b16 %v6567
  %v6854 = vunpack.c.l.b16 %v6568
  %v6855 = vunpack.c.h.b16 %v6568
  %v6856 = vunpack.c.l.b16 %v6569
  %v6857 = vunpack.c.l.b16 %v6570
  %v6858 = vunpack.c.h.b16 %v6570
  %v6859 = vunpack.c.l.b16 %v6571
  %v6860 = vunpack.c.l.b16 %v6572
  %v6861 = vunpack.c.h.b16 %v6572
  %v6862 = vunpack.c.l.b16 %v6573
  %v6863 = vunpack.c.l.b16 %v6574
  %v6864 = vunpack.c.h.b16 %v6574
  %v6865 = vunpack.c.l.b16 %v6575
  %v6866 = vunpack.c.l.b16 %v6576
  %v6867 = vunpack.c.h.b16 %v6576
  %v6868 = vunpack.c.l.b16 %v6577
  %v6869 = vunpack.c.l.b16 %v6578
  %v6870 = vunpack.c.h.b16 %v6578
  %v6871 = vunpack.c.l.b16 %v6579
  %v6872 = vunpack.c.l.b16 %v6580
  %v6873 = vunpack.c.h.b16 %v6580
  %v6874 = vunpack.c.l.b16 %v6581
  %v6875 = vunpack.c.l.b16 %v6582
  %v6876 = vunpack.c.h.b16 %v6582
  %v6877 = vunpack.c.l.b16 %v6583
  %v6878 = vunpack.c.l.b16 %v6584
  %v6879 = vunpack.c.h.b16 %v6584
  %v6880 = vunpack.c.l.b16 %v6585
  %v6881 = vunpack.c.l.b16 %v6586
  %v6882 = vunpack.c.h.b16 %v6586
  %v6883 = vunpack.c.l.b16 %v6587
  %v6884 = vunpack.c.l.b16 %v6588
  %v6885 = vunpack.c.h.b16 %v6588
  %v6886 = vunpack.c.l.b16 %v6589
  %v6887 = vunpack.c.l.b16 %v6590
  %v6888 = vunpack.c.h.b16 %v6590
  %v6889 = vunpack.c.l.b16 %v6591
  %v6890 = vunpack.c.l.b16 %v6592
  %v6891 = vunpack.c.h.b16 %v6592
  %v6892 = vunpack.c.l.b16 %v6593
  %v6893 = vunpack.c.l.b16 %v6594
  %v6894 = vunpack.c.h.b16 %v6594
  %v6895 = vunpack.c.l.b16 %v6595
  %v6896 = vunpack.c.l.b16 %v6596
  %v6897 = vunpack.c.h.b16 %v6596
  %v6898 = vunpack.c.l.b16 %v6597
  %v6899 = vunpack.c.l.b16 %v6598
  %v6900 = vunpack.c.h.b16 %v6598
  %v6901 = vunpack.c.l.b16 %v6599
  %v6902 = vunpack.c.l.b16 %v6600
  %v6903 = vunpack.c.h.b16 %v6600
  %v6904 = vunpack.c.l.b16 %v6601
  %v6905 = vunpack.c.l.b16 %v6602
  %v6906 = vunpack.c.h.b16 %v6602
  %v6907 = vunpack.c.l.b16 %v6603
  %v6908 = vunpack.c.l.b16 %v6604
  %v6909 = vunpack.c.h.b16 %v6604
  %v6910 = vunpack.c.l.b16 %v6605
  %v6911 = vunpack.c.l.b16 %v6606
  %v6912 = vunpack.c.h.b16 %v6606
  %v6913 = vunpack.c.l.b16 %v6607
  %v6914 = vunpack.c.l.b16 %v6608
  %v6915 = vunpack.c.h.b16 %v6608
  %v6916 = vunpack.c.l.b16 %v6609
  %v6917 = vunpack.c.l.b16 %v6610
  %v6918 = vunpack.c.h.b16 %v6610
  %v6919 = vunpack.c.l.b16 %v6611
  %v6920 = vunpack.c.l.b16 %v6612
  %v6921 = vunpack.c.h.b16 %v6612
  %v6922 = vunpack.c.l.b16 %v6613
  %v6923 = vunpack.c.l.b16 %v6614
  %v6924 = vunpack.c.h.b16 %v6614
  %v6925 = vunpack.c.l.b16 %v6615
  %v6926 = vunpack.c.l.b16 %v6616
  %v6927 = vunpack.c.h.b16 %v6616
  %v6928 = vunpack.c.l.b16 %v6617
  %v6929 = vunpack.c.l.b16 %v6618
  %v6930 = vunpack.c.h.b16 %v6618
  %v6931 = vunpack.c.l.b16 %v6619
  %v6932 = vunpack.c.l.b16 %v6620
  %v6933 = vunpack.c.h.b16 %v6620
  %v6934 = vunpack.c.l.b16 %v6621
  %v6935 = vunpack.c.l.b16 %v6622
  %v6936 = vunpack.c.h.b16 %v6622
  %v6937 = vunpack.c.l.b16 %v6623
  %v6938 = vunpack.c.l.b16 %v6624
  %v6939 = vunpack.c.h.b16 %v6624
  %v6940 = vunpack.c.l.b16 %v6625
  %v6941 = vunpack.c.l.b16 %v6626
  %v6942 = vunpack.c.h.b16 %v6626
  %v6943 = vunpack.c.l.b16 %v6627
  %v6944 = vunpack.c.l.b16 %v6628
  %v6945 = vunpack.c.h.b16 %v6628
  %v6946 = vunpack.c.l.b16 %v6629
  %v6947 = vunpack.c.l.b16 %v6630
  %v6948 = vunpack.c.h.b16 %v6630
  %v6949 = vunpack.c.l.b16 %v6631
  %v6950 = vunpack.c.l.b16 %v6632
  %v6951 = vunpack.c.h.b16 %v6632
  %v6952 = vunpack.c.l.b16 %v6633
  %v6953 = vunpack.c.l.b16 %v6634
  %v6954 = vunpack.c.h.b16 %v6634
  %v6955 = vunpack.c.l.b16 %v6635
  %v6956 = vunpack.c.l.b16 %v6636
  %v6957 = vunpack.c.h.b16 %v6636
  %v6958 = vunpack.c.l.b16 %v6637
  %v6959 = vunpack.c.l.b16 %v6638
  %v6960 = vunpack.c.h.b16 %v6638
  %v6961 = vunpack.c.l.b16 %v6639
  %v6962 = vunpack.c.l.b16 %v6640
  %v6963 = vunpack.c.h.b16 %v6640
  %v6964 = vunpack.c.l.b16 %v6641
  %v6965 = vunpack.c.l.b16 %v6642
  %v6966 = vunpack.c.h.b16 %v6642
  %v6967 = vunpack.c.l.b16 %v6643
  %v6968 = vunpack.c.l.b16 %v6644
  %v6969 = vunpack.c.h.b16 %v6644
  %v6970 = vunpack.c.l.b16 %v6645
  %v6971 = vunpack.c.l.b16 %v6646
  %v6972 = vunpack.c.h.b16 %v6646
  %v6973 = vunpack.c.l.b16 %v6647
  %v6974 = vunpack.c.l.b16 %v6648
  %v6975 = vunpack.c.h.b16 %v6648
  %v6976 = vunpack.c.l.b16 %v6649
  %v6977 = vunpack.c.l.b16 %v6650
  %v6978 = vunpack.c.h.b16 %v6650
  %v6979 = vunpack.c.l.b16 %v6651
  %v6980 = vunpack.c.l.b16 %v6652
  %v6981 = vunpack.c.h.b16 %v6652
  %v6982 = vunpack.c.l.b16 %v6653
  %v6983 = vunpack.c.l.b16 %v6654
  %v6984 = vunpack.c.h.b16 %v6654
  %v6985 = vunpack.c.l.b16 %v6655
  %v6986 = vunpack.c.l.b16 %v6656
  %v6987 = vunpack.c.h.b16 %v6656
  %v6988 = vunpack.c.l.b16 %v6657
  %v6989 = vunpack.c.l.b16 %v6658
  %v6990 = vunpack.c.h.b16 %v6658
  %v6991 = vunpack.c.l.b16 %v6659
  %v6992 = vunpack.c.l.b16 %v6660
  %v6993 = vunpack.c.h.b16 %v6660
  %v6994 = vunpack.c.l.b16 %v6661
  %v6995 = vunpack.c.l.b16 %v6662
  %v6996 = vunpack.c.h.b16 %v6662
  %v6997 = vunpack.c.l.b16 %v6663
  %v6998 = vunpack.c.l.b16 %v6664
  %v6999 = vunpack.c.h.b16 %v6664
  %v7000 = vunpack.c.l.b16 %v6665
  %v7001 = vunpack.c.l.b16 %v6666
  %v7002 = vunpack.c.h.b16 %v6666
  %v7003 = vunpack.c.l.b16 %v6667
  %v7004 = vunpack.c.l.b16 %v6668
  %v7005 = vunpack.c.h.b16 %v6668
  %v7006 = vunpack.c.l.b16 %v6669
  %v7007 = vunpack.c.l.b16 %v6670
  %v7008 = vunpack.c.h.b16 %v6670
  %v7009 = vunpack.c.l.b16 %v6671
  %v7010 = vunpack.c.l.b16 %v6672
  %v7011 = vunpack.c.h.b16 %v6672
  %v7012 = vunpack.c.l.b16 %v6673
  %v7013 = vunpack.c.l.b16 %v6674
  %v7014 = vunpack.c.h.b16 %v6674
  %v7015 = vunpack.c.l.b16 %v6675
  %v7016 = vunpack.c.l.b16 %v6676
  %v7017 = vunpack.c.h.b16 %v6676
  %v7018 = vunpack.c.l.b16 %v6677
  %v7019 = vpack.c.b16 %v6842, %v6839
  %v7020 = vpack.c.b16 %v6843, %v6840
  %v7021 = vpack.c.b16 %v6844, %v6841
  %v7022 = vpack.c.b16 %v6848, %v6845
  %v7023 = vpack.c.b16 %v6849, %v6846
  %v7024 = vpack.c.b16 %v6850, %v6847
  %v7025 = vpack.c.b16 %v6854, %v6851
  %v7026 = vpack.c.b16 %v6855, %v6852
  %v7027 = vpack.c.b16 %v6856, %v6853
  %v7028 = vpack.c.b16 %v6860, %v6857
  %v7029 = vpack.c.b16 %v6861, %v6858
  %v7030 = vpack.c.b16 %v6862, %v6859
  %v7031 = vpack.c.b16 %v6866, %v6863
  %v7032 = vpack.c.b16 %v6867, %v6864
  %v7033 = vpack.c.b16 %v6868, %v6865
  %v7034 = vpack.c.b16 %v6872, %v6869
  %v7035 = vpack.c.b16 %v6873, %v6870
  %v7036 = vpack.c.b16 %v6874, %v6871
  %v7037 = vpack.c.b16 %v6878, %v6875
  %v7038 = vpack.c.b16 %v6879, %v6876
  %v7039 = vpack.c.b16 %v6880, %v6877
  %v7040 = vpack.c.b16 %v6884, %v6881
  %v7041 = vpack.c.b16 %v6885, %v6882
  %v7042 = vpack.c.b16 %v6886, %v6883
  %v7043 = vpack.c.b16 %v6890, %v6887
  %v7044 = vpack.c.b16 %v6891, %v6888
  %v7045 = vpack.c.b16 %v6892, %v6889
  %v7046 = vpack.c.b16 %v6896, %v6893
  %v7047 = vpack.c.b16 %v6897, %v6894
  %v7048 = vpack.c.b16 %v6898, %v6895
  %v7049 = vpack.c.b16 %v6902, %v6899
  %v7050 = vpack.c.b16 %v6903, %v6900
  %v7051 = vpack.c.b16 %v6904, %v6901
  %v7052 = vpack.c.b16 %v6908, %v6905
  %v7053 = vpack.c.b16 %v6909, %v6906
  %v7054 = vpack.c.b16 %v6910, %v6907
  %v7055 = vpack.c.b16 %v6914, %v6911
  %v7056 = vpack.c.b16 %v6915, %v6912
  %v7057 = vpack.c.b16 %v6916, %v6913
  %v7058 = vpack.c.b16 %v6920, %v6917
  %v7059 = vpack.c.b16 %v6921, %v6918
  %v7060 = vpack.c.b16 %v6922, %v6919
  %v7061 = vpack.c.b16 %v6926, %v6923
  %v7062 = vpack.c.b16 %v6927, %v6924
  %v7063 = vpack.c.b16 %v6928, %v6925
  %v7064 = vpack.c.b16 %v6932, %v6929
  %v7065 = vpack.c.b16 %v6933, %v6930
  %v7066 = vpack.c.b16 %v6934, %v6931
  %v7067 = vpack.c.b16 %v6938, %v6935
  %v7068 = vpack.c.b16 %v6939, %v6936
  %v7069 = vpack.c.b16 %v6940, %v6937
  %v7070 = vpack.c.b16 %v6944, %v6941
  %v7071 = vpack.c.b16 %v6945, %v6942
  %v7072 = vpack.c.b16 %v6946, %v6943
  %v7073 = vpack.c.b16 %v6950, %v6947
  %v7074 = vpack.c.b16 %v6951, %v6948
  %v7075 = vpack.c.b16 %v6952, %v6949
  %v7076 = vpack.c.b16 %v6956, %v6953
  %v7077 = vpack.c.b16 %v6957, %v6954
  %v7078 = vpack.c.b16 %v6958, %v6955
  %v7079 = vpack.c.b16 %v6962, %v6959
  %v7080 = vpack.c.b16 %v6963, %v6960
  %v7081 = vpack.c.b16 %v6964, %v6961
  %v7082 = vpack.c.b16 %v6968, %v6965
  %v7083 = vpack.c.b16 %v6969, %v6966
  %v7084 = vpack.c.b16 %v6970, %v6967
  %v7085 = vpack.c.b16 %v6974, %v6971
  %v7086 = vpack.c.b16 %v6975, %v6972
  %v7087 = vpack.c.b16 %v6976, %v6973
  %v7088 = vpack.c.b16 %v6980, %v6977
  %v7089 = vpack.c.b16 %v6981, %v6978
  %v7090 = vpack.c.b16 %v6982, %v6979
  %v7091 = vpack.c.b16 %v6986, %v6983
  %v7092 = vpack.c.b16 %v6987, %v6984
  %v7093 = vpack.c.b16 %v6988, %v6985
  %v7094 = vpack.c.b16 %v6992, %v6989
  %v7095 = vpack.c.b16 %v6993, %v6990
  %v7096 = vpack.c.b16 %v6994, %v6991
  %v7097 = vpack.c.b16 %v6998, %v6995
  %v7098 = vpack.c.b16 %v6999, %v6996
  %v7099 = vpack.c.b16 %v7000, %v6997
  %v7100 = vpack.c.b16 %v7004, %v7001
  %v7101 = vpack.c.b16 %v7005, %v7002
  %v7102 = vpack.c.b16 %v7006, %v7003
  %v7103 = vpack.c.b16 %v7010, %v7007
  %v7104 = vpack.c.b16 %v7011, %v7008
  %v7105 = vpack.c.b16 %v7012, %v7009
  %v7106 = vpack.c.b16 %v7016, %v7013
  %v7107 = vpack.c.b16 %v7017, %v7014
  %v7108 = vpack.c.b16 %v7018, %v7015
  %v7200 = vsel %vm5713, %v6715, 0
  %7202 = vmatprep.subr.bf16.mxu0 %v7041
  %7203 = vmatpush1.bf16.msra.mxu0 %v7040
  %7204 = vmatprep.subr.bf16.mxu0 %v7038
  %7205 = vmatpush1.bf16.msra.mxu0 %v7037
  %7206 = vmatprep.subr.bf16.mxu0 %v7035
  %7207 = vmatpush1.bf16.msra.mxu0 %v7034
  %7208 = vmatprep.subr.bf16.mxu0 %v7032
  %7209 = vmatpush1.bf16.msra.mxu0 %v7031
  %7210 = vmatprep.subr.bf16.mxu0 %v7029
  %7211 = vmatpush1.bf16.msra.mxu0 %v7028
  %7212 = vmatprep.subr.bf16.mxu0 %v7026
  %7213 = vmatpush1.bf16.msra.mxu0 %v7025
  %7214 = vmatprep.subr.bf16.mxu0 %v7023
  %7215 = vmatpush1.bf16.msra.mxu0 %v7022
  %7216 = vmatprep.subr.bf16.mxu0 %v7020
  %7217 = vmatpush1.bf16.msra.mxu0 %v7019
  %7218 = vmatprep.subr.bf16.mxu0 %v7065
  %7219 = vmatpush2.bf16.msra.mxu0 %v7064
  %7220 = vmatprep.subr.bf16.mxu0 %v7062
  %7221 = vmatpush2.bf16.msra.mxu0 %v7061
  %7222 = vmatprep.subr.bf16.mxu0 %v7059
  %7223 = vmatpush2.bf16.msra.mxu0 %v7058
  %7224 = vmatprep.subr.bf16.mxu0 %v7056
  %7225 = vmatpush2.bf16.msra.mxu0 %v7055
  %7226 = vmatprep.subr.bf16.mxu0 %v7053
  %7227 = vmatpush2.bf16.msra.mxu0 %v7052
  %7228 = vmatprep.subr.bf16.mxu0 %v7050
  %7229 = vmatpush2.bf16.msra.mxu0 %v7049
  %7230 = vmatprep.subr.bf16.mxu0 %v7047
  %7231 = vmatpush2.bf16.msra.mxu0 %v7046
  %7232 = vmatprep.subr.bf16.mxu0 %v7044
  %7233 = vmatpush2.bf16.msra.mxu0 %v7043
  %7234 = vmatprep.mubr.bf16.mxu0 %v6701
  %7235 = vmatmul.mubr.bf16.gmra.mxu0 %v6694
  %v7236 = vpop.f32.mrf.mxu0
  %v7237 = vadd.f32 0.0, %v7236
  %v7238 = vpop.f32.mrf.mxu0
  %v7239 = vadd.f32 0.0, %v7238
  %v7240 = vpop.f32.mrf.mxu0
  %v7241 = vadd.f32 0.0, %v7240
  %v7242 = vpop.f32.mrf.mxu0
  %v7243 = vadd.f32 0.0, %v7242
  %7244 = vdwg.mxu0
  %7245 = vmatprep.subr.bf16.mxu0 %v7089
  %7246 = vmatpush1.bf16.msra.mxu0 %v7088
  %7247 = vmatprep.subr.bf16.mxu0 %v7086
  %7248 = vmatpush1.bf16.msra.mxu0 %v7085
  %7249 = vmatprep.subr.bf16.mxu0 %v7083
  %7250 = vmatpush1.bf16.msra.mxu0 %v7082
  %7251 = vmatprep.subr.bf16.mxu0 %v7080
  %7252 = vmatpush1.bf16.msra.mxu0 %v7079
  %7253 = vmatprep.subr.bf16.mxu0 %v7077
  %7254 = vmatpush1.bf16.msra.mxu0 %v7076
  %7255 = vmatprep.subr.bf16.mxu0 %v7074
  %7256 = vmatpush1.bf16.msra.mxu0 %v7073
  %7257 = vmatprep.subr.bf16.mxu0 %v7071
  %7258 = vmatpush1.bf16.msra.mxu0 %v7070
  %7259 = vmatprep.subr.bf16.mxu0 %v7068
  %7260 = vmatpush1.bf16.msra.mxu0 %v7067
  %7261 = vmatprep.subr.bf16.mxu0 0
  %7262 = vmatpush2.bf16.msra.mxu0 0
  %7263 = vmatprep.subr.bf16.mxu0 0
  %7264 = vmatpush2.bf16.msra.mxu0 0
  %7265 = vmatprep.subr.bf16.mxu0 %v7107
  %7266 = vmatpush2.bf16.msra.mxu0 %v7106
  %7267 = vmatprep.subr.bf16.mxu0 %v7104
  %7268 = vmatpush2.bf16.msra.mxu0 %v7103
  %7269 = vmatprep.subr.bf16.mxu0 %v7101
  %7270 = vmatpush2.bf16.msra.mxu0 %v7100
  %7271 = vmatprep.subr.bf16.mxu0 %v7098
  %7272 = vmatpush2.bf16.msra.mxu0 %v7097
  %7273 = vmatprep.subr.bf16.mxu0 %v7095
  %7274 = vmatpush2.bf16.msra.mxu0 %v7094
  %7275 = vmatprep.subr.bf16.mxu0 %v7092
  %7276 = vmatpush2.bf16.msra.mxu0 %v7091
  %7277 = vmatprep.mubr.bf16.mxu0 %v7200
  %7278 = vmatmul.mubr.bf16.gmra.mxu0 %v6708
  %v7279 = vpop.f32.mrf.mxu0
  %v7280 = vadd.f32 %v7237, %v7279
  %v7281 = vpop.f32.mrf.mxu0
  %v7282 = vadd.f32 %v7239, %v7281
  %v7283 = vpop.f32.mrf.mxu0
  %v7284 = vadd.f32 %v7241, %v7283
  %v7285 = vpop.f32.mrf.mxu0
  %v7286 = vadd.f32 %v7243, %v7285
  %7287 = vdwg.mxu0
  %7288 = vmatprep.subr.bf16.mxu0 0
  %7289 = vmatpush1.bf16.msra.mxu0 %v7042
  %7290 = vmatprep.subr.bf16.mxu0 0
  %7291 = vmatpush1.bf16.msra.mxu0 %v7039
  %7292 = vmatprep.subr.bf16.mxu0 0
  %7293 = vmatpush1.bf16.msra.mxu0 %v7036
  %7294 = vmatprep.subr.bf16.mxu0 0
  %7295 = vmatpush1.bf16.msra.mxu0 %v7033
  %7296 = vmatprep.subr.bf16.mxu0 0
  %7297 = vmatpush1.bf16.msra.mxu0 %v7030
  %7298 = vmatprep.subr.bf16.mxu0 0
  %7299 = vmatpush1.bf16.msra.mxu0 %v7027
  %7300 = vmatprep.subr.bf16.mxu0 0
  %7301 = vmatpush1.bf16.msra.mxu0 %v7024
  %7302 = vmatprep.subr.bf16.mxu0 0
  %7303 = vmatpush1.bf16.msra.mxu0 %v7021
  %7304 = vmatprep.subr.bf16.mxu0 0
  %7305 = vmatpush2.bf16.msra.mxu0 %v7066
  %7306 = vmatprep.subr.bf16.mxu0 0
  %7307 = vmatpush2.bf16.msra.mxu0 %v7063
  %7308 = vmatprep.subr.bf16.mxu0 0
  %7309 = vmatpush2.bf16.msra.mxu0 %v7060
  %7310 = vmatprep.subr.bf16.mxu0 0
  %7311 = vmatpush2.bf16.msra.mxu0 %v7057
  %7312 = vmatprep.subr.bf16.mxu0 0
  %7313 = vmatpush2.bf16.msra.mxu0 %v7054
  %7314 = vmatprep.subr.bf16.mxu0 0
  %7315 = vmatpush2.bf16.msra.mxu0 %v7051
  %7316 = vmatprep.subr.bf16.mxu0 0
  %7317 = vmatpush2.bf16.msra.mxu0 %v7048
  %7318 = vmatprep.subr.bf16.mxu0 0
  %7319 = vmatpush2.bf16.msra.mxu0 %v7045
  %7320 = vmatprep.mubr.bf16.mxu0 %v6701
  %7321 = vmatmul.mubr.bf16.gmra.mxu0 %v6694
  %v7322 = vpop.f32.mrf.mxu0
  %v7323 = vadd.f32 0.0, %v7322
  %v7324 = vpop.f32.mrf.mxu0
  %v7325 = vpop.f32.mrf.mxu0
  %v7326 = vadd.f32 0.0, %v7325
  %v7327 = vpop.f32.mrf.mxu0
  %7328 = vdwg.mxu0
  %7329 = vmatprep.subr.bf16.mxu0 0
  %7330 = vmatpush1.bf16.msra.mxu0 %v7090
  %7331 = vmatprep.subr.bf16.mxu0 0
  %7332 = vmatpush1.bf16.msra.mxu0 %v7087
  %7333 = vmatprep.subr.bf16.mxu0 0
  %7334 = vmatpush1.bf16.msra.mxu0 %v7084
  %7335 = vmatprep.subr.bf16.mxu0 0
  %7336 = vmatpush1.bf16.msra.mxu0 %v7081
  %7337 = vmatprep.subr.bf16.mxu0 0
  %7338 = vmatpush1.bf16.msra.mxu0 %v7078
  %7339 = vmatprep.subr.bf16.mxu0 0
  %7340 = vmatpush1.bf16.msra.mxu0 %v7075
  %7341 = vmatprep.subr.bf16.mxu0 0
  %7342 = vmatpush1.bf16.msra.mxu0 %v7072
  %7343 = vmatprep.subr.bf16.mxu0 0
  %7344 = vmatpush1.bf16.msra.mxu0 %v7069
  %7345 = vmatprep.subr.bf16.mxu0 0
  %7346 = vmatpush2.bf16.msra.mxu0 0
  %7347 = vmatprep.subr.bf16.mxu0 0
  %7348 = vmatpush2.bf16.msra.mxu0 0
  %7349 = vmatprep.subr.bf16.mxu0 0
  %7350 = vmatpush2.bf16.msra.mxu0 %v7108
  %7351 = vmatprep.subr.bf16.mxu0 0
  %7352 = vmatpush2.bf16.msra.mxu0 %v7105
  %7353 = vmatprep.subr.bf16.mxu0 0
  %7354 = vmatpush2.bf16.msra.mxu0 %v7102
  %7355 = vmatprep.subr.bf16.mxu0 0
  %7356 = vmatpush2.bf16.msra.mxu0 %v7099
  %7357 = vmatprep.subr.bf16.mxu0 0
  %7358 = vmatpush2.bf16.msra.mxu0 %v7096
  %7359 = vmatprep.subr.bf16.mxu0 0
  %7360 = vmatpush2.bf16.msra.mxu0 %v7093
  %7361 = vmatprep.mubr.bf16.mxu0 %v7200
  %7362 = vmatmul.mubr.bf16.gmra.mxu0 %v6708
  %v7363 = vpop.f32.mrf.mxu0
  %v7364 = vadd.f32 %v7323, %v7363
  %v7365 = vpop.f32.mrf.mxu0
  %v7366 = vpop.f32.mrf.mxu0
  %v7367 = vadd.f32 %v7326, %v7366
  %v7368 = vpop.f32.mrf.mxu0
  %7369 = vdwg.mxu0
  %v7370 = vadd.f32 %v6465, %v7280
  %v7371 = vadd.f32 %v6467, %v7282
  %v7372 = vadd.f32 %v6549, %v7364
  %v7373 = vadd.f32 %v6469, %v7284
  %v7374 = vadd.f32 %v6471, %v7286
  %v7375 = vadd.f32 %v6552, %v7367
  %v7376 = vld [vmem:[#allocation2 + $0x30] sm:$0xff]
  %v7377 = vld [vmem:[#allocation2 + $0x38] sm:$0xff]
  %s7378 = scalar_lea.vmem %s4, 2160
  %v7379 = vld [vmem:[%s7378] sm:$0xff]
  %v7380 = vld [vmem:[%s7378 + $0x8] sm:$0xf]
  %v7381 = vld [vmem:[%s7378 + $0xc] sm:$0xff]
  %v7382 = vld [vmem:[%s7378 + $0x14] sm:$0xf]
  %v7383 = vld [vmem:[%s7378 + $0x18] sm:$0xff]
  %v7384 = vld [vmem:[%s7378 + $0x20] sm:$0xf]
  %v7385 = vld [vmem:[%s7378 + $0x24] sm:$0xff]
  %v7386 = vld [vmem:[%s7378 + $0x2c] sm:$0xf]
  %v7387 = vld [vmem:[%s7378 + $0x30] sm:$0xff]
  %v7388 = vld [vmem:[%s7378 + $0x38] sm:$0xf]
  %v7389 = vld [vmem:[%s7378 + $0x3c] sm:$0xff]
  %v7390 = vld [vmem:[%s7378 + $0x44] sm:$0xf]
  %v7391 = vld [vmem:[%s7378 + $0x48] sm:$0xff]
  %v7392 = vld [vmem:[%s7378 + $0x50] sm:$0xf]
  %v7393 = vld [vmem:[%s7378 + $0x54] sm:$0xff]
  %v7394 = vld [vmem:[%s7378 + $0x5c] sm:$0xf]
  %v7395 = vld [vmem:[%s7378 + $0x60] sm:$0xff]
  %v7396 = vld [vmem:[%s7378 + $0x68] sm:$0xf]
  %v7397 = vld [vmem:[%s7378 + $0x6c] sm:$0xff]
  %v7398 = vld [vmem:[%s7378 + $0x74] sm:$0xf]
  %v7399 = vld [vmem:[%s7378 + $0x78] sm:$0xff]
  %v7400 = vld [vmem:[%s7378 + $0x80] sm:$0xf]
  %v7401 = vld [vmem:[%s7378 + $0x84] sm:$0xff]
  %v7402 = vld [vmem:[%s7378 + $0x8c] sm:$0xf]
  %v7403 = vld [vmem:[%s7378 + $0x90] sm:$0xff]
  %v7404 = vld [vmem:[%s7378 + $0x98] sm:$0xf]
  %v7405 = vld [vmem:[%s7378 + $0x9c] sm:$0xff]
  %v7406 = vld [vmem:[%s7378 + $0xa4] sm:$0xf]
  %v7407 = vld [vmem:[%s7378 + $0xa8] sm:$0xff]
  %v7408 = vld [vmem:[%s7378 + $0xb0] sm:$0xf]
  %v7409 = vld [vmem:[%s7378 + $0xb4] sm:$0xff]
  %v7410 = vld [vmem:[%s7378 + $0xbc] sm:$0xf]
  %v7411 = vld [vmem:[%s7378 + $0xc0] sm:$0xff]
  %v7412 = vld [vmem:[%s7378 + $0xc8] sm:$0xf]
  %v7413 = vld [vmem:[%s7378 + $0xcc] sm:$0xff]
  %v7414 = vld [vmem:[%s7378 + $0xd4] sm:$0xf]
  %v7415 = vld [vmem:[%s7378 + $0xd8] sm:$0xff]
  %v7416 = vld [vmem:[%s7378 + $0xe0] sm:$0xf]
  %v7417 = vld [vmem:[%s7378 + $0xe4] sm:$0xff]
  %v7418 = vld [vmem:[%s7378 + $0xec] sm:$0xf]
  %v7419 = vld [vmem:[%s7378 + $0xf0] sm:$0xff]
  %v7420 = vld [vmem:[%s7378 + $0xf8] sm:$0xf]
  %v7421 = vld [vmem:[%s7378 + $0xfc] sm:$0xff]
  %v7422 = vld [vmem:[%s7378 + $0x104] sm:$0xf]
  %v7423 = vld [vmem:[%s7378 + $0x108] sm:$0xff]
  %v7424 = vld [vmem:[%s7378 + $0x110] sm:$0xf]
  %v7425 = vld [vmem:[%s7378 + $0x114] sm:$0xff]
  %v7426 = vld [vmem:[%s7378 + $0x11c] sm:$0xf]
  %v7427 = vld [vmem:[%s7378 + $0x120] sm:$0xff]
  %v7428 = vld [vmem:[%s7378 + $0x128] sm:$0xf]
  %v7429 = vld [vmem:[%s7378 + $0x12c] sm:$0xff]
  %v7430 = vld [vmem:[%s7378 + $0x134] sm:$0xf]
  %v7431 = vld [vmem:[%s7378 + $0x138] sm:$0xff]
  %v7432 = vld [vmem:[%s7378 + $0x140] sm:$0xf]
  %v7433 = vld [vmem:[%s7378 + $0x144] sm:$0xff]
  %v7434 = vld [vmem:[%s7378 + $0x14c] sm:$0xf]
  %v7435 = vld [vmem:[%s7378 + $0x150] sm:$0xff]
  %v7436 = vld [vmem:[%s7378 + $0x158] sm:$0xf]
  %v7437 = vld [vmem:[%s7378 + $0x15c] sm:$0xff]
  %v7438 = vld [vmem:[%s7378 + $0x164] sm:$0xf]
  %v7439 = vld [vmem:[%s7378 + $0x168] sm:$0xff]
  %v7440 = vld [vmem:[%s7378 + $0x170] sm:$0xf]
  %v7441 = vld [vmem:[%s7378 + $0x174] sm:$0xff]
  %v7442 = vld [vmem:[%s7378 + $0x17c] sm:$0xf]
  %v7443 = vld [vmem:[%s7378 + $0x180] sm:$0xff]
  %v7444 = vld [vmem:[%s7378 + $0x188] sm:$0xf]
  %v7445 = vld [vmem:[%s7378 + $0x18c] sm:$0xff]
  %v7446 = vld [vmem:[%s7378 + $0x194] sm:$0xf]
  %v7447 = vld [vmem:[%s7378 + $0x198] sm:$0xff]
  %v7448 = vld [vmem:[%s7378 + $0x1a0] sm:$0xf]
  %v7449 = vld [vmem:[%s7378 + $0x1a4] sm:$0xff]
  %v7450 = vld [vmem:[%s7378 + $0x1ac] sm:$0xf]
  %v7451 = vld [vmem:[%s7378 + $0x1b0] sm:$0xff]
  %v7452 = vld [vmem:[%s7378 + $0x1b8] sm:$0xf]
  %v7453 = vld [vmem:[%s7378 + $0x1bc] sm:$0xff]
  %v7454 = vld [vmem:[%s7378 + $0x1c4] sm:$0xf]
  %v7455 = vld [vmem:[%s7378 + $0x1c8] sm:$0xff]
  %v7456 = vld [vmem:[%s7378 + $0x1d0] sm:$0xf]
  %v7457 = vld [vmem:[%s7378 + $0x1d4] sm:$0xff]
  %v7458 = vld [vmem:[%s7378 + $0x1dc] sm:$0xf]
  %v7459 = vld [vmem:[%s7378 + $0x1e0] sm:$0xff]
  %v7460 = vld [vmem:[%s7378 + $0x1e8] sm:$0xf]
  %v7461 = vld [vmem:[%s7378 + $0x1ec] sm:$0xff]
  %v7462 = vld [vmem:[%s7378 + $0x1f4] sm:$0xf]
  %v7463 = vld [vmem:[%s7378 + $0x1f8] sm:$0xff]
  %v7464 = vld [vmem:[%s7378 + $0x200] sm:$0xf]
  %v7465 = vld [vmem:[%s7378 + $0x204] sm:$0xff]
  %v7466 = vld [vmem:[%s7378 + $0x20c] sm:$0xf]
  %v7467 = vld [vmem:[%s7378 + $0x210] sm:$0xff]
  %v7468 = vld [vmem:[%s7378 + $0x218] sm:$0xf]
  %v7469 = vld [vmem:[%s7378 + $0x21c] sm:$0xff]
  %v7470 = vld [vmem:[%s7378 + $0x224] sm:$0xf]
  %v7471 = vld [vmem:[%s7378 + $0x228] sm:$0xff]
  %v7472 = vld [vmem:[%s7378 + $0x230] sm:$0xf]
  %v7473 = vld [vmem:[%s7378 + $0x234] sm:$0xff]
  %v7474 = vld [vmem:[%s7378 + $0x23c] sm:$0xf]
  %v7475 = vld [vmem:[%s7378 + $0x240] sm:$0xff]
  %v7476 = vld [vmem:[%s7378 + $0x248] sm:$0xf]
  %v7477 = vld [vmem:[%s7378 + $0x24c] sm:$0xff]
  %v7478 = vld [vmem:[%s7378 + $0x254] sm:$0xf]
  %v7479 = vld [vmem:[%s7378 + $0x258] sm:$0xff]
  %v7480 = vld [vmem:[%s7378 + $0x260] sm:$0xf]
  %v7481 = vld [vmem:[%s7378 + $0x264] sm:$0xff]
  %v7482 = vld [vmem:[%s7378 + $0x26c] sm:$0xf]
  %v7483 = vld [vmem:[%s7378 + $0x270] sm:$0xff]
  %v7484 = vld [vmem:[%s7378 + $0x278] sm:$0xf]
  %v7485 = vld [vmem:[%s7378 + $0x27c] sm:$0xff]
  %v7486 = vld [vmem:[%s7378 + $0x284] sm:$0xf]
  %v7487 = vld [vmem:[%s7378 + $0x288] sm:$0xff]
  %v7488 = vld [vmem:[%s7378 + $0x290] sm:$0xf]
  %v7489 = vld [vmem:[%s7378 + $0x294] sm:$0xff]
  %v7490 = vld [vmem:[%s7378 + $0x29c] sm:$0xf]
  %v7491 = vld [vmem:[%s7378 + $0x2a0] sm:$0xff]
  %v7492 = vld [vmem:[%s7378 + $0x2a8] sm:$0xf]
  %v7493 = vld [vmem:[%s7378 + $0x2ac] sm:$0xff]
  %v7494 = vld [vmem:[%s7378 + $0x2b4] sm:$0xf]
  %v7495 = vld [vmem:[%s7378 + $0x2b8] sm:$0xff]
  %v7496 = vld [vmem:[%s7378 + $0x2c0] sm:$0xf]
  %v7497 = vld [vmem:[%s7378 + $0x2c4] sm:$0xff]
  %v7498 = vld [vmem:[%s7378 + $0x2cc] sm:$0xf]
  %v7501 = vunpack.c.l.b16 %v7376
  %v7502 = vunpack.c.h.b16 %v7376
  %v7503 = vunpack.c.l.b16 %v7377
  %v7504 = vunpack.c.h.b16 %v7377
  %v7505 = vpack.c.b16 %v7501, %v5218
  %v7506 = vpack.c.b16 %v7502, %v5219
  %v7507 = vpack.c.b16 %v7503, %v5220
  %v7508 = vpack.c.b16 %v7504, %v5221
  %v7510 = vshrl.u32 %v7505, 16
  %v7512 = vshll.u32 %v7505, 16
  %v7514 = vrot.slane %v7512, 1
  %v7515 = vor.u32 %v7510, %v7514
  %v7517 = vshrl.u32 %v7506, 16
  %v7519 = vshll.u32 %v7506, 16
  %v7521 = vrot.slane %v7519, 1
  %v7522 = vor.u32 %v7517, %v7521
  %v7524 = vshrl.u32 %v7507, 16
  %v7526 = vshll.u32 %v7507, 16
  %v7528 = vrot.slane %v7526, 1
  %v7529 = vor.u32 %v7524, %v7528
  %v7531 = vshrl.u32 %v7508, 16
  %v7533 = vshll.u32 %v7508, 16
  %v7535 = vrot.slane %v7533, 1
  %v7536 = vor.u32 %v7531, %v7535
  %v7660 = vunpack.c.l.b16 %v7379
  %v7661 = vunpack.c.h.b16 %v7379
  %v7662 = vunpack.c.l.b16 %v7380
  %v7663 = vunpack.c.l.b16 %v7381
  %v7664 = vunpack.c.h.b16 %v7381
  %v7665 = vunpack.c.l.b16 %v7382
  %v7666 = vunpack.c.l.b16 %v7383
  %v7667 = vunpack.c.h.b16 %v7383
  %v7668 = vunpack.c.l.b16 %v7384
  %v7669 = vunpack.c.l.b16 %v7385
  %v7670 = vunpack.c.h.b16 %v7385
  %v7671 = vunpack.c.l.b16 %v7386
  %v7672 = vunpack.c.l.b16 %v7387
  %v7673 = vunpack.c.h.b16 %v7387
  %v7674 = vunpack.c.l.b16 %v7388
  %v7675 = vunpack.c.l.b16 %v7389
  %v7676 = vunpack.c.h.b16 %v7389
  %v7677 = vunpack.c.l.b16 %v7390
  %v7678 = vunpack.c.l.b16 %v7391
  %v7679 = vunpack.c.h.b16 %v7391
  %v7680 = vunpack.c.l.b16 %v7392
  %v7681 = vunpack.c.l.b16 %v7393
  %v7682 = vunpack.c.h.b16 %v7393
  %v7683 = vunpack.c.l.b16 %v7394
  %v7684 = vunpack.c.l.b16 %v7395
  %v7685 = vunpack.c.h.b16 %v7395
  %v7686 = vunpack.c.l.b16 %v7396
  %v7687 = vunpack.c.l.b16 %v7397
  %v7688 = vunpack.c.h.b16 %v7397
  %v7689 = vunpack.c.l.b16 %v7398
  %v7690 = vunpack.c.l.b16 %v7399
  %v7691 = vunpack.c.h.b16 %v7399
  %v7692 = vunpack.c.l.b16 %v7400
  %v7693 = vunpack.c.l.b16 %v7401
  %v7694 = vunpack.c.h.b16 %v7401
  %v7695 = vunpack.c.l.b16 %v7402
  %v7696 = vunpack.c.l.b16 %v7403
  %v7697 = vunpack.c.h.b16 %v7403
  %v7698 = vunpack.c.l.b16 %v7404
  %v7699 = vunpack.c.l.b16 %v7405
  %v7700 = vunpack.c.h.b16 %v7405
  %v7701 = vunpack.c.l.b16 %v7406
  %v7702 = vunpack.c.l.b16 %v7407
  %v7703 = vunpack.c.h.b16 %v7407
  %v7704 = vunpack.c.l.b16 %v7408
  %v7705 = vunpack.c.l.b16 %v7409
  %v7706 = vunpack.c.h.b16 %v7409
  %v7707 = vunpack.c.l.b16 %v7410
  %v7708 = vunpack.c.l.b16 %v7411
  %v7709 = vunpack.c.h.b16 %v7411
  %v7710 = vunpack.c.l.b16 %v7412
  %v7711 = vunpack.c.l.b16 %v7413
  %v7712 = vunpack.c.h.b16 %v7413
  %v7713 = vunpack.c.l.b16 %v7414
  %v7714 = vunpack.c.l.b16 %v7415
  %v7715 = vunpack.c.h.b16 %v7415
  %v7716 = vunpack.c.l.b16 %v7416
  %v7717 = vunpack.c.l.b16 %v7417
  %v7718 = vunpack.c.h.b16 %v7417
  %v7719 = vunpack.c.l.b16 %v7418
  %v7720 = vunpack.c.l.b16 %v7419
  %v7721 = vunpack.c.h.b16 %v7419
  %v7722 = vunpack.c.l.b16 %v7420
  %v7723 = vunpack.c.l.b16 %v7421
  %v7724 = vunpack.c.h.b16 %v7421
  %v7725 = vunpack.c.l.b16 %v7422
  %v7726 = vunpack.c.l.b16 %v7423
  %v7727 = vunpack.c.h.b16 %v7423
  %v7728 = vunpack.c.l.b16 %v7424
  %v7729 = vunpack.c.l.b16 %v7425
  %v7730 = vunpack.c.h.b16 %v7425
  %v7731 = vunpack.c.l.b16 %v7426
  %v7732 = vunpack.c.l.b16 %v7427
  %v7733 = vunpack.c.h.b16 %v7427
  %v7734 = vunpack.c.l.b16 %v7428
  %v7735 = vunpack.c.l.b16 %v7429
  %v7736 = vunpack.c.h.b16 %v7429
  %v7737 = vunpack.c.l.b16 %v7430
  %v7738 = vunpack.c.l.b16 %v7431
  %v7739 = vunpack.c.h.b16 %v7431
  %v7740 = vunpack.c.l.b16 %v7432
  %v7741 = vunpack.c.l.b16 %v7433
  %v7742 = vunpack.c.h.b16 %v7433
  %v7743 = vunpack.c.l.b16 %v7434
  %v7744 = vunpack.c.l.b16 %v7435
  %v7745 = vunpack.c.h.b16 %v7435
  %v7746 = vunpack.c.l.b16 %v7436
  %v7747 = vunpack.c.l.b16 %v7437
  %v7748 = vunpack.c.h.b16 %v7437
  %v7749 = vunpack.c.l.b16 %v7438
  %v7750 = vunpack.c.l.b16 %v7439
  %v7751 = vunpack.c.h.b16 %v7439
  %v7752 = vunpack.c.l.b16 %v7440
  %v7753 = vunpack.c.l.b16 %v7441
  %v7754 = vunpack.c.h.b16 %v7441
  %v7755 = vunpack.c.l.b16 %v7442
  %v7756 = vunpack.c.l.b16 %v7443
  %v7757 = vunpack.c.h.b16 %v7443
  %v7758 = vunpack.c.l.b16 %v7444
  %v7759 = vunpack.c.l.b16 %v7445
  %v7760 = vunpack.c.h.b16 %v7445
  %v7761 = vunpack.c.l.b16 %v7446
  %v7762 = vunpack.c.l.b16 %v7447
  %v7763 = vunpack.c.h.b16 %v7447
  %v7764 = vunpack.c.l.b16 %v7448
  %v7765 = vunpack.c.l.b16 %v7449
  %v7766 = vunpack.c.h.b16 %v7449
  %v7767 = vunpack.c.l.b16 %v7450
  %v7768 = vunpack.c.l.b16 %v7451
  %v7769 = vunpack.c.h.b16 %v7451
  %v7770 = vunpack.c.l.b16 %v7452
  %v7771 = vunpack.c.l.b16 %v7453
  %v7772 = vunpack.c.h.b16 %v7453
  %v7773 = vunpack.c.l.b16 %v7454
  %v7774 = vunpack.c.l.b16 %v7455
  %v7775 = vunpack.c.h.b16 %v7455
  %v7776 = vunpack.c.l.b16 %v7456
  %v7777 = vunpack.c.l.b16 %v7457
  %v7778 = vunpack.c.h.b16 %v7457
  %v7779 = vunpack.c.l.b16 %v7458
  %v7780 = vunpack.c.l.b16 %v7459
  %v7781 = vunpack.c.h.b16 %v7459
  %v7782 = vunpack.c.l.b16 %v7460
  %v7783 = vunpack.c.l.b16 %v7461
  %v7784 = vunpack.c.h.b16 %v7461
  %v7785 = vunpack.c.l.b16 %v7462
  %v7786 = vunpack.c.l.b16 %v7463
  %v7787 = vunpack.c.h.b16 %v7463
  %v7788 = vunpack.c.l.b16 %v7464
  %v7789 = vunpack.c.l.b16 %v7465
  %v7790 = vunpack.c.h.b16 %v7465
  %v7791 = vunpack.c.l.b16 %v7466
  %v7792 = vunpack.c.l.b16 %v7467
  %v7793 = vunpack.c.h.b16 %v7467
  %v7794 = vunpack.c.l.b16 %v7468
  %v7795 = vunpack.c.l.b16 %v7469
  %v7796 = vunpack.c.h.b16 %v7469
  %v7797 = vunpack.c.l.b16 %v7470
  %v7798 = vunpack.c.l.b16 %v7471
  %v7799 = vunpack.c.h.b16 %v7471
  %v7800 = vunpack.c.l.b16 %v7472
  %v7801 = vunpack.c.l.b16 %v7473
  %v7802 = vunpack.c.h.b16 %v7473
  %v7803 = vunpack.c.l.b16 %v7474
  %v7804 = vunpack.c.l.b16 %v7475
  %v7805 = vunpack.c.h.b16 %v7475
  %v7806 = vunpack.c.l.b16 %v7476
  %v7807 = vunpack.c.l.b16 %v7477
  %v7808 = vunpack.c.h.b16 %v7477
  %v7809 = vunpack.c.l.b16 %v7478
  %v7810 = vunpack.c.l.b16 %v7479
  %v7811 = vunpack.c.h.b16 %v7479
  %v7812 = vunpack.c.l.b16 %v7480
  %v7813 = vunpack.c.l.b16 %v7481
  %v7814 = vunpack.c.h.b16 %v7481
  %v7815 = vunpack.c.l.b16 %v7482
  %v7816 = vunpack.c.l.b16 %v7483
  %v7817 = vunpack.c.h.b16 %v7483
  %v7818 = vunpack.c.l.b16 %v7484
  %v7819 = vunpack.c.l.b16 %v7485
  %v7820 = vunpack.c.h.b16 %v7485
  %v7821 = vunpack.c.l.b16 %v7486
  %v7822 = vunpack.c.l.b16 %v7487
  %v7823 = vunpack.c.h.b16 %v7487
  %v7824 = vunpack.c.l.b16 %v7488
  %v7825 = vunpack.c.l.b16 %v7489
  %v7826 = vunpack.c.h.b16 %v7489
  %v7827 = vunpack.c.l.b16 %v7490
  %v7828 = vunpack.c.l.b16 %v7491
  %v7829 = vunpack.c.h.b16 %v7491
  %v7830 = vunpack.c.l.b16 %v7492
  %v7831 = vunpack.c.l.b16 %v7493
  %v7832 = vunpack.c.h.b16 %v7493
  %v7833 = vunpack.c.l.b16 %v7494
  %v7834 = vunpack.c.l.b16 %v7495
  %v7835 = vunpack.c.h.b16 %v7495
  %v7836 = vunpack.c.l.b16 %v7496
  %v7837 = vunpack.c.l.b16 %v7497
  %v7838 = vunpack.c.h.b16 %v7497
  %v7839 = vunpack.c.l.b16 %v7498
  %v7840 = vpack.c.b16 %v7663, %v7660
  %v7841 = vpack.c.b16 %v7664, %v7661
  %v7842 = vpack.c.b16 %v7665, %v7662
  %v7843 = vpack.c.b16 %v7669, %v7666
  %v7844 = vpack.c.b16 %v7670, %v7667
  %v7845 = vpack.c.b16 %v7671, %v7668
  %v7846 = vpack.c.b16 %v7675, %v7672
  %v7847 = vpack.c.b16 %v7676, %v7673
  %v7848 = vpack.c.b16 %v7677, %v7674
  %v7849 = vpack.c.b16 %v7681, %v7678
  %v7850 = vpack.c.b16 %v7682, %v7679
  %v7851 = vpack.c.b16 %v7683, %v7680
  %v7852 = vpack.c.b16 %v7687, %v7684
  %v7853 = vpack.c.b16 %v7688, %v7685
  %v7854 = vpack.c.b16 %v7689, %v7686
  %v7855 = vpack.c.b16 %v7693, %v7690
  %v7856 = vpack.c.b16 %v7694, %v7691
  %v7857 = vpack.c.b16 %v7695, %v7692
  %v7858 = vpack.c.b16 %v7699, %v7696
  %v7859 = vpack.c.b16 %v7700, %v7697
  %v7860 = vpack.c.b16 %v7701, %v7698
  %v7861 = vpack.c.b16 %v7705, %v7702
  %v7862 = vpack.c.b16 %v7706, %v7703
  %v7863 = vpack.c.b16 %v7707, %v7704
  %v7864 = vpack.c.b16 %v7711, %v7708
  %v7865 = vpack.c.b16 %v7712, %v7709
  %v7866 = vpack.c.b16 %v7713, %v7710
  %v7867 = vpack.c.b16 %v7717, %v7714
  %v7868 = vpack.c.b16 %v7718, %v7715
  %v7869 = vpack.c.b16 %v7719, %v7716
  %v7870 = vpack.c.b16 %v7723, %v7720
  %v7871 = vpack.c.b16 %v7724, %v7721
  %v7872 = vpack.c.b16 %v7725, %v7722
  %v7873 = vpack.c.b16 %v7729, %v7726
  %v7874 = vpack.c.b16 %v7730, %v7727
  %v7875 = vpack.c.b16 %v7731, %v7728
  %v7876 = vpack.c.b16 %v7735, %v7732
  %v7877 = vpack.c.b16 %v7736, %v7733
  %v7878 = vpack.c.b16 %v7737, %v7734
  %v7879 = vpack.c.b16 %v7741, %v7738
  %v7880 = vpack.c.b16 %v7742, %v7739
  %v7881 = vpack.c.b16 %v7743, %v7740
  %v7882 = vpack.c.b16 %v7747, %v7744
  %v7883 = vpack.c.b16 %v7748, %v7745
  %v7884 = vpack.c.b16 %v7749, %v7746
  %v7885 = vpack.c.b16 %v7753, %v7750
  %v7886 = vpack.c.b16 %v7754, %v7751
  %v7887 = vpack.c.b16 %v7755, %v7752
  %v7888 = vpack.c.b16 %v7759, %v7756
  %v7889 = vpack.c.b16 %v7760, %v7757
  %v7890 = vpack.c.b16 %v7761, %v7758
  %v7891 = vpack.c.b16 %v7765, %v7762
  %v7892 = vpack.c.b16 %v7766, %v7763
  %v7893 = vpack.c.b16 %v7767, %v7764
  %v7894 = vpack.c.b16 %v7771, %v7768
  %v7895 = vpack.c.b16 %v7772, %v7769
  %v7896 = vpack.c.b16 %v7773, %v7770
  %v7897 = vpack.c.b16 %v7777, %v7774
  %v7898 = vpack.c.b16 %v7778, %v7775
  %v7899 = vpack.c.b16 %v7779, %v7776
  %v7900 = vpack.c.b16 %v7783, %v7780
  %v7901 = vpack.c.b16 %v7784, %v7781
  %v7902 = vpack.c.b16 %v7785, %v7782
  %v7903 = vpack.c.b16 %v7789, %v7786
  %v7904 = vpack.c.b16 %v7790, %v7787
  %v7905 = vpack.c.b16 %v7791, %v7788
  %v7906 = vpack.c.b16 %v7795, %v7792
  %v7907 = vpack.c.b16 %v7796, %v7793
  %v7908 = vpack.c.b16 %v7797, %v7794
  %v7909 = vpack.c.b16 %v7801, %v7798
  %v7910 = vpack.c.b16 %v7802, %v7799
  %v7911 = vpack.c.b16 %v7803, %v7800
  %v7912 = vpack.c.b16 %v7807, %v7804
  %v7913 = vpack.c.b16 %v7808, %v7805
  %v7914 = vpack.c.b16 %v7809, %v7806
  %v7915 = vpack.c.b16 %v7813, %v7810
  %v7916 = vpack.c.b16 %v7814, %v7811
  %v7917 = vpack.c.b16 %v7815, %v7812
  %v7918 = vpack.c.b16 %v7819, %v7816
  %v7919 = vpack.c.b16 %v7820, %v7817
  %v7920 = vpack.c.b16 %v7821, %v7818
  %v7921 = vpack.c.b16 %v7825, %v7822
  %v7922 = vpack.c.b16 %v7826, %v7823
  %v7923 = vpack.c.b16 %v7827, %v7824
  %v7924 = vpack.c.b16 %v7831, %v7828
  %v7925 = vpack.c.b16 %v7832, %v7829
  %v7926 = vpack.c.b16 %v7833, %v7830
  %v7927 = vpack.c.b16 %v7837, %v7834
  %v7928 = vpack.c.b16 %v7838, %v7835
  %v7929 = vpack.c.b16 %v7839, %v7836
  %v8021 = vsel %vm5713, %v7536, 0
  %8023 = vmatprep.subr.bf16.mxu0 %v7862
  %8024 = vmatpush1.bf16.msra.mxu0 %v7861
  %8025 = vmatprep.subr.bf16.mxu0 %v7859
  %8026 = vmatpush1.bf16.msra.mxu0 %v7858
  %8027 = vmatprep.subr.bf16.mxu0 %v7856
  %8028 = vmatpush1.bf16.msra.mxu0 %v7855
  %8029 = vmatprep.subr.bf16.mxu0 %v7853
  %8030 = vmatpush1.bf16.msra.mxu0 %v7852
  %8031 = vmatprep.subr.bf16.mxu0 %v7850
  %8032 = vmatpush1.bf16.msra.mxu0 %v7849
  %8033 = vmatprep.subr.bf16.mxu0 %v7847
  %8034 = vmatpush1.bf16.msra.mxu0 %v7846
  %8035 = vmatprep.subr.bf16.mxu0 %v7844
  %8036 = vmatpush1.bf16.msra.mxu0 %v7843
  %8037 = vmatprep.subr.bf16.mxu0 %v7841
  %8038 = vmatpush1.bf16.msra.mxu0 %v7840
  %8039 = vmatprep.subr.bf16.mxu0 %v7886
  %8040 = vmatpush2.bf16.msra.mxu0 %v7885
  %8041 = vmatprep.subr.bf16.mxu0 %v7883
  %8042 = vmatpush2.bf16.msra.mxu0 %v7882
  %8043 = vmatprep.subr.bf16.mxu0 %v7880
  %8044 = vmatpush2.bf16.msra.mxu0 %v7879
  %8045 = vmatprep.subr.bf16.mxu0 %v7877
  %8046 = vmatpush2.bf16.msra.mxu0 %v7876
  %8047 = vmatprep.subr.bf16.mxu0 %v7874
  %8048 = vmatpush2.bf16.msra.mxu0 %v7873
  %8049 = vmatprep.subr.bf16.mxu0 %v7871
  %8050 = vmatpush2.bf16.msra.mxu0 %v7870
  %8051 = vmatprep.subr.bf16.mxu0 %v7868
  %8052 = vmatpush2.bf16.msra.mxu0 %v7867
  %8053 = vmatprep.subr.bf16.mxu0 %v7865
  %8054 = vmatpush2.bf16.msra.mxu0 %v7864
  %8055 = vmatprep.mubr.bf16.mxu0 %v7522
  %8056 = vmatmul.mubr.bf16.gmra.mxu0 %v7515
  %v8057 = vpop.f32.mrf.mxu0
  %v8058 = vadd.f32 0.0, %v8057
  %v8059 = vpop.f32.mrf.mxu0
  %v8060 = vadd.f32 0.0, %v8059
  %v8061 = vpop.f32.mrf.mxu0
  %v8062 = vadd.f32 0.0, %v8061
  %v8063 = vpop.f32.mrf.mxu0
  %v8064 = vadd.f32 0.0, %v8063
  %8065 = vdwg.mxu0
  %8066 = vmatprep.subr.bf16.mxu0 %v7910
  %8067 = vmatpush1.bf16.msra.mxu0 %v7909
  %8068 = vmatprep.subr.bf16.mxu0 %v7907
  %8069 = vmatpush1.bf16.msra.mxu0 %v7906
  %8070 = vmatprep.subr.bf16.mxu0 %v7904
  %8071 = vmatpush1.bf16.msra.mxu0 %v7903
  %8072 = vmatprep.subr.bf16.mxu0 %v7901
  %8073 = vmatpush1.bf16.msra.mxu0 %v7900
  %8074 = vmatprep.subr.bf16.mxu0 %v7898
  %8075 = vmatpush1.bf16.msra.mxu0 %v7897
  %8076 = vmatprep.subr.bf16.mxu0 %v7895
  %8077 = vmatpush1.bf16.msra.mxu0 %v7894
  %8078 = vmatprep.subr.bf16.mxu0 %v7892
  %8079 = vmatpush1.bf16.msra.mxu0 %v7891
  %8080 = vmatprep.subr.bf16.mxu0 %v7889
  %8081 = vmatpush1.bf16.msra.mxu0 %v7888
  %8082 = vmatprep.subr.bf16.mxu0 0
  %8083 = vmatpush2.bf16.msra.mxu0 0
  %8084 = vmatprep.subr.bf16.mxu0 0
  %8085 = vmatpush2.bf16.msra.mxu0 0
  %8086 = vmatprep.subr.bf16.mxu0 %v7928
  %8087 = vmatpush2.bf16.msra.mxu0 %v7927
  %8088 = vmatprep.subr.bf16.mxu0 %v7925
  %8089 = vmatpush2.bf16.msra.mxu0 %v7924
  %8090 = vmatprep.subr.bf16.mxu0 %v7922
  %8091 = vmatpush2.bf16.msra.mxu0 %v7921
  %8092 = vmatprep.subr.bf16.mxu0 %v7919
  %8093 = vmatpush2.bf16.msra.mxu0 %v7918
  %8094 = vmatprep.subr.bf16.mxu0 %v7916
  %8095 = vmatpush2.bf16.msra.mxu0 %v7915
  %8096 = vmatprep.subr.bf16.mxu0 %v7913
  %8097 = vmatpush2.bf16.msra.mxu0 %v7912
  %8098 = vmatprep.mubr.bf16.mxu0 %v8021
  %8099 = vmatmul.mubr.bf16.gmra.mxu0 %v7529
  %v8100 = vpop.f32.mrf.mxu0
  %v8101 = vadd.f32 %v8058, %v8100
  %v8102 = vpop.f32.mrf.mxu0
  %v8103 = vadd.f32 %v8060, %v8102
  %v8104 = vpop.f32.mrf.mxu0
  %v8105 = vadd.f32 %v8062, %v8104
  %v8106 = vpop.f32.mrf.mxu0
  %v8107 = vadd.f32 %v8064, %v8106
  %8108 = vdwg.mxu0
  %8109 = vmatprep.subr.bf16.mxu0 0
  %8110 = vmatpush1.bf16.msra.mxu0 %v7863
  %8111 = vmatprep.subr.bf16.mxu0 0
  %8112 = vmatpush1.bf16.msra.mxu0 %v7860
  %8113 = vmatprep.subr.bf16.mxu0 0
  %8114 = vmatpush1.bf16.msra.mxu0 %v7857
  %8115 = vmatprep.subr.bf16.mxu0 0
  %8116 = vmatpush1.bf16.msra.mxu0 %v7854
  %8117 = vmatprep.subr.bf16.mxu0 0
  %8118 = vmatpush1.bf16.msra.mxu0 %v7851
  %8119 = vmatprep.subr.bf16.mxu0 0
  %8120 = vmatpush1.bf16.msra.mxu0 %v7848
  %8121 = vmatprep.subr.bf16.mxu0 0
  %8122 = vmatpush1.bf16.msra.mxu0 %v7845
  %8123 = vmatprep.subr.bf16.mxu0 0
  %8124 = vmatpush1.bf16.msra.mxu0 %v7842
  %8125 = vmatprep.subr.bf16.mxu0 0
  %8126 = vmatpush2.bf16.msra.mxu0 %v7887
  %8127 = vmatprep.subr.bf16.mxu0 0
  %8128 = vmatpush2.bf16.msra.mxu0 %v7884
  %8129 = vmatprep.subr.bf16.mxu0 0
  %8130 = vmatpush2.bf16.msra.mxu0 %v7881
  %8131 = vmatprep.subr.bf16.mxu0 0
  %8132 = vmatpush2.bf16.msra.mxu0 %v7878
  %8133 = vmatprep.subr.bf16.mxu0 0
  %8134 = vmatpush2.bf16.msra.mxu0 %v7875
  %8135 = vmatprep.subr.bf16.mxu0 0
  %8136 = vmatpush2.bf16.msra.mxu0 %v7872
  %8137 = vmatprep.subr.bf16.mxu0 0
  %8138 = vmatpush2.bf16.msra.mxu0 %v7869
  %8139 = vmatprep.subr.bf16.mxu0 0
  %8140 = vmatpush2.bf16.msra.mxu0 %v7866
  %8141 = vmatprep.mubr.bf16.mxu0 %v7522
  %8142 = vmatmul.mubr.bf16.gmra.mxu0 %v7515
  %v8143 = vpop.f32.mrf.mxu0
  %v8144 = vadd.f32 0.0, %v8143
  %v8145 = vpop.f32.mrf.mxu0
  %v8146 = vpop.f32.mrf.mxu0
  %v8147 = vadd.f32 0.0, %v8146
  %v8148 = vpop.f32.mrf.mxu0
  %8149 = vdwg.mxu0
  %8150 = vmatprep.subr.bf16.mxu0 0
  %8151 = vmatpush1.bf16.msra.mxu0 %v7911
  %8152 = vmatprep.subr.bf16.mxu0 0
  %8153 = vmatpush1.bf16.msra.mxu0 %v7908
  %8154 = vmatprep.subr.bf16.mxu0 0
  %8155 = vmatpush1.bf16.msra.mxu0 %v7905
  %8156 = vmatprep.subr.bf16.mxu0 0
  %8157 = vmatpush1.bf16.msra.mxu0 %v7902
  %8158 = vmatprep.subr.bf16.mxu0 0
  %8159 = vmatpush1.bf16.msra.mxu0 %v7899
  %8160 = vmatprep.subr.bf16.mxu0 0
  %8161 = vmatpush1.bf16.msra.mxu0 %v7896
  %8162 = vmatprep.subr.bf16.mxu0 0
  %8163 = vmatpush1.bf16.msra.mxu0 %v7893
  %8164 = vmatprep.subr.bf16.mxu0 0
  %8165 = vmatpush1.bf16.msra.mxu0 %v7890
  %8166 = vmatprep.subr.bf16.mxu0 0
  %8167 = vmatpush2.bf16.msra.mxu0 0
  %8168 = vmatprep.subr.bf16.mxu0 0
  %8169 = vmatpush2.bf16.msra.mxu0 0
  %8170 = vmatprep.subr.bf16.mxu0 0
  %8171 = vmatpush2.bf16.msra.mxu0 %v7929
  %8172 = vmatprep.subr.bf16.mxu0 0
  %8173 = vmatpush2.bf16.msra.mxu0 %v7926
  %8174 = vmatprep.subr.bf16.mxu0 0
  %8175 = vmatpush2.bf16.msra.mxu0 %v7923
  %8176 = vmatprep.subr.bf16.mxu0 0
  %8177 = vmatpush2.bf16.msra.mxu0 %v7920
  %8178 = vmatprep.subr.bf16.mxu0 0
  %8179 = vmatpush2.bf16.msra.mxu0 %v7917
  %8180 = vmatprep.subr.bf16.mxu0 0
  %8181 = vmatpush2.bf16.msra.mxu0 %v7914
  %8182 = vmatprep.mubr.bf16.mxu0 %v8021
  %8183 = vmatmul.mubr.bf16.gmra.mxu0 %v7529
  %v8184 = vpop.f32.mrf.mxu0
  %v8185 = vadd.f32 %v8144, %v8184
  %v8186 = vpop.f32.mrf.mxu0
  %v8187 = vpop.f32.mrf.mxu0
  %v8188 = vadd.f32 %v8147, %v8187
  %v8189 = vpop.f32.mrf.mxu0
  %8190 = vdwg.mxu0
  %v8191 = vadd.f32 %v7370, %v8101
  %v8192 = vadd.f32 %v7371, %v8103
  %v8193 = vadd.f32 %v7372, %v8185
  %v8194 = vadd.f32 %v7373, %v8105
  %v8195 = vadd.f32 %v7374, %v8107
  %v8196 = vadd.f32 %v7375, %v8188
  %v8198 = vlaneseq
  %v8199 = vshrl.u32 %v8198, 7
  %v8200 = vsub.s32 0, %v8199
  %v8201 = vrot.slane %v228, %v8200
  %v8202 = vlaneseq
  %v8203 = vshrl.u32 %v8202, 7
  %v8204 = vsub.s32 1, %v8203
  %v8205 = vrot.slane %v228, %v8204
  %v8206 = vlaneseq
  %v8207 = vshrl.u32 %v8206, 7
  %v8208 = vsub.s32 2, %v8207
  %v8209 = vrot.slane %v228, %v8208
  %v8213 = vadd.f32 %v8191, %v8201
  %v8214 = vadd.f32 %v8192, %v8205
  %v8215 = vadd.f32 %v8193, %v8209
  %v8216 = vadd.f32 %v8194, %v8201
  %v8217 = vadd.f32 %v8195, %v8205
  %v8218 = vadd.f32 %v8196, %v8209
  %v8219 = vtanh.pop %v8213
  %v8220 = vtanh.pop %v8214
  %v8221 = vtanh.pop %v8215
  %v8222 = vtanh.pop %v8216
  %v8223 = vtanh.pop %v8217
  %v8224 = vtanh.pop %v8218
  %v8225 = vpack.c.bf16 %v8222, %v8219
  %v8226 = vpack.c.bf16 %v8223, %v8220
  %v8227 = vpack.c.bf16 %v8224, %v8221
  %v8231 = vunpack.c.l.b16 %v8225
  %v8232 = vunpack.c.l.b16 %v8226
  %v8233 = vunpack.c.l.b16 %v8227
  %v8234 = vunpack.c.h.b16 %v8225
  %v8235 = vunpack.c.h.b16 %v8226
  %v8236 = vunpack.c.h.b16 %v8227
  %v8237 = vpack.c.b16 %v8232, %v8231
  %v8238 = vpack.c.b16 %v8233, %v8233
  %v8239 = vpack.c.b16 %v8235, %v8234
  %v8240 = vpack.c.b16 %v8236, %v8236
  %8245 = vst [vmem:[#allocation3] sm:$0xff] %v8237
  %8246 = vst [vmem:[#allocation3 + $0x8] sm:$0xf] %v8238
  %8247 = vst [vmem:[#allocation3 + $0xc] sm:$0x77] %v8239
  %8248 = vst [vmem:[#allocation3 + $0x14] sm:$0x7] %v8240
  %v8249 = vld [vmem:[#allocation3] sm:$0xff]
  %v8250 = vld [vmem:[#allocation3 + $0x8] sm:$0xf]
  %v8251 = vld [vmem:[#allocation3 + $0xc] sm:$0x33]
  %v8252 = vld [vmem:[#allocation3 + $0x14] sm:$0x3]
  %v8253 = vld [vmem:[%s6] sm:$0xff]
  %v8254 = vld [vmem:[%s6 + $0x8] sm:$0xff]
  %v8255 = vld [vmem:[%s6 + $0x10] sm:$0xff]
  %v8256 = vld [vmem:[%s6 + $0x18] sm:$0xff]
  %v8257 = vld [vmem:[%s6 + $0x20] sm:$0xff]
  %v8258 = vld [vmem:[%s6 + $0x28] sm:$0xff]
  %v8259 = vld [vmem:[%s6 + $0x30] sm:$0xff]
  %v8260 = vld [vmem:[%s6 + $0x38] sm:$0xff]
  %v8261 = vld [vmem:[%s6 + $0x40] sm:$0xff]
  %v8262 = vld [vmem:[%s6 + $0x48] sm:$0xff]
  %v8263 = vld [vmem:[%s6 + $0x50] sm:$0xff]
  %v8264 = vld [vmem:[%s6 + $0x58] sm:$0xff]
  %v8265 = vld [vmem:[%s6 + $0x60] sm:$0xff]
  %v8266 = vld [vmem:[%s6 + $0x68] sm:$0xff]
  %v8267 = vld [vmem:[%s6 + $0x70] sm:$0xff]
  %v8268 = vld [vmem:[%s6 + $0x78] sm:$0xff]
  %v8269 = vld [vmem:[%s6 + $0x80] sm:$0xff]
  %v8270 = vld [vmem:[%s6 + $0x88] sm:$0xff]
  %v8271 = vld [vmem:[%s6 + $0x90] sm:$0xff]
  %v8272 = vld [vmem:[%s6 + $0x98] sm:$0xff]
  %v8273 = vld [vmem:[%s6 + $0xa0] sm:$0xff]
  %v8274 = vld [vmem:[%s6 + $0xa8] sm:$0xff]
  %v8275 = vld [vmem:[%s6 + $0xb0] sm:$0xff]
  %v8276 = vld [vmem:[%s6 + $0xb8] sm:$0xff]
  %v8277 = vld [vmem:[%s6 + $0xc0] sm:$0xff]
  %v8278 = vld [vmem:[%s6 + $0xc8] sm:$0xff]
  %v8279 = vld [vmem:[%s6 + $0xd0] sm:$0xff]
  %v8280 = vld [vmem:[%s6 + $0xd8] sm:$0xff]
  %v8281 = vld [vmem:[%s6 + $0xe0] sm:$0xff]
  %v8282 = vld [vmem:[%s6 + $0xe8] sm:$0xff]
  %v8283 = vld [vmem:[%s6 + $0xf0] sm:$0xff]
  %v8284 = vld [vmem:[%s6 + $0xf8] sm:$0xff]
  %v8285 = vld [vmem:[%s6 + $0x100] sm:$0xff]
  %v8286 = vld [vmem:[%s6 + $0x108] sm:$0xff]
  %v8287 = vld [vmem:[%s6 + $0x110] sm:$0xff]
  %v8288 = vld [vmem:[%s6 + $0x118] sm:$0xff]
  %v8289 = vld [vmem:[%s6 + $0x120] sm:$0xff]
  %v8290 = vld [vmem:[%s6 + $0x128] sm:$0xff]
  %v8291 = vld [vmem:[%s6 + $0x130] sm:$0xff]
  %v8292 = vld [vmem:[%s6 + $0x138] sm:$0xff]
  %v8293 = vld [vmem:[%s6 + $0x140] sm:$0xff]
  %v8294 = vld [vmem:[%s6 + $0x148] sm:$0xff]
  %v8295 = vld [vmem:[%s6 + $0x150] sm:$0xff]
  %v8296 = vld [vmem:[%s6 + $0x158] sm:$0xff]
  %v8297 = vld [vmem:[%s6 + $0x160] sm:$0xff]
  %v8298 = vld [vmem:[%s6 + $0x168] sm:$0xff]
  %v8299 = vld [vmem:[%s6 + $0x170] sm:$0xff]
  %v8300 = vld [vmem:[%s6 + $0x178] sm:$0xff]
  %v8301 = vld [vmem:[#allocation3 + $0xc] sm:$0x77]
  %v8302 = vld [vmem:[#allocation3 + $0x14] sm:$0x7]
  %s8303 = scalar_lea.vmem %s6, 384
  %v8304 = vld [vmem:[%s8303] sm:$0xff]
  %v8305 = vld [vmem:[%s8303 + $0x8] sm:$0xff]
  %v8306 = vld [vmem:[%s8303 + $0x10] sm:$0xff]
  %v8307 = vld [vmem:[%s8303 + $0x18] sm:$0xff]
  %v8308 = vld [vmem:[%s8303 + $0x20] sm:$0xff]
  %v8309 = vld [vmem:[%s8303 + $0x28] sm:$0xff]
  %v8310 = vld [vmem:[%s8303 + $0x30] sm:$0xff]
  %v8311 = vld [vmem:[%s8303 + $0x38] sm:$0xff]
  %v8312 = vld [vmem:[%s8303 + $0x40] sm:$0xff]
  %v8313 = vld [vmem:[%s8303 + $0x48] sm:$0xff]
  %v8314 = vld [vmem:[%s8303 + $0x50] sm:$0xff]
  %v8315 = vld [vmem:[%s8303 + $0x58] sm:$0xff]
  %v8316 = vld [vmem:[%s8303 + $0x60] sm:$0xff]
  %v8317 = vld [vmem:[%s8303 + $0x68] sm:$0xff]
  %v8318 = vld [vmem:[%s8303 + $0x70] sm:$0xff]
  %v8319 = vld [vmem:[%s8303 + $0x78] sm:$0xff]
  %v8320 = vld [vmem:[%s8303 + $0x80] sm:$0xff]
  %v8321 = vld [vmem:[%s8303 + $0x88] sm:$0xff]
  %v8322 = vld [vmem:[%s8303 + $0x90] sm:$0xff]
  %v8323 = vld [vmem:[%s8303 + $0x98] sm:$0xff]
  %v8324 = vld [vmem:[%s8303 + $0xa0] sm:$0xff]
  %v8325 = vld [vmem:[%s8303 + $0xa8] sm:$0xff]
  %v8326 = vld [vmem:[%s8303 + $0xb0] sm:$0xff]
  %v8327 = vld [vmem:[%s8303 + $0xb8] sm:$0xff]
  %v8328 = vld [vmem:[%s8303 + $0xc0] sm:$0xff]
  %v8329 = vld [vmem:[%s8303 + $0xc8] sm:$0xff]
  %v8330 = vld [vmem:[%s8303 + $0xd0] sm:$0xff]
  %v8331 = vld [vmem:[%s8303 + $0xd8] sm:$0xff]
  %v8332 = vld [vmem:[%s8303 + $0xe0] sm:$0xff]
  %v8333 = vld [vmem:[%s8303 + $0xe8] sm:$0xff]
  %v8334 = vld [vmem:[%s8303 + $0xf0] sm:$0xff]
  %v8335 = vld [vmem:[%s8303 + $0xf8] sm:$0xff]
  %v8336 = vld [vmem:[%s8303 + $0x100] sm:$0xff]
  %v8337 = vld [vmem:[%s8303 + $0x108] sm:$0xff]
  %v8338 = vld [vmem:[%s8303 + $0x110] sm:$0xff]
  %v8339 = vld [vmem:[%s8303 + $0x118] sm:$0xff]
  %v8340 = vld [vmem:[%s8303 + $0x120] sm:$0xff]
  %v8341 = vld [vmem:[%s8303 + $0x128] sm:$0xff]
  %v8342 = vld [vmem:[%s8303 + $0x130] sm:$0xff]
  %v8343 = vld [vmem:[%s8303 + $0x138] sm:$0xff]
  %v8344 = vld [vmem:[%s8303 + $0x140] sm:$0xff]
  %v8345 = vld [vmem:[%s8303 + $0x148] sm:$0xff]
  %v8346 = vld [vmem:[%s8303 + $0x150] sm:$0xff]
  %v8347 = vld [vmem:[%s8303 + $0x158] sm:$0xff]
  %v8348 = vld [vmem:[%s8303 + $0x160] sm:$0xff]
  %v8349 = vld [vmem:[%s8303 + $0x168] sm:$0xff]
  %v8350 = vld [vmem:[%s8303 + $0x170] sm:$0xff]
  %v8351 = vld [vmem:[%s8303 + $0x178] sm:$0xff]
  %v8356 = vunpack.c.l.b16 %v8249
  %v8357 = vunpack.c.h.b16 %v8249
  %v8358 = vunpack.c.l.b16 %v8250
  %v8359 = vunpack.c.l.b16 %v8301
  %v8360 = vunpack.c.h.b16 %v8301
  %v8361 = vunpack.c.l.b16 %v8302
  %v8362 = vpack.c.b16 %v8359, %v8356
  %v8363 = vpack.c.b16 %v8360, %v8357
  %v8364 = vpack.c.b16 %v8361, %v8358
  %v8366 = vshrl.u32 %v8362, 16
  %v8368 = vshll.u32 %v8362, 16
  %v8370 = vrot.slane %v8368, 1
  %v8371 = vor.u32 %v8366, %v8370
  %v8373 = vshrl.u32 %v8363, 16
  %v8375 = vshll.u32 %v8363, 16
  %v8377 = vrot.slane %v8375, 1
  %v8378 = vor.u32 %v8373, %v8377
  %v8380 = vshrl.u32 %v8364, 16
  %v8382 = vshll.u32 %v8364, 16
  %v8384 = vrot.slane %v8382, 1
  %v8385 = vor.u32 %v8380, %v8384
  %v8437 = vunpack.c.l.b16 %v8304
  %v8438 = vunpack.c.h.b16 %v8304
  %v8439 = vunpack.c.l.b16 %v8305
  %v8440 = vunpack.c.h.b16 %v8305
  %v8441 = vunpack.c.l.b16 %v8306
  %v8442 = vunpack.c.h.b16 %v8306
  %v8443 = vunpack.c.l.b16 %v8307
  %v8444 = vunpack.c.h.b16 %v8307
  %v8445 = vunpack.c.l.b16 %v8308
  %v8446 = vunpack.c.h.b16 %v8308
  %v8447 = vunpack.c.l.b16 %v8309
  %v8448 = vunpack.c.h.b16 %v8309
  %v8449 = vunpack.c.l.b16 %v8310
  %v8450 = vunpack.c.h.b16 %v8310
  %v8451 = vunpack.c.l.b16 %v8311
  %v8452 = vunpack.c.h.b16 %v8311
  %v8453 = vunpack.c.l.b16 %v8312
  %v8454 = vunpack.c.h.b16 %v8312
  %v8455 = vunpack.c.l.b16 %v8313
  %v8456 = vunpack.c.h.b16 %v8313
  %v8457 = vunpack.c.l.b16 %v8314
  %v8458 = vunpack.c.h.b16 %v8314
  %v8459 = vunpack.c.l.b16 %v8315
  %v8460 = vunpack.c.h.b16 %v8315
  %v8461 = vunpack.c.l.b16 %v8316
  %v8462 = vunpack.c.h.b16 %v8316
  %v8463 = vunpack.c.l.b16 %v8317
  %v8464 = vunpack.c.h.b16 %v8317
  %v8465 = vunpack.c.l.b16 %v8318
  %v8466 = vunpack.c.h.b16 %v8318
  %v8467 = vunpack.c.l.b16 %v8319
  %v8468 = vunpack.c.h.b16 %v8319
  %v8469 = vunpack.c.l.b16 %v8320
  %v8470 = vunpack.c.h.b16 %v8320
  %v8471 = vunpack.c.l.b16 %v8321
  %v8472 = vunpack.c.h.b16 %v8321
  %v8473 = vunpack.c.l.b16 %v8322
  %v8474 = vunpack.c.h.b16 %v8322
  %v8475 = vunpack.c.l.b16 %v8323
  %v8476 = vunpack.c.h.b16 %v8323
  %v8477 = vunpack.c.l.b16 %v8324
  %v8478 = vunpack.c.h.b16 %v8324
  %v8479 = vunpack.c.l.b16 %v8325
  %v8480 = vunpack.c.h.b16 %v8325
  %v8481 = vunpack.c.l.b16 %v8326
  %v8482 = vunpack.c.h.b16 %v8326
  %v8483 = vunpack.c.l.b16 %v8327
  %v8484 = vunpack.c.h.b16 %v8327
  %v8485 = vunpack.c.l.b16 %v8328
  %v8486 = vunpack.c.h.b16 %v8328
  %v8487 = vunpack.c.l.b16 %v8329
  %v8488 = vunpack.c.h.b16 %v8329
  %v8489 = vunpack.c.l.b16 %v8330
  %v8490 = vunpack.c.h.b16 %v8330
  %v8491 = vunpack.c.l.b16 %v8331
  %v8492 = vunpack.c.h.b16 %v8331
  %v8493 = vunpack.c.l.b16 %v8332
  %v8494 = vunpack.c.h.b16 %v8332
  %v8495 = vunpack.c.l.b16 %v8333
  %v8496 = vunpack.c.h.b16 %v8333
  %v8497 = vunpack.c.l.b16 %v8334
  %v8498 = vunpack.c.h.b16 %v8334
  %v8499 = vunpack.c.l.b16 %v8335
  %v8500 = vunpack.c.h.b16 %v8335
  %v8501 = vunpack.c.l.b16 %v8336
  %v8502 = vunpack.c.h.b16 %v8336
  %v8503 = vunpack.c.l.b16 %v8337
  %v8504 = vunpack.c.h.b16 %v8337
  %v8505 = vunpack.c.l.b16 %v8338
  %v8506 = vunpack.c.h.b16 %v8338
  %v8507 = vunpack.c.l.b16 %v8339
  %v8508 = vunpack.c.h.b16 %v8339
  %v8509 = vunpack.c.l.b16 %v8340
  %v8510 = vunpack.c.h.b16 %v8340
  %v8511 = vunpack.c.l.b16 %v8341
  %v8512 = vunpack.c.h.b16 %v8341
  %v8513 = vunpack.c.l.b16 %v8342
  %v8514 = vunpack.c.h.b16 %v8342
  %v8515 = vunpack.c.l.b16 %v8343
  %v8516 = vunpack.c.h.b16 %v8343
  %v8517 = vunpack.c.l.b16 %v8344
  %v8518 = vunpack.c.h.b16 %v8344
  %v8519 = vunpack.c.l.b16 %v8345
  %v8520 = vunpack.c.h.b16 %v8345
  %v8521 = vunpack.c.l.b16 %v8346
  %v8522 = vunpack.c.h.b16 %v8346
  %v8523 = vunpack.c.l.b16 %v8347
  %v8524 = vunpack.c.h.b16 %v8347
  %v8525 = vunpack.c.l.b16 %v8348
  %v8526 = vunpack.c.h.b16 %v8348
  %v8527 = vunpack.c.l.b16 %v8349
  %v8528 = vunpack.c.h.b16 %v8349
  %v8529 = vunpack.c.l.b16 %v8350
  %v8530 = vunpack.c.h.b16 %v8350
  %v8531 = vunpack.c.l.b16 %v8351
  %v8532 = vunpack.c.h.b16 %v8351
  %v8533 = vpack.c.b16 %v8439, %v8437
  %v8534 = vpack.c.b16 %v8440, %v8438
  %v8535 = vpack.c.b16 %v8443, %v8441
  %v8536 = vpack.c.b16 %v8444, %v8442
  %v8537 = vpack.c.b16 %v8447, %v8445
  %v8538 = vpack.c.b16 %v8448, %v8446
  %v8539 = vpack.c.b16 %v8451, %v8449
  %v8540 = vpack.c.b16 %v8452, %v8450
  %v8541 = vpack.c.b16 %v8455, %v8453
  %v8542 = vpack.c.b16 %v8456, %v8454
  %v8543 = vpack.c.b16 %v8459, %v8457
  %v8544 = vpack.c.b16 %v8460, %v8458
  %v8545 = vpack.c.b16 %v8463, %v8461
  %v8546 = vpack.c.b16 %v8464, %v8462
  %v8547 = vpack.c.b16 %v8467, %v8465
  %v8548 = vpack.c.b16 %v8468, %v8466
  %v8549 = vpack.c.b16 %v8471, %v8469
  %v8550 = vpack.c.b16 %v8472, %v8470
  %v8551 = vpack.c.b16 %v8475, %v8473
  %v8552 = vpack.c.b16 %v8476, %v8474
  %v8553 = vpack.c.b16 %v8479, %v8477
  %v8554 = vpack.c.b16 %v8480, %v8478
  %v8555 = vpack.c.b16 %v8483, %v8481
  %v8556 = vpack.c.b16 %v8484, %v8482
  %v8557 = vpack.c.b16 %v8487, %v8485
  %v8558 = vpack.c.b16 %v8488, %v8486
  %v8559 = vpack.c.b16 %v8491, %v8489
  %v8560 = vpack.c.b16 %v8492, %v8490
  %v8561 = vpack.c.b16 %v8495, %v8493
  %v8562 = vpack.c.b16 %v8496, %v8494
  %v8563 = vpack.c.b16 %v8499, %v8497
  %v8564 = vpack.c.b16 %v8500, %v8498
  %v8565 = vpack.c.b16 %v8503, %v8501
  %v8566 = vpack.c.b16 %v8504, %v8502
  %v8567 = vpack.c.b16 %v8507, %v8505
  %v8568 = vpack.c.b16 %v8508, %v8506
  %v8569 = vpack.c.b16 %v8511, %v8509
  %v8570 = vpack.c.b16 %v8512, %v8510
  %v8571 = vpack.c.b16 %v8515, %v8513
  %v8572 = vpack.c.b16 %v8516, %v8514
  %v8573 = vpack.c.b16 %v8519, %v8517
  %v8574 = vpack.c.b16 %v8520, %v8518
  %v8575 = vpack.c.b16 %v8523, %v8521
  %v8576 = vpack.c.b16 %v8524, %v8522
  %v8577 = vpack.c.b16 %v8527, %v8525
  %v8578 = vpack.c.b16 %v8528, %v8526
  %v8579 = vpack.c.b16 %v8531, %v8529
  %v8580 = vpack.c.b16 %v8532, %v8530
  %8629 = vmatprep.subr.bf16.mxu0 %v8548
  %8630 = vmatpush1.bf16.msra.mxu0 %v8547
  %8631 = vmatprep.subr.bf16.mxu0 %v8546
  %8632 = vmatpush1.bf16.msra.mxu0 %v8545
  %8633 = vmatprep.subr.bf16.mxu0 %v8544
  %8634 = vmatpush1.bf16.msra.mxu0 %v8543
  %8635 = vmatprep.subr.bf16.mxu0 %v8542
  %8636 = vmatpush1.bf16.msra.mxu0 %v8541
  %8637 = vmatprep.subr.bf16.mxu0 %v8540
  %8638 = vmatpush1.bf16.msra.mxu0 %v8539
  %8639 = vmatprep.subr.bf16.mxu0 %v8538
  %8640 = vmatpush1.bf16.msra.mxu0 %v8537
  %8641 = vmatprep.subr.bf16.mxu0 %v8536
  %8642 = vmatpush1.bf16.msra.mxu0 %v8535
  %8643 = vmatprep.subr.bf16.mxu0 %v8534
  %8644 = vmatpush1.bf16.msra.mxu0 %v8533
  %8645 = vmatprep.subr.bf16.mxu0 %v8564
  %8646 = vmatpush2.bf16.msra.mxu0 %v8563
  %8647 = vmatprep.subr.bf16.mxu0 %v8562
  %8648 = vmatpush2.bf16.msra.mxu0 %v8561
  %8649 = vmatprep.subr.bf16.mxu0 %v8560
  %8650 = vmatpush2.bf16.msra.mxu0 %v8559
  %8651 = vmatprep.subr.bf16.mxu0 %v8558
  %8652 = vmatpush2.bf16.msra.mxu0 %v8557
  %8653 = vmatprep.subr.bf16.mxu0 %v8556
  %8654 = vmatpush2.bf16.msra.mxu0 %v8555
  %8655 = vmatprep.subr.bf16.mxu0 %v8554
  %8656 = vmatpush2.bf16.msra.mxu0 %v8553
  %8657 = vmatprep.subr.bf16.mxu0 %v8552
  %8658 = vmatpush2.bf16.msra.mxu0 %v8551
  %8659 = vmatprep.subr.bf16.mxu0 %v8550
  %8660 = vmatpush2.bf16.msra.mxu0 %v8549
  %8661 = vmatprep.mubr.bf16.mxu0 %v8378
  %8662 = vmatmul.mubr.bf16.gmra.mxu0 %v8371
  %v8663 = vpop.f32.mrf.mxu0
  %v8664 = vadd.f32 0.0, %v8663
  %v8665 = vpop.f32.mrf.mxu0
  %v8666 = vadd.f32 0.0, %v8665
  %v8667 = vpop.f32.mrf.mxu0
  %v8668 = vadd.f32 0.0, %v8667
  %v8669 = vpop.f32.mrf.mxu0
  %v8670 = vadd.f32 0.0, %v8669
  %8671 = vdwg.mxu0
  %8672 = vmatprep.subr.bf16.mxu0 %v8580
  %8673 = vmatpush1.bf16.msra.mxu0 %v8579
  %8674 = vmatprep.subr.bf16.mxu0 %v8578
  %8675 = vmatpush1.bf16.msra.mxu0 %v8577
  %8676 = vmatprep.subr.bf16.mxu0 %v8576
  %8677 = vmatpush1.bf16.msra.mxu0 %v8575
  %8678 = vmatprep.subr.bf16.mxu0 %v8574
  %8679 = vmatpush1.bf16.msra.mxu0 %v8573
  %8680 = vmatprep.subr.bf16.mxu0 %v8572
  %8681 = vmatpush1.bf16.msra.mxu0 %v8571
  %8682 = vmatprep.subr.bf16.mxu0 %v8570
  %8683 = vmatpush1.bf16.msra.mxu0 %v8569
  %8684 = vmatprep.subr.bf16.mxu0 %v8568
  %8685 = vmatpush1.bf16.msra.mxu0 %v8567
  %8686 = vmatprep.subr.bf16.mxu0 %v8566
  %8687 = vmatpush1.bf16.msra.mxu0 %v8565
  %8688 = vmatprep.subr.bf16.mxu0 0
  %8689 = vmatpush2.bf16.msra.mxu0 0
  %8690 = vmatprep.subr.bf16.mxu0 0
  %8691 = vmatpush2.bf16.msra.mxu0 0
  %8692 = vmatprep.subr.bf16.mxu0 0
  %8693 = vmatpush2.bf16.msra.mxu0 0
  %8694 = vmatprep.subr.bf16.mxu0 0
  %8695 = vmatpush2.bf16.msra.mxu0 0
  %8696 = vmatprep.subr.bf16.mxu0 0
  %8697 = vmatpush2.bf16.msra.mxu0 0
  %8698 = vmatprep.subr.bf16.mxu0 0
  %8699 = vmatpush2.bf16.msra.mxu0 0
  %8700 = vmatprep.subr.bf16.mxu0 0
  %8701 = vmatpush2.bf16.msra.mxu0 0
  %8702 = vmatprep.subr.bf16.mxu0 0
  %8703 = vmatpush2.bf16.msra.mxu0 0
  %8704 = vmatprep.mubr.bf16.mxu0 0
  %8705 = vmatmul.mubr.bf16.gmra.mxu0 %v8385
  %v8706 = vpop.f32.mrf.mxu0
  %v8707 = vadd.f32 %v8664, %v8706
  %v8708 = vpop.f32.mrf.mxu0
  %v8709 = vadd.f32 %v8666, %v8708
  %v8710 = vpop.f32.mrf.mxu0
  %v8711 = vadd.f32 %v8668, %v8710
  %v8712 = vpop.f32.mrf.mxu0
  %v8713 = vadd.f32 %v8670, %v8712
  %8714 = vdwg.mxu0
  %v8717 = vunpack.c.l.b16 %v8251
  %v8718 = vunpack.c.h.b16 %v8251
  %v8719 = vunpack.c.l.b16 %v8252
  %v8720 = vpack.c.b16 %v8717, %v8356
  %v8721 = vpack.c.b16 %v8718, %v8357
  %v8722 = vpack.c.b16 %v8719, %v8358
  %v8774 = vunpack.c.l.b16 %v8253
  %v8775 = vunpack.c.h.b16 %v8253
  %v8776 = vunpack.c.l.b16 %v8254
  %v8777 = vunpack.c.h.b16 %v8254
  %v8778 = vunpack.c.l.b16 %v8255
  %v8779 = vunpack.c.h.b16 %v8255
  %v8780 = vunpack.c.l.b16 %v8256
  %v8781 = vunpack.c.h.b16 %v8256
  %v8782 = vunpack.c.l.b16 %v8257
  %v8783 = vunpack.c.h.b16 %v8257
  %v8784 = vunpack.c.l.b16 %v8258
  %v8785 = vunpack.c.h.b16 %v8258
  %v8786 = vunpack.c.l.b16 %v8259
  %v8787 = vunpack.c.h.b16 %v8259
  %v8788 = vunpack.c.l.b16 %v8260
  %v8789 = vunpack.c.h.b16 %v8260
  %v8790 = vunpack.c.l.b16 %v8261
  %v8791 = vunpack.c.h.b16 %v8261
  %v8792 = vunpack.c.l.b16 %v8262
  %v8793 = vunpack.c.h.b16 %v8262
  %v8794 = vunpack.c.l.b16 %v8263
  %v8795 = vunpack.c.h.b16 %v8263
  %v8796 = vunpack.c.l.b16 %v8264
  %v8797 = vunpack.c.h.b16 %v8264
  %v8798 = vunpack.c.l.b16 %v8265
  %v8799 = vunpack.c.h.b16 %v8265
  %v8800 = vunpack.c.l.b16 %v8266
  %v8801 = vunpack.c.h.b16 %v8266
  %v8802 = vunpack.c.l.b16 %v8267
  %v8803 = vunpack.c.h.b16 %v8267
  %v8804 = vunpack.c.l.b16 %v8268
  %v8805 = vunpack.c.h.b16 %v8268
  %v8806 = vunpack.c.l.b16 %v8269
  %v8807 = vunpack.c.h.b16 %v8269
  %v8808 = vunpack.c.l.b16 %v8270
  %v8809 = vunpack.c.h.b16 %v8270
  %v8810 = vunpack.c.l.b16 %v8271
  %v8811 = vunpack.c.h.b16 %v8271
  %v8812 = vunpack.c.l.b16 %v8272
  %v8813 = vunpack.c.h.b16 %v8272
  %v8814 = vunpack.c.l.b16 %v8273
  %v8815 = vunpack.c.h.b16 %v8273
  %v8816 = vunpack.c.l.b16 %v8274
  %v8817 = vunpack.c.h.b16 %v8274
  %v8818 = vunpack.c.l.b16 %v8275
  %v8819 = vunpack.c.h.b16 %v8275
  %v8820 = vunpack.c.l.b16 %v8276
  %v8821 = vunpack.c.h.b16 %v8276
  %v8822 = vunpack.c.l.b16 %v8277
  %v8823 = vunpack.c.h.b16 %v8277
  %v8824 = vunpack.c.l.b16 %v8278
  %v8825 = vunpack.c.h.b16 %v8278
  %v8826 = vunpack.c.l.b16 %v8279
  %v8827 = vunpack.c.h.b16 %v8279
  %v8828 = vunpack.c.l.b16 %v8280
  %v8829 = vunpack.c.h.b16 %v8280
  %v8830 = vunpack.c.l.b16 %v8281
  %v8831 = vunpack.c.h.b16 %v8281
  %v8832 = vunpack.c.l.b16 %v8282
  %v8833 = vunpack.c.h.b16 %v8282
  %v8834 = vunpack.c.l.b16 %v8283
  %v8835 = vunpack.c.h.b16 %v8283
  %v8836 = vunpack.c.l.b16 %v8284
  %v8837 = vunpack.c.h.b16 %v8284
  %v8838 = vunpack.c.l.b16 %v8285
  %v8839 = vunpack.c.h.b16 %v8285
  %v8840 = vunpack.c.l.b16 %v8286
  %v8841 = vunpack.c.h.b16 %v8286
  %v8842 = vunpack.c.l.b16 %v8287
  %v8843 = vunpack.c.h.b16 %v8287
  %v8844 = vunpack.c.l.b16 %v8288
  %v8845 = vunpack.c.h.b16 %v8288
  %v8846 = vunpack.c.l.b16 %v8289
  %v8847 = vunpack.c.h.b16 %v8289
  %v8848 = vunpack.c.l.b16 %v8290
  %v8849 = vunpack.c.h.b16 %v8290
  %v8850 = vunpack.c.l.b16 %v8291
  %v8851 = vunpack.c.h.b16 %v8291
  %v8852 = vunpack.c.l.b16 %v8292
  %v8853 = vunpack.c.h.b16 %v8292
  %v8854 = vunpack.c.l.b16 %v8293
  %v8855 = vunpack.c.h.b16 %v8293
  %v8856 = vunpack.c.l.b16 %v8294
  %v8857 = vunpack.c.h.b16 %v8294
  %v8858 = vunpack.c.l.b16 %v8295
  %v8859 = vunpack.c.h.b16 %v8295
  %v8860 = vunpack.c.l.b16 %v8296
  %v8861 = vunpack.c.h.b16 %v8296
  %v8862 = vunpack.c.l.b16 %v8297
  %v8863 = vunpack.c.h.b16 %v8297
  %v8864 = vunpack.c.l.b16 %v8298
  %v8865 = vunpack.c.h.b16 %v8298
  %v8866 = vunpack.c.l.b16 %v8299
  %v8867 = vunpack.c.h.b16 %v8299
  %v8868 = vunpack.c.l.b16 %v8300
  %v8869 = vunpack.c.h.b16 %v8300
  %v8870 = vpack.c.b16 %v8776, %v8774
  %v8871 = vpack.c.b16 %v8777, %v8775
  %v8872 = vpack.c.b16 %v8780, %v8778
  %v8873 = vpack.c.b16 %v8781, %v8779
  %v8874 = vpack.c.b16 %v8784, %v8782
  %v8875 = vpack.c.b16 %v8785, %v8783
  %v8876 = vpack.c.b16 %v8788, %v8786
  %v8877 = vpack.c.b16 %v8789, %v8787
  %v8878 = vpack.c.b16 %v8792, %v8790
  %v8879 = vpack.c.b16 %v8793, %v8791
  %v8880 = vpack.c.b16 %v8796, %v8794
  %v8881 = vpack.c.b16 %v8797, %v8795
  %v8882 = vpack.c.b16 %v8800, %v8798
  %v8883 = vpack.c.b16 %v8801, %v8799
  %v8884 = vpack.c.b16 %v8804, %v8802
  %v8885 = vpack.c.b16 %v8805, %v8803
  %v8886 = vpack.c.b16 %v8808, %v8806
  %v8887 = vpack.c.b16 %v8809, %v8807
  %v8888 = vpack.c.b16 %v8812, %v8810
  %v8889 = vpack.c.b16 %v8813, %v8811
  %v8890 = vpack.c.b16 %v8816, %v8814
  %v8891 = vpack.c.b16 %v8817, %v8815
  %v8892 = vpack.c.b16 %v8820, %v8818
  %v8893 = vpack.c.b16 %v8821, %v8819
  %v8894 = vpack.c.b16 %v8824, %v8822
  %v8895 = vpack.c.b16 %v8825, %v8823
  %v8896 = vpack.c.b16 %v8828, %v8826
  %v8897 = vpack.c.b16 %v8829, %v8827
  %v8898 = vpack.c.b16 %v8832, %v8830
  %v8899 = vpack.c.b16 %v8833, %v8831
  %v8900 = vpack.c.b16 %v8836, %v8834
  %v8901 = vpack.c.b16 %v8837, %v8835
  %v8902 = vpack.c.b16 %v8840, %v8838
  %v8903 = vpack.c.b16 %v8841, %v8839
  %v8904 = vpack.c.b16 %v8844, %v8842
  %v8905 = vpack.c.b16 %v8845, %v8843
  %v8906 = vpack.c.b16 %v8848, %v8846
  %v8907 = vpack.c.b16 %v8849, %v8847
  %v8908 = vpack.c.b16 %v8852, %v8850
  %v8909 = vpack.c.b16 %v8853, %v8851
  %v8910 = vpack.c.b16 %v8856, %v8854
  %v8911 = vpack.c.b16 %v8857, %v8855
  %v8912 = vpack.c.b16 %v8860, %v8858
  %v8913 = vpack.c.b16 %v8861, %v8859
  %v8914 = vpack.c.b16 %v8864, %v8862
  %v8915 = vpack.c.b16 %v8865, %v8863
  %v8916 = vpack.c.b16 %v8868, %v8866
  %v8917 = vpack.c.b16 %v8869, %v8867
  %8966 = vmatprep.subr.bf16.mxu0 %v8885
  %8967 = vmatpush1.bf16.msra.mxu0 %v8884
  %8968 = vmatprep.subr.bf16.mxu0 %v8883
  %8969 = vmatpush1.bf16.msra.mxu0 %v8882
  %8970 = vmatprep.subr.bf16.mxu0 %v8881
  %8971 = vmatpush1.bf16.msra.mxu0 %v8880
  %8972 = vmatprep.subr.bf16.mxu0 %v8879
  %8973 = vmatpush1.bf16.msra.mxu0 %v8878
  %8974 = vmatprep.subr.bf16.mxu0 %v8877
  %8975 = vmatpush1.bf16.msra.mxu0 %v8876
  %8976 = vmatprep.subr.bf16.mxu0 %v8875
  %8977 = vmatpush1.bf16.msra.mxu0 %v8874
  %8978 = vmatprep.subr.bf16.mxu0 %v8873
  %8979 = vmatpush1.bf16.msra.mxu0 %v8872
  %8980 = vmatprep.subr.bf16.mxu0 %v8871
  %8981 = vmatpush1.bf16.msra.mxu0 %v8870
  %8982 = vmatprep.subr.bf16.mxu0 %v8901
  %8983 = vmatpush2.bf16.msra.mxu0 %v8900
  %8984 = vmatprep.subr.bf16.mxu0 %v8899
  %8985 = vmatpush2.bf16.msra.mxu0 %v8898
  %8986 = vmatprep.subr.bf16.mxu0 %v8897
  %8987 = vmatpush2.bf16.msra.mxu0 %v8896
  %8988 = vmatprep.subr.bf16.mxu0 %v8895
  %8989 = vmatpush2.bf16.msra.mxu0 %v8894
  %8990 = vmatprep.subr.bf16.mxu0 %v8893
  %8991 = vmatpush2.bf16.msra.mxu0 %v8892
  %8992 = vmatprep.subr.bf16.mxu0 %v8891
  %8993 = vmatpush2.bf16.msra.mxu0 %v8890
  %8994 = vmatprep.subr.bf16.mxu0 %v8889
  %8995 = vmatpush2.bf16.msra.mxu0 %v8888
  %8996 = vmatprep.subr.bf16.mxu0 %v8887
  %8997 = vmatpush2.bf16.msra.mxu0 %v8886
  %8998 = vmatprep.mubr.bf16.mxu0 %v8721
  %8999 = vmatmul.mubr.bf16.gmra.mxu0 %v8720
  %v9000 = vpop.f32.mrf.mxu0
  %v9001 = vadd.f32 %v8707, %v9000
  %v9002 = vpop.f32.mrf.mxu0
  %v9003 = vadd.f32 %v8709, %v9002
  %v9004 = vpop.f32.mrf.mxu0
  %v9005 = vadd.f32 %v8711, %v9004
  %v9006 = vpop.f32.mrf.mxu0
  %v9007 = vadd.f32 %v8713, %v9006
  %9008 = vdwg.mxu0
  %9009 = vmatprep.subr.bf16.mxu0 %v8917
  %9010 = vmatpush1.bf16.msra.mxu0 %v8916
  %9011 = vmatprep.subr.bf16.mxu0 %v8915
  %9012 = vmatpush1.bf16.msra.mxu0 %v8914
  %9013 = vmatprep.subr.bf16.mxu0 %v8913
  %9014 = vmatpush1.bf16.msra.mxu0 %v8912
  %9015 = vmatprep.subr.bf16.mxu0 %v8911
  %9016 = vmatpush1.bf16.msra.mxu0 %v8910
  %9017 = vmatprep.subr.bf16.mxu0 %v8909
  %9018 = vmatpush1.bf16.msra.mxu0 %v8908
  %9019 = vmatprep.subr.bf16.mxu0 %v8907
  %9020 = vmatpush1.bf16.msra.mxu0 %v8906
  %9021 = vmatprep.subr.bf16.mxu0 %v8905
  %9022 = vmatpush1.bf16.msra.mxu0 %v8904
  %9023 = vmatprep.subr.bf16.mxu0 %v8903
  %9024 = vmatpush1.bf16.msra.mxu0 %v8902
  %9025 = vmatprep.subr.bf16.mxu0 0
  %9026 = vmatpush2.bf16.msra.mxu0 0
  %9027 = vmatprep.subr.bf16.mxu0 0
  %9028 = vmatpush2.bf16.msra.mxu0 0
  %9029 = vmatprep.subr.bf16.mxu0 0
  %9030 = vmatpush2.bf16.msra.mxu0 0
  %9031 = vmatprep.subr.bf16.mxu0 0
  %9032 = vmatpush2.bf16.msra.mxu0 0
  %9033 = vmatprep.subr.bf16.mxu0 0
  %9034 = vmatpush2.bf16.msra.mxu0 0
  %9035 = vmatprep.subr.bf16.mxu0 0
  %9036 = vmatpush2.bf16.msra.mxu0 0
  %9037 = vmatprep.subr.bf16.mxu0 0
  %9038 = vmatpush2.bf16.msra.mxu0 0
  %9039 = vmatprep.subr.bf16.mxu0 0
  %9040 = vmatpush2.bf16.msra.mxu0 0
  %9041 = vmatprep.mubr.bf16.mxu0 0
  %9042 = vmatmul.mubr.bf16.gmra.mxu0 %v8722
  %v9043 = vpop.f32.mrf.mxu0
  %v9044 = vadd.f32 %v9001, %v9043
  %v9045 = vpop.f32.mrf.mxu0
  %v9046 = vadd.f32 %v9003, %v9045
  %v9047 = vpop.f32.mrf.mxu0
  %v9048 = vadd.f32 %v9005, %v9047
  %v9049 = vpop.f32.mrf.mxu0
  %v9050 = vadd.f32 %v9007, %v9049
  %9051 = vdwg.mxu0
  %v9052 = vld [vmem:[#allocation3] sm:$0xee]
  %v9053 = vld [vmem:[#allocation3 + $0x8] sm:$0xe]
  %s9054 = scalar_lea.vmem %s6, 768
  %v9055 = vld [vmem:[%s9054] sm:$0xff]
  %v9056 = vld [vmem:[%s9054 + $0x8] sm:$0xff]
  %v9057 = vld [vmem:[%s9054 + $0x10] sm:$0xff]
  %v9058 = vld [vmem:[%s9054 + $0x18] sm:$0xff]
  %v9059 = vld [vmem:[%s9054 + $0x20] sm:$0xff]
  %v9060 = vld [vmem:[%s9054 + $0x28] sm:$0xff]
  %v9061 = vld [vmem:[%s9054 + $0x30] sm:$0xff]
  %v9062 = vld [vmem:[%s9054 + $0x38] sm:$0xff]
  %v9063 = vld [vmem:[%s9054 + $0x40] sm:$0xff]
  %v9064 = vld [vmem:[%s9054 + $0x48] sm:$0xff]
  %v9065 = vld [vmem:[%s9054 + $0x50] sm:$0xff]
  %v9066 = vld [vmem:[%s9054 + $0x58] sm:$0xff]
  %v9067 = vld [vmem:[%s9054 + $0x60] sm:$0xff]
  %v9068 = vld [vmem:[%s9054 + $0x68] sm:$0xff]
  %v9069 = vld [vmem:[%s9054 + $0x70] sm:$0xff]
  %v9070 = vld [vmem:[%s9054 + $0x78] sm:$0xff]
  %v9071 = vld [vmem:[%s9054 + $0x80] sm:$0xff]
  %v9072 = vld [vmem:[%s9054 + $0x88] sm:$0xff]
  %v9073 = vld [vmem:[%s9054 + $0x90] sm:$0xff]
  %v9074 = vld [vmem:[%s9054 + $0x98] sm:$0xff]
  %v9075 = vld [vmem:[%s9054 + $0xa0] sm:$0xff]
  %v9076 = vld [vmem:[%s9054 + $0xa8] sm:$0xff]
  %v9077 = vld [vmem:[%s9054 + $0xb0] sm:$0xff]
  %v9078 = vld [vmem:[%s9054 + $0xb8] sm:$0xff]
  %v9079 = vld [vmem:[%s9054 + $0xc0] sm:$0xff]
  %v9080 = vld [vmem:[%s9054 + $0xc8] sm:$0xff]
  %v9081 = vld [vmem:[%s9054 + $0xd0] sm:$0xff]
  %v9082 = vld [vmem:[%s9054 + $0xd8] sm:$0xff]
  %v9083 = vld [vmem:[%s9054 + $0xe0] sm:$0xff]
  %v9084 = vld [vmem:[%s9054 + $0xe8] sm:$0xff]
  %v9085 = vld [vmem:[%s9054 + $0xf0] sm:$0xff]
  %v9086 = vld [vmem:[%s9054 + $0xf8] sm:$0xff]
  %v9087 = vld [vmem:[%s9054 + $0x100] sm:$0xff]
  %v9088 = vld [vmem:[%s9054 + $0x108] sm:$0xff]
  %v9089 = vld [vmem:[%s9054 + $0x110] sm:$0xff]
  %v9090 = vld [vmem:[%s9054 + $0x118] sm:$0xff]
  %v9091 = vld [vmem:[%s9054 + $0x120] sm:$0xff]
  %v9092 = vld [vmem:[%s9054 + $0x128] sm:$0xff]
  %v9093 = vld [vmem:[%s9054 + $0x130] sm:$0xff]
  %v9094 = vld [vmem:[%s9054 + $0x138] sm:$0xff]
  %v9095 = vld [vmem:[%s9054 + $0x140] sm:$0xff]
  %v9096 = vld [vmem:[%s9054 + $0x148] sm:$0xff]
  %v9097 = vld [vmem:[%s9054 + $0x150] sm:$0xff]
  %v9098 = vld [vmem:[%s9054 + $0x158] sm:$0xff]
  %v9099 = vld [vmem:[%s9054 + $0x160] sm:$0xff]
  %v9100 = vld [vmem:[%s9054 + $0x168] sm:$0xff]
  %v9101 = vld [vmem:[%s9054 + $0x170] sm:$0xff]
  %v9102 = vld [vmem:[%s9054 + $0x178] sm:$0xff]
  %v9105 = vunpack.c.l.b16 %v9052
  %v9106 = vunpack.c.h.b16 %v9052
  %v9107 = vunpack.c.l.b16 %v9053
  %v9108 = vpack.c.b16 %v8359, %v9105
  %v9109 = vpack.c.b16 %v8360, %v9106
  %v9110 = vpack.c.b16 %v8361, %v9107
  %v9111 = vrot.slane %v9108, 1
  %v9112 = vrot.slane %v9109, 1
  %v9113 = vrot.slane %v9110, 1
  %v9165 = vunpack.c.l.b16 %v9055
  %v9166 = vunpack.c.h.b16 %v9055
  %v9167 = vunpack.c.l.b16 %v9056
  %v9168 = vunpack.c.h.b16 %v9056
  %v9169 = vunpack.c.l.b16 %v9057
  %v9170 = vunpack.c.h.b16 %v9057
  %v9171 = vunpack.c.l.b16 %v9058
  %v9172 = vunpack.c.h.b16 %v9058
  %v9173 = vunpack.c.l.b16 %v9059
  %v9174 = vunpack.c.h.b16 %v9059
  %v9175 = vunpack.c.l.b16 %v9060
  %v9176 = vunpack.c.h.b16 %v9060
  %v9177 = vunpack.c.l.b16 %v9061
  %v9178 = vunpack.c.h.b16 %v9061
  %v9179 = vunpack.c.l.b16 %v9062
  %v9180 = vunpack.c.h.b16 %v9062
  %v9181 = vunpack.c.l.b16 %v9063
  %v9182 = vunpack.c.h.b16 %v9063
  %v9183 = vunpack.c.l.b16 %v9064
  %v9184 = vunpack.c.h.b16 %v9064
  %v9185 = vunpack.c.l.b16 %v9065
  %v9186 = vunpack.c.h.b16 %v9065
  %v9187 = vunpack.c.l.b16 %v9066
  %v9188 = vunpack.c.h.b16 %v9066
  %v9189 = vunpack.c.l.b16 %v9067
  %v9190 = vunpack.c.h.b16 %v9067
  %v9191 = vunpack.c.l.b16 %v9068
  %v9192 = vunpack.c.h.b16 %v9068
  %v9193 = vunpack.c.l.b16 %v9069
  %v9194 = vunpack.c.h.b16 %v9069
  %v9195 = vunpack.c.l.b16 %v9070
  %v9196 = vunpack.c.h.b16 %v9070
  %v9197 = vunpack.c.l.b16 %v9071
  %v9198 = vunpack.c.h.b16 %v9071
  %v9199 = vunpack.c.l.b16 %v9072
  %v9200 = vunpack.c.h.b16 %v9072
  %v9201 = vunpack.c.l.b16 %v9073
  %v9202 = vunpack.c.h.b16 %v9073
  %v9203 = vunpack.c.l.b16 %v9074
  %v9204 = vunpack.c.h.b16 %v9074
  %v9205 = vunpack.c.l.b16 %v9075
  %v9206 = vunpack.c.h.b16 %v9075
  %v9207 = vunpack.c.l.b16 %v9076
  %v9208 = vunpack.c.h.b16 %v9076
  %v9209 = vunpack.c.l.b16 %v9077
  %v9210 = vunpack.c.h.b16 %v9077
  %v9211 = vunpack.c.l.b16 %v9078
  %v9212 = vunpack.c.h.b16 %v9078
  %v9213 = vunpack.c.l.b16 %v9079
  %v9214 = vunpack.c.h.b16 %v9079
  %v9215 = vunpack.c.l.b16 %v9080
  %v9216 = vunpack.c.h.b16 %v9080
  %v9217 = vunpack.c.l.b16 %v9081
  %v9218 = vunpack.c.h.b16 %v9081
  %v9219 = vunpack.c.l.b16 %v9082
  %v9220 = vunpack.c.h.b16 %v9082
  %v9221 = vunpack.c.l.b16 %v9083
  %v9222 = vunpack.c.h.b16 %v9083
  %v9223 = vunpack.c.l.b16 %v9084
  %v9224 = vunpack.c.h.b16 %v9084
  %v9225 = vunpack.c.l.b16 %v9085
  %v9226 = vunpack.c.h.b16 %v9085
  %v9227 = vunpack.c.l.b16 %v9086
  %v9228 = vunpack.c.h.b16 %v9086
  %v9229 = vunpack.c.l.b16 %v9087
  %v9230 = vunpack.c.h.b16 %v9087
  %v9231 = vunpack.c.l.b16 %v9088
  %v9232 = vunpack.c.h.b16 %v9088
  %v9233 = vunpack.c.l.b16 %v9089
  %v9234 = vunpack.c.h.b16 %v9089
  %v9235 = vunpack.c.l.b16 %v9090
  %v9236 = vunpack.c.h.b16 %v9090
  %v9237 = vunpack.c.l.b16 %v9091
  %v9238 = vunpack.c.h.b16 %v9091
  %v9239 = vunpack.c.l.b16 %v9092
  %v9240 = vunpack.c.h.b16 %v9092
  %v9241 = vunpack.c.l.b16 %v9093
  %v9242 = vunpack.c.h.b16 %v9093
  %v9243 = vunpack.c.l.b16 %v9094
  %v9244 = vunpack.c.h.b16 %v9094
  %v9245 = vunpack.c.l.b16 %v9095
  %v9246 = vunpack.c.h.b16 %v9095
  %v9247 = vunpack.c.l.b16 %v9096
  %v9248 = vunpack.c.h.b16 %v9096
  %v9249 = vunpack.c.l.b16 %v9097
  %v9250 = vunpack.c.h.b16 %v9097
  %v9251 = vunpack.c.l.b16 %v9098
  %v9252 = vunpack.c.h.b16 %v9098
  %v9253 = vunpack.c.l.b16 %v9099
  %v9254 = vunpack.c.h.b16 %v9099
  %v9255 = vunpack.c.l.b16 %v9100
  %v9256 = vunpack.c.h.b16 %v9100
  %v9257 = vunpack.c.l.b16 %v9101
  %v9258 = vunpack.c.h.b16 %v9101
  %v9259 = vunpack.c.l.b16 %v9102
  %v9260 = vunpack.c.h.b16 %v9102
  %v9261 = vpack.c.b16 %v9167, %v9165
  %v9262 = vpack.c.b16 %v9168, %v9166
  %v9263 = vpack.c.b16 %v9171, %v9169
  %v9264 = vpack.c.b16 %v9172, %v9170
  %v9265 = vpack.c.b16 %v9175, %v9173
  %v9266 = vpack.c.b16 %v9176, %v9174
  %v9267 = vpack.c.b16 %v9179, %v9177
  %v9268 = vpack.c.b16 %v9180, %v9178
  %v9269 = vpack.c.b16 %v9183, %v9181
  %v9270 = vpack.c.b16 %v9184, %v9182
  %v9271 = vpack.c.b16 %v9187, %v9185
  %v9272 = vpack.c.b16 %v9188, %v9186
  %v9273 = vpack.c.b16 %v9191, %v9189
  %v9274 = vpack.c.b16 %v9192, %v9190
  %v9275 = vpack.c.b16 %v9195, %v9193
  %v9276 = vpack.c.b16 %v9196, %v9194
  %v9277 = vpack.c.b16 %v9199, %v9197
  %v9278 = vpack.c.b16 %v9200, %v9198
  %v9279 = vpack.c.b16 %v9203, %v9201
  %v9280 = vpack.c.b16 %v9204, %v9202
  %v9281 = vpack.c.b16 %v9207, %v9205
  %v9282 = vpack.c.b16 %v9208, %v9206
  %v9283 = vpack.c.b16 %v9211, %v9209
  %v9284 = vpack.c.b16 %v9212, %v9210
  %v9285 = vpack.c.b16 %v9215, %v9213
  %v9286 = vpack.c.b16 %v9216, %v9214
  %v9287 = vpack.c.b16 %v9219, %v9217
  %v9288 = vpack.c.b16 %v9220, %v9218
  %v9289 = vpack.c.b16 %v9223, %v9221
  %v9290 = vpack.c.b16 %v9224, %v9222
  %v9291 = vpack.c.b16 %v9227, %v9225
  %v9292 = vpack.c.b16 %v9228, %v9226
  %v9293 = vpack.c.b16 %v9231, %v9229
  %v9294 = vpack.c.b16 %v9232, %v9230
  %v9295 = vpack.c.b16 %v9235, %v9233
  %v9296 = vpack.c.b16 %v9236, %v9234
  %v9297 = vpack.c.b16 %v9239, %v9237
  %v9298 = vpack.c.b16 %v9240, %v9238
  %v9299 = vpack.c.b16 %v9243, %v9241
  %v9300 = vpack.c.b16 %v9244, %v9242
  %v9301 = vpack.c.b16 %v9247, %v9245
  %v9302 = vpack.c.b16 %v9248, %v9246
  %v9303 = vpack.c.b16 %v9251, %v9249
  %v9304 = vpack.c.b16 %v9252, %v9250
  %v9305 = vpack.c.b16 %v9255, %v9253
  %v9306 = vpack.c.b16 %v9256, %v9254
  %v9307 = vpack.c.b16 %v9259, %v9257
  %v9308 = vpack.c.b16 %v9260, %v9258
  %9357 = vmatprep.subr.bf16.mxu0 %v9276
  %9358 = vmatpush1.bf16.msra.mxu0 %v9275
  %9359 = vmatprep.subr.bf16.mxu0 %v9274
  %9360 = vmatpush1.bf16.msra.mxu0 %v9273
  %9361 = vmatprep.subr.bf16.mxu0 %v9272
  %9362 = vmatpush1.bf16.msra.mxu0 %v9271
  %9363 = vmatprep.subr.bf16.mxu0 %v9270
  %9364 = vmatpush1.bf16.msra.mxu0 %v9269
  %9365 = vmatprep.subr.bf16.mxu0 %v9268
  %9366 = vmatpush1.bf16.msra.mxu0 %v9267
  %9367 = vmatprep.subr.bf16.mxu0 %v9266
  %9368 = vmatpush1.bf16.msra.mxu0 %v9265
  %9369 = vmatprep.subr.bf16.mxu0 %v9264
  %9370 = vmatpush1.bf16.msra.mxu0 %v9263
  %9371 = vmatprep.subr.bf16.mxu0 %v9262
  %9372 = vmatpush1.bf16.msra.mxu0 %v9261
  %9373 = vmatprep.subr.bf16.mxu0 %v9292
  %9374 = vmatpush2.bf16.msra.mxu0 %v9291
  %9375 = vmatprep.subr.bf16.mxu0 %v9290
  %9376 = vmatpush2.bf16.msra.mxu0 %v9289
  %9377 = vmatprep.subr.bf16.mxu0 %v9288
  %9378 = vmatpush2.bf16.msra.mxu0 %v9287
  %9379 = vmatprep.subr.bf16.mxu0 %v9286
  %9380 = vmatpush2.bf16.msra.mxu0 %v9285
  %9381 = vmatprep.subr.bf16.mxu0 %v9284
  %9382 = vmatpush2.bf16.msra.mxu0 %v9283
  %9383 = vmatprep.subr.bf16.mxu0 %v9282
  %9384 = vmatpush2.bf16.msra.mxu0 %v9281
  %9385 = vmatprep.subr.bf16.mxu0 %v9280
  %9386 = vmatpush2.bf16.msra.mxu0 %v9279
  %9387 = vmatprep.subr.bf16.mxu0 %v9278
  %9388 = vmatpush2.bf16.msra.mxu0 %v9277
  %9389 = vmatprep.mubr.bf16.mxu0 %v9112
  %9390 = vmatmul.mubr.bf16.gmra.mxu0 %v9111
  %v9391 = vpop.f32.mrf.mxu0
  %v9392 = vadd.f32 0.0, %v9391
  %v9393 = vpop.f32.mrf.mxu0
  %v9394 = vadd.f32 0.0, %v9393
  %v9395 = vpop.f32.mrf.mxu0
  %v9396 = vadd.f32 0.0, %v9395
  %v9397 = vpop.f32.mrf.mxu0
  %v9398 = vadd.f32 0.0, %v9397
  %9399 = vdwg.mxu0
  %9400 = vmatprep.subr.bf16.mxu0 %v9308
  %9401 = vmatpush1.bf16.msra.mxu0 %v9307
  %9402 = vmatprep.subr.bf16.mxu0 %v9306
  %9403 = vmatpush1.bf16.msra.mxu0 %v9305
  %9404 = vmatprep.subr.bf16.mxu0 %v9304
  %9405 = vmatpush1.bf16.msra.mxu0 %v9303
  %9406 = vmatprep.subr.bf16.mxu0 %v9302
  %9407 = vmatpush1.bf16.msra.mxu0 %v9301
  %9408 = vmatprep.subr.bf16.mxu0 %v9300
  %9409 = vmatpush1.bf16.msra.mxu0 %v9299
  %9410 = vmatprep.subr.bf16.mxu0 %v9298
  %9411 = vmatpush1.bf16.msra.mxu0 %v9297
  %9412 = vmatprep.subr.bf16.mxu0 %v9296
  %9413 = vmatpush1.bf16.msra.mxu0 %v9295
  %9414 = vmatprep.subr.bf16.mxu0 %v9294
  %9415 = vmatpush1.bf16.msra.mxu0 %v9293
  %9416 = vmatprep.subr.bf16.mxu0 0
  %9417 = vmatpush2.bf16.msra.mxu0 0
  %9418 = vmatprep.subr.bf16.mxu0 0
  %9419 = vmatpush2.bf16.msra.mxu0 0
  %9420 = vmatprep.subr.bf16.mxu0 0
  %9421 = vmatpush2.bf16.msra.mxu0 0
  %9422 = vmatprep.subr.bf16.mxu0 0
  %9423 = vmatpush2.bf16.msra.mxu0 0
  %9424 = vmatprep.subr.bf16.mxu0 0
  %9425 = vmatpush2.bf16.msra.mxu0 0
  %9426 = vmatprep.subr.bf16.mxu0 0
  %9427 = vmatpush2.bf16.msra.mxu0 0
  %9428 = vmatprep.subr.bf16.mxu0 0
  %9429 = vmatpush2.bf16.msra.mxu0 0
  %9430 = vmatprep.subr.bf16.mxu0 0
  %9431 = vmatpush2.bf16.msra.mxu0 0
  %9432 = vmatprep.mubr.bf16.mxu0 0
  %9433 = vmatmul.mubr.bf16.gmra.mxu0 %v9113
  %v9434 = vpop.f32.mrf.mxu0
  %v9435 = vadd.f32 %v9392, %v9434
  %v9436 = vpop.f32.mrf.mxu0
  %v9437 = vadd.f32 %v9394, %v9436
  %v9438 = vpop.f32.mrf.mxu0
  %v9439 = vadd.f32 %v9396, %v9438
  %v9440 = vpop.f32.mrf.mxu0
  %v9441 = vadd.f32 %v9398, %v9440
  %9442 = vdwg.mxu0
  %v9443 = vadd.f32 %v9044, %v9435
  %v9444 = vadd.f32 %v9046, %v9437
  %v9445 = vadd.f32 %v9048, %v9439
  %v9446 = vadd.f32 %v9050, %v9441
  %v9448 = vlaneseq
  %v9449 = vshrl.u32 %v9448, 7
  %v9450 = vsub.s32 0, %v9449
  %v9451 = vrot.slane %v229, %v9450
  %v9452 = vlaneseq
  %v9453 = vshrl.u32 %v9452, 7
  %v9454 = vsub.s32 1, %v9453
  %v9455 = vrot.slane %v229, %v9454
  %v9458 = vadd.f32 %v9443, %v9451
  %v9459 = vadd.f32 %v9444, %v9455
  %v9460 = vadd.f32 %v9445, %v9451
  %v9461 = vadd.f32 %v9446, %v9455
  %v9462 = vtanh.pop %v9458
  %v9463 = vtanh.pop %v9459
  %v9464 = vtanh.pop %v9460
  %v9465 = vtanh.pop %v9461
  %9466 = vst [vmem:[#allocation4] sm:$0xff] %v9462
  %9467 = vst [vmem:[#allocation4 + $0x8] sm:$0xff] %v9463
  %9468 = vst [vmem:[#allocation4 + $0x10] sm:$0xf] %v9464
  %9469 = vst [vmem:[#allocation4 + $0x18] sm:$0xf] %v9465
  %v9470 = vld [vmem:[#allocation4] sm:$0xf]
  %9472 = vrot.lane.b32.xlu0 %v9470, 64
  %v9473 = vpop.permute.xlu0 %9472
  %v9475 = vmax.f32 %v9470, %v9473
  %v9476 = vld [vmem:[#allocation4 + $0x8] sm:$0xf]
  %9478 = vrot.lane.b32.xlu0 %v9476, 64
  %v9479 = vpop.permute.xlu0 %9478
  %v9481 = vmax.f32 %v9476, %v9479
  %v9482 = vmax.f32 %v9475, %v9481
  %vm9483 = vcmask 519168
  %v9484 = vsel %vm9483, %v9482, -inf
  %v9485 = vrot.slane %v9484, 4
  %v9486 = vmax.f32 %v9484, %v9485
  %v9487 = vrot.slane %v9486, 2
  %v9488 = vmax.f32 %v9486, %v9487
  %v9489 = vrot.slane %v9488, 1
  %v9490 = vmax.f32 %v9488, %v9489
  %vm9491 = vcmask 516096
  %9492 = vst.msk [vmem:[#allocation5] sm:$0x1] %vm9491, %v9490
  %v9493 = vld [vmem:[#allocation4 + $0x10] sm:$0xf]
  %9495 = vrot.lane.b32.xlu0 %v9493, 64
  %v9496 = vpop.permute.xlu0 %9495
  %v9498 = vmax.f32 %v9493, %v9496
  %v9499 = vld [vmem:[#allocation4 + $0x18] sm:$0xf]
  %9501 = vrot.lane.b32.xlu0 %v9499, 64
  %v9502 = vpop.permute.xlu0 %9501
  %v9504 = vmax.f32 %v9499, %v9502
  %v9505 = vmax.f32 %v9498, %v9504
  %v9506 = vsel %vm9483, %v9505, -inf
  %v9507 = vrot.slane %v9506, 4
  %v9508 = vmax.f32 %v9506, %v9507
  %v9509 = vrot.slane %v9508, 2
  %v9510 = vmax.f32 %v9508, %v9509
  %v9511 = vrot.slane %v9510, 1
  %v9512 = vmax.f32 %v9510, %v9511
  %9513 = vst.msk [vmem:[#allocation5 + $0x1] sm:$0x1] %vm9491, %v9512
  %v9514 = vld [vmem:[#allocation5] sm:$0x3]
  %v9515 = vld [vmem:[%s12] sm:$0xff]
  %v9516 = vld [vmem:[%s12 + $0x8] sm:$0xff]
  %v9517 = vld [vmem:[%s12 + $0x10] sm:$0xff]
  %v9518 = vld [vmem:[%s12 + $0x18] sm:$0xff]
  %v9519 = vld [vmem:[%s12 + $0x20] sm:$0xff]
  %v9520 = vld [vmem:[%s12 + $0x28] sm:$0xff]
  %v9521 = vld [vmem:[%s12 + $0x30] sm:$0xff]
  %v9522 = vld [vmem:[%s12 + $0x38] sm:$0xff]
  %v9523 = vld [vmem:[%s13] sm:$0xff]
  %v9524 = vld [vmem:[%s13 + $0x8] sm:$0xff]
  %v9526 = vsel %vm152, %v226, 0
  %9528 = vmatprep.subr.mxu0 0.0
  %9529 = vmatpush1.msra.mxu0 0.0
  %9530 = vmatprep.subr.mxu0 0.0
  %9531 = vmatpush1.msra.mxu0 0.0
  %9532 = vmatprep.subr.mxu0 0.0
  %9533 = vmatpush1.msra.mxu0 0.0
  %9534 = vmatprep.subr.mxu0 0.0
  %9535 = vmatpush1.msra.mxu0 0.0
  %9536 = vmatprep.subr.mxu0 0.0
  %9537 = vmatpush1.msra.mxu0 0.0
  %9538 = vmatprep.subr.mxu0 0.0
  %9539 = vmatpush1.msra.mxu0 0.0
  %9540 = vmatprep.subr.mxu0 0.0
  %9541 = vmatpush1.msra.mxu0 0.0
  %9542 = vmatprep.subr.mxu0 0.0
  %9543 = vmatpush1.msra.mxu0 0.0
  %9544 = vmatprep.subr.mxu0 0.0
  %9545 = vmatpush1.msra.mxu0 0.0
  %9546 = vmatprep.subr.mxu0 0.0
  %9547 = vmatpush1.msra.mxu0 0.0
  %9548 = vmatprep.subr.mxu0 0.0
  %9549 = vmatpush1.msra.mxu0 0.0
  %9550 = vmatprep.subr.mxu0 0.0
  %9551 = vmatpush1.msra.mxu0 0.0
  %9552 = vmatprep.subr.mxu0 0.0
  %9553 = vmatpush1.msra.mxu0 0.0
  %9554 = vmatprep.subr.mxu0 0.0
  %9555 = vmatpush1.msra.mxu0 0.0
  %9556 = vmatprep.subr.mxu0 0.0
  %9557 = vmatpush1.msra.mxu0 %v9524
  %9558 = vmatprep.subr.mxu0 0.0
  %9559 = vmatpush1.msra.mxu0 %v9523
  %9560 = vmatprep.subr.mxu0 0.0
  %9561 = vmatpush2.msra.mxu0 0.0
  %9562 = vmatprep.subr.mxu0 0.0
  %9563 = vmatpush2.msra.mxu0 0.0
  %9564 = vmatprep.subr.mxu0 0.0
  %9565 = vmatpush2.msra.mxu0 0.0
  %9566 = vmatprep.subr.mxu0 0.0
  %9567 = vmatpush2.msra.mxu0 0.0
  %9568 = vmatprep.subr.mxu0 0.0
  %9569 = vmatpush2.msra.mxu0 0.0
  %9570 = vmatprep.subr.mxu0 0.0
  %9571 = vmatpush2.msra.mxu0 0.0
  %9572 = vmatprep.subr.mxu0 0.0
  %9573 = vmatpush2.msra.mxu0 0.0
  %9574 = vmatprep.subr.mxu0 0.0
  %9575 = vmatpush2.msra.mxu0 0.0
  %9576 = vmatprep.subr.mxu0 0.0
  %9577 = vmatpush2.msra.mxu0 0.0
  %9578 = vmatprep.subr.mxu0 0.0
  %9579 = vmatpush2.msra.mxu0 0.0
  %9580 = vmatprep.subr.mxu0 0.0
  %9581 = vmatpush2.msra.mxu0 0.0
  %9582 = vmatprep.subr.mxu0 0.0
  %9583 = vmatpush2.msra.mxu0 0.0
  %9584 = vmatprep.subr.mxu0 0.0
  %9585 = vmatpush2.msra.mxu0 0.0
  %9586 = vmatprep.subr.mxu0 0.0
  %9587 = vmatpush2.msra.mxu0 0.0
  %9588 = vmatprep.subr.mxu0 0.0
  %9589 = vmatpush2.msra.mxu0 0.0
  %9590 = vmatprep.subr.mxu0 0.0
  %9591 = vmatpush2.msra.mxu0 0.0
  %9592 = vmatprep.mubr.f32.mxu0 0.0
  %9593 = vmatmul.mubr.f32.gmra.mxu0 %v9526
  %v9594 = vpop.f32.mrf.mxu0
  %v9595 = vadd.f32 0.0, %v9594
  %v9596 = vpop.f32.mrf.mxu0
  %9597 = vdwg.mxu0
  %vm9598 = vcmask 523264
  %v9600 = vsel %vm9598, %v9514, 0
  %9602 = vmatprep.subr.mxu0 0.0
  %9603 = vmatpush1.msra.mxu0 0.0
  %9604 = vmatprep.subr.mxu0 0.0
  %9605 = vmatpush1.msra.mxu0 0.0
  %9606 = vmatprep.subr.mxu0 0.0
  %9607 = vmatpush1.msra.mxu0 0.0
  %9608 = vmatprep.subr.mxu0 0.0
  %9609 = vmatpush1.msra.mxu0 0.0
  %9610 = vmatprep.subr.mxu0 0.0
  %9611 = vmatpush1.msra.mxu0 0.0
  %9612 = vmatprep.subr.mxu0 0.0
  %9613 = vmatpush1.msra.mxu0 0.0
  %9614 = vmatprep.subr.mxu0 0.0
  %9615 = vmatpush1.msra.mxu0 0.0
  %9616 = vmatprep.subr.mxu0 0.0
  %9617 = vmatpush1.msra.mxu0 0.0
  %9618 = vmatprep.subr.mxu0 0.0
  %9619 = vmatpush1.msra.mxu0 %v9522
  %9620 = vmatprep.subr.mxu0 0.0
  %9621 = vmatpush1.msra.mxu0 %v9521
  %9622 = vmatprep.subr.mxu0 0.0
  %9623 = vmatpush1.msra.mxu0 %v9520
  %9624 = vmatprep.subr.mxu0 0.0
  %9625 = vmatpush1.msra.mxu0 %v9519
  %9626 = vmatprep.subr.mxu0 0.0
  %9627 = vmatpush1.msra.mxu0 %v9518
  %9628 = vmatprep.subr.mxu0 0.0
  %9629 = vmatpush1.msra.mxu0 %v9517
  %9630 = vmatprep.subr.mxu0 0.0
  %9631 = vmatpush1.msra.mxu0 %v9516
  %9632 = vmatprep.subr.mxu0 0.0
  %9633 = vmatpush1.msra.mxu0 %v9515
  %9634 = vmatprep.subr.mxu0 0.0
  %9635 = vmatpush2.msra.mxu0 0.0
  %9636 = vmatprep.subr.mxu0 0.0
  %9637 = vmatpush2.msra.mxu0 0.0
  %9638 = vmatprep.subr.mxu0 0.0
  %9639 = vmatpush2.msra.mxu0 0.0
  %9640 = vmatprep.subr.mxu0 0.0
  %9641 = vmatpush2.msra.mxu0 0.0
  %9642 = vmatprep.subr.mxu0 0.0
  %9643 = vmatpush2.msra.mxu0 0.0
  %9644 = vmatprep.subr.mxu0 0.0
  %9645 = vmatpush2.msra.mxu0 0.0
  %9646 = vmatprep.subr.mxu0 0.0
  %9647 = vmatpush2.msra.mxu0 0.0
  %9648 = vmatprep.subr.mxu0 0.0
  %9649 = vmatpush2.msra.mxu0 0.0
  %9650 = vmatprep.subr.mxu0 0.0
  %9651 = vmatpush2.msra.mxu0 0.0
  %9652 = vmatprep.subr.mxu0 0.0
  %9653 = vmatpush2.msra.mxu0 0.0
  %9654 = vmatprep.subr.mxu0 0.0
  %9655 = vmatpush2.msra.mxu0 0.0
  %9656 = vmatprep.subr.mxu0 0.0
  %9657 = vmatpush2.msra.mxu0 0.0
  %9658 = vmatprep.subr.mxu0 0.0
  %9659 = vmatpush2.msra.mxu0 0.0
  %9660 = vmatprep.subr.mxu0 0.0
  %9661 = vmatpush2.msra.mxu0 0.0
  %9662 = vmatprep.subr.mxu0 0.0
  %9663 = vmatpush2.msra.mxu0 0.0
  %9664 = vmatprep.subr.mxu0 0.0
  %9665 = vmatpush2.msra.mxu0 0.0
  %9666 = vmatprep.mubr.f32.mxu0 0.0
  %9667 = vmatmul.mubr.f32.gmra.mxu0 %v9600
  %v9668 = vpop.f32.mrf.mxu0
  %v9669 = vadd.f32 %v9595, %v9668
  %v9670 = vpop.f32.mrf.mxu0
  %9671 = vdwg.mxu0
  %v9672 = vld [vmem:[%s14] sm:$0x1]
  %v9674 = vlaneseq
  %v9675 = vshrl.u32 %v9674, 7
  %v9676 = vsub.s32 0, %v9675
  %v9677 = vrot.slane %v9672, %v9676
  %v9679 = vadd.f32 %v9669, %v9677
  %v9680 = vtanh.pop %v9679
  %v9681 = vld [vmem:[%s15] sm:$0xff]
  %v9682 = vld [vmem:[%s15 + $0x8] sm:$0xff]
  %v9683 = vld [vmem:[%s15 + $0x10] sm:$0xff]
  %v9684 = vld [vmem:[%s15 + $0x18] sm:$0xff]
  %v9685 = vld [vmem:[%s15 + $0x20] sm:$0xff]
  %v9686 = vld [vmem:[%s15 + $0x28] sm:$0xff]
  %v9687 = vld [vmem:[%s15 + $0x30] sm:$0xff]
  %v9688 = vld [vmem:[%s15 + $0x38] sm:$0xff]
  %v9689 = vld [vmem:[#allocation6] sm:$0x1]
  %v9691 = vlaneseq
  %v9692 = vshrl.u32 %v9691, 7
  %v9693 = vsub.s32 0, %v9692
  %v9694 = vrot.slane %v9689, %v9693
  %v9697 = vsel %vm9598, %v9680, 0
  %9699 = vmatprep.subr.mxu0 0.0
  %9700 = vmatpush1.msra.mxu0 0.0
  %9701 = vmatprep.subr.mxu0 0.0
  %9702 = vmatpush1.msra.mxu0 0.0
  %9703 = vmatprep.subr.mxu0 0.0
  %9704 = vmatpush1.msra.mxu0 0.0
  %9705 = vmatprep.subr.mxu0 0.0
  %9706 = vmatpush1.msra.mxu0 0.0
  %9707 = vmatprep.subr.mxu0 0.0
  %9708 = vmatpush1.msra.mxu0 0.0
  %9709 = vmatprep.subr.mxu0 0.0
  %9710 = vmatpush1.msra.mxu0 0.0
  %9711 = vmatprep.subr.mxu0 0.0
  %9712 = vmatpush1.msra.mxu0 0.0
  %9713 = vmatprep.subr.mxu0 0.0
  %9714 = vmatpush1.msra.mxu0 0.0
  %9715 = vmatprep.subr.mxu0 0.0
  %9716 = vmatpush1.msra.mxu0 %v9688
  %9717 = vmatprep.subr.mxu0 0.0
  %9718 = vmatpush1.msra.mxu0 %v9687
  %9719 = vmatprep.subr.mxu0 0.0
  %9720 = vmatpush1.msra.mxu0 %v9686
  %9721 = vmatprep.subr.mxu0 0.0
  %9722 = vmatpush1.msra.mxu0 %v9685
  %9723 = vmatprep.subr.mxu0 0.0
  %9724 = vmatpush1.msra.mxu0 %v9684
  %9725 = vmatprep.subr.mxu0 0.0
  %9726 = vmatpush1.msra.mxu0 %v9683
  %9727 = vmatprep.subr.mxu0 0.0
  %9728 = vmatpush1.msra.mxu0 %v9682
  %9729 = vmatprep.subr.mxu0 0.0
  %9730 = vmatpush1.msra.mxu0 %v9681
  %9731 = vmatprep.subr.mxu0 0.0
  %9732 = vmatpush2.msra.mxu0 0.0
  %9733 = vmatprep.subr.mxu0 0.0
  %9734 = vmatpush2.msra.mxu0 0.0
  %9735 = vmatprep.subr.mxu0 0.0
  %9736 = vmatpush2.msra.mxu0 0.0
  %9737 = vmatprep.subr.mxu0 0.0
  %9738 = vmatpush2.msra.mxu0 0.0
  %9739 = vmatprep.subr.mxu0 0.0
  %9740 = vmatpush2.msra.mxu0 0.0
  %9741 = vmatprep.subr.mxu0 0.0
  %9742 = vmatpush2.msra.mxu0 0.0
  %9743 = vmatprep.subr.mxu0 0.0
  %9744 = vmatpush2.msra.mxu0 0.0
  %9745 = vmatprep.subr.mxu0 0.0
  %9746 = vmatpush2.msra.mxu0 0.0
  %9747 = vmatprep.subr.mxu0 0.0
  %9748 = vmatpush2.msra.mxu0 0.0
  %9749 = vmatprep.subr.mxu0 0.0
  %9750 = vmatpush2.msra.mxu0 0.0
  %9751 = vmatprep.subr.mxu0 0.0
  %9752 = vmatpush2.msra.mxu0 0.0
  %9753 = vmatprep.subr.mxu0 0.0
  %9754 = vmatpush2.msra.mxu0 0.0
  %9755 = vmatprep.subr.mxu0 0.0
  %9756 = vmatpush2.msra.mxu0 0.0
  %9757 = vmatprep.subr.mxu0 0.0
  %9758 = vmatpush2.msra.mxu0 0.0
  %9759 = vmatprep.subr.mxu0 0.0
  %9760 = vmatpush2.msra.mxu0 0.0
  %9761 = vmatprep.subr.mxu0 0.0
  %9762 = vmatpush2.msra.mxu0 0.0
  %9763 = vmatprep.mubr.f32.mxu0 0.0
  %9764 = vmatmul.mubr.f32.gmra.mxu0 %v9697
  %v9765 = vpop.f32.mrf.mxu0
  %v9766 = vadd.f32 %v9694, %v9765
  %v9767 = vpop.f32.mrf.mxu0
  %9768 = vdwg.mxu0
  %vm9769 = vcmask 1024
  %9770 = vst.msk [vmem:[%s17] sm:$0x3] %vm9769, %v9766
  // Predicated region
  $region70: #{pooled_value_function.1} parent=0 // pred_check
    _
  $region71: #{pooled_value_function.1} parent=0 // pred_check_branch
    %9772 = sbr.rel (0) target = $region73
  $region72: #{pooled_value_function.1} parent=0 // pred_region
    _
  $region73: #{pooled_value_function.1} parent=0 // pred_fallthru
    _
  // Predicated region
  $region74: #{pooled_value_function.1} parent=0 // pred_check
    _
  $region75: #{pooled_value_function.1} parent=0 // pred_check_branch
    %9774 = sbr.rel (0) target = $region77
  $region76: #{pooled_value_function.1} parent=0 // pred_region
    _
  $region77: #{pooled_value_function.1} parent=0 // pred_fallthru
    _

</llo_original>
